<compile_context>
chip_gen: v7x
topology: tpu7x:2x2x1
jax: 0.10.0
libtpu: 0.0.40
codegen_flags: <defaults>
</compile_context>

<pallas_src>
import math

import jax
import jax.numpy as jnp
import numpy as np
from jax import lax
from jax.experimental import pallas as pl
from jax.experimental.pallas import tpu as pltpu

# ----------------------------- model config ---------------------------------
B = 2           # batch
T_WORD = 8      # word sequence length
T_ENT = 8       # entity sequence length
T_TOTAL = T_WORD + T_ENT
HIDDEN = 64     # hidden_size
N_HEADS = 4     # num_attention_heads
HEAD = HIDDEN // N_HEADS
INTER = 128     # intermediate_size
N_LAYERS = 2    # num_hidden_layers
LN_EPS = 1e-12  # layer_norm_eps

R_WORD = B * T_WORD      # rows holding word tokens in the folded layout
R_TOTAL = B * T_TOTAL    # total rows of the folded residual stream


def _layer_norm(x, gamma, beta):
    mean = jnp.mean(x, axis=-1, keepdims=True)
    var = jnp.mean(jnp.square(x - mean), axis=-1, keepdims=True)
    return (x - mean) * lax.rsqrt(var + LN_EPS) * gamma + beta


def _gelu(x):
    # TODO(synk): HF ACT2FN["gelu"] is the exact erf GELU; the tanh
    # approximation is used for guaranteed Mosaic lowering (the in-script
    # reference uses the same formula).
    return jax.nn.gelu(x, approximate=True)


def _split_heads(x):
    # (T, NH*HEAD) -> (NH, T, HEAD) via static lane slices stacked along a new
    # untiled leading axis (avoids an in-kernel 3-D transpose).
    return jnp.stack([x[:, h * HEAD:(h + 1) * HEAD] for h in range(N_HEADS)],
                     axis=0)


# ------------------------- fused Pallas kernel -------------------------------
def luke_encoder_kernel(hidden_ref, mask_ref,
                        wp_w_ref, bp_w_ref, wp_e_ref, bp_e_ref,
                        wo_h_ref, bo_ref, ln1g_ref, ln1b_ref,
                        w1_ref, b1_ref, w2_ref, b2_ref, ln2g_ref, ln2b_ref,
                        out_ref):
    """All N_LAYERS LukeLayers for the whole (folded) batch, resident in VMEM.

    hidden_ref: (B*T_TOTAL, H) rows laid out [all word rows ; all entity rows].
    mask_ref:   (B, 1, T_TOTAL) additive attention mask.
    """
    x = hidden_ref[...]                             # (R_TOTAL, H)

    # Hoist the per-batch mask broadcast out of the unrolled layer loop
    # (JAX does not CSE broadcast_in_dim).
    masks = [jnp.broadcast_to(mask_ref[b].reshape(1, 1, T_TOTAL),
                              (N_HEADS, T_TOTAL, T_TOTAL)) for b in range(B)]

    for l in range(N_LAYERS):                       # static unrolled layer loop
        # -------- entity-aware self-attention (LukeSelfAttention) --------
        word = x[:R_WORD, :]                        # (B*Tw, H)  contiguous rows
        ent = x[R_WORD:, :]                         # (B*Te, H)

        # stacked projections over ALL batches at once;
        # output columns = [q_vs_word | q_vs_entity | k | v]
        # (1/sqrt(HEAD) already folded into the q columns at stack time)
        proj_w = jnp.dot(word, wp_w_ref[l],
                         preferred_element_type=jnp.float32) + bp_w_ref[l]  # (B*Tw, 4H)
        proj_e = jnp.dot(ent, wp_e_ref[l],
                         preferred_element_type=jnp.float32) + bp_e_ref[l]  # (B*Te, 4H)

        wo_h = wo_h_ref[l]                          # (NH, HEAD, H)
        ctx_word, ctx_ent = [], []
        for b in range(B):                          # static tiny batch loop
            pw = proj_w[b * T_WORD:(b + 1) * T_WORD, :]          # (Tw, 4H)
            pe = proj_e[b * T_ENT:(b + 1) * T_ENT, :]            # (Te, 4H)
            pb = jnp.concatenate([pw, pe], axis=0)               # (T, 4H) [word;ent]

            q_vs_word = _split_heads(pb[:, 0:HIDDEN])            # (NH, T, HEAD)
            q_vs_ent = _split_heads(pb[:, HIDDEN:2 * HIDDEN])    # (NH, T, HEAD)
            k = _split_heads(pb[:, 2 * HIDDEN:3 * HIDDEN])       # (NH, T, HEAD)
            v = _split_heads(pb[:, 3 * HIDDEN:4 * HIDDEN])       # (NH, T, HEAD)

            # key-split scores: word-queries vs word-keys, ent-queries vs
            # ent-keys only (no full-size where-select, half the score MXU work)
            s_w = jnp.einsum('hqd,hkd->hqk', q_vs_word, k[:, :T_WORD, :],
                             preferred_element_type=jnp.float32)  # (NH, T, Tw)
            s_e = jnp.einsum('hqd,hkd->hqk', q_vs_ent, k[:, T_WORD:, :],
                             preferred_element_type=jnp.float32)  # (NH, T, Te)
            scores = jnp.concatenate([s_w, s_e], axis=2) + masks[b]

            # per-head softmax (exact EUP reciprocal, f32 math)
            scores = scores - jnp.max(scores, axis=-1, keepdims=True)
            p = jnp.exp(scores)
            p = p * pl.reciprocal(jnp.sum(p, axis=-1, keepdims=True), approx=False)

            ctx = jnp.einsum('hqk,hkd->hqd', p, v,
                             preferred_element_type=jnp.float32)  # (NH, T, HEAD)

            # attention-output dense consumed per head (wo pre-reshaped to
            # (NH, HEAD, H)); summing heads replaces the lane concat.
            y = jnp.einsum('hqd,hdo->hqo', ctx, wo_h,
                           preferred_element_type=jnp.float32)    # (NH, T, H)
            cd = y[0]
            for h in range(1, N_HEADS):
                cd = cd + y[h]                                    # (T, H)

            ctx_word.append(cd[:T_WORD, :])
            ctx_ent.append(cd[T_WORD:, :])

        # reassemble into the [all word ; all entity] row layout (sublane concat)
        dense = jnp.concatenate(ctx_word + ctx_ent, axis=0) + bo_ref[l]  # (R_TOTAL, H)

        # -------- LukeSelfOutput: residual + LayerNorm --------------------
        x = _layer_norm(dense + x, ln1g_ref[l], ln1b_ref[l])

        # -------- LukeIntermediate (GELU) + LukeOutput ---------------------
        inter = _gelu(jnp.dot(x, w1_ref[l],
                              preferred_element_type=jnp.float32) + b1_ref[l])
        ffn = jnp.dot(inter, w2_ref[l],
                      preferred_element_type=jnp.float32) + b2_ref[l]
        x = _layer_norm(ffn + x, ln2g_ref[l], ln2b_ref[l])

    # TODO(synk): HIDDEN=64 means the output store is a 64-lane masked store;
    # at real H=768 (multiple of 128) this is naturally lane-dense.
    out_ref[...] = x


# ----------------------------- Pallas wrapper --------------------------------
def stack_layer_params(layer_params):
    """Stack per-layer params with a leading layer axis.

    - The six QKV / entity-query projections fuse into one (H, 4H) matrix per
      token group; the 1/sqrt(HEAD) attention scale is folded into the query
      weight/bias columns (one-time constant fold).
    - wo is stored per-head as (NH, HEAD, H) so the kernel never has to
      lane-concat the per-head context slices.
    """
    scale = 1.0 / math.sqrt(HEAD)

    def stack(fn):
        return jnp.stack([fn(p) for p in layer_params], axis=0)

    return dict(
        wp_w=stack(lambda p: jnp.concatenate(
            [p["wq"] * scale, p["ww2e"] * scale, p["wk"], p["wv"]], axis=1)),   # (L,H,4H)
        bp_w=stack(lambda p: jnp.concatenate(
            [p["bq"] * scale, p["bw2e"] * scale, p["bk"], p["bv"]], axis=1)),   # (L,1,4H)
        wp_e=stack(lambda p: jnp.concatenate(
            [p["we2w"] * scale, p["we2e"] * scale, p["wk"], p["wv"]], axis=1)), # (L,H,4H)
        bp_e=stack(lambda p: jnp.concatenate(
            [p["be2w"] * scale, p["be2e"] * scale, p["bk"], p["bv"]], axis=1)), # (L,1,4H)
        wo_h=stack(lambda p: p["wo_attn"].reshape(N_HEADS, HEAD, HIDDEN)),      # (L,NH,HEAD,H)
        bo=stack(lambda p: p["bo_attn"]),
        ln1_g=stack(lambda p: p["ln1_g"]), ln1_b=stack(lambda p: p["ln1_b"]),
        w1=stack(lambda p: p["w1"]), b1=stack(lambda p: p["b1"]),
        w2=stack(lambda p: p["w2"]), b2=stack(lambda p: p["b2"]),
        ln2_g=stack(lambda p: p["ln2_g"]), ln2_b=stack(lambda p: p["ln2_b"]),
    )


def luke_encoder_forward(word_hs, ent_hs, mask, layer_params):
    """LukeEncoder.forward (eval, return_dict=False flavour): returns
    (word_last_hidden_state, entity_last_hidden_state)."""
    # Fold batch into rows: [all word rows of all batches ; all entity rows].
    hidden = jnp.concatenate([word_hs.reshape(B * T_WORD, HIDDEN),
                              ent_hs.reshape(B * T_ENT, HIDDEN)], axis=0)   # (32, 64)
    sp = stack_layer_params(layer_params)
    weight_args = (sp["wp_w"], sp["bp_w"], sp["wp_e"], sp["bp_e"],
                   sp["wo_h"], sp["bo"], sp["ln1_g"], sp["ln1_b"],
                   sp["w1"], sp["b1"], sp["w2"], sp["b2"],
                   sp["ln2_g"], sp["ln2_b"])

    # No grid: one kernel invocation, every operand (~0.4 MB of f32 weights +
    # the 8 KB activation slab) lives whole in VMEM with no double buffering.
    out = pl.pallas_call(
        luke_encoder_kernel,
        out_shape=jax.ShapeDtypeStruct((R_TOTAL, HIDDEN), jnp.float32),
        compiler_params=pltpu.CompilerParams(vmem_limit_bytes=32 * 1024 * 1024),
    )(hidden, mask, *weight_args)

    word_out = out[:B * T_WORD].reshape(B, T_WORD, HIDDEN)
    ent_out = out[B * T_WORD:].reshape(B, T_ENT, HIDDEN)
    return word_out, ent_out


# --------------------------- pure-JAX reference ------------------------------
def _ref_layer(word, ent, mask, p):
    concat = jnp.concatenate([word, ent], axis=1)                 # (B, T, H)

    def lin(x, w, b):
        return jnp.einsum("bth,ho->bto", x, w) + b

    def heads(x):
        return x.reshape(x.shape[0], x.shape[1], N_HEADS, HEAD).transpose(0, 2, 1, 3)

    q_w2w = heads(lin(word, p["wq"], p["bq"]))
    q_w2e = heads(lin(word, p["ww2e"], p["bw2e"]))
    q_e2w = heads(lin(ent, p["we2w"], p["be2w"]))
    q_e2e = heads(lin(ent, p["we2e"], p["be2e"]))
    k = heads(lin(concat, p["wk"], p["bk"]))
    v = heads(lin(concat, p["wv"], p["bv"]))
    kw, ke = k[:, :, :T_WORD], k[:, :, T_WORD:]

    w2w = q_w2w @ kw.transpose(0, 1, 3, 2)
    w2e = q_w2e @ ke.transpose(0, 1, 3, 2)
    e2w = q_e2w @ kw.transpose(0, 1, 3, 2)
    e2e = q_e2e @ ke.transpose(0, 1, 3, 2)
    word_scores = jnp.concatenate([w2w, w2e], axis=3)
    ent_scores = jnp.concatenate([e2w, e2e], axis=3)
    scores = jnp.concatenate([word_scores, ent_scores], axis=2)    # (B, NH, T, T)
    scores = scores / math.sqrt(HEAD) + mask[:, None, :, :]
    probs = jax.nn.softmax(scores, axis=-1)
    ctx = (probs @ v).transpose(0, 2, 1, 3).reshape(word.shape[0], T_TOTAL, HIDDEN)

    dense = jnp.einsum("bth,ho->bto", ctx, p["wo_attn"]) + p["bo_attn"]
    attn_out = _layer_norm(dense + concat, p["ln1_g"], p["ln1_b"])

    inter = _gelu(jnp.einsum("bth,hi->bti", attn_out, p["w1"]) + p["b1"])
    out = jnp.einsum("bti,ih->bth", inter, p["w2"]) + p["b2"]
    layer_out = _layer_norm(out + attn_out, p["ln2_g"], p["ln2_b"])
    return layer_out[:, :T_WORD, :], layer_out[:, T_WORD:, :]


def _ref_forward(word, ent, mask, layer_params):
    for p in layer_params:
        word, ent = _ref_layer(word, ent, mask, p)
    return word, ent


# ------------------------------- param init ----------------------------------
def init_layer_params(key):
    ks = jax.random.split(key, 20)

    def w(k, shape, scale=0.02):
        return (scale * jax.random.normal(k, shape)).astype(jnp.float32)

    return dict(
        wq=w(ks[0], (HIDDEN, HIDDEN)), bq=w(ks[1], (1, HIDDEN)),
        wk=w(ks[2], (HIDDEN, HIDDEN)), bk=w(ks[3], (1, HIDDEN)),
        wv=w(ks[4], (HIDDEN, HIDDEN)), bv=w(ks[5], (1, HIDDEN)),
        ww2e=w(ks[6], (HIDDEN, HIDDEN)), bw2e=w(ks[7], (1, HIDDEN)),
        we2w=w(ks[8], (HIDDEN, HIDDEN)), be2w=w(ks[9], (1, HIDDEN)),
        we2e=w(ks[10], (HIDDEN, HIDDEN)), be2e=w(ks[11], (1, HIDDEN)),
        wo_attn=w(ks[12], (HIDDEN, HIDDEN)), bo_attn=w(ks[13], (1, HIDDEN)),
        ln1_g=jnp.ones((1, HIDDEN), jnp.float32), ln1_b=jnp.zeros((1, HIDDEN), jnp.float32),
        w1=w(ks[14], (HIDDEN, INTER)), b1=w(ks[15], (1, INTER)),
        w2=w(ks[16], (INTER, HIDDEN)), b2=w(ks[17], (1, HIDDEN)),
        ln2_g=jnp.ones((1, HIDDEN), jnp.float32), ln2_b=jnp.zeros((1, HIDDEN), jnp.float32),
    )


# ---------------------------------- main --------------------------------------
if __name__ == "__main__":
    root = jax.random.PRNGKey(0)
    k_word, k_ent, *layer_keys = jax.random.split(root, 2 + N_LAYERS)

    word_hs = jax.random.normal(k_word, (B, T_WORD, HIDDEN), jnp.float32)
    ent_hs = jax.random.normal(k_ent, (B, T_ENT, HIDDEN), jnp.float32)

    # additive attention mask, shape (B, 1, T_total); make it non-trivial so
    # the per-batch mask routing in the folded layout is genuinely exercised
    attn_mask = jnp.zeros((B, 1, T_TOTAL), jnp.float32)
    attn_mask = attn_mask.at[0, 0, 3].set(-1e9)
    attn_mask = attn_mask.at[1, 0, T_TOTAL - 2:].set(-1e9)

    layer_params = [init_layer_params(k) for k in layer_keys]

    forward = jax.jit(luke_encoder_forward)
    word_out, ent_out = forward(word_hs, ent_hs, attn_mask, layer_params)
    jax.block_until_ready(word_out)
    jax.block_until_ready(ent_out)

    # correctness check against a pure-JAX reference (exact EUP reciprocal in
    # the kernel softmax -> tighter tolerance than the previous version)
    ref_word, ref_ent = _ref_forward(word_hs, ent_hs, attn_mask, layer_params)
    np.testing.assert_allclose(np.asarray(word_out), np.asarray(ref_word),
                               atol=1e-3, rtol=1e-3)
    np.testing.assert_allclose(np.asarray(ent_out), np.asarray(ref_ent),
                               atol=1e-3, rtol=1e-3)

    print("KERNEL_OK")
</pallas_src>

<mosaic_0001>
module attributes {stable_mosaic.version = 11 : i64} {
  func.func @luke_encoder_kernel(%arg0: memref<32x64xf32, #tpu.memory_space<vmem>>, %arg1: memref<2x1x16xf32, #tpu.memory_space<vmem>>, %arg2: memref<2x64x256xf32, #tpu.memory_space<vmem>>, %arg3: memref<2x1x256xf32, #tpu.memory_space<vmem>>, %arg4: memref<2x64x256xf32, #tpu.memory_space<vmem>>, %arg5: memref<2x1x256xf32, #tpu.memory_space<vmem>>, %arg6: memref<2x4x16x64xf32, #tpu.memory_space<vmem>>, %arg7: memref<2x1x64xf32, #tpu.memory_space<vmem>>, %arg8: memref<2x1x64xf32, #tpu.memory_space<vmem>>, %arg9: memref<2x1x64xf32, #tpu.memory_space<vmem>>, %arg10: memref<2x64x128xf32, #tpu.memory_space<vmem>>, %arg11: memref<2x1x128xf32, #tpu.memory_space<vmem>>, %arg12: memref<2x128x64xf32, #tpu.memory_space<vmem>>, %arg13: memref<2x1x64xf32, #tpu.memory_space<vmem>>, %arg14: memref<2x1x64xf32, #tpu.memory_space<vmem>>, %arg15: memref<2x1x64xf32, #tpu.memory_space<vmem>>, %arg16: memref<32x64xf32, #tpu.memory_space<vmem>>) attributes {dimension_semantics = [], scalar_prefetch = 0 : i64, scratch_operands = 0 : i64, tpu.core_type = #tpu.core_type<tc>} {
    %c0 = arith.constant 0 : index
    %c0_0 = arith.constant 0 : index
    %0 = vector.load %arg0[%c0, %c0_0] : memref<32x64xf32, #tpu.memory_space<vmem>>, vector<32x64xf32>
    %c0_1 = arith.constant 0 : index
    %c0_2 = arith.constant 0 : index
    %c0_3 = arith.constant 0 : index
    %1 = vector.load %arg1[%c0_1, %c0_2, %c0_3] : memref<2x1x16xf32, #tpu.memory_space<vmem>>, vector<1x1x16xf32>
    %2 = vector.shape_cast %1 : vector<1x1x16xf32> to vector<1x16xf32>
    %3 = vector.shape_cast %2 : vector<1x16xf32> to vector<1x1x16xf32>
    %4 = vector.shape_cast %3 : vector<1x1x16xf32> to vector<1x1x16xf32>
    %5 = vector.broadcast %4 : vector<1x1x16xf32> to vector<4x16x16xf32>
    %c1 = arith.constant 1 : index
    %c0_4 = arith.constant 0 : index
    %c0_5 = arith.constant 0 : index
    %6 = vector.load %arg1[%c1, %c0_4, %c0_5] : memref<2x1x16xf32, #tpu.memory_space<vmem>>, vector<1x1x16xf32>
    %7 = vector.shape_cast %6 : vector<1x1x16xf32> to vector<1x16xf32>
    %8 = vector.shape_cast %7 : vector<1x16xf32> to vector<1x1x16xf32>
    %9 = vector.shape_cast %8 : vector<1x1x16xf32> to vector<1x1x16xf32>
    %10 = vector.broadcast %9 : vector<1x1x16xf32> to vector<4x16x16xf32>
    %11 = vector.extract_strided_slice %0 {offsets = [0, 0], sizes = [16, 64], strides = [1, 1]} : vector<32x64xf32> to vector<16x64xf32>
    %12 = vector.extract_strided_slice %0 {offsets = [16, 0], sizes = [16, 64], strides = [1, 1]} : vector<32x64xf32> to vector<16x64xf32>
    %c0_6 = arith.constant 0 : index
    %c0_7 = arith.constant 0 : index
    %c0_8 = arith.constant 0 : index
    %13 = vector.load %arg2[%c0_6, %c0_7, %c0_8] : memref<2x64x256xf32, #tpu.memory_space<vmem>>, vector<1x64x256xf32>
    %14 = vector.shape_cast %13 : vector<1x64x256xf32> to vector<64x256xf32>
    %cst = arith.constant dense<0.000000e+00> : vector<16x256xf32>
    %15 = tpu.matmul %11, %14, %cst {dimension_numbers = #tpu.dot_dimension_numbers<[1], [0], [0], [1], [0, 0, 1, 1], [], []>} : vector<16x64xf32>, vector<64x256xf32>, vector<16x256xf32> -> vector<16x256xf32>
    %c0_9 = arith.constant 0 : index
    %c0_10 = arith.constant 0 : index
    %c0_11 = arith.constant 0 : index
    %16 = vector.load %arg3[%c0_9, %c0_10, %c0_11] : memref<2x1x256xf32, #tpu.memory_space<vmem>>, vector<1x1x256xf32>
    %17 = vector.shape_cast %16 : vector<1x1x256xf32> to vector<1x256xf32>
    %18 = vector.broadcast %17 : vector<1x256xf32> to vector<16x256xf32>
    %19 = arith.addf %15, %18 : vector<16x256xf32>
    %c0_12 = arith.constant 0 : index
    %c0_13 = arith.constant 0 : index
    %c0_14 = arith.constant 0 : index
    %20 = vector.load %arg4[%c0_12, %c0_13, %c0_14] : memref<2x64x256xf32, #tpu.memory_space<vmem>>, vector<1x64x256xf32>
    %21 = vector.shape_cast %20 : vector<1x64x256xf32> to vector<64x256xf32>
    %cst_15 = arith.constant dense<0.000000e+00> : vector<16x256xf32>
    %22 = tpu.matmul %12, %21, %cst_15 {dimension_numbers = #tpu.dot_dimension_numbers<[1], [0], [0], [1], [0, 0, 1, 1], [], []>} : vector<16x64xf32>, vector<64x256xf32>, vector<16x256xf32> -> vector<16x256xf32>
    %c0_16 = arith.constant 0 : index
    %c0_17 = arith.constant 0 : index
    %c0_18 = arith.constant 0 : index
    %23 = vector.load %arg5[%c0_16, %c0_17, %c0_18] : memref<2x1x256xf32, #tpu.memory_space<vmem>>, vector<1x1x256xf32>
    %24 = vector.shape_cast %23 : vector<1x1x256xf32> to vector<1x256xf32>
    %25 = vector.broadcast %24 : vector<1x256xf32> to vector<16x256xf32>
    %26 = arith.addf %22, %25 : vector<16x256xf32>
    %c0_19 = arith.constant 0 : index
    %c0_20 = arith.constant 0 : index
    %c0_21 = arith.constant 0 : index
    %c0_22 = arith.constant 0 : index
    %27 = vector.load %arg6[%c0_19, %c0_20, %c0_21, %c0_22] : memref<2x4x16x64xf32, #tpu.memory_space<vmem>>, vector<1x4x16x64xf32>
    %28 = vector.shape_cast %27 : vector<1x4x16x64xf32> to vector<4x16x64xf32>
    %29 = vector.extract_strided_slice %19 {offsets = [0, 0], sizes = [8, 256], strides = [1, 1]} : vector<16x256xf32> to vector<8x256xf32>
    %30 = vector.extract_strided_slice %26 {offsets = [0, 0], sizes = [8, 256], strides = [1, 1]} : vector<16x256xf32> to vector<8x256xf32>
    %31 = tpu.concatenate %29, %30 in 0 : vector<8x256xf32>, vector<8x256xf32> -> vector<16x256xf32>
    %32 = vector.extract_strided_slice %31 {offsets = [0, 0], sizes = [16, 64], strides = [1, 1]} : vector<16x256xf32> to vector<16x64xf32>
    %33 = vector.extract_strided_slice %32 {offsets = [0, 0], sizes = [16, 16], strides = [1, 1]} : vector<16x64xf32> to vector<16x16xf32>
    %34 = vector.extract_strided_slice %32 {offsets = [0, 16], sizes = [16, 16], strides = [1, 1]} : vector<16x64xf32> to vector<16x16xf32>
    %35 = vector.extract_strided_slice %32 {offsets = [0, 32], sizes = [16, 16], strides = [1, 1]} : vector<16x64xf32> to vector<16x16xf32>
    %36 = vector.extract_strided_slice %32 {offsets = [0, 48], sizes = [16, 16], strides = [1, 1]} : vector<16x64xf32> to vector<16x16xf32>
    %37 = vector.shape_cast %33 : vector<16x16xf32> to vector<1x16x16xf32>
    %38 = vector.shape_cast %34 : vector<16x16xf32> to vector<1x16x16xf32>
    %39 = vector.shape_cast %35 : vector<16x16xf32> to vector<1x16x16xf32>
    %40 = vector.shape_cast %36 : vector<16x16xf32> to vector<1x16x16xf32>
    %41 = tpu.concatenate %37, %38, %39, %40 in 0 : vector<1x16x16xf32>, vector<1x16x16xf32>, vector<1x16x16xf32>, vector<1x16x16xf32> -> vector<4x16x16xf32>
    %42 = vector.extract_strided_slice %31 {offsets = [0, 64], sizes = [16, 64], strides = [1, 1]} : vector<16x256xf32> to vector<16x64xf32>
    %43 = vector.extract_strided_slice %42 {offsets = [0, 0], sizes = [16, 16], strides = [1, 1]} : vector<16x64xf32> to vector<16x16xf32>
    %44 = vector.extract_strided_slice %42 {offsets = [0, 16], sizes = [16, 16], strides = [1, 1]} : vector<16x64xf32> to vector<16x16xf32>
    %45 = vector.extract_strided_slice %42 {offsets = [0, 32], sizes = [16, 16], strides = [1, 1]} : vector<16x64xf32> to vector<16x16xf32>
    %46 = vector.extract_strided_slice %42 {offsets = [0, 48], sizes = [16, 16], strides = [1, 1]} : vector<16x64xf32> to vector<16x16xf32>
    %47 = vector.shape_cast %43 : vector<16x16xf32> to vector<1x16x16xf32>
    %48 = vector.shape_cast %44 : vector<16x16xf32> to vector<1x16x16xf32>
    %49 = vector.shape_cast %45 : vector<16x16xf32> to vector<1x16x16xf32>
    %50 = vector.shape_cast %46 : vector<16x16xf32> to vector<1x16x16xf32>
    %51 = tpu.concatenate %47, %48, %49, %50 in 0 : vector<1x16x16xf32>, vector<1x16x16xf32>, vector<1x16x16xf32>, vector<1x16x16xf32> -> vector<4x16x16xf32>
    %52 = vector.extract_strided_slice %31 {offsets = [0, 128], sizes = [16, 64], strides = [1, 1]} : vector<16x256xf32> to vector<16x64xf32>
    %53 = vector.extract_strided_slice %52 {offsets = [0, 0], sizes = [16, 16], strides = [1, 1]} : vector<16x64xf32> to vector<16x16xf32>
    %54 = vector.extract_strided_slice %52 {offsets = [0, 16], sizes = [16, 16], strides = [1, 1]} : vector<16x64xf32> to vector<16x16xf32>
    %55 = vector.extract_strided_slice %52 {offsets = [0, 32], sizes = [16, 16], strides = [1, 1]} : vector<16x64xf32> to vector<16x16xf32>
    %56 = vector.extract_strided_slice %52 {offsets = [0, 48], sizes = [16, 16], strides = [1, 1]} : vector<16x64xf32> to vector<16x16xf32>
    %57 = vector.shape_cast %53 : vector<16x16xf32> to vector<1x16x16xf32>
    %58 = vector.shape_cast %54 : vector<16x16xf32> to vector<1x16x16xf32>
    %59 = vector.shape_cast %55 : vector<16x16xf32> to vector<1x16x16xf32>
    %60 = vector.shape_cast %56 : vector<16x16xf32> to vector<1x16x16xf32>
    %61 = tpu.concatenate %57, %58, %59, %60 in 0 : vector<1x16x16xf32>, vector<1x16x16xf32>, vector<1x16x16xf32>, vector<1x16x16xf32> -> vector<4x16x16xf32>
    %62 = vector.extract_strided_slice %31 {offsets = [0, 192], sizes = [16, 64], strides = [1, 1]} : vector<16x256xf32> to vector<16x64xf32>
    %63 = vector.extract_strided_slice %62 {offsets = [0, 0], sizes = [16, 16], strides = [1, 1]} : vector<16x64xf32> to vector<16x16xf32>
    %64 = vector.extract_strided_slice %62 {offsets = [0, 16], sizes = [16, 16], strides = [1, 1]} : vector<16x64xf32> to vector<16x16xf32>
    %65 = vector.extract_strided_slice %62 {offsets = [0, 32], sizes = [16, 16], strides = [1, 1]} : vector<16x64xf32> to vector<16x16xf32>
    %66 = vector.extract_strided_slice %62 {offsets = [0, 48], sizes = [16, 16], strides = [1, 1]} : vector<16x64xf32> to vector<16x16xf32>
    %67 = vector.shape_cast %63 : vector<16x16xf32> to vector<1x16x16xf32>
    %68 = vector.shape_cast %64 : vector<16x16xf32> to vector<1x16x16xf32>
    %69 = vector.shape_cast %65 : vector<16x16xf32> to vector<1x16x16xf32>
    %70 = vector.shape_cast %66 : vector<16x16xf32> to vector<1x16x16xf32>
    %71 = tpu.concatenate %67, %68, %69, %70 in 0 : vector<1x16x16xf32>, vector<1x16x16xf32>, vector<1x16x16xf32>, vector<1x16x16xf32> -> vector<4x16x16xf32>
    %72 = vector.extract_strided_slice %61 {offsets = [0, 0, 0], sizes = [4, 8, 16], strides = [1, 1, 1]} : vector<4x16x16xf32> to vector<4x8x16xf32>
    "tpu.trace_start"() <{level = 10 : i32, message = "hqd,hkd->hqk"}> : () -> ()
    %cst_23 = arith.constant dense<0.000000e+00> : vector<4x16x8xf32>
    %73 = tpu.matmul %41, %72, %cst_23 {dimension_numbers = #tpu.dot_dimension_numbers<[2], [2], [1], [1], [0, 0, 0, 1, 1, 1], [0], [0]>} : vector<4x16x16xf32>, vector<4x8x16xf32>, vector<4x16x8xf32> -> vector<4x16x8xf32>
    "tpu.trace_stop"() : () -> ()
    %74 = vector.extract_strided_slice %61 {offsets = [0, 8, 0], sizes = [4, 8, 16], strides = [1, 1, 1]} : vector<4x16x16xf32> to vector<4x8x16xf32>
    "tpu.trace_start"() <{level = 10 : i32, message = "hqd,hkd->hqk"}> : () -> ()
    %cst_24 = arith.constant dense<0.000000e+00> : vector<4x16x8xf32>
    %75 = tpu.matmul %51, %74, %cst_24 {dimension_numbers = #tpu.dot_dimension_numbers<[2], [2], [1], [1], [0, 0, 0, 1, 1, 1], [0], [0]>} : vector<4x16x16xf32>, vector<4x8x16xf32>, vector<4x16x8xf32> -> vector<4x16x8xf32>
    "tpu.trace_stop"() : () -> ()
    %76 = tpu.concatenate %73, %75 in 2 : vector<4x16x8xf32>, vector<4x16x8xf32> -> vector<4x16x16xf32>
    %77 = arith.addf %76, %5 : vector<4x16x16xf32>
    %cst_25 = arith.constant dense<0xFF800000> : vector<4x16xf32>
    %78 = vector.multi_reduction <maximumf>, %77, %cst_25 [2] : vector<4x16x16xf32> to vector<4x16xf32>
    %79 = vector.shape_cast %78 : vector<4x16xf32> to vector<4x16x1xf32>
    %80 = vector.broadcast %79 : vector<4x16x1xf32> to vector<4x16x16xf32>
    %81 = arith.subf %77, %80 : vector<4x16x16xf32>
    %82 = math.exp %81 : vector<4x16x16xf32>
    %cst_26 = arith.constant dense<0.000000e+00> : vector<4x16xf32>
    %83 = vector.multi_reduction <add>, %82, %cst_26 [2] : vector<4x16x16xf32> to vector<4x16xf32>
    %84 = vector.shape_cast %83 : vector<4x16xf32> to vector<4x16x1xf32>
    %85 = tpu.reciprocal %84 : vector<4x16x1xf32> -> vector<4x16x1xf32>
    %86 = vector.broadcast %85 : vector<4x16x1xf32> to vector<4x16x16xf32>
    %87 = arith.mulf %82, %86 : vector<4x16x16xf32>
    "tpu.trace_start"() <{level = 10 : i32, message = "hqk,hkd->hqd"}> : () -> ()
    %cst_27 = arith.constant dense<0.000000e+00> : vector<4x16x16xf32>
    %88 = tpu.matmul %87, %71, %cst_27 {dimension_numbers = #tpu.dot_dimension_numbers<[2], [1], [1], [2], [0, 0, 0, 1, 1, 2], [0], [0]>} : vector<4x16x16xf32>, vector<4x16x16xf32>, vector<4x16x16xf32> -> vector<4x16x16xf32>
    "tpu.trace_stop"() : () -> ()
    "tpu.trace_start"() <{level = 10 : i32, message = "hqd,hdo->hqo"}> : () -> ()
    %cst_28 = arith.constant dense<0.000000e+00> : vector<4x16x64xf32>
    %89 = tpu.matmul %88, %28, %cst_28 {dimension_numbers = #tpu.dot_dimension_numbers<[2], [1], [1], [2], [0, 0, 0, 1, 1, 2], [0], [0]>} : vector<4x16x16xf32>, vector<4x16x64xf32>, vector<4x16x64xf32> -> vector<4x16x64xf32>
    "tpu.trace_stop"() : () -> ()
    %90 = vector.extract_strided_slice %89 {offsets = [0, 0, 0], sizes = [1, 16, 64], strides = [1, 1, 1]} : vector<4x16x64xf32> to vector<1x16x64xf32>
    %91 = vector.shape_cast %90 : vector<1x16x64xf32> to vector<16x64xf32>
    %92 = vector.extract_strided_slice %89 {offsets = [1, 0, 0], sizes = [1, 16, 64], strides = [1, 1, 1]} : vector<4x16x64xf32> to vector<1x16x64xf32>
    %93 = vector.shape_cast %92 : vector<1x16x64xf32> to vector<16x64xf32>
    %94 = arith.addf %91, %93 : vector<16x64xf32>
    %95 = vector.extract_strided_slice %89 {offsets = [2, 0, 0], sizes = [1, 16, 64], strides = [1, 1, 1]} : vector<4x16x64xf32> to vector<1x16x64xf32>
    %96 = vector.shape_cast %95 : vector<1x16x64xf32> to vector<16x64xf32>
    %97 = arith.addf %94, %96 : vector<16x64xf32>
    %98 = vector.extract_strided_slice %89 {offsets = [3, 0, 0], sizes = [1, 16, 64], strides = [1, 1, 1]} : vector<4x16x64xf32> to vector<1x16x64xf32>
    %99 = vector.shape_cast %98 : vector<1x16x64xf32> to vector<16x64xf32>
    %100 = arith.addf %97, %99 : vector<16x64xf32>
    %101 = vector.extract_strided_slice %100 {offsets = [0, 0], sizes = [8, 64], strides = [1, 1]} : vector<16x64xf32> to vector<8x64xf32>
    %102 = vector.extract_strided_slice %100 {offsets = [8, 0], sizes = [8, 64], strides = [1, 1]} : vector<16x64xf32> to vector<8x64xf32>
    %103 = vector.extract_strided_slice %19 {offsets = [8, 0], sizes = [8, 256], strides = [1, 1]} : vector<16x256xf32> to vector<8x256xf32>
    %104 = vector.extract_strided_slice %26 {offsets = [8, 0], sizes = [8, 256], strides = [1, 1]} : vector<16x256xf32> to vector<8x256xf32>
    %105 = tpu.concatenate %103, %104 in 0 : vector<8x256xf32>, vector<8x256xf32> -> vector<16x256xf32>
    %106 = vector.extract_strided_slice %105 {offsets = [0, 0], sizes = [16, 64], strides = [1, 1]} : vector<16x256xf32> to vector<16x64xf32>
    %107 = vector.extract_strided_slice %106 {offsets = [0, 0], sizes = [16, 16], strides = [1, 1]} : vector<16x64xf32> to vector<16x16xf32>
    %108 = vector.extract_strided_slice %106 {offsets = [0, 16], sizes = [16, 16], strides = [1, 1]} : vector<16x64xf32> to vector<16x16xf32>
    %109 = vector.extract_strided_slice %106 {offsets = [0, 32], sizes = [16, 16], strides = [1, 1]} : vector<16x64xf32> to vector<16x16xf32>
    %110 = vector.extract_strided_slice %106 {offsets = [0, 48], sizes = [16, 16], strides = [1, 1]} : vector<16x64xf32> to vector<16x16xf32>
    %111 = vector.shape_cast %107 : vector<16x16xf32> to vector<1x16x16xf32>
    %112 = vector.shape_cast %108 : vector<16x16xf32> to vector<1x16x16xf32>
    %113 = vector.shape_cast %109 : vector<16x16xf32> to vector<1x16x16xf32>
    %114 = vector.shape_cast %110 : vector<16x16xf32> to vector<1x16x16xf32>
    %115 = tpu.concatenate %111, %112, %113, %114 in 0 : vector<1x16x16xf32>, vector<1x16x16xf32>, vector<1x16x16xf32>, vector<1x16x16xf32> -> vector<4x16x16xf32>
    %116 = vector.extract_strided_slice %105 {offsets = [0, 64], sizes = [16, 64], strides = [1, 1]} : vector<16x256xf32> to vector<16x64xf32>
    %117 = vector.extract_strided_slice %116 {offsets = [0, 0], sizes = [16, 16], strides = [1, 1]} : vector<16x64xf32> to vector<16x16xf32>
    %118 = vector.extract_strided_slice %116 {offsets = [0, 16], sizes = [16, 16], strides = [1, 1]} : vector<16x64xf32> to vector<16x16xf32>
    %119 = vector.extract_strided_slice %116 {offsets = [0, 32], sizes = [16, 16], strides = [1, 1]} : vector<16x64xf32> to vector<16x16xf32>
    %120 = vector.extract_strided_slice %116 {offsets = [0, 48], sizes = [16, 16], strides = [1, 1]} : vector<16x64xf32> to vector<16x16xf32>
    %121 = vector.shape_cast %117 : vector<16x16xf32> to vector<1x16x16xf32>
    %122 = vector.shape_cast %118 : vector<16x16xf32> to vector<1x16x16xf32>
    %123 = vector.shape_cast %119 : vector<16x16xf32> to vector<1x16x16xf32>
    %124 = vector.shape_cast %120 : vector<16x16xf32> to vector<1x16x16xf32>
    %125 = tpu.concatenate %121, %122, %123, %124 in 0 : vector<1x16x16xf32>, vector<1x16x16xf32>, vector<1x16x16xf32>, vector<1x16x16xf32> -> vector<4x16x16xf32>
    %126 = vector.extract_strided_slice %105 {offsets = [0, 128], sizes = [16, 64], strides = [1, 1]} : vector<16x256xf32> to vector<16x64xf32>
    %127 = vector.extract_strided_slice %126 {offsets = [0, 0], sizes = [16, 16], strides = [1, 1]} : vector<16x64xf32> to vector<16x16xf32>
    %128 = vector.extract_strided_slice %126 {offsets = [0, 16], sizes = [16, 16], strides = [1, 1]} : vector<16x64xf32> to vector<16x16xf32>
    %129 = vector.extract_strided_slice %126 {offsets = [0, 32], sizes = [16, 16], strides = [1, 1]} : vector<16x64xf32> to vector<16x16xf32>
    %130 = vector.extract_strided_slice %126 {offsets = [0, 48], sizes = [16, 16], strides = [1, 1]} : vector<16x64xf32> to vector<16x16xf32>
    %131 = vector.shape_cast %127 : vector<16x16xf32> to vector<1x16x16xf32>
    %132 = vector.shape_cast %128 : vector<16x16xf32> to vector<1x16x16xf32>
    %133 = vector.shape_cast %129 : vector<16x16xf32> to vector<1x16x16xf32>
    %134 = vector.shape_cast %130 : vector<16x16xf32> to vector<1x16x16xf32>
    %135 = tpu.concatenate %131, %132, %133, %134 in 0 : vector<1x16x16xf32>, vector<1x16x16xf32>, vector<1x16x16xf32>, vector<1x16x16xf32> -> vector<4x16x16xf32>
    %136 = vector.extract_strided_slice %105 {offsets = [0, 192], sizes = [16, 64], strides = [1, 1]} : vector<16x256xf32> to vector<16x64xf32>
    %137 = vector.extract_strided_slice %136 {offsets = [0, 0], sizes = [16, 16], strides = [1, 1]} : vector<16x64xf32> to vector<16x16xf32>
    %138 = vector.extract_strided_slice %136 {offsets = [0, 16], sizes = [16, 16], strides = [1, 1]} : vector<16x64xf32> to vector<16x16xf32>
    %139 = vector.extract_strided_slice %136 {offsets = [0, 32], sizes = [16, 16], strides = [1, 1]} : vector<16x64xf32> to vector<16x16xf32>
    %140 = vector.extract_strided_slice %136 {offsets = [0, 48], sizes = [16, 16], strides = [1, 1]} : vector<16x64xf32> to vector<16x16xf32>
    %141 = vector.shape_cast %137 : vector<16x16xf32> to vector<1x16x16xf32>
    %142 = vector.shape_cast %138 : vector<16x16xf32> to vector<1x16x16xf32>
    %143 = vector.shape_cast %139 : vector<16x16xf32> to vector<1x16x16xf32>
    %144 = vector.shape_cast %140 : vector<16x16xf32> to vector<1x16x16xf32>
    %145 = tpu.concatenate %141, %142, %143, %144 in 0 : vector<1x16x16xf32>, vector<1x16x16xf32>, vector<1x16x16xf32>, vector<1x16x16xf32> -> vector<4x16x16xf32>
    %146 = vector.extract_strided_slice %135 {offsets = [0, 0, 0], sizes = [4, 8, 16], strides = [1, 1, 1]} : vector<4x16x16xf32> to vector<4x8x16xf32>
    "tpu.trace_start"() <{level = 10 : i32, message = "hqd,hkd->hqk"}> : () -> ()
    %cst_29 = arith.constant dense<0.000000e+00> : vector<4x16x8xf32>
    %147 = tpu.matmul %115, %146, %cst_29 {dimension_numbers = #tpu.dot_dimension_numbers<[2], [2], [1], [1], [0, 0, 0, 1, 1, 1], [0], [0]>} : vector<4x16x16xf32>, vector<4x8x16xf32>, vector<4x16x8xf32> -> vector<4x16x8xf32>
    "tpu.trace_stop"() : () -> ()
    %148 = vector.extract_strided_slice %135 {offsets = [0, 8, 0], sizes = [4, 8, 16], strides = [1, 1, 1]} : vector<4x16x16xf32> to vector<4x8x16xf32>
    "tpu.trace_start"() <{level = 10 : i32, message = "hqd,hkd->hqk"}> : () -> ()
    %cst_30 = arith.constant dense<0.000000e+00> : vector<4x16x8xf32>
    %149 = tpu.matmul %125, %148, %cst_30 {dimension_numbers = #tpu.dot_dimension_numbers<[2], [2], [1], [1], [0, 0, 0, 1, 1, 1], [0], [0]>} : vector<4x16x16xf32>, vector<4x8x16xf32>, vector<4x16x8xf32> -> vector<4x16x8xf32>
    "tpu.trace_stop"() : () -> ()
    %150 = tpu.concatenate %147, %149 in 2 : vector<4x16x8xf32>, vector<4x16x8xf32> -> vector<4x16x16xf32>
    %151 = arith.addf %150, %10 : vector<4x16x16xf32>
    %cst_31 = arith.constant dense<0xFF800000> : vector<4x16xf32>
    %152 = vector.multi_reduction <maximumf>, %151, %cst_31 [2] : vector<4x16x16xf32> to vector<4x16xf32>
    %153 = vector.shape_cast %152 : vector<4x16xf32> to vector<4x16x1xf32>
    %154 = vector.broadcast %153 : vector<4x16x1xf32> to vector<4x16x16xf32>
    %155 = arith.subf %151, %154 : vector<4x16x16xf32>
    %156 = math.exp %155 : vector<4x16x16xf32>
    %cst_32 = arith.constant dense<0.000000e+00> : vector<4x16xf32>
    %157 = vector.multi_reduction <add>, %156, %cst_32 [2] : vector<4x16x16xf32> to vector<4x16xf32>
    %158 = vector.shape_cast %157 : vector<4x16xf32> to vector<4x16x1xf32>
    %159 = tpu.reciprocal %158 : vector<4x16x1xf32> -> vector<4x16x1xf32>
    %160 = vector.broadcast %159 : vector<4x16x1xf32> to vector<4x16x16xf32>
    %161 = arith.mulf %156, %160 : vector<4x16x16xf32>
    "tpu.trace_start"() <{level = 10 : i32, message = "hqk,hkd->hqd"}> : () -> ()
    %cst_33 = arith.constant dense<0.000000e+00> : vector<4x16x16xf32>
    %162 = tpu.matmul %161, %145, %cst_33 {dimension_numbers = #tpu.dot_dimension_numbers<[2], [1], [1], [2], [0, 0, 0, 1, 1, 2], [0], [0]>} : vector<4x16x16xf32>, vector<4x16x16xf32>, vector<4x16x16xf32> -> vector<4x16x16xf32>
    "tpu.trace_stop"() : () -> ()
    "tpu.trace_start"() <{level = 10 : i32, message = "hqd,hdo->hqo"}> : () -> ()
    %cst_34 = arith.constant dense<0.000000e+00> : vector<4x16x64xf32>
    %163 = tpu.matmul %162, %28, %cst_34 {dimension_numbers = #tpu.dot_dimension_numbers<[2], [1], [1], [2], [0, 0, 0, 1, 1, 2], [0], [0]>} : vector<4x16x16xf32>, vector<4x16x64xf32>, vector<4x16x64xf32> -> vector<4x16x64xf32>
    "tpu.trace_stop"() : () -> ()
    %164 = vector.extract_strided_slice %163 {offsets = [0, 0, 0], sizes = [1, 16, 64], strides = [1, 1, 1]} : vector<4x16x64xf32> to vector<1x16x64xf32>
    %165 = vector.shape_cast %164 : vector<1x16x64xf32> to vector<16x64xf32>
    %166 = vector.extract_strided_slice %163 {offsets = [1, 0, 0], sizes = [1, 16, 64], strides = [1, 1, 1]} : vector<4x16x64xf32> to vector<1x16x64xf32>
    %167 = vector.shape_cast %166 : vector<1x16x64xf32> to vector<16x64xf32>
    %168 = arith.addf %165, %167 : vector<16x64xf32>
    %169 = vector.extract_strided_slice %163 {offsets = [2, 0, 0], sizes = [1, 16, 64], strides = [1, 1, 1]} : vector<4x16x64xf32> to vector<1x16x64xf32>
    %170 = vector.shape_cast %169 : vector<1x16x64xf32> to vector<16x64xf32>
    %171 = arith.addf %168, %170 : vector<16x64xf32>
    %172 = vector.extract_strided_slice %163 {offsets = [3, 0, 0], sizes = [1, 16, 64], strides = [1, 1, 1]} : vector<4x16x64xf32> to vector<1x16x64xf32>
    %173 = vector.shape_cast %172 : vector<1x16x64xf32> to vector<16x64xf32>
    %174 = arith.addf %171, %173 : vector<16x64xf32>
    %175 = vector.extract_strided_slice %174 {offsets = [0, 0], sizes = [8, 64], strides = [1, 1]} : vector<16x64xf32> to vector<8x64xf32>
    %176 = vector.extract_strided_slice %174 {offsets = [8, 0], sizes = [8, 64], strides = [1, 1]} : vector<16x64xf32> to vector<8x64xf32>
    %177 = tpu.concatenate %101, %175, %102, %176 in 0 : vector<8x64xf32>, vector<8x64xf32>, vector<8x64xf32>, vector<8x64xf32> -> vector<32x64xf32>
    %c0_35 = arith.constant 0 : index
    %c0_36 = arith.constant 0 : index
    %c0_37 = arith.constant 0 : index
    %178 = vector.load %arg7[%c0_35, %c0_36, %c0_37] : memref<2x1x64xf32, #tpu.memory_space<vmem>>, vector<1x1x64xf32>
    %179 = vector.shape_cast %178 : vector<1x1x64xf32> to vector<1x64xf32>
    %180 = vector.broadcast %179 : vector<1x64xf32> to vector<32x64xf32>
    %181 = arith.addf %177, %180 : vector<32x64xf32>
    %182 = arith.addf %181, %0 : vector<32x64xf32>
    %c0_38 = arith.constant 0 : index
    %c0_39 = arith.constant 0 : index
    %c0_40 = arith.constant 0 : index
    %183 = vector.load %arg8[%c0_38, %c0_39, %c0_40] : memref<2x1x64xf32, #tpu.memory_space<vmem>>, vector<1x1x64xf32>
    %184 = vector.shape_cast %183 : vector<1x1x64xf32> to vector<1x64xf32>
    %c0_41 = arith.constant 0 : index
    %c0_42 = arith.constant 0 : index
    %c0_43 = arith.constant 0 : index
    %185 = vector.load %arg9[%c0_41, %c0_42, %c0_43] : memref<2x1x64xf32, #tpu.memory_space<vmem>>, vector<1x1x64xf32>
    %186 = vector.shape_cast %185 : vector<1x1x64xf32> to vector<1x64xf32>
    %cst_44 = arith.constant dense<0.000000e+00> : vector<32xf32>
    %187 = vector.multi_reduction <add>, %182, %cst_44 [1] : vector<32x64xf32> to vector<32xf32>
    %188 = vector.shape_cast %187 : vector<32xf32> to vector<32x1xf32>
    %cst_45 = arith.constant 6.400000e+01 : f32
    %189 = vector.broadcast %cst_45 : f32 to vector<32x1xf32>
    %190 = arith.divf %188, %189 : vector<32x1xf32>
    %191 = vector.broadcast %190 : vector<32x1xf32> to vector<32x64xf32>
    %192 = arith.subf %182, %191 : vector<32x64xf32>
    %193 = arith.mulf %192, %192 : vector<32x64xf32>
    %cst_46 = arith.constant dense<0.000000e+00> : vector<32xf32>
    %194 = vector.multi_reduction <add>, %193, %cst_46 [1] : vector<32x64xf32> to vector<32xf32>
    %195 = vector.shape_cast %194 : vector<32xf32> to vector<32x1xf32>
    %cst_47 = arith.constant 6.400000e+01 : f32
    %196 = vector.broadcast %cst_47 : f32 to vector<32x1xf32>
    %197 = arith.divf %195, %196 : vector<32x1xf32>
    %198 = vector.broadcast %190 : vector<32x1xf32> to vector<32x64xf32>
    %199 = arith.subf %182, %198 : vector<32x64xf32>
    %cst_48 = arith.constant 9.99999996E-13 : f32
    %200 = vector.broadcast %cst_48 : f32 to vector<32x1xf32>
    %201 = arith.addf %197, %200 : vector<32x1xf32>
    %202 = math.rsqrt %201 : vector<32x1xf32>
    %203 = vector.broadcast %202 : vector<32x1xf32> to vector<32x64xf32>
    %204 = arith.mulf %199, %203 : vector<32x64xf32>
    %205 = vector.broadcast %184 : vector<1x64xf32> to vector<32x64xf32>
    %206 = arith.mulf %204, %205 : vector<32x64xf32>
    %207 = vector.broadcast %186 : vector<1x64xf32> to vector<32x64xf32>
    %208 = arith.addf %206, %207 : vector<32x64xf32>
    %c0_49 = arith.constant 0 : index
    %c0_50 = arith.constant 0 : index
    %c0_51 = arith.constant 0 : index
    %209 = vector.load %arg10[%c0_49, %c0_50, %c0_51] : memref<2x64x128xf32, #tpu.memory_space<vmem>>, vector<1x64x128xf32>
    %210 = vector.shape_cast %209 : vector<1x64x128xf32> to vector<64x128xf32>
    %cst_52 = arith.constant dense<0.000000e+00> : vector<32x128xf32>
    %211 = tpu.matmul %208, %210, %cst_52 {dimension_numbers = #tpu.dot_dimension_numbers<[1], [0], [0], [1], [0, 0, 1, 1], [], []>} : vector<32x64xf32>, vector<64x128xf32>, vector<32x128xf32> -> vector<32x128xf32>
    %c0_53 = arith.constant 0 : index
    %c0_54 = arith.constant 0 : index
    %c0_55 = arith.constant 0 : index
    %212 = vector.load %arg11[%c0_53, %c0_54, %c0_55] : memref<2x1x128xf32, #tpu.memory_space<vmem>>, vector<1x1x128xf32>
    %213 = vector.shape_cast %212 : vector<1x1x128xf32> to vector<1x128xf32>
    %214 = vector.broadcast %213 : vector<1x128xf32> to vector<32x128xf32>
    %215 = arith.addf %211, %214 : vector<32x128xf32>
    %216 = arith.mulf %215, %215 : vector<32x128xf32>
    %217 = arith.mulf %215, %216 : vector<32x128xf32>
    %cst_56 = arith.constant 4.471500e-02 : f32
    %218 = vector.broadcast %cst_56 : f32 to vector<32x128xf32>
    %219 = arith.mulf %218, %217 : vector<32x128xf32>
    %220 = arith.addf %215, %219 : vector<32x128xf32>
    %cst_57 = arith.constant 0.797884583 : f32
    %221 = vector.broadcast %cst_57 : f32 to vector<32x128xf32>
    %222 = arith.mulf %221, %220 : vector<32x128xf32>
    %223 = math.tanh %222 : vector<32x128xf32>
    %cst_58 = arith.constant 1.000000e+00 : f32
    %224 = vector.broadcast %cst_58 : f32 to vector<32x128xf32>
    %225 = arith.addf %224, %223 : vector<32x128xf32>
    %cst_59 = arith.constant 5.000000e-01 : f32
    %226 = vector.broadcast %cst_59 : f32 to vector<32x128xf32>
    %227 = arith.mulf %226, %225 : vector<32x128xf32>
    %228 = arith.mulf %215, %227 : vector<32x128xf32>
    %c0_60 = arith.constant 0 : index
    %c0_61 = arith.constant 0 : index
    %c0_62 = arith.constant 0 : index
    %229 = vector.load %arg12[%c0_60, %c0_61, %c0_62] : memref<2x128x64xf32, #tpu.memory_space<vmem>>, vector<1x128x64xf32>
    %230 = vector.shape_cast %229 : vector<1x128x64xf32> to vector<128x64xf32>
    %cst_63 = arith.constant dense<0.000000e+00> : vector<32x64xf32>
    %231 = tpu.matmul %228, %230, %cst_63 {dimension_numbers = #tpu.dot_dimension_numbers<[1], [0], [0], [1], [0, 0, 1, 1], [], []>} : vector<32x128xf32>, vector<128x64xf32>, vector<32x64xf32> -> vector<32x64xf32>
    %c0_64 = arith.constant 0 : index
    %c0_65 = arith.constant 0 : index
    %c0_66 = arith.constant 0 : index
    %232 = vector.load %arg13[%c0_64, %c0_65, %c0_66] : memref<2x1x64xf32, #tpu.memory_space<vmem>>, vector<1x1x64xf32>
    %233 = vector.shape_cast %232 : vector<1x1x64xf32> to vector<1x64xf32>
    %234 = vector.broadcast %233 : vector<1x64xf32> to vector<32x64xf32>
    %235 = arith.addf %231, %234 : vector<32x64xf32>
    %236 = arith.addf %235, %208 : vector<32x64xf32>
    %c0_67 = arith.constant 0 : index
    %c0_68 = arith.constant 0 : index
    %c0_69 = arith.constant 0 : index
    %237 = vector.load %arg14[%c0_67, %c0_68, %c0_69] : memref<2x1x64xf32, #tpu.memory_space<vmem>>, vector<1x1x64xf32>
    %238 = vector.shape_cast %237 : vector<1x1x64xf32> to vector<1x64xf32>
    %c0_70 = arith.constant 0 : index
    %c0_71 = arith.constant 0 : index
    %c0_72 = arith.constant 0 : index
    %239 = vector.load %arg15[%c0_70, %c0_71, %c0_72] : memref<2x1x64xf32, #tpu.memory_space<vmem>>, vector<1x1x64xf32>
    %240 = vector.shape_cast %239 : vector<1x1x64xf32> to vector<1x64xf32>
    %cst_73 = arith.constant dense<0.000000e+00> : vector<32xf32>
    %241 = vector.multi_reduction <add>, %236, %cst_73 [1] : vector<32x64xf32> to vector<32xf32>
    %242 = vector.shape_cast %241 : vector<32xf32> to vector<32x1xf32>
    %cst_74 = arith.constant 6.400000e+01 : f32
    %243 = vector.broadcast %cst_74 : f32 to vector<32x1xf32>
    %244 = arith.divf %242, %243 : vector<32x1xf32>
    %245 = vector.broadcast %244 : vector<32x1xf32> to vector<32x64xf32>
    %246 = arith.subf %236, %245 : vector<32x64xf32>
    %247 = arith.mulf %246, %246 : vector<32x64xf32>
    %cst_75 = arith.constant dense<0.000000e+00> : vector<32xf32>
    %248 = vector.multi_reduction <add>, %247, %cst_75 [1] : vector<32x64xf32> to vector<32xf32>
    %249 = vector.shape_cast %248 : vector<32xf32> to vector<32x1xf32>
    %cst_76 = arith.constant 6.400000e+01 : f32
    %250 = vector.broadcast %cst_76 : f32 to vector<32x1xf32>
    %251 = arith.divf %249, %250 : vector<32x1xf32>
    %252 = vector.broadcast %244 : vector<32x1xf32> to vector<32x64xf32>
    %253 = arith.subf %236, %252 : vector<32x64xf32>
    %cst_77 = arith.constant 9.99999996E-13 : f32
    %254 = vector.broadcast %cst_77 : f32 to vector<32x1xf32>
    %255 = arith.addf %251, %254 : vector<32x1xf32>
    %256 = math.rsqrt %255 : vector<32x1xf32>
    %257 = vector.broadcast %256 : vector<32x1xf32> to vector<32x64xf32>
    %258 = arith.mulf %253, %257 : vector<32x64xf32>
    %259 = vector.broadcast %238 : vector<1x64xf32> to vector<32x64xf32>
    %260 = arith.mulf %258, %259 : vector<32x64xf32>
    %261 = vector.broadcast %240 : vector<1x64xf32> to vector<32x64xf32>
    %262 = arith.addf %260, %261 : vector<32x64xf32>
    %263 = vector.extract_strided_slice %262 {offsets = [0, 0], sizes = [16, 64], strides = [1, 1]} : vector<32x64xf32> to vector<16x64xf32>
    %264 = vector.extract_strided_slice %262 {offsets = [16, 0], sizes = [16, 64], strides = [1, 1]} : vector<32x64xf32> to vector<16x64xf32>
    %c1_78 = arith.constant 1 : index
    %c0_79 = arith.constant 0 : index
    %c0_80 = arith.constant 0 : index
    %265 = vector.load %arg2[%c1_78, %c0_79, %c0_80] : memref<2x64x256xf32, #tpu.memory_space<vmem>>, vector<1x64x256xf32>
    %266 = vector.shape_cast %265 : vector<1x64x256xf32> to vector<64x256xf32>
    %cst_81 = arith.constant dense<0.000000e+00> : vector<16x256xf32>
    %267 = tpu.matmul %263, %266, %cst_81 {dimension_numbers = #tpu.dot_dimension_numbers<[1], [0], [0], [1], [0, 0, 1, 1], [], []>} : vector<16x64xf32>, vector<64x256xf32>, vector<16x256xf32> -> vector<16x256xf32>
    %c1_82 = arith.constant 1 : index
    %c0_83 = arith.constant 0 : index
    %c0_84 = arith.constant 0 : index
    %268 = vector.load %arg3[%c1_82, %c0_83, %c0_84] : memref<2x1x256xf32, #tpu.memory_space<vmem>>, vector<1x1x256xf32>
    %269 = vector.shape_cast %268 : vector<1x1x256xf32> to vector<1x256xf32>
    %270 = vector.broadcast %269 : vector<1x256xf32> to vector<16x256xf32>
    %271 = arith.addf %267, %270 : vector<16x256xf32>
    %c1_85 = arith.constant 1 : index
    %c0_86 = arith.constant 0 : index
    %c0_87 = arith.constant 0 : index
    %272 = vector.load %arg4[%c1_85, %c0_86, %c0_87] : memref<2x64x256xf32, #tpu.memory_space<vmem>>, vector<1x64x256xf32>
    %273 = vector.shape_cast %272 : vector<1x64x256xf32> to vector<64x256xf32>
    %cst_88 = arith.constant dense<0.000000e+00> : vector<16x256xf32>
    %274 = tpu.matmul %264, %273, %cst_88 {dimension_numbers = #tpu.dot_dimension_numbers<[1], [0], [0], [1], [0, 0, 1, 1], [], []>} : vector<16x64xf32>, vector<64x256xf32>, vector<16x256xf32> -> vector<16x256xf32>
    %c1_89 = arith.constant 1 : index
    %c0_90 = arith.constant 0 : index
    %c0_91 = arith.constant 0 : index
    %275 = vector.load %arg5[%c1_89, %c0_90, %c0_91] : memref<2x1x256xf32, #tpu.memory_space<vmem>>, vector<1x1x256xf32>
    %276 = vector.shape_cast %275 : vector<1x1x256xf32> to vector<1x256xf32>
    %277 = vector.broadcast %276 : vector<1x256xf32> to vector<16x256xf32>
    %278 = arith.addf %274, %277 : vector<16x256xf32>
    %c1_92 = arith.constant 1 : index
    %c0_93 = arith.constant 0 : index
    %c0_94 = arith.constant 0 : index
    %c0_95 = arith.constant 0 : index
    %279 = vector.load %arg6[%c1_92, %c0_93, %c0_94, %c0_95] : memref<2x4x16x64xf32, #tpu.memory_space<vmem>>, vector<1x4x16x64xf32>
    %280 = vector.shape_cast %279 : vector<1x4x16x64xf32> to vector<4x16x64xf32>
    %281 = vector.extract_strided_slice %271 {offsets = [0, 0], sizes = [8, 256], strides = [1, 1]} : vector<16x256xf32> to vector<8x256xf32>
    %282 = vector.extract_strided_slice %278 {offsets = [0, 0], sizes = [8, 256], strides = [1, 1]} : vector<16x256xf32> to vector<8x256xf32>
    %283 = tpu.concatenate %281, %282 in 0 : vector<8x256xf32>, vector<8x256xf32> -> vector<16x256xf32>
    %284 = vector.extract_strided_slice %283 {offsets = [0, 0], sizes = [16, 64], strides = [1, 1]} : vector<16x256xf32> to vector<16x64xf32>
    %285 = vector.extract_strided_slice %284 {offsets = [0, 0], sizes = [16, 16], strides = [1, 1]} : vector<16x64xf32> to vector<16x16xf32>
    %286 = vector.extract_strided_slice %284 {offsets = [0, 16], sizes = [16, 16], strides = [1, 1]} : vector<16x64xf32> to vector<16x16xf32>
    %287 = vector.extract_strided_slice %284 {offsets = [0, 32], sizes = [16, 16], strides = [1, 1]} : vector<16x64xf32> to vector<16x16xf32>
    %288 = vector.extract_strided_slice %284 {offsets = [0, 48], sizes = [16, 16], strides = [1, 1]} : vector<16x64xf32> to vector<16x16xf32>
    %289 = vector.shape_cast %285 : vector<16x16xf32> to vector<1x16x16xf32>
    %290 = vector.shape_cast %286 : vector<16x16xf32> to vector<1x16x16xf32>
    %291 = vector.shape_cast %287 : vector<16x16xf32> to vector<1x16x16xf32>
    %292 = vector.shape_cast %288 : vector<16x16xf32> to vector<1x16x16xf32>
    %293 = tpu.concatenate %289, %290, %291, %292 in 0 : vector<1x16x16xf32>, vector<1x16x16xf32>, vector<1x16x16xf32>, vector<1x16x16xf32> -> vector<4x16x16xf32>
    %294 = vector.extract_strided_slice %283 {offsets = [0, 64], sizes = [16, 64], strides = [1, 1]} : vector<16x256xf32> to vector<16x64xf32>
    %295 = vector.extract_strided_slice %294 {offsets = [0, 0], sizes = [16, 16], strides = [1, 1]} : vector<16x64xf32> to vector<16x16xf32>
    %296 = vector.extract_strided_slice %294 {offsets = [0, 16], sizes = [16, 16], strides = [1, 1]} : vector<16x64xf32> to vector<16x16xf32>
    %297 = vector.extract_strided_slice %294 {offsets = [0, 32], sizes = [16, 16], strides = [1, 1]} : vector<16x64xf32> to vector<16x16xf32>
    %298 = vector.extract_strided_slice %294 {offsets = [0, 48], sizes = [16, 16], strides = [1, 1]} : vector<16x64xf32> to vector<16x16xf32>
    %299 = vector.shape_cast %295 : vector<16x16xf32> to vector<1x16x16xf32>
    %300 = vector.shape_cast %296 : vector<16x16xf32> to vector<1x16x16xf32>
    %301 = vector.shape_cast %297 : vector<16x16xf32> to vector<1x16x16xf32>
    %302 = vector.shape_cast %298 : vector<16x16xf32> to vector<1x16x16xf32>
    %303 = tpu.concatenate %299, %300, %301, %302 in 0 : vector<1x16x16xf32>, vector<1x16x16xf32>, vector<1x16x16xf32>, vector<1x16x16xf32> -> vector<4x16x16xf32>
    %304 = vector.extract_strided_slice %283 {offsets = [0, 128], sizes = [16, 64], strides = [1, 1]} : vector<16x256xf32> to vector<16x64xf32>
    %305 = vector.extract_strided_slice %304 {offsets = [0, 0], sizes = [16, 16], strides = [1, 1]} : vector<16x64xf32> to vector<16x16xf32>
    %306 = vector.extract_strided_slice %304 {offsets = [0, 16], sizes = [16, 16], strides = [1, 1]} : vector<16x64xf32> to vector<16x16xf32>
    %307 = vector.extract_strided_slice %304 {offsets = [0, 32], sizes = [16, 16], strides = [1, 1]} : vector<16x64xf32> to vector<16x16xf32>
    %308 = vector.extract_strided_slice %304 {offsets = [0, 48], sizes = [16, 16], strides = [1, 1]} : vector<16x64xf32> to vector<16x16xf32>
    %309 = vector.shape_cast %305 : vector<16x16xf32> to vector<1x16x16xf32>
    %310 = vector.shape_cast %306 : vector<16x16xf32> to vector<1x16x16xf32>
    %311 = vector.shape_cast %307 : vector<16x16xf32> to vector<1x16x16xf32>
    %312 = vector.shape_cast %308 : vector<16x16xf32> to vector<1x16x16xf32>
    %313 = tpu.concatenate %309, %310, %311, %312 in 0 : vector<1x16x16xf32>, vector<1x16x16xf32>, vector<1x16x16xf32>, vector<1x16x16xf32> -> vector<4x16x16xf32>
    %314 = vector.extract_strided_slice %283 {offsets = [0, 192], sizes = [16, 64], strides = [1, 1]} : vector<16x256xf32> to vector<16x64xf32>
    %315 = vector.extract_strided_slice %314 {offsets = [0, 0], sizes = [16, 16], strides = [1, 1]} : vector<16x64xf32> to vector<16x16xf32>
    %316 = vector.extract_strided_slice %314 {offsets = [0, 16], sizes = [16, 16], strides = [1, 1]} : vector<16x64xf32> to vector<16x16xf32>
    %317 = vector.extract_strided_slice %314 {offsets = [0, 32], sizes = [16, 16], strides = [1, 1]} : vector<16x64xf32> to vector<16x16xf32>
    %318 = vector.extract_strided_slice %314 {offsets = [0, 48], sizes = [16, 16], strides = [1, 1]} : vector<16x64xf32> to vector<16x16xf32>
    %319 = vector.shape_cast %315 : vector<16x16xf32> to vector<1x16x16xf32>
    %320 = vector.shape_cast %316 : vector<16x16xf32> to vector<1x16x16xf32>
    %321 = vector.shape_cast %317 : vector<16x16xf32> to vector<1x16x16xf32>
    %322 = vector.shape_cast %318 : vector<16x16xf32> to vector<1x16x16xf32>
    %323 = tpu.concatenate %319, %320, %321, %322 in 0 : vector<1x16x16xf32>, vector<1x16x16xf32>, vector<1x16x16xf32>, vector<1x16x16xf32> -> vector<4x16x16xf32>
    %324 = vector.extract_strided_slice %313 {offsets = [0, 0, 0], sizes = [4, 8, 16], strides = [1, 1, 1]} : vector<4x16x16xf32> to vector<4x8x16xf32>
    "tpu.trace_start"() <{level = 10 : i32, message = "hqd,hkd->hqk"}> : () -> ()
    %cst_96 = arith.constant dense<0.000000e+00> : vector<4x16x8xf32>
    %325 = tpu.matmul %293, %324, %cst_96 {dimension_numbers = #tpu.dot_dimension_numbers<[2], [2], [1], [1], [0, 0, 0, 1, 1, 1], [0], [0]>} : vector<4x16x16xf32>, vector<4x8x16xf32>, vector<4x16x8xf32> -> vector<4x16x8xf32>
    "tpu.trace_stop"() : () -> ()
    %326 = vector.extract_strided_slice %313 {offsets = [0, 8, 0], sizes = [4, 8, 16], strides = [1, 1, 1]} : vector<4x16x16xf32> to vector<4x8x16xf32>
    "tpu.trace_start"() <{level = 10 : i32, message = "hqd,hkd->hqk"}> : () -> ()
    %cst_97 = arith.constant dense<0.000000e+00> : vector<4x16x8xf32>
    %327 = tpu.matmul %303, %326, %cst_97 {dimension_numbers = #tpu.dot_dimension_numbers<[2], [2], [1], [1], [0, 0, 0, 1, 1, 1], [0], [0]>} : vector<4x16x16xf32>, vector<4x8x16xf32>, vector<4x16x8xf32> -> vector<4x16x8xf32>
    "tpu.trace_stop"() : () -> ()
    %328 = tpu.concatenate %325, %327 in 2 : vector<4x16x8xf32>, vector<4x16x8xf32> -> vector<4x16x16xf32>
    %329 = arith.addf %328, %5 : vector<4x16x16xf32>
    %cst_98 = arith.constant dense<0xFF800000> : vector<4x16xf32>
    %330 = vector.multi_reduction <maximumf>, %329, %cst_98 [2] : vector<4x16x16xf32> to vector<4x16xf32>
    %331 = vector.shape_cast %330 : vector<4x16xf32> to vector<4x16x1xf32>
    %332 = vector.broadcast %331 : vector<4x16x1xf32> to vector<4x16x16xf32>
    %333 = arith.subf %329, %332 : vector<4x16x16xf32>
    %334 = math.exp %333 : vector<4x16x16xf32>
    %cst_99 = arith.constant dense<0.000000e+00> : vector<4x16xf32>
    %335 = vector.multi_reduction <add>, %334, %cst_99 [2] : vector<4x16x16xf32> to vector<4x16xf32>
    %336 = vector.shape_cast %335 : vector<4x16xf32> to vector<4x16x1xf32>
    %337 = tpu.reciprocal %336 : vector<4x16x1xf32> -> vector<4x16x1xf32>
    %338 = vector.broadcast %337 : vector<4x16x1xf32> to vector<4x16x16xf32>
    %339 = arith.mulf %334, %338 : vector<4x16x16xf32>
    "tpu.trace_start"() <{level = 10 : i32, message = "hqk,hkd->hqd"}> : () -> ()
    %cst_100 = arith.constant dense<0.000000e+00> : vector<4x16x16xf32>
    %340 = tpu.matmul %339, %323, %cst_100 {dimension_numbers = #tpu.dot_dimension_numbers<[2], [1], [1], [2], [0, 0, 0, 1, 1, 2], [0], [0]>} : vector<4x16x16xf32>, vector<4x16x16xf32>, vector<4x16x16xf32> -> vector<4x16x16xf32>
    "tpu.trace_stop"() : () -> ()
    "tpu.trace_start"() <{level = 10 : i32, message = "hqd,hdo->hqo"}> : () -> ()
    %cst_101 = arith.constant dense<0.000000e+00> : vector<4x16x64xf32>
    %341 = tpu.matmul %340, %280, %cst_101 {dimension_numbers = #tpu.dot_dimension_numbers<[2], [1], [1], [2], [0, 0, 0, 1, 1, 2], [0], [0]>} : vector<4x16x16xf32>, vector<4x16x64xf32>, vector<4x16x64xf32> -> vector<4x16x64xf32>
    "tpu.trace_stop"() : () -> ()
    %342 = vector.extract_strided_slice %341 {offsets = [0, 0, 0], sizes = [1, 16, 64], strides = [1, 1, 1]} : vector<4x16x64xf32> to vector<1x16x64xf32>
    %343 = vector.shape_cast %342 : vector<1x16x64xf32> to vector<16x64xf32>
    %344 = vector.extract_strided_slice %341 {offsets = [1, 0, 0], sizes = [1, 16, 64], strides = [1, 1, 1]} : vector<4x16x64xf32> to vector<1x16x64xf32>
    %345 = vector.shape_cast %344 : vector<1x16x64xf32> to vector<16x64xf32>
    %346 = arith.addf %343, %345 : vector<16x64xf32>
    %347 = vector.extract_strided_slice %341 {offsets = [2, 0, 0], sizes = [1, 16, 64], strides = [1, 1, 1]} : vector<4x16x64xf32> to vector<1x16x64xf32>
    %348 = vector.shape_cast %347 : vector<1x16x64xf32> to vector<16x64xf32>
    %349 = arith.addf %346, %348 : vector<16x64xf32>
    %350 = vector.extract_strided_slice %341 {offsets = [3, 0, 0], sizes = [1, 16, 64], strides = [1, 1, 1]} : vector<4x16x64xf32> to vector<1x16x64xf32>
    %351 = vector.shape_cast %350 : vector<1x16x64xf32> to vector<16x64xf32>
    %352 = arith.addf %349, %351 : vector<16x64xf32>
    %353 = vector.extract_strided_slice %352 {offsets = [0, 0], sizes = [8, 64], strides = [1, 1]} : vector<16x64xf32> to vector<8x64xf32>
    %354 = vector.extract_strided_slice %352 {offsets = [8, 0], sizes = [8, 64], strides = [1, 1]} : vector<16x64xf32> to vector<8x64xf32>
    %355 = vector.extract_strided_slice %271 {offsets = [8, 0], sizes = [8, 256], strides = [1, 1]} : vector<16x256xf32> to vector<8x256xf32>
    %356 = vector.extract_strided_slice %278 {offsets = [8, 0], sizes = [8, 256], strides = [1, 1]} : vector<16x256xf32> to vector<8x256xf32>
    %357 = tpu.concatenate %355, %356 in 0 : vector<8x256xf32>, vector<8x256xf32> -> vector<16x256xf32>
    %358 = vector.extract_strided_slice %357 {offsets = [0, 0], sizes = [16, 64], strides = [1, 1]} : vector<16x256xf32> to vector<16x64xf32>
    %359 = vector.extract_strided_slice %358 {offsets = [0, 0], sizes = [16, 16], strides = [1, 1]} : vector<16x64xf32> to vector<16x16xf32>
    %360 = vector.extract_strided_slice %358 {offsets = [0, 16], sizes = [16, 16], strides = [1, 1]} : vector<16x64xf32> to vector<16x16xf32>
    %361 = vector.extract_strided_slice %358 {offsets = [0, 32], sizes = [16, 16], strides = [1, 1]} : vector<16x64xf32> to vector<16x16xf32>
    %362 = vector.extract_strided_slice %358 {offsets = [0, 48], sizes = [16, 16], strides = [1, 1]} : vector<16x64xf32> to vector<16x16xf32>
    %363 = vector.shape_cast %359 : vector<16x16xf32> to vector<1x16x16xf32>
    %364 = vector.shape_cast %360 : vector<16x16xf32> to vector<1x16x16xf32>
    %365 = vector.shape_cast %361 : vector<16x16xf32> to vector<1x16x16xf32>
    %366 = vector.shape_cast %362 : vector<16x16xf32> to vector<1x16x16xf32>
    %367 = tpu.concatenate %363, %364, %365, %366 in 0 : vector<1x16x16xf32>, vector<1x16x16xf32>, vector<1x16x16xf32>, vector<1x16x16xf32> -> vector<4x16x16xf32>
    %368 = vector.extract_strided_slice %357 {offsets = [0, 64], sizes = [16, 64], strides = [1, 1]} : vector<16x256xf32> to vector<16x64xf32>
    %369 = vector.extract_strided_slice %368 {offsets = [0, 0], sizes = [16, 16], strides = [1, 1]} : vector<16x64xf32> to vector<16x16xf32>
    %370 = vector.extract_strided_slice %368 {offsets = [0, 16], sizes = [16, 16], strides = [1, 1]} : vector<16x64xf32> to vector<16x16xf32>
    %371 = vector.extract_strided_slice %368 {offsets = [0, 32], sizes = [16, 16], strides = [1, 1]} : vector<16x64xf32> to vector<16x16xf32>
    %372 = vector.extract_strided_slice %368 {offsets = [0, 48], sizes = [16, 16], strides = [1, 1]} : vector<16x64xf32> to vector<16x16xf32>
    %373 = vector.shape_cast %369 : vector<16x16xf32> to vector<1x16x16xf32>
    %374 = vector.shape_cast %370 : vector<16x16xf32> to vector<1x16x16xf32>
    %375 = vector.shape_cast %371 : vector<16x16xf32> to vector<1x16x16xf32>
    %376 = vector.shape_cast %372 : vector<16x16xf32> to vector<1x16x16xf32>
    %377 = tpu.concatenate %373, %374, %375, %376 in 0 : vector<1x16x16xf32>, vector<1x16x16xf32>, vector<1x16x16xf32>, vector<1x16x16xf32> -> vector<4x16x16xf32>
    %378 = vector.extract_strided_slice %357 {offsets = [0, 128], sizes = [16, 64], strides = [1, 1]} : vector<16x256xf32> to vector<16x64xf32>
    %379 = vector.extract_strided_slice %378 {offsets = [0, 0], sizes = [16, 16], strides = [1, 1]} : vector<16x64xf32> to vector<16x16xf32>
    %380 = vector.extract_strided_slice %378 {offsets = [0, 16], sizes = [16, 16], strides = [1, 1]} : vector<16x64xf32> to vector<16x16xf32>
    %381 = vector.extract_strided_slice %378 {offsets = [0, 32], sizes = [16, 16], strides = [1, 1]} : vector<16x64xf32> to vector<16x16xf32>
    %382 = vector.extract_strided_slice %378 {offsets = [0, 48], sizes = [16, 16], strides = [1, 1]} : vector<16x64xf32> to vector<16x16xf32>
    %383 = vector.shape_cast %379 : vector<16x16xf32> to vector<1x16x16xf32>
    %384 = vector.shape_cast %380 : vector<16x16xf32> to vector<1x16x16xf32>
    %385 = vector.shape_cast %381 : vector<16x16xf32> to vector<1x16x16xf32>
    %386 = vector.shape_cast %382 : vector<16x16xf32> to vector<1x16x16xf32>
    %387 = tpu.concatenate %383, %384, %385, %386 in 0 : vector<1x16x16xf32>, vector<1x16x16xf32>, vector<1x16x16xf32>, vector<1x16x16xf32> -> vector<4x16x16xf32>
    %388 = vector.extract_strided_slice %357 {offsets = [0, 192], sizes = [16, 64], strides = [1, 1]} : vector<16x256xf32> to vector<16x64xf32>
    %389 = vector.extract_strided_slice %388 {offsets = [0, 0], sizes = [16, 16], strides = [1, 1]} : vector<16x64xf32> to vector<16x16xf32>
    %390 = vector.extract_strided_slice %388 {offsets = [0, 16], sizes = [16, 16], strides = [1, 1]} : vector<16x64xf32> to vector<16x16xf32>
    %391 = vector.extract_strided_slice %388 {offsets = [0, 32], sizes = [16, 16], strides = [1, 1]} : vector<16x64xf32> to vector<16x16xf32>
    %392 = vector.extract_strided_slice %388 {offsets = [0, 48], sizes = [16, 16], strides = [1, 1]} : vector<16x64xf32> to vector<16x16xf32>
    %393 = vector.shape_cast %389 : vector<16x16xf32> to vector<1x16x16xf32>
    %394 = vector.shape_cast %390 : vector<16x16xf32> to vector<1x16x16xf32>
    %395 = vector.shape_cast %391 : vector<16x16xf32> to vector<1x16x16xf32>
    %396 = vector.shape_cast %392 : vector<16x16xf32> to vector<1x16x16xf32>
    %397 = tpu.concatenate %393, %394, %395, %396 in 0 : vector<1x16x16xf32>, vector<1x16x16xf32>, vector<1x16x16xf32>, vector<1x16x16xf32> -> vector<4x16x16xf32>
    %398 = vector.extract_strided_slice %387 {offsets = [0, 0, 0], sizes = [4, 8, 16], strides = [1, 1, 1]} : vector<4x16x16xf32> to vector<4x8x16xf32>
    "tpu.trace_start"() <{level = 10 : i32, message = "hqd,hkd->hqk"}> : () -> ()
    %cst_102 = arith.constant dense<0.000000e+00> : vector<4x16x8xf32>
    %399 = tpu.matmul %367, %398, %cst_102 {dimension_numbers = #tpu.dot_dimension_numbers<[2], [2], [1], [1], [0, 0, 0, 1, 1, 1], [0], [0]>} : vector<4x16x16xf32>, vector<4x8x16xf32>, vector<4x16x8xf32> -> vector<4x16x8xf32>
    "tpu.trace_stop"() : () -> ()
    %400 = vector.extract_strided_slice %387 {offsets = [0, 8, 0], sizes = [4, 8, 16], strides = [1, 1, 1]} : vector<4x16x16xf32> to vector<4x8x16xf32>
    "tpu.trace_start"() <{level = 10 : i32, message = "hqd,hkd->hqk"}> : () -> ()
    %cst_103 = arith.constant dense<0.000000e+00> : vector<4x16x8xf32>
    %401 = tpu.matmul %377, %400, %cst_103 {dimension_numbers = #tpu.dot_dimension_numbers<[2], [2], [1], [1], [0, 0, 0, 1, 1, 1], [0], [0]>} : vector<4x16x16xf32>, vector<4x8x16xf32>, vector<4x16x8xf32> -> vector<4x16x8xf32>
    "tpu.trace_stop"() : () -> ()
    %402 = tpu.concatenate %399, %401 in 2 : vector<4x16x8xf32>, vector<4x16x8xf32> -> vector<4x16x16xf32>
    %403 = arith.addf %402, %10 : vector<4x16x16xf32>
    %cst_104 = arith.constant dense<0xFF800000> : vector<4x16xf32>
    %404 = vector.multi_reduction <maximumf>, %403, %cst_104 [2] : vector<4x16x16xf32> to vector<4x16xf32>
    %405 = vector.shape_cast %404 : vector<4x16xf32> to vector<4x16x1xf32>
    %406 = vector.broadcast %405 : vector<4x16x1xf32> to vector<4x16x16xf32>
    %407 = arith.subf %403, %406 : vector<4x16x16xf32>
    %408 = math.exp %407 : vector<4x16x16xf32>
    %cst_105 = arith.constant dense<0.000000e+00> : vector<4x16xf32>
    %409 = vector.multi_reduction <add>, %408, %cst_105 [2] : vector<4x16x16xf32> to vector<4x16xf32>
    %410 = vector.shape_cast %409 : vector<4x16xf32> to vector<4x16x1xf32>
    %411 = tpu.reciprocal %410 : vector<4x16x1xf32> -> vector<4x16x1xf32>
    %412 = vector.broadcast %411 : vector<4x16x1xf32> to vector<4x16x16xf32>
    %413 = arith.mulf %408, %412 : vector<4x16x16xf32>
    "tpu.trace_start"() <{level = 10 : i32, message = "hqk,hkd->hqd"}> : () -> ()
    %cst_106 = arith.constant dense<0.000000e+00> : vector<4x16x16xf32>
    %414 = tpu.matmul %413, %397, %cst_106 {dimension_numbers = #tpu.dot_dimension_numbers<[2], [1], [1], [2], [0, 0, 0, 1, 1, 2], [0], [0]>} : vector<4x16x16xf32>, vector<4x16x16xf32>, vector<4x16x16xf32> -> vector<4x16x16xf32>
    "tpu.trace_stop"() : () -> ()
    "tpu.trace_start"() <{level = 10 : i32, message = "hqd,hdo->hqo"}> : () -> ()
    %cst_107 = arith.constant dense<0.000000e+00> : vector<4x16x64xf32>
    %415 = tpu.matmul %414, %280, %cst_107 {dimension_numbers = #tpu.dot_dimension_numbers<[2], [1], [1], [2], [0, 0, 0, 1, 1, 2], [0], [0]>} : vector<4x16x16xf32>, vector<4x16x64xf32>, vector<4x16x64xf32> -> vector<4x16x64xf32>
    "tpu.trace_stop"() : () -> ()
    %416 = vector.extract_strided_slice %415 {offsets = [0, 0, 0], sizes = [1, 16, 64], strides = [1, 1, 1]} : vector<4x16x64xf32> to vector<1x16x64xf32>
    %417 = vector.shape_cast %416 : vector<1x16x64xf32> to vector<16x64xf32>
    %418 = vector.extract_strided_slice %415 {offsets = [1, 0, 0], sizes = [1, 16, 64], strides = [1, 1, 1]} : vector<4x16x64xf32> to vector<1x16x64xf32>
    %419 = vector.shape_cast %418 : vector<1x16x64xf32> to vector<16x64xf32>
    %420 = arith.addf %417, %419 : vector<16x64xf32>
    %421 = vector.extract_strided_slice %415 {offsets = [2, 0, 0], sizes = [1, 16, 64], strides = [1, 1, 1]} : vector<4x16x64xf32> to vector<1x16x64xf32>
    %422 = vector.shape_cast %421 : vector<1x16x64xf32> to vector<16x64xf32>
    %423 = arith.addf %420, %422 : vector<16x64xf32>
    %424 = vector.extract_strided_slice %415 {offsets = [3, 0, 0], sizes = [1, 16, 64], strides = [1, 1, 1]} : vector<4x16x64xf32> to vector<1x16x64xf32>
    %425 = vector.shape_cast %424 : vector<1x16x64xf32> to vector<16x64xf32>
    %426 = arith.addf %423, %425 : vector<16x64xf32>
    %427 = vector.extract_strided_slice %426 {offsets = [0, 0], sizes = [8, 64], strides = [1, 1]} : vector<16x64xf32> to vector<8x64xf32>
    %428 = vector.extract_strided_slice %426 {offsets = [8, 0], sizes = [8, 64], strides = [1, 1]} : vector<16x64xf32> to vector<8x64xf32>
    %429 = tpu.concatenate %353, %427, %354, %428 in 0 : vector<8x64xf32>, vector<8x64xf32>, vector<8x64xf32>, vector<8x64xf32> -> vector<32x64xf32>
    %c1_108 = arith.constant 1 : index
    %c0_109 = arith.constant 0 : index
    %c0_110 = arith.constant 0 : index
    %430 = vector.load %arg7[%c1_108, %c0_109, %c0_110] : memref<2x1x64xf32, #tpu.memory_space<vmem>>, vector<1x1x64xf32>
    %431 = vector.shape_cast %430 : vector<1x1x64xf32> to vector<1x64xf32>
    %432 = vector.broadcast %431 : vector<1x64xf32> to vector<32x64xf32>
    %433 = arith.addf %429, %432 : vector<32x64xf32>
    %434 = arith.addf %433, %262 : vector<32x64xf32>
    %c1_111 = arith.constant 1 : index
    %c0_112 = arith.constant 0 : index
    %c0_113 = arith.constant 0 : index
    %435 = vector.load %arg8[%c1_111, %c0_112, %c0_113] : memref<2x1x64xf32, #tpu.memory_space<vmem>>, vector<1x1x64xf32>
    %436 = vector.shape_cast %435 : vector<1x1x64xf32> to vector<1x64xf32>
    %c1_114 = arith.constant 1 : index
    %c0_115 = arith.constant 0 : index
    %c0_116 = arith.constant 0 : index
    %437 = vector.load %arg9[%c1_114, %c0_115, %c0_116] : memref<2x1x64xf32, #tpu.memory_space<vmem>>, vector<1x1x64xf32>
    %438 = vector.shape_cast %437 : vector<1x1x64xf32> to vector<1x64xf32>
    %cst_117 = arith.constant dense<0.000000e+00> : vector<32xf32>
    %439 = vector.multi_reduction <add>, %434, %cst_117 [1] : vector<32x64xf32> to vector<32xf32>
    %440 = vector.shape_cast %439 : vector<32xf32> to vector<32x1xf32>
    %cst_118 = arith.constant 6.400000e+01 : f32
    %441 = vector.broadcast %cst_118 : f32 to vector<32x1xf32>
    %442 = arith.divf %440, %441 : vector<32x1xf32>
    %443 = vector.broadcast %442 : vector<32x1xf32> to vector<32x64xf32>
    %444 = arith.subf %434, %443 : vector<32x64xf32>
    %445 = arith.mulf %444, %444 : vector<32x64xf32>
    %cst_119 = arith.constant dense<0.000000e+00> : vector<32xf32>
    %446 = vector.multi_reduction <add>, %445, %cst_119 [1] : vector<32x64xf32> to vector<32xf32>
    %447 = vector.shape_cast %446 : vector<32xf32> to vector<32x1xf32>
    %cst_120 = arith.constant 6.400000e+01 : f32
    %448 = vector.broadcast %cst_120 : f32 to vector<32x1xf32>
    %449 = arith.divf %447, %448 : vector<32x1xf32>
    %450 = vector.broadcast %442 : vector<32x1xf32> to vector<32x64xf32>
    %451 = arith.subf %434, %450 : vector<32x64xf32>
    %cst_121 = arith.constant 9.99999996E-13 : f32
    %452 = vector.broadcast %cst_121 : f32 to vector<32x1xf32>
    %453 = arith.addf %449, %452 : vector<32x1xf32>
    %454 = math.rsqrt %453 : vector<32x1xf32>
    %455 = vector.broadcast %454 : vector<32x1xf32> to vector<32x64xf32>
    %456 = arith.mulf %451, %455 : vector<32x64xf32>
    %457 = vector.broadcast %436 : vector<1x64xf32> to vector<32x64xf32>
    %458 = arith.mulf %456, %457 : vector<32x64xf32>
    %459 = vector.broadcast %438 : vector<1x64xf32> to vector<32x64xf32>
    %460 = arith.addf %458, %459 : vector<32x64xf32>
    %c1_122 = arith.constant 1 : index
    %c0_123 = arith.constant 0 : index
    %c0_124 = arith.constant 0 : index
    %461 = vector.load %arg10[%c1_122, %c0_123, %c0_124] : memref<2x64x128xf32, #tpu.memory_space<vmem>>, vector<1x64x128xf32>
    %462 = vector.shape_cast %461 : vector<1x64x128xf32> to vector<64x128xf32>
    %cst_125 = arith.constant dense<0.000000e+00> : vector<32x128xf32>
    %463 = tpu.matmul %460, %462, %cst_125 {dimension_numbers = #tpu.dot_dimension_numbers<[1], [0], [0], [1], [0, 0, 1, 1], [], []>} : vector<32x64xf32>, vector<64x128xf32>, vector<32x128xf32> -> vector<32x128xf32>
    %c1_126 = arith.constant 1 : index
    %c0_127 = arith.constant 0 : index
    %c0_128 = arith.constant 0 : index
    %464 = vector.load %arg11[%c1_126, %c0_127, %c0_128] : memref<2x1x128xf32, #tpu.memory_space<vmem>>, vector<1x1x128xf32>
    %465 = vector.shape_cast %464 : vector<1x1x128xf32> to vector<1x128xf32>
    %466 = vector.broadcast %465 : vector<1x128xf32> to vector<32x128xf32>
    %467 = arith.addf %463, %466 : vector<32x128xf32>
    %468 = arith.mulf %467, %467 : vector<32x128xf32>
    %469 = arith.mulf %467, %468 : vector<32x128xf32>
    %cst_129 = arith.constant 4.471500e-02 : f32
    %470 = vector.broadcast %cst_129 : f32 to vector<32x128xf32>
    %471 = arith.mulf %470, %469 : vector<32x128xf32>
    %472 = arith.addf %467, %471 : vector<32x128xf32>
    %cst_130 = arith.constant 0.797884583 : f32
    %473 = vector.broadcast %cst_130 : f32 to vector<32x128xf32>
    %474 = arith.mulf %473, %472 : vector<32x128xf32>
    %475 = math.tanh %474 : vector<32x128xf32>
    %cst_131 = arith.constant 1.000000e+00 : f32
    %476 = vector.broadcast %cst_131 : f32 to vector<32x128xf32>
    %477 = arith.addf %476, %475 : vector<32x128xf32>
    %cst_132 = arith.constant 5.000000e-01 : f32
    %478 = vector.broadcast %cst_132 : f32 to vector<32x128xf32>
    %479 = arith.mulf %478, %477 : vector<32x128xf32>
    %480 = arith.mulf %467, %479 : vector<32x128xf32>
    %c1_133 = arith.constant 1 : index
    %c0_134 = arith.constant 0 : index
    %c0_135 = arith.constant 0 : index
    %481 = vector.load %arg12[%c1_133, %c0_134, %c0_135] : memref<2x128x64xf32, #tpu.memory_space<vmem>>, vector<1x128x64xf32>
    %482 = vector.shape_cast %481 : vector<1x128x64xf32> to vector<128x64xf32>
    %cst_136 = arith.constant dense<0.000000e+00> : vector<32x64xf32>
    %483 = tpu.matmul %480, %482, %cst_136 {dimension_numbers = #tpu.dot_dimension_numbers<[1], [0], [0], [1], [0, 0, 1, 1], [], []>} : vector<32x128xf32>, vector<128x64xf32>, vector<32x64xf32> -> vector<32x64xf32>
    %c1_137 = arith.constant 1 : index
    %c0_138 = arith.constant 0 : index
    %c0_139 = arith.constant 0 : index
    %484 = vector.load %arg13[%c1_137, %c0_138, %c0_139] : memref<2x1x64xf32, #tpu.memory_space<vmem>>, vector<1x1x64xf32>
    %485 = vector.shape_cast %484 : vector<1x1x64xf32> to vector<1x64xf32>
    %486 = vector.broadcast %485 : vector<1x64xf32> to vector<32x64xf32>
    %487 = arith.addf %483, %486 : vector<32x64xf32>
    %488 = arith.addf %487, %460 : vector<32x64xf32>
    %c1_140 = arith.constant 1 : index
    %c0_141 = arith.constant 0 : index
    %c0_142 = arith.constant 0 : index
    %489 = vector.load %arg14[%c1_140, %c0_141, %c0_142] : memref<2x1x64xf32, #tpu.memory_space<vmem>>, vector<1x1x64xf32>
    %490 = vector.shape_cast %489 : vector<1x1x64xf32> to vector<1x64xf32>
    %c1_143 = arith.constant 1 : index
    %c0_144 = arith.constant 0 : index
    %c0_145 = arith.constant 0 : index
    %491 = vector.load %arg15[%c1_143, %c0_144, %c0_145] : memref<2x1x64xf32, #tpu.memory_space<vmem>>, vector<1x1x64xf32>
    %492 = vector.shape_cast %491 : vector<1x1x64xf32> to vector<1x64xf32>
    %cst_146 = arith.constant dense<0.000000e+00> : vector<32xf32>
    %493 = vector.multi_reduction <add>, %488, %cst_146 [1] : vector<32x64xf32> to vector<32xf32>
    %494 = vector.shape_cast %493 : vector<32xf32> to vector<32x1xf32>
    %cst_147 = arith.constant 6.400000e+01 : f32
    %495 = vector.broadcast %cst_147 : f32 to vector<32x1xf32>
    %496 = arith.divf %494, %495 : vector<32x1xf32>
    %497 = vector.broadcast %496 : vector<32x1xf32> to vector<32x64xf32>
    %498 = arith.subf %488, %497 : vector<32x64xf32>
    %499 = arith.mulf %498, %498 : vector<32x64xf32>
    %cst_148 = arith.constant dense<0.000000e+00> : vector<32xf32>
    %500 = vector.multi_reduction <add>, %499, %cst_148 [1] : vector<32x64xf32> to vector<32xf32>
    %501 = vector.shape_cast %500 : vector<32xf32> to vector<32x1xf32>
    %cst_149 = arith.constant 6.400000e+01 : f32
    %502 = vector.broadcast %cst_149 : f32 to vector<32x1xf32>
    %503 = arith.divf %501, %502 : vector<32x1xf32>
    %504 = vector.broadcast %496 : vector<32x1xf32> to vector<32x64xf32>
    %505 = arith.subf %488, %504 : vector<32x64xf32>
    %cst_150 = arith.constant 9.99999996E-13 : f32
    %506 = vector.broadcast %cst_150 : f32 to vector<32x1xf32>
    %507 = arith.addf %503, %506 : vector<32x1xf32>
    %508 = math.rsqrt %507 : vector<32x1xf32>
    %509 = vector.broadcast %508 : vector<32x1xf32> to vector<32x64xf32>
    %510 = arith.mulf %505, %509 : vector<32x64xf32>
    %511 = vector.broadcast %490 : vector<1x64xf32> to vector<32x64xf32>
    %512 = arith.mulf %510, %511 : vector<32x64xf32>
    %513 = vector.broadcast %492 : vector<1x64xf32> to vector<32x64xf32>
    %514 = arith.addf %512, %513 : vector<32x64xf32>
    %c0_151 = arith.constant 0 : index
    %c0_152 = arith.constant 0 : index
    %515 = vector.load %arg16[%c0_151, %c0_152] : memref<32x64xf32, #tpu.memory_space<vmem>>, vector<32x64xf32>
    tpu.vector_store %arg16[%c0_151, %c0_152], %514 {strides = array<i32>} : memref<32x64xf32, #tpu.memory_space<vmem>>, vector<32x64xf32>,
    return
  }
}

</mosaic_0001>

<llo_original>
// kernel: luke_encoder_forward.1
$region0: #{luke_encoder_forward.1}
  #allocation0 [shape = 'u32[]', space=smem, size = 0x4, offset = 0x4, fixed_abs, tag = 'smem constant byte address 0x4 - core index']
  #allocation1 [shape = 'u32[144,128]{1,0:T(1,128)}', space=vmem, size = 0x12000, scoped, tag = 'internal scratch']
  %s0 = inlined_call_operand.vmem [shape: f32[32,64], index: 0, kind: input, shape index: {}]
  %s1 = inlined_call_operand.vmem [shape: f32[2,1,16], index: 1, kind: input, shape index: {}]
  %s2 = inlined_call_operand.vmem [shape: f32[2,64,256], index: 2, kind: input, shape index: {}]
  %s3 = inlined_call_operand.vmem [shape: f32[2,1,256], index: 3, kind: input, shape index: {}]
  %s4 = inlined_call_operand.vmem [shape: f32[2,64,256], index: 4, kind: input, shape index: {}]
  %s5 = inlined_call_operand.vmem [shape: f32[2,1,256], index: 5, kind: input, shape index: {}]
  %s6 = inlined_call_operand.vmem [shape: f32[2,4,16,64], index: 6, kind: input, shape index: {}]
  %s7 = inlined_call_operand.vmem [shape: f32[2,1,64], index: 7, kind: input, shape index: {}]
  %s8 = inlined_call_operand.vmem [shape: f32[2,1,64], index: 8, kind: input, shape index: {}]
  %s9 = inlined_call_operand.vmem [shape: f32[2,1,64], index: 9, kind: input, shape index: {}]
  %s10 = inlined_call_operand.vmem [shape: f32[2,64,128], index: 10, kind: input, shape index: {}]
  %s11 = inlined_call_operand.vmem [shape: f32[2,1,128], index: 11, kind: input, shape index: {}]
  %s12 = inlined_call_operand.vmem [shape: f32[2,128,64], index: 12, kind: input, shape index: {}]
  %s13 = inlined_call_operand.vmem [shape: f32[2,1,64], index: 13, kind: input, shape index: {}]
  %s14 = inlined_call_operand.vmem [shape: f32[2,1,64], index: 14, kind: input, shape index: {}]
  %s15 = inlined_call_operand.vmem [shape: f32[2,1,64], index: 15, kind: input, shape index: {}]
  %s16 = inlined_call_operand.vmem [shape: f32[32,64], index: 16, kind: output, shape index: {}]
  %s17 = sld [smem:[#allocation0]]
  $region74: #{luke_encoder_forward.1} parent=0
    _
  %s19 = ssub.s32 1, %s17
  %s20 = scalar_select 0, %s19, %s17
  // Predicated region
  $region2: #{luke_encoder_forward.1} parent=0 // pred_check
    _
  $region3: #{luke_encoder_forward.1} parent=0 // pred_check_branch
    %22 = sbr.rel (0) target = $region5
  $region4: #{luke_encoder_forward.1} parent=0 // pred_region
    _
  $region5: #{luke_encoder_forward.1} parent=0 // pred_fallthru
    _
  // Predicated region
  $region6: #{luke_encoder_forward.1} parent=0 // pred_check
    _
  $region7: #{luke_encoder_forward.1} parent=0 // pred_check_branch
    %24 = sbr.rel (0) target = $region9
  $region8: #{luke_encoder_forward.1} parent=0 // pred_region
    _
  $region9: #{luke_encoder_forward.1} parent=0 // pred_fallthru
    _
  // Predicated region
  $region10: #{luke_encoder_forward.1} parent=0 // pred_check
    _
  $region11: #{luke_encoder_forward.1} parent=0 // pred_check_branch
    %26 = sbr.rel (0) target = $region13
  $region12: #{luke_encoder_forward.1} parent=0 // pred_region
    _
  $region13: #{luke_encoder_forward.1} parent=0 // pred_fallthru
    _
  // Predicated region
  $region14: #{luke_encoder_forward.1} parent=0 // pred_check
    _
  $region15: #{luke_encoder_forward.1} parent=0 // pred_check_branch
    %28 = sbr.rel (0) target = $region17
  $region16: #{luke_encoder_forward.1} parent=0 // pred_region
    _
  $region17: #{luke_encoder_forward.1} parent=0 // pred_fallthru
    _
  // Predicated region
  $region18: #{luke_encoder_forward.1} parent=0 // pred_check
    _
  $region19: #{luke_encoder_forward.1} parent=0 // pred_check_branch
    %30 = sbr.rel (0) target = $region21
  $region20: #{luke_encoder_forward.1} parent=0 // pred_region
    _
  $region21: #{luke_encoder_forward.1} parent=0 // pred_fallthru
    _
  // Predicated region
  $region22: #{luke_encoder_forward.1} parent=0 // pred_check
    _
  $region23: #{luke_encoder_forward.1} parent=0 // pred_check_branch
    %32 = sbr.rel (0) target = $region25
  $region24: #{luke_encoder_forward.1} parent=0 // pred_region
    _
  $region25: #{luke_encoder_forward.1} parent=0 // pred_fallthru
    _
  // Predicated region
  $region26: #{luke_encoder_forward.1} parent=0 // pred_check
    _
  $region27: #{luke_encoder_forward.1} parent=0 // pred_check_branch
    %34 = sbr.rel (0) target = $region29
  $region28: #{luke_encoder_forward.1} parent=0 // pred_region
    _
  $region29: #{luke_encoder_forward.1} parent=0 // pred_fallthru
    _
  // Predicated region
  $region30: #{luke_encoder_forward.1} parent=0 // pred_check
    _
  $region31: #{luke_encoder_forward.1} parent=0 // pred_check_branch
    %36 = sbr.rel (0) target = $region33
  $region32: #{luke_encoder_forward.1} parent=0 // pred_region
    _
  $region33: #{luke_encoder_forward.1} parent=0 // pred_fallthru
    _
  // Predicated region
  $region34: #{luke_encoder_forward.1} parent=0 // pred_check
    _
  $region35: #{luke_encoder_forward.1} parent=0 // pred_check_branch
    %38 = sbr.rel (0) target = $region37
  $region36: #{luke_encoder_forward.1} parent=0 // pred_region
    _
  $region37: #{luke_encoder_forward.1} parent=0 // pred_fallthru
    _
  // Predicated region
  $region38: #{luke_encoder_forward.1} parent=0 // pred_check
    _
  $region39: #{luke_encoder_forward.1} parent=0 // pred_check_branch
    %40 = sbr.rel (0) target = $region41
  $region40: #{luke_encoder_forward.1} parent=0 // pred_region
    _
  $region41: #{luke_encoder_forward.1} parent=0 // pred_fallthru
    _
  // Predicated region
  $region42: #{luke_encoder_forward.1} parent=0 // pred_check
    _
  $region43: #{luke_encoder_forward.1} parent=0 // pred_check_branch
    %42 = sbr.rel (0) target = $region45
  $region44: #{luke_encoder_forward.1} parent=0 // pred_region
    _
  $region45: #{luke_encoder_forward.1} parent=0 // pred_fallthru
    _
  // Predicated region
  $region46: #{luke_encoder_forward.1} parent=0 // pred_check
    _
  $region47: #{luke_encoder_forward.1} parent=0 // pred_check_branch
    %44 = sbr.rel (0) target = $region49
  $region48: #{luke_encoder_forward.1} parent=0 // pred_region
    _
  $region49: #{luke_encoder_forward.1} parent=0 // pred_fallthru
    _
  // Predicated region
  $region50: #{luke_encoder_forward.1} parent=0 // pred_check
    _
  $region51: #{luke_encoder_forward.1} parent=0 // pred_check_branch
    %46 = sbr.rel (0) target = $region53
  $region52: #{luke_encoder_forward.1} parent=0 // pred_region
    _
  $region53: #{luke_encoder_forward.1} parent=0 // pred_fallthru
    _
  // Predicated region
  $region54: #{luke_encoder_forward.1} parent=0 // pred_check
    _
  $region55: #{luke_encoder_forward.1} parent=0 // pred_check_branch
    %48 = sbr.rel (0) target = $region57
  $region56: #{luke_encoder_forward.1} parent=0 // pred_region
    _
  $region57: #{luke_encoder_forward.1} parent=0 // pred_fallthru
    _
  // Predicated region
  $region58: #{luke_encoder_forward.1} parent=0 // pred_check
    _
  $region59: #{luke_encoder_forward.1} parent=0 // pred_check_branch
    %50 = sbr.rel (0) target = $region61
  $region60: #{luke_encoder_forward.1} parent=0 // pred_region
    _
  $region61: #{luke_encoder_forward.1} parent=0 // pred_fallthru
    _
  // Predicated region
  $region62: #{luke_encoder_forward.1} parent=0 // pred_check
    _
  $region63: #{luke_encoder_forward.1} parent=0 // pred_check_branch
    %52 = sbr.rel (0) target = $region65
  $region64: #{luke_encoder_forward.1} parent=0 // pred_region
    _
  $region65: #{luke_encoder_forward.1} parent=0 // pred_fallthru
    _
  %v53 = vld [vmem:[%s0] sm:$0xff]
  %v54 = vld [vmem:[%s0 + $0x8] sm:$0xff]
  %v55 = vld [vmem:[%s0 + $0x10] sm:$0xff]
  %v56 = vld [vmem:[%s0 + $0x18] sm:$0xff]
  %v57 = vld [vmem:[%s1] sm:$0x1]
  %v59 = vlaneseq
  %v60 = vshrl.u32 %v59, 7
  %v61 = vsub.s32 0, %v60
  %v62 = vrot.slane %v57, %v61
  %s64 = scalar_lea.vmem %s1, 1
  %v65 = vld [vmem:[%s64] sm:$0x1]
  %v67 = vlaneseq
  %v68 = vshrl.u32 %v67, 7
  %v69 = vsub.s32 0, %v68
  %v70 = vrot.slane %v65, %v69
  %v72 = vld [vmem:[%s2] sm:$0xff]
  %v73 = vld [vmem:[%s2 + $0x8] sm:$0xff]
  %v74 = vld [vmem:[%s2 + $0x10] sm:$0xff]
  %v75 = vld [vmem:[%s2 + $0x18] sm:$0xff]
  %v76 = vld [vmem:[%s2 + $0x20] sm:$0xff]
  %v77 = vld [vmem:[%s2 + $0x28] sm:$0xff]
  %v78 = vld [vmem:[%s2 + $0x30] sm:$0xff]
  %v79 = vld [vmem:[%s2 + $0x38] sm:$0xff]
  %v80 = vld [vmem:[%s2 + $0x40] sm:$0xff]
  %v81 = vld [vmem:[%s2 + $0x48] sm:$0xff]
  %v82 = vld [vmem:[%s2 + $0x50] sm:$0xff]
  %v83 = vld [vmem:[%s2 + $0x58] sm:$0xff]
  %v84 = vld [vmem:[%s2 + $0x60] sm:$0xff]
  %v85 = vld [vmem:[%s2 + $0x68] sm:$0xff]
  %v86 = vld [vmem:[%s2 + $0x70] sm:$0xff]
  %v87 = vld [vmem:[%s2 + $0x78] sm:$0xff]
  %v88 = vld [vmem:[%s3] sm:$0x3]
  %v90 = vlaneseq
  %v91 = vshrl.u32 %v90, 7
  %v92 = vsub.s32 0, %v91
  %v93 = vrot.slane %v88, %v92
  %v94 = vlaneseq
  %v95 = vshrl.u32 %v94, 7
  %v96 = vsub.s32 1, %v95
  %v97 = vrot.slane %v88, %v96
  %vm100 = vcmask 523264
  %v102 = vsel %vm100, %v53, 0
  %v105 = vsel %vm100, %v54, 0
  %107 = vmatprep.subr.mxu0 %v73
  %108 = vmatpush1.msra.mxu0 %v72
  %109 = vmatprep.subr.mxu0 %v75
  %110 = vmatpush1.msra.mxu0 %v74
  %111 = vmatprep.subr.mxu0 %v77
  %112 = vmatpush1.msra.mxu0 %v76
  %113 = vmatprep.subr.mxu0 %v79
  %114 = vmatpush1.msra.mxu0 %v78
  %115 = vmatprep.subr.mxu0 %v81
  %116 = vmatpush1.msra.mxu0 %v80
  %117 = vmatprep.subr.mxu0 %v83
  %118 = vmatpush1.msra.mxu0 %v82
  %119 = vmatprep.subr.mxu0 %v85
  %120 = vmatpush1.msra.mxu0 %v84
  %121 = vmatprep.subr.mxu0 %v87
  %122 = vmatpush1.msra.mxu0 %v86
  %123 = vmatprep.subr.mxu0 0.0
  %124 = vmatpush1.msra.mxu0 0.0
  %125 = vmatprep.subr.mxu0 0.0
  %126 = vmatpush1.msra.mxu0 0.0
  %127 = vmatprep.subr.mxu0 0.0
  %128 = vmatpush1.msra.mxu0 0.0
  %129 = vmatprep.subr.mxu0 0.0
  %130 = vmatpush1.msra.mxu0 0.0
  %131 = vmatprep.subr.mxu0 0.0
  %132 = vmatpush1.msra.mxu0 0.0
  %133 = vmatprep.subr.mxu0 0.0
  %134 = vmatpush1.msra.mxu0 0.0
  %135 = vmatprep.subr.mxu0 0.0
  %136 = vmatpush1.msra.mxu0 0.0
  %137 = vmatprep.subr.mxu0 0.0
  %138 = vmatpush1.msra.mxu0 0.0
  %139 = vmatprep.subr.mxu0 0.0
  %140 = vmatpush1.msra.mxu0 0.0
  %141 = vmatprep.subr.mxu0 0.0
  %142 = vmatpush1.msra.mxu0 0.0
  %143 = vmatprep.subr.mxu0 0.0
  %144 = vmatpush1.msra.mxu0 0.0
  %145 = vmatprep.subr.mxu0 0.0
  %146 = vmatpush1.msra.mxu0 0.0
  %147 = vmatprep.subr.mxu0 0.0
  %148 = vmatpush1.msra.mxu0 0.0
  %149 = vmatprep.subr.mxu0 0.0
  %150 = vmatpush1.msra.mxu0 0.0
  %151 = vmatprep.subr.mxu0 0.0
  %152 = vmatpush1.msra.mxu0 0.0
  %153 = vmatprep.subr.mxu0 0.0
  %154 = vmatpush1.msra.mxu0 0.0
  %155 = vmatprep.subr.mxu0 0.0
  %156 = vmatpush1.msra.mxu0 0.0
  %157 = vmatprep.subr.mxu0 0.0
  %158 = vmatpush1.msra.mxu0 0.0
  %159 = vmatprep.subr.mxu0 0.0
  %160 = vmatpush1.msra.mxu0 0.0
  %161 = vmatprep.subr.mxu0 0.0
  %162 = vmatpush1.msra.mxu0 0.0
  %163 = vmatprep.subr.mxu0 0.0
  %164 = vmatpush1.msra.mxu0 0.0
  %165 = vmatprep.subr.mxu0 0.0
  %166 = vmatpush1.msra.mxu0 0.0
  %167 = vmatprep.subr.mxu0 0.0
  %168 = vmatpush1.msra.mxu0 0.0
  %169 = vmatprep.subr.mxu0 0.0
  %170 = vmatpush1.msra.mxu0 0.0
  %171 = vmatprep.mubr.f32.mxu0 0.0
  %172 = vmatmul.mubr.f32.gmra.mrb[0].mxu0 %v102
  %v173 = vpop.f32.mrb[0].mxu0
  %v174 = vadd.f32 %v93, %v173
  %v175 = vpop.f32.mrb[0].mxu0
  %v176 = vadd.f32 %v97, %v175
  %177 = vmatprep.mubr.f32.mxu0 0.0
  %178 = vmatmul.mubr.f32.gmra.mrb[0].mxu0 %v105
  %v179 = vpop.f32.mrb[0].mxu0
  %v180 = vadd.f32 %v93, %v179
  %v181 = vpop.f32.mrb[0].mxu0
  %v182 = vadd.f32 %v97, %v181
  %183 = vdwg.mxu0
  %v184 = vld [vmem:[%s4] sm:$0xff]
  %v185 = vld [vmem:[%s4 + $0x8] sm:$0xff]
  %v186 = vld [vmem:[%s4 + $0x10] sm:$0xff]
  %v187 = vld [vmem:[%s4 + $0x18] sm:$0xff]
  %v188 = vld [vmem:[%s4 + $0x20] sm:$0xff]
  %v189 = vld [vmem:[%s4 + $0x28] sm:$0xff]
  %v190 = vld [vmem:[%s4 + $0x30] sm:$0xff]
  %v191 = vld [vmem:[%s4 + $0x38] sm:$0xff]
  %v192 = vld [vmem:[%s4 + $0x40] sm:$0xff]
  %v193 = vld [vmem:[%s4 + $0x48] sm:$0xff]
  %v194 = vld [vmem:[%s4 + $0x50] sm:$0xff]
  %v195 = vld [vmem:[%s4 + $0x58] sm:$0xff]
  %v196 = vld [vmem:[%s4 + $0x60] sm:$0xff]
  %v197 = vld [vmem:[%s4 + $0x68] sm:$0xff]
  %v198 = vld [vmem:[%s4 + $0x70] sm:$0xff]
  %v199 = vld [vmem:[%s4 + $0x78] sm:$0xff]
  %v200 = vld [vmem:[%s5] sm:$0x3]
  %v202 = vlaneseq
  %v203 = vshrl.u32 %v202, 7
  %v204 = vsub.s32 0, %v203
  %v205 = vrot.slane %v200, %v204
  %v206 = vlaneseq
  %v207 = vshrl.u32 %v206, 7
  %v208 = vsub.s32 1, %v207
  %v209 = vrot.slane %v200, %v208
  %v213 = vsel %vm100, %v55, 0
  %v216 = vsel %vm100, %v56, 0
  %218 = vmatprep.subr.mxu0 %v185
  %219 = vmatpush1.msra.mxu0 %v184
  %220 = vmatprep.subr.mxu0 %v187
  %221 = vmatpush1.msra.mxu0 %v186
  %222 = vmatprep.subr.mxu0 %v189
  %223 = vmatpush1.msra.mxu0 %v188
  %224 = vmatprep.subr.mxu0 %v191
  %225 = vmatpush1.msra.mxu0 %v190
  %226 = vmatprep.subr.mxu0 %v193
  %227 = vmatpush1.msra.mxu0 %v192
  %228 = vmatprep.subr.mxu0 %v195
  %229 = vmatpush1.msra.mxu0 %v194
  %230 = vmatprep.subr.mxu0 %v197
  %231 = vmatpush1.msra.mxu0 %v196
  %232 = vmatprep.subr.mxu0 %v199
  %233 = vmatpush1.msra.mxu0 %v198
  %234 = vmatprep.subr.mxu0 0.0
  %235 = vmatpush1.msra.mxu0 0.0
  %236 = vmatprep.subr.mxu0 0.0
  %237 = vmatpush1.msra.mxu0 0.0
  %238 = vmatprep.subr.mxu0 0.0
  %239 = vmatpush1.msra.mxu0 0.0
  %240 = vmatprep.subr.mxu0 0.0
  %241 = vmatpush1.msra.mxu0 0.0
  %242 = vmatprep.subr.mxu0 0.0
  %243 = vmatpush1.msra.mxu0 0.0
  %244 = vmatprep.subr.mxu0 0.0
  %245 = vmatpush1.msra.mxu0 0.0
  %246 = vmatprep.subr.mxu0 0.0
  %247 = vmatpush1.msra.mxu0 0.0
  %248 = vmatprep.subr.mxu0 0.0
  %249 = vmatpush1.msra.mxu0 0.0
  %250 = vmatprep.subr.mxu0 0.0
  %251 = vmatpush1.msra.mxu0 0.0
  %252 = vmatprep.subr.mxu0 0.0
  %253 = vmatpush1.msra.mxu0 0.0
  %254 = vmatprep.subr.mxu0 0.0
  %255 = vmatpush1.msra.mxu0 0.0
  %256 = vmatprep.subr.mxu0 0.0
  %257 = vmatpush1.msra.mxu0 0.0
  %258 = vmatprep.subr.mxu0 0.0
  %259 = vmatpush1.msra.mxu0 0.0
  %260 = vmatprep.subr.mxu0 0.0
  %261 = vmatpush1.msra.mxu0 0.0
  %262 = vmatprep.subr.mxu0 0.0
  %263 = vmatpush1.msra.mxu0 0.0
  %264 = vmatprep.subr.mxu0 0.0
  %265 = vmatpush1.msra.mxu0 0.0
  %266 = vmatprep.subr.mxu0 0.0
  %267 = vmatpush1.msra.mxu0 0.0
  %268 = vmatprep.subr.mxu0 0.0
  %269 = vmatpush1.msra.mxu0 0.0
  %270 = vmatprep.subr.mxu0 0.0
  %271 = vmatpush1.msra.mxu0 0.0
  %272 = vmatprep.subr.mxu0 0.0
  %273 = vmatpush1.msra.mxu0 0.0
  %274 = vmatprep.subr.mxu0 0.0
  %275 = vmatpush1.msra.mxu0 0.0
  %276 = vmatprep.subr.mxu0 0.0
  %277 = vmatpush1.msra.mxu0 0.0
  %278 = vmatprep.subr.mxu0 0.0
  %279 = vmatpush1.msra.mxu0 0.0
  %280 = vmatprep.subr.mxu0 0.0
  %281 = vmatpush1.msra.mxu0 0.0
  %282 = vmatprep.mubr.f32.mxu0 0.0
  %283 = vmatmul.mubr.f32.gmra.mrb[0].mxu0 %v213
  %v284 = vpop.f32.mrb[0].mxu0
  %v285 = vadd.f32 %v205, %v284
  %v286 = vpop.f32.mrb[0].mxu0
  %v287 = vadd.f32 %v209, %v286
  %288 = vmatprep.mubr.f32.mxu0 0.0
  %289 = vmatmul.mubr.f32.gmra.mrb[0].mxu0 %v216
  %v290 = vpop.f32.mrb[0].mxu0
  %v291 = vadd.f32 %v205, %v290
  %v292 = vpop.f32.mrb[0].mxu0
  %v293 = vadd.f32 %v209, %v292
  %294 = vdwg.mxu0
  %v295 = vld [vmem:[%s6] sm:$0xff]
  %v296 = vld [vmem:[%s6 + $0x8] sm:$0xff]
  %v297 = vld [vmem:[%s6 + $0x10] sm:$0xff]
  %v298 = vld [vmem:[%s6 + $0x18] sm:$0xff]
  %v299 = vld [vmem:[%s6 + $0x20] sm:$0xff]
  %v300 = vld [vmem:[%s6 + $0x28] sm:$0xff]
  %v301 = vld [vmem:[%s6 + $0x30] sm:$0xff]
  %v302 = vld [vmem:[%s6 + $0x38] sm:$0xff]
  %305 = vrot.lane.b32.xlu0 %v174, 112
  %v306 = vpop.permute.xlu0 %305
  %307 = vrot.lane.b32.xlu0 %v285, 112
  %v308 = vpop.permute.xlu0 %307
  %309 = vrot.lane.b32.xlu0 %v174, 96
  %v310 = vpop.permute.xlu0 %309
  %311 = vrot.lane.b32.xlu0 %v285, 96
  %v312 = vpop.permute.xlu0 %311
  %313 = vrot.lane.b32.xlu0 %v174, 80
  %v314 = vpop.permute.xlu0 %313
  %315 = vrot.lane.b32.xlu0 %v285, 80
  %v316 = vpop.permute.xlu0 %315
  %319 = vrot.lane.b32.xlu0 %v176, 112
  %v320 = vpop.permute.xlu0 %319
  %321 = vrot.lane.b32.xlu0 %v287, 112
  %v322 = vpop.permute.xlu0 %321
  %323 = vrot.lane.b32.xlu0 %v176, 96
  %v324 = vpop.permute.xlu0 %323
  %325 = vrot.lane.b32.xlu0 %v287, 96
  %v326 = vpop.permute.xlu0 %325
  %327 = vrot.lane.b32.xlu0 %v176, 80
  %v328 = vpop.permute.xlu0 %327
  %329 = vrot.lane.b32.xlu0 %v287, 80
  %v330 = vpop.permute.xlu0 %329
  %vm331 = vcmask 130048
  %v332 = vsel %vm331, %v174, 0
  %v334 = vsel %vm331, %v285, 0
  %v336 = vsel %vm331, %v176, 0
  %338 = vmatprep.subr.mxu0 0.0
  %339 = vmatpush1.xpose.msra.mxu0 %v336
  %340 = vmatprep.subr.mxu0 0.0
  %341 = vmatpush1.xpose.msra.mxu0 0.0
  %342 = vmatprep.subr.mxu0 0.0
  %343 = vmatpush1.xpose.msra.mxu0 0.0
  %344 = vmatprep.subr.mxu0 0.0
  %345 = vmatpush1.xpose.msra.mxu0 0.0
  %346 = vmatprep.subr.mxu0 0.0
  %347 = vmatpush1.xpose.msra.mxu0 0.0
  %348 = vmatprep.subr.mxu0 0.0
  %349 = vmatpush1.xpose.msra.mxu0 0.0
  %350 = vmatprep.subr.mxu0 0.0
  %351 = vmatpush1.xpose.msra.mxu0 0.0
  %352 = vmatprep.subr.mxu0 0.0
  %353 = vmatpush1.xpose.msra.mxu0 0.0
  %354 = vmatprep.subr.mxu0 0.0
  %355 = vmatpush1.xpose.msra.mxu0 0.0
  %356 = vmatprep.subr.mxu0 0.0
  %357 = vmatpush1.xpose.msra.mxu0 0.0
  %358 = vmatprep.subr.mxu0 0.0
  %359 = vmatpush1.xpose.msra.mxu0 0.0
  %360 = vmatprep.subr.mxu0 0.0
  %361 = vmatpush1.xpose.msra.mxu0 0.0
  %362 = vmatprep.subr.mxu0 0.0
  %363 = vmatpush1.xpose.msra.mxu0 0.0
  %364 = vmatprep.subr.mxu0 0.0
  %365 = vmatpush1.xpose.msra.mxu0 0.0
  %366 = vmatprep.subr.mxu0 0.0
  %367 = vmatpush1.xpose.msra.mxu0 0.0
  %368 = vmatprep.subr.mxu0 0.0
  %369 = vmatpush1.xpose.msra.mxu0 0.0
  %370 = vmatprep.subr.mxu0 0.0
  %371 = vmatpush1.xpose.msra.mxu0 0.0
  %372 = vmatprep.subr.mxu0 0.0
  %373 = vmatpush1.xpose.msra.mxu0 0.0
  %374 = vmatprep.subr.mxu0 0.0
  %375 = vmatpush1.xpose.msra.mxu0 0.0
  %376 = vmatprep.subr.mxu0 0.0
  %377 = vmatpush1.xpose.msra.mxu0 0.0
  %378 = vmatprep.subr.mxu0 0.0
  %379 = vmatpush1.xpose.msra.mxu0 0.0
  %380 = vmatprep.subr.mxu0 0.0
  %381 = vmatpush1.xpose.msra.mxu0 0.0
  %382 = vmatprep.subr.mxu0 0.0
  %383 = vmatpush1.xpose.msra.mxu0 0.0
  %384 = vmatprep.subr.mxu0 0.0
  %385 = vmatpush1.xpose.msra.mxu0 0.0
  %386 = vmatprep.subr.mxu0 0.0
  %387 = vmatpush1.xpose.msra.mxu0 0.0
  %388 = vmatprep.subr.mxu0 0.0
  %389 = vmatpush1.xpose.msra.mxu0 0.0
  %390 = vmatprep.subr.mxu0 0.0
  %391 = vmatpush1.xpose.msra.mxu0 0.0
  %392 = vmatprep.subr.mxu0 0.0
  %393 = vmatpush1.xpose.msra.mxu0 0.0
  %394 = vmatprep.subr.mxu0 0.0
  %395 = vmatpush1.xpose.msra.mxu0 0.0
  %396 = vmatprep.subr.mxu0 0.0
  %397 = vmatpush1.xpose.msra.mxu0 0.0
  %398 = vmatprep.subr.mxu0 0.0
  %399 = vmatpush1.xpose.msra.mxu0 0.0
  %400 = vmatprep.subr.mxu0 0.0
  %401 = vmatpush1.xpose.msra.mxu0 0.0
  %402 = vmatprep.mubr.f32.mxu0 0.0
  %403 = vmatmul.mubr.f32.gmra.mrb[0].mxu0 %v332
  %v404 = vpop.f32.mrb[0].mxu0
  %v405 = vadd.f32 0.0, %v404
  %v406 = vpop.f32.mrb[0].mxu0
  %407 = vmatprep.mubr.f32.mxu0 0.0
  %408 = vmatmul.mubr.f32.gmra.mrb[0].mxu0 %v334
  %v409 = vpop.f32.mrb[0].mxu0
  %v410 = vadd.f32 0.0, %v409
  %v411 = vpop.f32.mrb[0].mxu0
  %412 = vdwg.mxu0
  %v413 = vsel %vm331, %v306, 0
  %v415 = vsel %vm331, %v308, 0
  %v417 = vsel %vm331, %v320, 0
  %419 = vmatprep.subr.mxu0 0.0
  %420 = vmatpush1.xpose.msra.mxu0 %v417
  %421 = vmatprep.subr.mxu0 0.0
  %422 = vmatpush1.xpose.msra.mxu0 0.0
  %423 = vmatprep.subr.mxu0 0.0
  %424 = vmatpush1.xpose.msra.mxu0 0.0
  %425 = vmatprep.subr.mxu0 0.0
  %426 = vmatpush1.xpose.msra.mxu0 0.0
  %427 = vmatprep.subr.mxu0 0.0
  %428 = vmatpush1.xpose.msra.mxu0 0.0
  %429 = vmatprep.subr.mxu0 0.0
  %430 = vmatpush1.xpose.msra.mxu0 0.0
  %431 = vmatprep.subr.mxu0 0.0
  %432 = vmatpush1.xpose.msra.mxu0 0.0
  %433 = vmatprep.subr.mxu0 0.0
  %434 = vmatpush1.xpose.msra.mxu0 0.0
  %435 = vmatprep.subr.mxu0 0.0
  %436 = vmatpush1.xpose.msra.mxu0 0.0
  %437 = vmatprep.subr.mxu0 0.0
  %438 = vmatpush1.xpose.msra.mxu0 0.0
  %439 = vmatprep.subr.mxu0 0.0
  %440 = vmatpush1.xpose.msra.mxu0 0.0
  %441 = vmatprep.subr.mxu0 0.0
  %442 = vmatpush1.xpose.msra.mxu0 0.0
  %443 = vmatprep.subr.mxu0 0.0
  %444 = vmatpush1.xpose.msra.mxu0 0.0
  %445 = vmatprep.subr.mxu0 0.0
  %446 = vmatpush1.xpose.msra.mxu0 0.0
  %447 = vmatprep.subr.mxu0 0.0
  %448 = vmatpush1.xpose.msra.mxu0 0.0
  %449 = vmatprep.subr.mxu0 0.0
  %450 = vmatpush1.xpose.msra.mxu0 0.0
  %451 = vmatprep.subr.mxu0 0.0
  %452 = vmatpush1.xpose.msra.mxu0 0.0
  %453 = vmatprep.subr.mxu0 0.0
  %454 = vmatpush1.xpose.msra.mxu0 0.0
  %455 = vmatprep.subr.mxu0 0.0
  %456 = vmatpush1.xpose.msra.mxu0 0.0
  %457 = vmatprep.subr.mxu0 0.0
  %458 = vmatpush1.xpose.msra.mxu0 0.0
  %459 = vmatprep.subr.mxu0 0.0
  %460 = vmatpush1.xpose.msra.mxu0 0.0
  %461 = vmatprep.subr.mxu0 0.0
  %462 = vmatpush1.xpose.msra.mxu0 0.0
  %463 = vmatprep.subr.mxu0 0.0
  %464 = vmatpush1.xpose.msra.mxu0 0.0
  %465 = vmatprep.subr.mxu0 0.0
  %466 = vmatpush1.xpose.msra.mxu0 0.0
  %467 = vmatprep.subr.mxu0 0.0
  %468 = vmatpush1.xpose.msra.mxu0 0.0
  %469 = vmatprep.subr.mxu0 0.0
  %470 = vmatpush1.xpose.msra.mxu0 0.0
  %471 = vmatprep.subr.mxu0 0.0
  %472 = vmatpush1.xpose.msra.mxu0 0.0
  %473 = vmatprep.subr.mxu0 0.0
  %474 = vmatpush1.xpose.msra.mxu0 0.0
  %475 = vmatprep.subr.mxu0 0.0
  %476 = vmatpush1.xpose.msra.mxu0 0.0
  %477 = vmatprep.subr.mxu0 0.0
  %478 = vmatpush1.xpose.msra.mxu0 0.0
  %479 = vmatprep.subr.mxu0 0.0
  %480 = vmatpush1.xpose.msra.mxu0 0.0
  %481 = vmatprep.subr.mxu0 0.0
  %482 = vmatpush1.xpose.msra.mxu0 0.0
  %483 = vmatprep.mubr.f32.mxu0 0.0
  %484 = vmatmul.mubr.f32.gmra.mrb[0].mxu0 %v413
  %v485 = vpop.f32.mrb[0].mxu0
  %v486 = vadd.f32 0.0, %v485
  %v487 = vpop.f32.mrb[0].mxu0
  %488 = vmatprep.mubr.f32.mxu0 0.0
  %489 = vmatmul.mubr.f32.gmra.mrb[0].mxu0 %v415
  %v490 = vpop.f32.mrb[0].mxu0
  %v491 = vadd.f32 0.0, %v490
  %v492 = vpop.f32.mrb[0].mxu0
  %493 = vdwg.mxu0
  %v494 = vsel %vm331, %v310, 0
  %v496 = vsel %vm331, %v312, 0
  %v498 = vsel %vm331, %v324, 0
  %500 = vmatprep.subr.mxu0 0.0
  %501 = vmatpush1.xpose.msra.mxu0 %v498
  %502 = vmatprep.subr.mxu0 0.0
  %503 = vmatpush1.xpose.msra.mxu0 0.0
  %504 = vmatprep.subr.mxu0 0.0
  %505 = vmatpush1.xpose.msra.mxu0 0.0
  %506 = vmatprep.subr.mxu0 0.0
  %507 = vmatpush1.xpose.msra.mxu0 0.0
  %508 = vmatprep.subr.mxu0 0.0
  %509 = vmatpush1.xpose.msra.mxu0 0.0
  %510 = vmatprep.subr.mxu0 0.0
  %511 = vmatpush1.xpose.msra.mxu0 0.0
  %512 = vmatprep.subr.mxu0 0.0
  %513 = vmatpush1.xpose.msra.mxu0 0.0
  %514 = vmatprep.subr.mxu0 0.0
  %515 = vmatpush1.xpose.msra.mxu0 0.0
  %516 = vmatprep.subr.mxu0 0.0
  %517 = vmatpush1.xpose.msra.mxu0 0.0
  %518 = vmatprep.subr.mxu0 0.0
  %519 = vmatpush1.xpose.msra.mxu0 0.0
  %520 = vmatprep.subr.mxu0 0.0
  %521 = vmatpush1.xpose.msra.mxu0 0.0
  %522 = vmatprep.subr.mxu0 0.0
  %523 = vmatpush1.xpose.msra.mxu0 0.0
  %524 = vmatprep.subr.mxu0 0.0
  %525 = vmatpush1.xpose.msra.mxu0 0.0
  %526 = vmatprep.subr.mxu0 0.0
  %527 = vmatpush1.xpose.msra.mxu0 0.0
  %528 = vmatprep.subr.mxu0 0.0
  %529 = vmatpush1.xpose.msra.mxu0 0.0
  %530 = vmatprep.subr.mxu0 0.0
  %531 = vmatpush1.xpose.msra.mxu0 0.0
  %532 = vmatprep.subr.mxu0 0.0
  %533 = vmatpush1.xpose.msra.mxu0 0.0
  %534 = vmatprep.subr.mxu0 0.0
  %535 = vmatpush1.xpose.msra.mxu0 0.0
  %536 = vmatprep.subr.mxu0 0.0
  %537 = vmatpush1.xpose.msra.mxu0 0.0
  %538 = vmatprep.subr.mxu0 0.0
  %539 = vmatpush1.xpose.msra.mxu0 0.0
  %540 = vmatprep.subr.mxu0 0.0
  %541 = vmatpush1.xpose.msra.mxu0 0.0
  %542 = vmatprep.subr.mxu0 0.0
  %543 = vmatpush1.xpose.msra.mxu0 0.0
  %544 = vmatprep.subr.mxu0 0.0
  %545 = vmatpush1.xpose.msra.mxu0 0.0
  %546 = vmatprep.subr.mxu0 0.0
  %547 = vmatpush1.xpose.msra.mxu0 0.0
  %548 = vmatprep.subr.mxu0 0.0
  %549 = vmatpush1.xpose.msra.mxu0 0.0
  %550 = vmatprep.subr.mxu0 0.0
  %551 = vmatpush1.xpose.msra.mxu0 0.0
  %552 = vmatprep.subr.mxu0 0.0
  %553 = vmatpush1.xpose.msra.mxu0 0.0
  %554 = vmatprep.subr.mxu0 0.0
  %555 = vmatpush1.xpose.msra.mxu0 0.0
  %556 = vmatprep.subr.mxu0 0.0
  %557 = vmatpush1.xpose.msra.mxu0 0.0
  %558 = vmatprep.subr.mxu0 0.0
  %559 = vmatpush1.xpose.msra.mxu0 0.0
  %560 = vmatprep.subr.mxu0 0.0
  %561 = vmatpush1.xpose.msra.mxu0 0.0
  %562 = vmatprep.subr.mxu0 0.0
  %563 = vmatpush1.xpose.msra.mxu0 0.0
  %564 = vmatprep.mubr.f32.mxu0 0.0
  %565 = vmatmul.mubr.f32.gmra.mrb[0].mxu0 %v494
  %v566 = vpop.f32.mrb[0].mxu0
  %v567 = vadd.f32 0.0, %v566
  %v568 = vpop.f32.mrb[0].mxu0
  %569 = vmatprep.mubr.f32.mxu0 0.0
  %570 = vmatmul.mubr.f32.gmra.mrb[0].mxu0 %v496
  %v571 = vpop.f32.mrb[0].mxu0
  %v572 = vadd.f32 0.0, %v571
  %v573 = vpop.f32.mrb[0].mxu0
  %574 = vdwg.mxu0
  %v575 = vsel %vm331, %v314, 0
  %v577 = vsel %vm331, %v316, 0
  %v579 = vsel %vm331, %v328, 0
  %581 = vmatprep.subr.mxu0 0.0
  %582 = vmatpush1.xpose.msra.mxu0 %v579
  %583 = vmatprep.subr.mxu0 0.0
  %584 = vmatpush1.xpose.msra.mxu0 0.0
  %585 = vmatprep.subr.mxu0 0.0
  %586 = vmatpush1.xpose.msra.mxu0 0.0
  %587 = vmatprep.subr.mxu0 0.0
  %588 = vmatpush1.xpose.msra.mxu0 0.0
  %589 = vmatprep.subr.mxu0 0.0
  %590 = vmatpush1.xpose.msra.mxu0 0.0
  %591 = vmatprep.subr.mxu0 0.0
  %592 = vmatpush1.xpose.msra.mxu0 0.0
  %593 = vmatprep.subr.mxu0 0.0
  %594 = vmatpush1.xpose.msra.mxu0 0.0
  %595 = vmatprep.subr.mxu0 0.0
  %596 = vmatpush1.xpose.msra.mxu0 0.0
  %597 = vmatprep.subr.mxu0 0.0
  %598 = vmatpush1.xpose.msra.mxu0 0.0
  %599 = vmatprep.subr.mxu0 0.0
  %600 = vmatpush1.xpose.msra.mxu0 0.0
  %601 = vmatprep.subr.mxu0 0.0
  %602 = vmatpush1.xpose.msra.mxu0 0.0
  %603 = vmatprep.subr.mxu0 0.0
  %604 = vmatpush1.xpose.msra.mxu0 0.0
  %605 = vmatprep.subr.mxu0 0.0
  %606 = vmatpush1.xpose.msra.mxu0 0.0
  %607 = vmatprep.subr.mxu0 0.0
  %608 = vmatpush1.xpose.msra.mxu0 0.0
  %609 = vmatprep.subr.mxu0 0.0
  %610 = vmatpush1.xpose.msra.mxu0 0.0
  %611 = vmatprep.subr.mxu0 0.0
  %612 = vmatpush1.xpose.msra.mxu0 0.0
  %613 = vmatprep.subr.mxu0 0.0
  %614 = vmatpush1.xpose.msra.mxu0 0.0
  %615 = vmatprep.subr.mxu0 0.0
  %616 = vmatpush1.xpose.msra.mxu0 0.0
  %617 = vmatprep.subr.mxu0 0.0
  %618 = vmatpush1.xpose.msra.mxu0 0.0
  %619 = vmatprep.subr.mxu0 0.0
  %620 = vmatpush1.xpose.msra.mxu0 0.0
  %621 = vmatprep.subr.mxu0 0.0
  %622 = vmatpush1.xpose.msra.mxu0 0.0
  %623 = vmatprep.subr.mxu0 0.0
  %624 = vmatpush1.xpose.msra.mxu0 0.0
  %625 = vmatprep.subr.mxu0 0.0
  %626 = vmatpush1.xpose.msra.mxu0 0.0
  %627 = vmatprep.subr.mxu0 0.0
  %628 = vmatpush1.xpose.msra.mxu0 0.0
  %629 = vmatprep.subr.mxu0 0.0
  %630 = vmatpush1.xpose.msra.mxu0 0.0
  %631 = vmatprep.subr.mxu0 0.0
  %632 = vmatpush1.xpose.msra.mxu0 0.0
  %633 = vmatprep.subr.mxu0 0.0
  %634 = vmatpush1.xpose.msra.mxu0 0.0
  %635 = vmatprep.subr.mxu0 0.0
  %636 = vmatpush1.xpose.msra.mxu0 0.0
  %637 = vmatprep.subr.mxu0 0.0
  %638 = vmatpush1.xpose.msra.mxu0 0.0
  %639 = vmatprep.subr.mxu0 0.0
  %640 = vmatpush1.xpose.msra.mxu0 0.0
  %641 = vmatprep.subr.mxu0 0.0
  %642 = vmatpush1.xpose.msra.mxu0 0.0
  %643 = vmatprep.subr.mxu0 0.0
  %644 = vmatpush1.xpose.msra.mxu0 0.0
  %645 = vmatprep.mubr.f32.mxu0 0.0
  %646 = vmatmul.mubr.f32.gmra.mrb[0].mxu0 %v575
  %v647 = vpop.f32.mrb[0].mxu0
  %v648 = vadd.f32 0.0, %v647
  %v649 = vpop.f32.mrb[0].mxu0
  %650 = vmatprep.mubr.f32.mxu0 0.0
  %651 = vmatmul.mubr.f32.gmra.mrb[0].mxu0 %v577
  %v652 = vpop.f32.mrb[0].mxu0
  %v653 = vadd.f32 0.0, %v652
  %v654 = vpop.f32.mrb[0].mxu0
  %655 = vdwg.mxu0
  %656 = vrot.lane.b32.xlu0 %v174, 64
  %v657 = vpop.permute.xlu0 %656
  %658 = vrot.lane.b32.xlu0 %v285, 64
  %v659 = vpop.permute.xlu0 %658
  %v660 = vsel %vm331, %v657, 0
  %v662 = vsel %vm331, %v659, 0
  %v664 = vsel %vm331, %v287, 0
  %666 = vmatprep.subr.mxu0 0.0
  %667 = vmatpush1.xpose.msra.mxu0 %v664
  %668 = vmatprep.subr.mxu0 0.0
  %669 = vmatpush1.xpose.msra.mxu0 0.0
  %670 = vmatprep.subr.mxu0 0.0
  %671 = vmatpush1.xpose.msra.mxu0 0.0
  %672 = vmatprep.subr.mxu0 0.0
  %673 = vmatpush1.xpose.msra.mxu0 0.0
  %674 = vmatprep.subr.mxu0 0.0
  %675 = vmatpush1.xpose.msra.mxu0 0.0
  %676 = vmatprep.subr.mxu0 0.0
  %677 = vmatpush1.xpose.msra.mxu0 0.0
  %678 = vmatprep.subr.mxu0 0.0
  %679 = vmatpush1.xpose.msra.mxu0 0.0
  %680 = vmatprep.subr.mxu0 0.0
  %681 = vmatpush1.xpose.msra.mxu0 0.0
  %682 = vmatprep.subr.mxu0 0.0
  %683 = vmatpush1.xpose.msra.mxu0 0.0
  %684 = vmatprep.subr.mxu0 0.0
  %685 = vmatpush1.xpose.msra.mxu0 0.0
  %686 = vmatprep.subr.mxu0 0.0
  %687 = vmatpush1.xpose.msra.mxu0 0.0
  %688 = vmatprep.subr.mxu0 0.0
  %689 = vmatpush1.xpose.msra.mxu0 0.0
  %690 = vmatprep.subr.mxu0 0.0
  %691 = vmatpush1.xpose.msra.mxu0 0.0
  %692 = vmatprep.subr.mxu0 0.0
  %693 = vmatpush1.xpose.msra.mxu0 0.0
  %694 = vmatprep.subr.mxu0 0.0
  %695 = vmatpush1.xpose.msra.mxu0 0.0
  %696 = vmatprep.subr.mxu0 0.0
  %697 = vmatpush1.xpose.msra.mxu0 0.0
  %698 = vmatprep.subr.mxu0 0.0
  %699 = vmatpush1.xpose.msra.mxu0 0.0
  %700 = vmatprep.subr.mxu0 0.0
  %701 = vmatpush1.xpose.msra.mxu0 0.0
  %702 = vmatprep.subr.mxu0 0.0
  %703 = vmatpush1.xpose.msra.mxu0 0.0
  %704 = vmatprep.subr.mxu0 0.0
  %705 = vmatpush1.xpose.msra.mxu0 0.0
  %706 = vmatprep.subr.mxu0 0.0
  %707 = vmatpush1.xpose.msra.mxu0 0.0
  %708 = vmatprep.subr.mxu0 0.0
  %709 = vmatpush1.xpose.msra.mxu0 0.0
  %710 = vmatprep.subr.mxu0 0.0
  %711 = vmatpush1.xpose.msra.mxu0 0.0
  %712 = vmatprep.subr.mxu0 0.0
  %713 = vmatpush1.xpose.msra.mxu0 0.0
  %714 = vmatprep.subr.mxu0 0.0
  %715 = vmatpush1.xpose.msra.mxu0 0.0
  %716 = vmatprep.subr.mxu0 0.0
  %717 = vmatpush1.xpose.msra.mxu0 0.0
  %718 = vmatprep.subr.mxu0 0.0
  %719 = vmatpush1.xpose.msra.mxu0 0.0
  %720 = vmatprep.subr.mxu0 0.0
  %721 = vmatpush1.xpose.msra.mxu0 0.0
  %722 = vmatprep.subr.mxu0 0.0
  %723 = vmatpush1.xpose.msra.mxu0 0.0
  %724 = vmatprep.subr.mxu0 0.0
  %725 = vmatpush1.xpose.msra.mxu0 0.0
  %726 = vmatprep.subr.mxu0 0.0
  %727 = vmatpush1.xpose.msra.mxu0 0.0
  %728 = vmatprep.subr.mxu0 0.0
  %729 = vmatpush1.xpose.msra.mxu0 0.0
  %730 = vmatprep.mubr.f32.mxu0 0.0
  %731 = vmatmul.mubr.f32.gmra.mrb[0].mxu0 %v660
  %v732 = vpop.f32.mrb[0].mxu0
  %v733 = vadd.f32 0.0, %v732
  %v734 = vpop.f32.mrb[0].mxu0
  %735 = vmatprep.mubr.f32.mxu0 0.0
  %736 = vmatmul.mubr.f32.gmra.mrb[0].mxu0 %v662
  %v737 = vpop.f32.mrb[0].mxu0
  %v738 = vadd.f32 0.0, %v737
  %v739 = vpop.f32.mrb[0].mxu0
  %740 = vdwg.mxu0
  %741 = vrot.lane.b32.xlu0 %v306, 64
  %v742 = vpop.permute.xlu0 %741
  %743 = vrot.lane.b32.xlu0 %v308, 64
  %v744 = vpop.permute.xlu0 %743
  %v745 = vsel %vm331, %v742, 0
  %v747 = vsel %vm331, %v744, 0
  %v749 = vsel %vm331, %v322, 0
  %751 = vmatprep.subr.mxu0 0.0
  %752 = vmatpush1.xpose.msra.mxu0 %v749
  %753 = vmatprep.subr.mxu0 0.0
  %754 = vmatpush1.xpose.msra.mxu0 0.0
  %755 = vmatprep.subr.mxu0 0.0
  %756 = vmatpush1.xpose.msra.mxu0 0.0
  %757 = vmatprep.subr.mxu0 0.0
  %758 = vmatpush1.xpose.msra.mxu0 0.0
  %759 = vmatprep.subr.mxu0 0.0
  %760 = vmatpush1.xpose.msra.mxu0 0.0
  %761 = vmatprep.subr.mxu0 0.0
  %762 = vmatpush1.xpose.msra.mxu0 0.0
  %763 = vmatprep.subr.mxu0 0.0
  %764 = vmatpush1.xpose.msra.mxu0 0.0
  %765 = vmatprep.subr.mxu0 0.0
  %766 = vmatpush1.xpose.msra.mxu0 0.0
  %767 = vmatprep.subr.mxu0 0.0
  %768 = vmatpush1.xpose.msra.mxu0 0.0
  %769 = vmatprep.subr.mxu0 0.0
  %770 = vmatpush1.xpose.msra.mxu0 0.0
  %771 = vmatprep.subr.mxu0 0.0
  %772 = vmatpush1.xpose.msra.mxu0 0.0
  %773 = vmatprep.subr.mxu0 0.0
  %774 = vmatpush1.xpose.msra.mxu0 0.0
  %775 = vmatprep.subr.mxu0 0.0
  %776 = vmatpush1.xpose.msra.mxu0 0.0
  %777 = vmatprep.subr.mxu0 0.0
  %778 = vmatpush1.xpose.msra.mxu0 0.0
  %779 = vmatprep.subr.mxu0 0.0
  %780 = vmatpush1.xpose.msra.mxu0 0.0
  %781 = vmatprep.subr.mxu0 0.0
  %782 = vmatpush1.xpose.msra.mxu0 0.0
  %783 = vmatprep.subr.mxu0 0.0
  %784 = vmatpush1.xpose.msra.mxu0 0.0
  %785 = vmatprep.subr.mxu0 0.0
  %786 = vmatpush1.xpose.msra.mxu0 0.0
  %787 = vmatprep.subr.mxu0 0.0
  %788 = vmatpush1.xpose.msra.mxu0 0.0
  %789 = vmatprep.subr.mxu0 0.0
  %790 = vmatpush1.xpose.msra.mxu0 0.0
  %791 = vmatprep.subr.mxu0 0.0
  %792 = vmatpush1.xpose.msra.mxu0 0.0
  %793 = vmatprep.subr.mxu0 0.0
  %794 = vmatpush1.xpose.msra.mxu0 0.0
  %795 = vmatprep.subr.mxu0 0.0
  %796 = vmatpush1.xpose.msra.mxu0 0.0
  %797 = vmatprep.subr.mxu0 0.0
  %798 = vmatpush1.xpose.msra.mxu0 0.0
  %799 = vmatprep.subr.mxu0 0.0
  %800 = vmatpush1.xpose.msra.mxu0 0.0
  %801 = vmatprep.subr.mxu0 0.0
  %802 = vmatpush1.xpose.msra.mxu0 0.0
  %803 = vmatprep.subr.mxu0 0.0
  %804 = vmatpush1.xpose.msra.mxu0 0.0
  %805 = vmatprep.subr.mxu0 0.0
  %806 = vmatpush1.xpose.msra.mxu0 0.0
  %807 = vmatprep.subr.mxu0 0.0
  %808 = vmatpush1.xpose.msra.mxu0 0.0
  %809 = vmatprep.subr.mxu0 0.0
  %810 = vmatpush1.xpose.msra.mxu0 0.0
  %811 = vmatprep.subr.mxu0 0.0
  %812 = vmatpush1.xpose.msra.mxu0 0.0
  %813 = vmatprep.subr.mxu0 0.0
  %814 = vmatpush1.xpose.msra.mxu0 0.0
  %815 = vmatprep.mubr.f32.mxu0 0.0
  %816 = vmatmul.mubr.f32.gmra.mrb[0].mxu0 %v745
  %v817 = vpop.f32.mrb[0].mxu0
  %v818 = vadd.f32 0.0, %v817
  %v819 = vpop.f32.mrb[0].mxu0
  %820 = vmatprep.mubr.f32.mxu0 0.0
  %821 = vmatmul.mubr.f32.gmra.mrb[0].mxu0 %v747
  %v822 = vpop.f32.mrb[0].mxu0
  %v823 = vadd.f32 0.0, %v822
  %v824 = vpop.f32.mrb[0].mxu0
  %825 = vdwg.mxu0
  %826 = vrot.lane.b32.xlu0 %v310, 64
  %v827 = vpop.permute.xlu0 %826
  %828 = vrot.lane.b32.xlu0 %v312, 64
  %v829 = vpop.permute.xlu0 %828
  %v830 = vsel %vm331, %v827, 0
  %v832 = vsel %vm331, %v829, 0
  %v834 = vsel %vm331, %v326, 0
  %836 = vmatprep.subr.mxu0 0.0
  %837 = vmatpush1.xpose.msra.mxu0 %v834
  %838 = vmatprep.subr.mxu0 0.0
  %839 = vmatpush1.xpose.msra.mxu0 0.0
  %840 = vmatprep.subr.mxu0 0.0
  %841 = vmatpush1.xpose.msra.mxu0 0.0
  %842 = vmatprep.subr.mxu0 0.0
  %843 = vmatpush1.xpose.msra.mxu0 0.0
  %844 = vmatprep.subr.mxu0 0.0
  %845 = vmatpush1.xpose.msra.mxu0 0.0
  %846 = vmatprep.subr.mxu0 0.0
  %847 = vmatpush1.xpose.msra.mxu0 0.0
  %848 = vmatprep.subr.mxu0 0.0
  %849 = vmatpush1.xpose.msra.mxu0 0.0
  %850 = vmatprep.subr.mxu0 0.0
  %851 = vmatpush1.xpose.msra.mxu0 0.0
  %852 = vmatprep.subr.mxu0 0.0
  %853 = vmatpush1.xpose.msra.mxu0 0.0
  %854 = vmatprep.subr.mxu0 0.0
  %855 = vmatpush1.xpose.msra.mxu0 0.0
  %856 = vmatprep.subr.mxu0 0.0
  %857 = vmatpush1.xpose.msra.mxu0 0.0
  %858 = vmatprep.subr.mxu0 0.0
  %859 = vmatpush1.xpose.msra.mxu0 0.0
  %860 = vmatprep.subr.mxu0 0.0
  %861 = vmatpush1.xpose.msra.mxu0 0.0
  %862 = vmatprep.subr.mxu0 0.0
  %863 = vmatpush1.xpose.msra.mxu0 0.0
  %864 = vmatprep.subr.mxu0 0.0
  %865 = vmatpush1.xpose.msra.mxu0 0.0
  %866 = vmatprep.subr.mxu0 0.0
  %867 = vmatpush1.xpose.msra.mxu0 0.0
  %868 = vmatprep.subr.mxu0 0.0
  %869 = vmatpush1.xpose.msra.mxu0 0.0
  %870 = vmatprep.subr.mxu0 0.0
  %871 = vmatpush1.xpose.msra.mxu0 0.0
  %872 = vmatprep.subr.mxu0 0.0
  %873 = vmatpush1.xpose.msra.mxu0 0.0
  %874 = vmatprep.subr.mxu0 0.0
  %875 = vmatpush1.xpose.msra.mxu0 0.0
  %876 = vmatprep.subr.mxu0 0.0
  %877 = vmatpush1.xpose.msra.mxu0 0.0
  %878 = vmatprep.subr.mxu0 0.0
  %879 = vmatpush1.xpose.msra.mxu0 0.0
  %880 = vmatprep.subr.mxu0 0.0
  %881 = vmatpush1.xpose.msra.mxu0 0.0
  %882 = vmatprep.subr.mxu0 0.0
  %883 = vmatpush1.xpose.msra.mxu0 0.0
  %884 = vmatprep.subr.mxu0 0.0
  %885 = vmatpush1.xpose.msra.mxu0 0.0
  %886 = vmatprep.subr.mxu0 0.0
  %887 = vmatpush1.xpose.msra.mxu0 0.0
  %888 = vmatprep.subr.mxu0 0.0
  %889 = vmatpush1.xpose.msra.mxu0 0.0
  %890 = vmatprep.subr.mxu0 0.0
  %891 = vmatpush1.xpose.msra.mxu0 0.0
  %892 = vmatprep.subr.mxu0 0.0
  %893 = vmatpush1.xpose.msra.mxu0 0.0
  %894 = vmatprep.subr.mxu0 0.0
  %895 = vmatpush1.xpose.msra.mxu0 0.0
  %896 = vmatprep.subr.mxu0 0.0
  %897 = vmatpush1.xpose.msra.mxu0 0.0
  %898 = vmatprep.subr.mxu0 0.0
  %899 = vmatpush1.xpose.msra.mxu0 0.0
  %900 = vmatprep.mubr.f32.mxu0 0.0
  %901 = vmatmul.mubr.f32.gmra.mrb[0].mxu0 %v830
  %v902 = vpop.f32.mrb[0].mxu0
  %v903 = vadd.f32 0.0, %v902
  %v904 = vpop.f32.mrb[0].mxu0
  %905 = vmatprep.mubr.f32.mxu0 0.0
  %906 = vmatmul.mubr.f32.gmra.mrb[0].mxu0 %v832
  %v907 = vpop.f32.mrb[0].mxu0
  %v908 = vadd.f32 0.0, %v907
  %v909 = vpop.f32.mrb[0].mxu0
  %910 = vdwg.mxu0
  %911 = vrot.lane.b32.xlu0 %v314, 64
  %v912 = vpop.permute.xlu0 %911
  %913 = vrot.lane.b32.xlu0 %v316, 64
  %v914 = vpop.permute.xlu0 %913
  %v915 = vsel %vm331, %v912, 0
  %v917 = vsel %vm331, %v914, 0
  %v919 = vsel %vm331, %v330, 0
  %921 = vmatprep.subr.mxu0 0.0
  %922 = vmatpush1.xpose.msra.mxu0 %v919
  %923 = vmatprep.subr.mxu0 0.0
  %924 = vmatpush1.xpose.msra.mxu0 0.0
  %925 = vmatprep.subr.mxu0 0.0
  %926 = vmatpush1.xpose.msra.mxu0 0.0
  %927 = vmatprep.subr.mxu0 0.0
  %928 = vmatpush1.xpose.msra.mxu0 0.0
  %929 = vmatprep.subr.mxu0 0.0
  %930 = vmatpush1.xpose.msra.mxu0 0.0
  %931 = vmatprep.subr.mxu0 0.0
  %932 = vmatpush1.xpose.msra.mxu0 0.0
  %933 = vmatprep.subr.mxu0 0.0
  %934 = vmatpush1.xpose.msra.mxu0 0.0
  %935 = vmatprep.subr.mxu0 0.0
  %936 = vmatpush1.xpose.msra.mxu0 0.0
  %937 = vmatprep.subr.mxu0 0.0
  %938 = vmatpush1.xpose.msra.mxu0 0.0
  %939 = vmatprep.subr.mxu0 0.0
  %940 = vmatpush1.xpose.msra.mxu0 0.0
  %941 = vmatprep.subr.mxu0 0.0
  %942 = vmatpush1.xpose.msra.mxu0 0.0
  %943 = vmatprep.subr.mxu0 0.0
  %944 = vmatpush1.xpose.msra.mxu0 0.0
  %945 = vmatprep.subr.mxu0 0.0
  %946 = vmatpush1.xpose.msra.mxu0 0.0
  %947 = vmatprep.subr.mxu0 0.0
  %948 = vmatpush1.xpose.msra.mxu0 0.0
  %949 = vmatprep.subr.mxu0 0.0
  %950 = vmatpush1.xpose.msra.mxu0 0.0
  %951 = vmatprep.subr.mxu0 0.0
  %952 = vmatpush1.xpose.msra.mxu0 0.0
  %953 = vmatprep.subr.mxu0 0.0
  %954 = vmatpush1.xpose.msra.mxu0 0.0
  %955 = vmatprep.subr.mxu0 0.0
  %956 = vmatpush1.xpose.msra.mxu0 0.0
  %957 = vmatprep.subr.mxu0 0.0
  %958 = vmatpush1.xpose.msra.mxu0 0.0
  %959 = vmatprep.subr.mxu0 0.0
  %960 = vmatpush1.xpose.msra.mxu0 0.0
  %961 = vmatprep.subr.mxu0 0.0
  %962 = vmatpush1.xpose.msra.mxu0 0.0
  %963 = vmatprep.subr.mxu0 0.0
  %964 = vmatpush1.xpose.msra.mxu0 0.0
  %965 = vmatprep.subr.mxu0 0.0
  %966 = vmatpush1.xpose.msra.mxu0 0.0
  %967 = vmatprep.subr.mxu0 0.0
  %968 = vmatpush1.xpose.msra.mxu0 0.0
  %969 = vmatprep.subr.mxu0 0.0
  %970 = vmatpush1.xpose.msra.mxu0 0.0
  %971 = vmatprep.subr.mxu0 0.0
  %972 = vmatpush1.xpose.msra.mxu0 0.0
  %973 = vmatprep.subr.mxu0 0.0
  %974 = vmatpush1.xpose.msra.mxu0 0.0
  %975 = vmatprep.subr.mxu0 0.0
  %976 = vmatpush1.xpose.msra.mxu0 0.0
  %977 = vmatprep.subr.mxu0 0.0
  %978 = vmatpush1.xpose.msra.mxu0 0.0
  %979 = vmatprep.subr.mxu0 0.0
  %980 = vmatpush1.xpose.msra.mxu0 0.0
  %981 = vmatprep.subr.mxu0 0.0
  %982 = vmatpush1.xpose.msra.mxu0 0.0
  %983 = vmatprep.subr.mxu0 0.0
  %984 = vmatpush1.xpose.msra.mxu0 0.0
  %985 = vmatprep.mubr.f32.mxu0 0.0
  %986 = vmatmul.mubr.f32.gmra.mrb[0].mxu0 %v915
  %v987 = vpop.f32.mrb[0].mxu0
  %v988 = vadd.f32 0.0, %v987
  %v989 = vpop.f32.mrb[0].mxu0
  %990 = vmatprep.mubr.f32.mxu0 0.0
  %991 = vmatmul.mubr.f32.gmra.mrb[0].mxu0 %v917
  %v992 = vpop.f32.mrb[0].mxu0
  %v993 = vadd.f32 0.0, %v992
  %v994 = vpop.f32.mrb[0].mxu0
  %995 = vdwg.mxu0
  %1004 = vrot.lane.b32.xlu0 %v733, 8
  %v1005 = vpop.permute.xlu0 %1004
  %1006 = vrot.lane.b32.xlu0 %v738, 8
  %v1007 = vpop.permute.xlu0 %1006
  %1008 = vrot.lane.b32.xlu0 %v818, 8
  %v1009 = vpop.permute.xlu0 %1008
  %1010 = vrot.lane.b32.xlu0 %v823, 8
  %v1011 = vpop.permute.xlu0 %1010
  %1012 = vrot.lane.b32.xlu0 %v903, 8
  %v1013 = vpop.permute.xlu0 %1012
  %1014 = vrot.lane.b32.xlu0 %v908, 8
  %v1015 = vpop.permute.xlu0 %1014
  %1016 = vrot.lane.b32.xlu0 %v988, 8
  %v1017 = vpop.permute.xlu0 %1016
  %1018 = vrot.lane.b32.xlu0 %v993, 8
  %v1019 = vpop.permute.xlu0 %1018
  %vm1028 = vcmask 64512
  %v1029 = vsel %vm1028, %v405, %v1005
  %v1030 = vsel %vm1028, %v410, %v1007
  %v1031 = vsel %vm1028, %v486, %v1009
  %v1032 = vsel %vm1028, %v491, %v1011
  %v1033 = vsel %vm1028, %v567, %v1013
  %v1034 = vsel %vm1028, %v572, %v1015
  %v1035 = vsel %vm1028, %v648, %v1017
  %v1036 = vsel %vm1028, %v653, %v1019
  %v1037 = vadd.f32 %v1029, %v62
  %v1038 = vadd.f32 %v1030, %v62
  %v1039 = vadd.f32 %v1031, %v62
  %v1040 = vadd.f32 %v1032, %v62
  %v1041 = vadd.f32 %v1033, %v62
  %v1042 = vadd.f32 %v1034, %v62
  %v1043 = vadd.f32 %v1035, %v62
  %v1044 = vadd.f32 %v1036, %v62
  %v1045 = vsel %vm331, %v1037, -inf
  %1046 = vmax.xlane.f32.xlu0 %v1045
  %v1047 = vpop.xlane.xlu0 %1046
  %v1048 = vsel %vm331, %v1038, -inf
  %1049 = vmax.xlane.f32.xlu0 %v1048
  %v1050 = vpop.xlane.xlu0 %1049
  %v1051 = vsel %vm331, %v1039, -inf
  %1052 = vmax.xlane.f32.xlu0 %v1051
  %v1053 = vpop.xlane.xlu0 %1052
  %v1054 = vsel %vm331, %v1040, -inf
  %1055 = vmax.xlane.f32.xlu0 %v1054
  %v1056 = vpop.xlane.xlu0 %1055
  %v1057 = vsel %vm331, %v1041, -inf
  %1058 = vmax.xlane.f32.xlu0 %v1057
  %v1059 = vpop.xlane.xlu0 %1058
  %v1060 = vsel %vm331, %v1042, -inf
  %1061 = vmax.xlane.f32.xlu0 %v1060
  %v1062 = vpop.xlane.xlu0 %1061
  %v1063 = vsel %vm331, %v1043, -inf
  %1064 = vmax.xlane.f32.xlu0 %v1063
  %v1065 = vpop.xlane.xlu0 %1064
  %v1066 = vsel %vm331, %v1044, -inf
  %1067 = vmax.xlane.f32.xlu0 %v1066
  %v1068 = vpop.xlane.xlu0 %1067
  %v1069 = vsub.f32 %v1037, %v1047
  %v1070 = vsub.f32 %v1038, %v1050
  %v1071 = vsub.f32 %v1039, %v1053
  %v1072 = vsub.f32 %v1040, %v1056
  %v1073 = vsub.f32 %v1041, %v1059
  %v1074 = vsub.f32 %v1042, %v1062
  %v1075 = vsub.f32 %v1043, %v1065
  %v1076 = vsub.f32 %v1044, %v1068
  %v1077 = vmul.f32 %v1069, 1.442695
  %v1078 = vpow.pop %v1077
  %v1079 = vmul.f32 %v1070, 1.442695
  %v1080 = vpow.pop %v1079
  %v1081 = vmul.f32 %v1071, 1.442695
  %v1082 = vpow.pop %v1081
  %v1083 = vmul.f32 %v1072, 1.442695
  %v1084 = vpow.pop %v1083
  %v1085 = vmul.f32 %v1073, 1.442695
  %v1086 = vpow.pop %v1085
  %v1087 = vmul.f32 %v1074, 1.442695
  %v1088 = vpow.pop %v1087
  %v1089 = vmul.f32 %v1075, 1.442695
  %v1090 = vpow.pop %v1089
  %v1091 = vmul.f32 %v1076, 1.442695
  %v1092 = vpow.pop %v1091
  %v1093 = vsel %vm331, %v1078, 0.0
  %1094 = vadd.xlane.f32.xlu0 %v1093
  %v1095 = vpop.xlane.xlu0 %1094
  %v1096 = vsel %vm331, %v1080, 0.0
  %1097 = vadd.xlane.f32.xlu0 %v1096
  %v1098 = vpop.xlane.xlu0 %1097
  %v1099 = vsel %vm331, %v1082, 0.0
  %1100 = vadd.xlane.f32.xlu0 %v1099
  %v1101 = vpop.xlane.xlu0 %1100
  %v1102 = vsel %vm331, %v1084, 0.0
  %1103 = vadd.xlane.f32.xlu0 %v1102
  %v1104 = vpop.xlane.xlu0 %1103
  %v1105 = vsel %vm331, %v1086, 0.0
  %1106 = vadd.xlane.f32.xlu0 %v1105
  %v1107 = vpop.xlane.xlu0 %1106
  %v1108 = vsel %vm331, %v1088, 0.0
  %1109 = vadd.xlane.f32.xlu0 %v1108
  %v1110 = vpop.xlane.xlu0 %1109
  %v1111 = vsel %vm331, %v1090, 0.0
  %1112 = vadd.xlane.f32.xlu0 %v1111
  %v1113 = vpop.xlane.xlu0 %1112
  %v1114 = vsel %vm331, %v1092, 0.0
  %1115 = vadd.xlane.f32.xlu0 %v1114
  %v1116 = vpop.xlane.xlu0 %1115
  %v1117 = vrcp.pop %v1095
  %v1118 = vrcp.pop %v1098
  %v1119 = vrcp.pop %v1101
  %v1120 = vrcp.pop %v1104
  %v1121 = vrcp.pop %v1107
  %v1122 = vrcp.pop %v1110
  %v1123 = vrcp.pop %v1113
  %v1124 = vrcp.pop %v1116
  %v1125 = vmul.f32 %v1078, %v1117
  %v1126 = vmul.f32 %v1080, %v1118
  %v1127 = vmul.f32 %v1082, %v1119
  %v1128 = vmul.f32 %v1084, %v1120
  %v1129 = vmul.f32 %v1086, %v1121
  %v1130 = vmul.f32 %v1088, %v1122
  %v1131 = vmul.f32 %v1090, %v1123
  %v1132 = vmul.f32 %v1092, %v1124
  %1133 = vrot.lane.b32.xlu0 %v176, 64
  %v1134 = vpop.permute.xlu0 %1133
  %1135 = vrot.lane.b32.xlu0 %v287, 64
  %v1136 = vpop.permute.xlu0 %1135
  %v1140 = vsel %vm331, %v1125, 0
  %v1143 = vsel %vm331, %v1126, 0
  %1145 = vmatprep.subr.mxu0 0.0
  %1146 = vmatpush1.msra.mxu0 %v1134
  %1147 = vmatprep.subr.mxu0 0.0
  %1148 = vmatpush1.msra.mxu0 %v1136
  %1149 = vmatprep.subr.mxu0 0.0
  %1150 = vmatpush1.msra.mxu0 0.0
  %1151 = vmatprep.subr.mxu0 0.0
  %1152 = vmatpush1.msra.mxu0 0.0
  %1153 = vmatprep.subr.mxu0 0.0
  %1154 = vmatpush1.msra.mxu0 0.0
  %1155 = vmatprep.subr.mxu0 0.0
  %1156 = vmatpush1.msra.mxu0 0.0
  %1157 = vmatprep.subr.mxu0 0.0
  %1158 = vmatpush1.msra.mxu0 0.0
  %1159 = vmatprep.subr.mxu0 0.0
  %1160 = vmatpush1.msra.mxu0 0.0
  %1161 = vmatprep.subr.mxu0 0.0
  %1162 = vmatpush1.msra.mxu0 0.0
  %1163 = vmatprep.subr.mxu0 0.0
  %1164 = vmatpush1.msra.mxu0 0.0
  %1165 = vmatprep.subr.mxu0 0.0
  %1166 = vmatpush1.msra.mxu0 0.0
  %1167 = vmatprep.subr.mxu0 0.0
  %1168 = vmatpush1.msra.mxu0 0.0
  %1169 = vmatprep.subr.mxu0 0.0
  %1170 = vmatpush1.msra.mxu0 0.0
  %1171 = vmatprep.subr.mxu0 0.0
  %1172 = vmatpush1.msra.mxu0 0.0
  %1173 = vmatprep.subr.mxu0 0.0
  %1174 = vmatpush1.msra.mxu0 0.0
  %1175 = vmatprep.subr.mxu0 0.0
  %1176 = vmatpush1.msra.mxu0 0.0
  %1177 = vmatprep.subr.mxu0 0.0
  %1178 = vmatpush1.msra.mxu0 0.0
  %1179 = vmatprep.subr.mxu0 0.0
  %1180 = vmatpush1.msra.mxu0 0.0
  %1181 = vmatprep.subr.mxu0 0.0
  %1182 = vmatpush1.msra.mxu0 0.0
  %1183 = vmatprep.subr.mxu0 0.0
  %1184 = vmatpush1.msra.mxu0 0.0
  %1185 = vmatprep.subr.mxu0 0.0
  %1186 = vmatpush1.msra.mxu0 0.0
  %1187 = vmatprep.subr.mxu0 0.0
  %1188 = vmatpush1.msra.mxu0 0.0
  %1189 = vmatprep.subr.mxu0 0.0
  %1190 = vmatpush1.msra.mxu0 0.0
  %1191 = vmatprep.subr.mxu0 0.0
  %1192 = vmatpush1.msra.mxu0 0.0
  %1193 = vmatprep.subr.mxu0 0.0
  %1194 = vmatpush1.msra.mxu0 0.0
  %1195 = vmatprep.subr.mxu0 0.0
  %1196 = vmatpush1.msra.mxu0 0.0
  %1197 = vmatprep.subr.mxu0 0.0
  %1198 = vmatpush1.msra.mxu0 0.0
  %1199 = vmatprep.subr.mxu0 0.0
  %1200 = vmatpush1.msra.mxu0 0.0
  %1201 = vmatprep.subr.mxu0 0.0
  %1202 = vmatpush1.msra.mxu0 0.0
  %1203 = vmatprep.subr.mxu0 0.0
  %1204 = vmatpush1.msra.mxu0 0.0
  %1205 = vmatprep.subr.mxu0 0.0
  %1206 = vmatpush1.msra.mxu0 0.0
  %1207 = vmatprep.subr.mxu0 0.0
  %1208 = vmatpush1.msra.mxu0 0.0
  %1209 = vmatprep.mubr.f32.mxu0 0.0
  %1210 = vmatmul.mubr.f32.gmra.mrb[0].mxu0 %v1140
  %v1211 = vpop.f32.mrb[0].mxu0
  %v1212 = vadd.f32 0.0, %v1211
  %v1213 = vpop.f32.mrb[0].mxu0
  %1214 = vmatprep.mubr.f32.mxu0 0.0
  %1215 = vmatmul.mubr.f32.gmra.mrb[0].mxu0 %v1143
  %v1216 = vpop.f32.mrb[0].mxu0
  %v1217 = vadd.f32 0.0, %v1216
  %v1218 = vpop.f32.mrb[0].mxu0
  %1219 = vdwg.mxu0
  %1220 = vrot.lane.b32.xlu0 %v320, 64
  %v1221 = vpop.permute.xlu0 %1220
  %1222 = vrot.lane.b32.xlu0 %v322, 64
  %v1223 = vpop.permute.xlu0 %1222
  %v1227 = vsel %vm331, %v1127, 0
  %v1230 = vsel %vm331, %v1128, 0
  %1232 = vmatprep.subr.mxu0 0.0
  %1233 = vmatpush1.msra.mxu0 %v1221
  %1234 = vmatprep.subr.mxu0 0.0
  %1235 = vmatpush1.msra.mxu0 %v1223
  %1236 = vmatprep.subr.mxu0 0.0
  %1237 = vmatpush1.msra.mxu0 0.0
  %1238 = vmatprep.subr.mxu0 0.0
  %1239 = vmatpush1.msra.mxu0 0.0
  %1240 = vmatprep.subr.mxu0 0.0
  %1241 = vmatpush1.msra.mxu0 0.0
  %1242 = vmatprep.subr.mxu0 0.0
  %1243 = vmatpush1.msra.mxu0 0.0
  %1244 = vmatprep.subr.mxu0 0.0
  %1245 = vmatpush1.msra.mxu0 0.0
  %1246 = vmatprep.subr.mxu0 0.0
  %1247 = vmatpush1.msra.mxu0 0.0
  %1248 = vmatprep.subr.mxu0 0.0
  %1249 = vmatpush1.msra.mxu0 0.0
  %1250 = vmatprep.subr.mxu0 0.0
  %1251 = vmatpush1.msra.mxu0 0.0
  %1252 = vmatprep.subr.mxu0 0.0
  %1253 = vmatpush1.msra.mxu0 0.0
  %1254 = vmatprep.subr.mxu0 0.0
  %1255 = vmatpush1.msra.mxu0 0.0
  %1256 = vmatprep.subr.mxu0 0.0
  %1257 = vmatpush1.msra.mxu0 0.0
  %1258 = vmatprep.subr.mxu0 0.0
  %1259 = vmatpush1.msra.mxu0 0.0
  %1260 = vmatprep.subr.mxu0 0.0
  %1261 = vmatpush1.msra.mxu0 0.0
  %1262 = vmatprep.subr.mxu0 0.0
  %1263 = vmatpush1.msra.mxu0 0.0
  %1264 = vmatprep.subr.mxu0 0.0
  %1265 = vmatpush1.msra.mxu0 0.0
  %1266 = vmatprep.subr.mxu0 0.0
  %1267 = vmatpush1.msra.mxu0 0.0
  %1268 = vmatprep.subr.mxu0 0.0
  %1269 = vmatpush1.msra.mxu0 0.0
  %1270 = vmatprep.subr.mxu0 0.0
  %1271 = vmatpush1.msra.mxu0 0.0
  %1272 = vmatprep.subr.mxu0 0.0
  %1273 = vmatpush1.msra.mxu0 0.0
  %1274 = vmatprep.subr.mxu0 0.0
  %1275 = vmatpush1.msra.mxu0 0.0
  %1276 = vmatprep.subr.mxu0 0.0
  %1277 = vmatpush1.msra.mxu0 0.0
  %1278 = vmatprep.subr.mxu0 0.0
  %1279 = vmatpush1.msra.mxu0 0.0
  %1280 = vmatprep.subr.mxu0 0.0
  %1281 = vmatpush1.msra.mxu0 0.0
  %1282 = vmatprep.subr.mxu0 0.0
  %1283 = vmatpush1.msra.mxu0 0.0
  %1284 = vmatprep.subr.mxu0 0.0
  %1285 = vmatpush1.msra.mxu0 0.0
  %1286 = vmatprep.subr.mxu0 0.0
  %1287 = vmatpush1.msra.mxu0 0.0
  %1288 = vmatprep.subr.mxu0 0.0
  %1289 = vmatpush1.msra.mxu0 0.0
  %1290 = vmatprep.subr.mxu0 0.0
  %1291 = vmatpush1.msra.mxu0 0.0
  %1292 = vmatprep.subr.mxu0 0.0
  %1293 = vmatpush1.msra.mxu0 0.0
  %1294 = vmatprep.subr.mxu0 0.0
  %1295 = vmatpush1.msra.mxu0 0.0
  %1296 = vmatprep.mubr.f32.mxu0 0.0
  %1297 = vmatmul.mubr.f32.gmra.mrb[0].mxu0 %v1227
  %v1298 = vpop.f32.mrb[0].mxu0
  %v1299 = vadd.f32 0.0, %v1298
  %v1300 = vpop.f32.mrb[0].mxu0
  %1301 = vmatprep.mubr.f32.mxu0 0.0
  %1302 = vmatmul.mubr.f32.gmra.mrb[0].mxu0 %v1230
  %v1303 = vpop.f32.mrb[0].mxu0
  %v1304 = vadd.f32 0.0, %v1303
  %v1305 = vpop.f32.mrb[0].mxu0
  %1306 = vdwg.mxu0
  %1307 = vrot.lane.b32.xlu0 %v324, 64
  %v1308 = vpop.permute.xlu0 %1307
  %1309 = vrot.lane.b32.xlu0 %v326, 64
  %v1310 = vpop.permute.xlu0 %1309
  %v1314 = vsel %vm331, %v1129, 0
  %v1317 = vsel %vm331, %v1130, 0
  %1319 = vmatprep.subr.mxu0 0.0
  %1320 = vmatpush1.msra.mxu0 %v1308
  %1321 = vmatprep.subr.mxu0 0.0
  %1322 = vmatpush1.msra.mxu0 %v1310
  %1323 = vmatprep.subr.mxu0 0.0
  %1324 = vmatpush1.msra.mxu0 0.0
  %1325 = vmatprep.subr.mxu0 0.0
  %1326 = vmatpush1.msra.mxu0 0.0
  %1327 = vmatprep.subr.mxu0 0.0
  %1328 = vmatpush1.msra.mxu0 0.0
  %1329 = vmatprep.subr.mxu0 0.0
  %1330 = vmatpush1.msra.mxu0 0.0
  %1331 = vmatprep.subr.mxu0 0.0
  %1332 = vmatpush1.msra.mxu0 0.0
  %1333 = vmatprep.subr.mxu0 0.0
  %1334 = vmatpush1.msra.mxu0 0.0
  %1335 = vmatprep.subr.mxu0 0.0
  %1336 = vmatpush1.msra.mxu0 0.0
  %1337 = vmatprep.subr.mxu0 0.0
  %1338 = vmatpush1.msra.mxu0 0.0
  %1339 = vmatprep.subr.mxu0 0.0
  %1340 = vmatpush1.msra.mxu0 0.0
  %1341 = vmatprep.subr.mxu0 0.0
  %1342 = vmatpush1.msra.mxu0 0.0
  %1343 = vmatprep.subr.mxu0 0.0
  %1344 = vmatpush1.msra.mxu0 0.0
  %1345 = vmatprep.subr.mxu0 0.0
  %1346 = vmatpush1.msra.mxu0 0.0
  %1347 = vmatprep.subr.mxu0 0.0
  %1348 = vmatpush1.msra.mxu0 0.0
  %1349 = vmatprep.subr.mxu0 0.0
  %1350 = vmatpush1.msra.mxu0 0.0
  %1351 = vmatprep.subr.mxu0 0.0
  %1352 = vmatpush1.msra.mxu0 0.0
  %1353 = vmatprep.subr.mxu0 0.0
  %1354 = vmatpush1.msra.mxu0 0.0
  %1355 = vmatprep.subr.mxu0 0.0
  %1356 = vmatpush1.msra.mxu0 0.0
  %1357 = vmatprep.subr.mxu0 0.0
  %1358 = vmatpush1.msra.mxu0 0.0
  %1359 = vmatprep.subr.mxu0 0.0
  %1360 = vmatpush1.msra.mxu0 0.0
  %1361 = vmatprep.subr.mxu0 0.0
  %1362 = vmatpush1.msra.mxu0 0.0
  %1363 = vmatprep.subr.mxu0 0.0
  %1364 = vmatpush1.msra.mxu0 0.0
  %1365 = vmatprep.subr.mxu0 0.0
  %1366 = vmatpush1.msra.mxu0 0.0
  %1367 = vmatprep.subr.mxu0 0.0
  %1368 = vmatpush1.msra.mxu0 0.0
  %1369 = vmatprep.subr.mxu0 0.0
  %1370 = vmatpush1.msra.mxu0 0.0
  %1371 = vmatprep.subr.mxu0 0.0
  %1372 = vmatpush1.msra.mxu0 0.0
  %1373 = vmatprep.subr.mxu0 0.0
  %1374 = vmatpush1.msra.mxu0 0.0
  %1375 = vmatprep.subr.mxu0 0.0
  %1376 = vmatpush1.msra.mxu0 0.0
  %1377 = vmatprep.subr.mxu0 0.0
  %1378 = vmatpush1.msra.mxu0 0.0
  %1379 = vmatprep.subr.mxu0 0.0
  %1380 = vmatpush1.msra.mxu0 0.0
  %1381 = vmatprep.subr.mxu0 0.0
  %1382 = vmatpush1.msra.mxu0 0.0
  %1383 = vmatprep.mubr.f32.mxu0 0.0
  %1384 = vmatmul.mubr.f32.gmra.mrb[0].mxu0 %v1314
  %v1385 = vpop.f32.mrb[0].mxu0
  %v1386 = vadd.f32 0.0, %v1385
  %v1387 = vpop.f32.mrb[0].mxu0
  %1388 = vmatprep.mubr.f32.mxu0 0.0
  %1389 = vmatmul.mubr.f32.gmra.mrb[0].mxu0 %v1317
  %v1390 = vpop.f32.mrb[0].mxu0
  %v1391 = vadd.f32 0.0, %v1390
  %v1392 = vpop.f32.mrb[0].mxu0
  %1393 = vdwg.mxu0
  %1394 = vrot.lane.b32.xlu0 %v328, 64
  %v1395 = vpop.permute.xlu0 %1394
  %1396 = vrot.lane.b32.xlu0 %v330, 64
  %v1397 = vpop.permute.xlu0 %1396
  %v1401 = vsel %vm331, %v1131, 0
  %v1404 = vsel %vm331, %v1132, 0
  %1406 = vmatprep.subr.mxu0 0.0
  %1407 = vmatpush1.msra.mxu0 %v1395
  %1408 = vmatprep.subr.mxu0 0.0
  %1409 = vmatpush1.msra.mxu0 %v1397
  %1410 = vmatprep.subr.mxu0 0.0
  %1411 = vmatpush1.msra.mxu0 0.0
  %1412 = vmatprep.subr.mxu0 0.0
  %1413 = vmatpush1.msra.mxu0 0.0
  %1414 = vmatprep.subr.mxu0 0.0
  %1415 = vmatpush1.msra.mxu0 0.0
  %1416 = vmatprep.subr.mxu0 0.0
  %1417 = vmatpush1.msra.mxu0 0.0
  %1418 = vmatprep.subr.mxu0 0.0
  %1419 = vmatpush1.msra.mxu0 0.0
  %1420 = vmatprep.subr.mxu0 0.0
  %1421 = vmatpush1.msra.mxu0 0.0
  %1422 = vmatprep.subr.mxu0 0.0
  %1423 = vmatpush1.msra.mxu0 0.0
  %1424 = vmatprep.subr.mxu0 0.0
  %1425 = vmatpush1.msra.mxu0 0.0
  %1426 = vmatprep.subr.mxu0 0.0
  %1427 = vmatpush1.msra.mxu0 0.0
  %1428 = vmatprep.subr.mxu0 0.0
  %1429 = vmatpush1.msra.mxu0 0.0
  %1430 = vmatprep.subr.mxu0 0.0
  %1431 = vmatpush1.msra.mxu0 0.0
  %1432 = vmatprep.subr.mxu0 0.0
  %1433 = vmatpush1.msra.mxu0 0.0
  %1434 = vmatprep.subr.mxu0 0.0
  %1435 = vmatpush1.msra.mxu0 0.0
  %1436 = vmatprep.subr.mxu0 0.0
  %1437 = vmatpush1.msra.mxu0 0.0
  %1438 = vmatprep.subr.mxu0 0.0
  %1439 = vmatpush1.msra.mxu0 0.0
  %1440 = vmatprep.subr.mxu0 0.0
  %1441 = vmatpush1.msra.mxu0 0.0
  %1442 = vmatprep.subr.mxu0 0.0
  %1443 = vmatpush1.msra.mxu0 0.0
  %1444 = vmatprep.subr.mxu0 0.0
  %1445 = vmatpush1.msra.mxu0 0.0
  %1446 = vmatprep.subr.mxu0 0.0
  %1447 = vmatpush1.msra.mxu0 0.0
  %1448 = vmatprep.subr.mxu0 0.0
  %1449 = vmatpush1.msra.mxu0 0.0
  %1450 = vmatprep.subr.mxu0 0.0
  %1451 = vmatpush1.msra.mxu0 0.0
  %1452 = vmatprep.subr.mxu0 0.0
  %1453 = vmatpush1.msra.mxu0 0.0
  %1454 = vmatprep.subr.mxu0 0.0
  %1455 = vmatpush1.msra.mxu0 0.0
  %1456 = vmatprep.subr.mxu0 0.0
  %1457 = vmatpush1.msra.mxu0 0.0
  %1458 = vmatprep.subr.mxu0 0.0
  %1459 = vmatpush1.msra.mxu0 0.0
  %1460 = vmatprep.subr.mxu0 0.0
  %1461 = vmatpush1.msra.mxu0 0.0
  %1462 = vmatprep.subr.mxu0 0.0
  %1463 = vmatpush1.msra.mxu0 0.0
  %1464 = vmatprep.subr.mxu0 0.0
  %1465 = vmatpush1.msra.mxu0 0.0
  %1466 = vmatprep.subr.mxu0 0.0
  %1467 = vmatpush1.msra.mxu0 0.0
  %1468 = vmatprep.subr.mxu0 0.0
  %1469 = vmatpush1.msra.mxu0 0.0
  %1470 = vmatprep.mubr.f32.mxu0 0.0
  %1471 = vmatmul.mubr.f32.gmra.mrb[0].mxu0 %v1401
  %v1472 = vpop.f32.mrb[0].mxu0
  %v1473 = vadd.f32 0.0, %v1472
  %v1474 = vpop.f32.mrb[0].mxu0
  %1475 = vmatprep.mubr.f32.mxu0 0.0
  %1476 = vmatmul.mubr.f32.gmra.mrb[0].mxu0 %v1404
  %v1477 = vpop.f32.mrb[0].mxu0
  %v1478 = vadd.f32 0.0, %v1477
  %v1479 = vpop.f32.mrb[0].mxu0
  %1480 = vdwg.mxu0
  %v1482 = vsel %vm331, %v1212, 0
  %v1485 = vsel %vm331, %v1217, 0
  %1487 = vmatprep.subr.mxu0 0.0
  %1488 = vmatpush1.msra.mxu0 %v295
  %1489 = vmatprep.subr.mxu0 0.0
  %1490 = vmatpush1.msra.mxu0 %v296
  %1491 = vmatprep.subr.mxu0 0.0
  %1492 = vmatpush1.msra.mxu0 0.0
  %1493 = vmatprep.subr.mxu0 0.0
  %1494 = vmatpush1.msra.mxu0 0.0
  %1495 = vmatprep.subr.mxu0 0.0
  %1496 = vmatpush1.msra.mxu0 0.0
  %1497 = vmatprep.subr.mxu0 0.0
  %1498 = vmatpush1.msra.mxu0 0.0
  %1499 = vmatprep.subr.mxu0 0.0
  %1500 = vmatpush1.msra.mxu0 0.0
  %1501 = vmatprep.subr.mxu0 0.0
  %1502 = vmatpush1.msra.mxu0 0.0
  %1503 = vmatprep.subr.mxu0 0.0
  %1504 = vmatpush1.msra.mxu0 0.0
  %1505 = vmatprep.subr.mxu0 0.0
  %1506 = vmatpush1.msra.mxu0 0.0
  %1507 = vmatprep.subr.mxu0 0.0
  %1508 = vmatpush1.msra.mxu0 0.0
  %1509 = vmatprep.subr.mxu0 0.0
  %1510 = vmatpush1.msra.mxu0 0.0
  %1511 = vmatprep.subr.mxu0 0.0
  %1512 = vmatpush1.msra.mxu0 0.0
  %1513 = vmatprep.subr.mxu0 0.0
  %1514 = vmatpush1.msra.mxu0 0.0
  %1515 = vmatprep.subr.mxu0 0.0
  %1516 = vmatpush1.msra.mxu0 0.0
  %1517 = vmatprep.subr.mxu0 0.0
  %1518 = vmatpush1.msra.mxu0 0.0
  %1519 = vmatprep.subr.mxu0 0.0
  %1520 = vmatpush1.msra.mxu0 0.0
  %1521 = vmatprep.subr.mxu0 0.0
  %1522 = vmatpush1.msra.mxu0 0.0
  %1523 = vmatprep.subr.mxu0 0.0
  %1524 = vmatpush1.msra.mxu0 0.0
  %1525 = vmatprep.subr.mxu0 0.0
  %1526 = vmatpush1.msra.mxu0 0.0
  %1527 = vmatprep.subr.mxu0 0.0
  %1528 = vmatpush1.msra.mxu0 0.0
  %1529 = vmatprep.subr.mxu0 0.0
  %1530 = vmatpush1.msra.mxu0 0.0
  %1531 = vmatprep.subr.mxu0 0.0
  %1532 = vmatpush1.msra.mxu0 0.0
  %1533 = vmatprep.subr.mxu0 0.0
  %1534 = vmatpush1.msra.mxu0 0.0
  %1535 = vmatprep.subr.mxu0 0.0
  %1536 = vmatpush1.msra.mxu0 0.0
  %1537 = vmatprep.subr.mxu0 0.0
  %1538 = vmatpush1.msra.mxu0 0.0
  %1539 = vmatprep.subr.mxu0 0.0
  %1540 = vmatpush1.msra.mxu0 0.0
  %1541 = vmatprep.subr.mxu0 0.0
  %1542 = vmatpush1.msra.mxu0 0.0
  %1543 = vmatprep.subr.mxu0 0.0
  %1544 = vmatpush1.msra.mxu0 0.0
  %1545 = vmatprep.subr.mxu0 0.0
  %1546 = vmatpush1.msra.mxu0 0.0
  %1547 = vmatprep.subr.mxu0 0.0
  %1548 = vmatpush1.msra.mxu0 0.0
  %1549 = vmatprep.subr.mxu0 0.0
  %1550 = vmatpush1.msra.mxu0 0.0
  %1551 = vmatprep.mubr.f32.mxu0 0.0
  %1552 = vmatmul.mubr.f32.gmra.mrb[0].mxu0 %v1482
  %v1553 = vpop.f32.mrb[0].mxu0
  %v1554 = vadd.f32 0.0, %v1553
  %v1555 = vpop.f32.mrb[0].mxu0
  %1556 = vmatprep.mubr.f32.mxu0 0.0
  %1557 = vmatmul.mubr.f32.gmra.mrb[0].mxu0 %v1485
  %v1558 = vpop.f32.mrb[0].mxu0
  %v1559 = vadd.f32 0.0, %v1558
  %v1560 = vpop.f32.mrb[0].mxu0
  %1561 = vdwg.mxu0
  %v1563 = vsel %vm331, %v1299, 0
  %v1566 = vsel %vm331, %v1304, 0
  %1568 = vmatprep.subr.mxu0 0.0
  %1569 = vmatpush1.msra.mxu0 %v297
  %1570 = vmatprep.subr.mxu0 0.0
  %1571 = vmatpush1.msra.mxu0 %v298
  %1572 = vmatprep.subr.mxu0 0.0
  %1573 = vmatpush1.msra.mxu0 0.0
  %1574 = vmatprep.subr.mxu0 0.0
  %1575 = vmatpush1.msra.mxu0 0.0
  %1576 = vmatprep.subr.mxu0 0.0
  %1577 = vmatpush1.msra.mxu0 0.0
  %1578 = vmatprep.subr.mxu0 0.0
  %1579 = vmatpush1.msra.mxu0 0.0
  %1580 = vmatprep.subr.mxu0 0.0
  %1581 = vmatpush1.msra.mxu0 0.0
  %1582 = vmatprep.subr.mxu0 0.0
  %1583 = vmatpush1.msra.mxu0 0.0
  %1584 = vmatprep.subr.mxu0 0.0
  %1585 = vmatpush1.msra.mxu0 0.0
  %1586 = vmatprep.subr.mxu0 0.0
  %1587 = vmatpush1.msra.mxu0 0.0
  %1588 = vmatprep.subr.mxu0 0.0
  %1589 = vmatpush1.msra.mxu0 0.0
  %1590 = vmatprep.subr.mxu0 0.0
  %1591 = vmatpush1.msra.mxu0 0.0
  %1592 = vmatprep.subr.mxu0 0.0
  %1593 = vmatpush1.msra.mxu0 0.0
  %1594 = vmatprep.subr.mxu0 0.0
  %1595 = vmatpush1.msra.mxu0 0.0
  %1596 = vmatprep.subr.mxu0 0.0
  %1597 = vmatpush1.msra.mxu0 0.0
  %1598 = vmatprep.subr.mxu0 0.0
  %1599 = vmatpush1.msra.mxu0 0.0
  %1600 = vmatprep.subr.mxu0 0.0
  %1601 = vmatpush1.msra.mxu0 0.0
  %1602 = vmatprep.subr.mxu0 0.0
  %1603 = vmatpush1.msra.mxu0 0.0
  %1604 = vmatprep.subr.mxu0 0.0
  %1605 = vmatpush1.msra.mxu0 0.0
  %1606 = vmatprep.subr.mxu0 0.0
  %1607 = vmatpush1.msra.mxu0 0.0
  %1608 = vmatprep.subr.mxu0 0.0
  %1609 = vmatpush1.msra.mxu0 0.0
  %1610 = vmatprep.subr.mxu0 0.0
  %1611 = vmatpush1.msra.mxu0 0.0
  %1612 = vmatprep.subr.mxu0 0.0
  %1613 = vmatpush1.msra.mxu0 0.0
  %1614 = vmatprep.subr.mxu0 0.0
  %1615 = vmatpush1.msra.mxu0 0.0
  %1616 = vmatprep.subr.mxu0 0.0
  %1617 = vmatpush1.msra.mxu0 0.0
  %1618 = vmatprep.subr.mxu0 0.0
  %1619 = vmatpush1.msra.mxu0 0.0
  %1620 = vmatprep.subr.mxu0 0.0
  %1621 = vmatpush1.msra.mxu0 0.0
  %1622 = vmatprep.subr.mxu0 0.0
  %1623 = vmatpush1.msra.mxu0 0.0
  %1624 = vmatprep.subr.mxu0 0.0
  %1625 = vmatpush1.msra.mxu0 0.0
  %1626 = vmatprep.subr.mxu0 0.0
  %1627 = vmatpush1.msra.mxu0 0.0
  %1628 = vmatprep.subr.mxu0 0.0
  %1629 = vmatpush1.msra.mxu0 0.0
  %1630 = vmatprep.subr.mxu0 0.0
  %1631 = vmatpush1.msra.mxu0 0.0
  %1632 = vmatprep.mubr.f32.mxu0 0.0
  %1633 = vmatmul.mubr.f32.gmra.mrb[0].mxu0 %v1563
  %v1634 = vpop.f32.mrb[0].mxu0
  %v1635 = vadd.f32 0.0, %v1634
  %v1636 = vpop.f32.mrb[0].mxu0
  %1637 = vmatprep.mubr.f32.mxu0 0.0
  %1638 = vmatmul.mubr.f32.gmra.mrb[0].mxu0 %v1566
  %v1639 = vpop.f32.mrb[0].mxu0
  %v1640 = vadd.f32 0.0, %v1639
  %v1641 = vpop.f32.mrb[0].mxu0
  %1642 = vdwg.mxu0
  %v1644 = vsel %vm331, %v1386, 0
  %v1647 = vsel %vm331, %v1391, 0
  %1649 = vmatprep.subr.mxu0 0.0
  %1650 = vmatpush1.msra.mxu0 %v299
  %1651 = vmatprep.subr.mxu0 0.0
  %1652 = vmatpush1.msra.mxu0 %v300
  %1653 = vmatprep.subr.mxu0 0.0
  %1654 = vmatpush1.msra.mxu0 0.0
  %1655 = vmatprep.subr.mxu0 0.0
  %1656 = vmatpush1.msra.mxu0 0.0
  %1657 = vmatprep.subr.mxu0 0.0
  %1658 = vmatpush1.msra.mxu0 0.0
  %1659 = vmatprep.subr.mxu0 0.0
  %1660 = vmatpush1.msra.mxu0 0.0
  %1661 = vmatprep.subr.mxu0 0.0
  %1662 = vmatpush1.msra.mxu0 0.0
  %1663 = vmatprep.subr.mxu0 0.0
  %1664 = vmatpush1.msra.mxu0 0.0
  %1665 = vmatprep.subr.mxu0 0.0
  %1666 = vmatpush1.msra.mxu0 0.0
  %1667 = vmatprep.subr.mxu0 0.0
  %1668 = vmatpush1.msra.mxu0 0.0
  %1669 = vmatprep.subr.mxu0 0.0
  %1670 = vmatpush1.msra.mxu0 0.0
  %1671 = vmatprep.subr.mxu0 0.0
  %1672 = vmatpush1.msra.mxu0 0.0
  %1673 = vmatprep.subr.mxu0 0.0
  %1674 = vmatpush1.msra.mxu0 0.0
  %1675 = vmatprep.subr.mxu0 0.0
  %1676 = vmatpush1.msra.mxu0 0.0
  %1677 = vmatprep.subr.mxu0 0.0
  %1678 = vmatpush1.msra.mxu0 0.0
  %1679 = vmatprep.subr.mxu0 0.0
  %1680 = vmatpush1.msra.mxu0 0.0
  %1681 = vmatprep.subr.mxu0 0.0
  %1682 = vmatpush1.msra.mxu0 0.0
  %1683 = vmatprep.subr.mxu0 0.0
  %1684 = vmatpush1.msra.mxu0 0.0
  %1685 = vmatprep.subr.mxu0 0.0
  %1686 = vmatpush1.msra.mxu0 0.0
  %1687 = vmatprep.subr.mxu0 0.0
  %1688 = vmatpush1.msra.mxu0 0.0
  %1689 = vmatprep.subr.mxu0 0.0
  %1690 = vmatpush1.msra.mxu0 0.0
  %1691 = vmatprep.subr.mxu0 0.0
  %1692 = vmatpush1.msra.mxu0 0.0
  %1693 = vmatprep.subr.mxu0 0.0
  %1694 = vmatpush1.msra.mxu0 0.0
  %1695 = vmatprep.subr.mxu0 0.0
  %1696 = vmatpush1.msra.mxu0 0.0
  %1697 = vmatprep.subr.mxu0 0.0
  %1698 = vmatpush1.msra.mxu0 0.0
  %1699 = vmatprep.subr.mxu0 0.0
  %1700 = vmatpush1.msra.mxu0 0.0
  %1701 = vmatprep.subr.mxu0 0.0
  %1702 = vmatpush1.msra.mxu0 0.0
  %1703 = vmatprep.subr.mxu0 0.0
  %1704 = vmatpush1.msra.mxu0 0.0
  %1705 = vmatprep.subr.mxu0 0.0
  %1706 = vmatpush1.msra.mxu0 0.0
  %1707 = vmatprep.subr.mxu0 0.0
  %1708 = vmatpush1.msra.mxu0 0.0
  %1709 = vmatprep.subr.mxu0 0.0
  %1710 = vmatpush1.msra.mxu0 0.0
  %1711 = vmatprep.subr.mxu0 0.0
  %1712 = vmatpush1.msra.mxu0 0.0
  %1713 = vmatprep.mubr.f32.mxu0 0.0
  %1714 = vmatmul.mubr.f32.gmra.mrb[0].mxu0 %v1644
  %v1715 = vpop.f32.mrb[0].mxu0
  %v1716 = vadd.f32 0.0, %v1715
  %v1717 = vpop.f32.mrb[0].mxu0
  %1718 = vmatprep.mubr.f32.mxu0 0.0
  %1719 = vmatmul.mubr.f32.gmra.mrb[0].mxu0 %v1647
  %v1720 = vpop.f32.mrb[0].mxu0
  %v1721 = vadd.f32 0.0, %v1720
  %v1722 = vpop.f32.mrb[0].mxu0
  %1723 = vdwg.mxu0
  %v1725 = vsel %vm331, %v1473, 0
  %v1728 = vsel %vm331, %v1478, 0
  %1730 = vmatprep.subr.mxu0 0.0
  %1731 = vmatpush1.msra.mxu0 %v301
  %1732 = vmatprep.subr.mxu0 0.0
  %1733 = vmatpush1.msra.mxu0 %v302
  %1734 = vmatprep.subr.mxu0 0.0
  %1735 = vmatpush1.msra.mxu0 0.0
  %1736 = vmatprep.subr.mxu0 0.0
  %1737 = vmatpush1.msra.mxu0 0.0
  %1738 = vmatprep.subr.mxu0 0.0
  %1739 = vmatpush1.msra.mxu0 0.0
  %1740 = vmatprep.subr.mxu0 0.0
  %1741 = vmatpush1.msra.mxu0 0.0
  %1742 = vmatprep.subr.mxu0 0.0
  %1743 = vmatpush1.msra.mxu0 0.0
  %1744 = vmatprep.subr.mxu0 0.0
  %1745 = vmatpush1.msra.mxu0 0.0
  %1746 = vmatprep.subr.mxu0 0.0
  %1747 = vmatpush1.msra.mxu0 0.0
  %1748 = vmatprep.subr.mxu0 0.0
  %1749 = vmatpush1.msra.mxu0 0.0
  %1750 = vmatprep.subr.mxu0 0.0
  %1751 = vmatpush1.msra.mxu0 0.0
  %1752 = vmatprep.subr.mxu0 0.0
  %1753 = vmatpush1.msra.mxu0 0.0
  %1754 = vmatprep.subr.mxu0 0.0
  %1755 = vmatpush1.msra.mxu0 0.0
  %1756 = vmatprep.subr.mxu0 0.0
  %1757 = vmatpush1.msra.mxu0 0.0
  %1758 = vmatprep.subr.mxu0 0.0
  %1759 = vmatpush1.msra.mxu0 0.0
  %1760 = vmatprep.subr.mxu0 0.0
  %1761 = vmatpush1.msra.mxu0 0.0
  %1762 = vmatprep.subr.mxu0 0.0
  %1763 = vmatpush1.msra.mxu0 0.0
  %1764 = vmatprep.subr.mxu0 0.0
  %1765 = vmatpush1.msra.mxu0 0.0
  %1766 = vmatprep.subr.mxu0 0.0
  %1767 = vmatpush1.msra.mxu0 0.0
  %1768 = vmatprep.subr.mxu0 0.0
  %1769 = vmatpush1.msra.mxu0 0.0
  %1770 = vmatprep.subr.mxu0 0.0
  %1771 = vmatpush1.msra.mxu0 0.0
  %1772 = vmatprep.subr.mxu0 0.0
  %1773 = vmatpush1.msra.mxu0 0.0
  %1774 = vmatprep.subr.mxu0 0.0
  %1775 = vmatpush1.msra.mxu0 0.0
  %1776 = vmatprep.subr.mxu0 0.0
  %1777 = vmatpush1.msra.mxu0 0.0
  %1778 = vmatprep.subr.mxu0 0.0
  %1779 = vmatpush1.msra.mxu0 0.0
  %1780 = vmatprep.subr.mxu0 0.0
  %1781 = vmatpush1.msra.mxu0 0.0
  %1782 = vmatprep.subr.mxu0 0.0
  %1783 = vmatpush1.msra.mxu0 0.0
  %1784 = vmatprep.subr.mxu0 0.0
  %1785 = vmatpush1.msra.mxu0 0.0
  %1786 = vmatprep.subr.mxu0 0.0
  %1787 = vmatpush1.msra.mxu0 0.0
  %1788 = vmatprep.subr.mxu0 0.0
  %1789 = vmatpush1.msra.mxu0 0.0
  %1790 = vmatprep.subr.mxu0 0.0
  %1791 = vmatpush1.msra.mxu0 0.0
  %1792 = vmatprep.subr.mxu0 0.0
  %1793 = vmatpush1.msra.mxu0 0.0
  %1794 = vmatprep.mubr.f32.mxu0 0.0
  %1795 = vmatmul.mubr.f32.gmra.mrb[0].mxu0 %v1725
  %v1796 = vpop.f32.mrb[0].mxu0
  %v1797 = vadd.f32 0.0, %v1796
  %v1798 = vpop.f32.mrb[0].mxu0
  %1799 = vmatprep.mubr.f32.mxu0 0.0
  %1800 = vmatmul.mubr.f32.gmra.mrb[0].mxu0 %v1728
  %v1801 = vpop.f32.mrb[0].mxu0
  %v1802 = vadd.f32 0.0, %v1801
  %v1803 = vpop.f32.mrb[0].mxu0
  %1804 = vdwg.mxu0
  %v1805 = vadd.f32 %v1554, %v1635
  %v1806 = vadd.f32 %v1559, %v1640
  %v1807 = vadd.f32 %v1805, %v1716
  %v1808 = vadd.f32 %v1806, %v1721
  %v1809 = vadd.f32 %v1807, %v1797
  %v1810 = vadd.f32 %v1808, %v1802
  %1813 = vrot.lane.b32.xlu0 %v180, 112
  %v1814 = vpop.permute.xlu0 %1813
  %1815 = vrot.lane.b32.xlu0 %v291, 112
  %v1816 = vpop.permute.xlu0 %1815
  %1817 = vrot.lane.b32.xlu0 %v180, 96
  %v1818 = vpop.permute.xlu0 %1817
  %1819 = vrot.lane.b32.xlu0 %v291, 96
  %v1820 = vpop.permute.xlu0 %1819
  %1821 = vrot.lane.b32.xlu0 %v180, 80
  %v1822 = vpop.permute.xlu0 %1821
  %1823 = vrot.lane.b32.xlu0 %v291, 80
  %v1824 = vpop.permute.xlu0 %1823
  %1827 = vrot.lane.b32.xlu0 %v182, 112
  %v1828 = vpop.permute.xlu0 %1827
  %1829 = vrot.lane.b32.xlu0 %v293, 112
  %v1830 = vpop.permute.xlu0 %1829
  %1831 = vrot.lane.b32.xlu0 %v182, 96
  %v1832 = vpop.permute.xlu0 %1831
  %1833 = vrot.lane.b32.xlu0 %v293, 96
  %v1834 = vpop.permute.xlu0 %1833
  %1835 = vrot.lane.b32.xlu0 %v182, 80
  %v1836 = vpop.permute.xlu0 %1835
  %1837 = vrot.lane.b32.xlu0 %v293, 80
  %v1838 = vpop.permute.xlu0 %1837
  %v1839 = vsel %vm331, %v180, 0
  %v1841 = vsel %vm331, %v291, 0
  %v1843 = vsel %vm331, %v182, 0
  %1845 = vmatprep.subr.mxu0 0.0
  %1846 = vmatpush1.xpose.msra.mxu0 %v1843
  %1847 = vmatprep.subr.mxu0 0.0
  %1848 = vmatpush1.xpose.msra.mxu0 0.0
  %1849 = vmatprep.subr.mxu0 0.0
  %1850 = vmatpush1.xpose.msra.mxu0 0.0
  %1851 = vmatprep.subr.mxu0 0.0
  %1852 = vmatpush1.xpose.msra.mxu0 0.0
  %1853 = vmatprep.subr.mxu0 0.0
  %1854 = vmatpush1.xpose.msra.mxu0 0.0
  %1855 = vmatprep.subr.mxu0 0.0
  %1856 = vmatpush1.xpose.msra.mxu0 0.0
  %1857 = vmatprep.subr.mxu0 0.0
  %1858 = vmatpush1.xpose.msra.mxu0 0.0
  %1859 = vmatprep.subr.mxu0 0.0
  %1860 = vmatpush1.xpose.msra.mxu0 0.0
  %1861 = vmatprep.subr.mxu0 0.0
  %1862 = vmatpush1.xpose.msra.mxu0 0.0
  %1863 = vmatprep.subr.mxu0 0.0
  %1864 = vmatpush1.xpose.msra.mxu0 0.0
  %1865 = vmatprep.subr.mxu0 0.0
  %1866 = vmatpush1.xpose.msra.mxu0 0.0
  %1867 = vmatprep.subr.mxu0 0.0
  %1868 = vmatpush1.xpose.msra.mxu0 0.0
  %1869 = vmatprep.subr.mxu0 0.0
  %1870 = vmatpush1.xpose.msra.mxu0 0.0
  %1871 = vmatprep.subr.mxu0 0.0
  %1872 = vmatpush1.xpose.msra.mxu0 0.0
  %1873 = vmatprep.subr.mxu0 0.0
  %1874 = vmatpush1.xpose.msra.mxu0 0.0
  %1875 = vmatprep.subr.mxu0 0.0
  %1876 = vmatpush1.xpose.msra.mxu0 0.0
  %1877 = vmatprep.subr.mxu0 0.0
  %1878 = vmatpush1.xpose.msra.mxu0 0.0
  %1879 = vmatprep.subr.mxu0 0.0
  %1880 = vmatpush1.xpose.msra.mxu0 0.0
  %1881 = vmatprep.subr.mxu0 0.0
  %1882 = vmatpush1.xpose.msra.mxu0 0.0
  %1883 = vmatprep.subr.mxu0 0.0
  %1884 = vmatpush1.xpose.msra.mxu0 0.0
  %1885 = vmatprep.subr.mxu0 0.0
  %1886 = vmatpush1.xpose.msra.mxu0 0.0
  %1887 = vmatprep.subr.mxu0 0.0
  %1888 = vmatpush1.xpose.msra.mxu0 0.0
  %1889 = vmatprep.subr.mxu0 0.0
  %1890 = vmatpush1.xpose.msra.mxu0 0.0
  %1891 = vmatprep.subr.mxu0 0.0
  %1892 = vmatpush1.xpose.msra.mxu0 0.0
  %1893 = vmatprep.subr.mxu0 0.0
  %1894 = vmatpush1.xpose.msra.mxu0 0.0
  %1895 = vmatprep.subr.mxu0 0.0
  %1896 = vmatpush1.xpose.msra.mxu0 0.0
  %1897 = vmatprep.subr.mxu0 0.0
  %1898 = vmatpush1.xpose.msra.mxu0 0.0
  %1899 = vmatprep.subr.mxu0 0.0
  %1900 = vmatpush1.xpose.msra.mxu0 0.0
  %1901 = vmatprep.subr.mxu0 0.0
  %1902 = vmatpush1.xpose.msra.mxu0 0.0
  %1903 = vmatprep.subr.mxu0 0.0
  %1904 = vmatpush1.xpose.msra.mxu0 0.0
  %1905 = vmatprep.subr.mxu0 0.0
  %1906 = vmatpush1.xpose.msra.mxu0 0.0
  %1907 = vmatprep.subr.mxu0 0.0
  %1908 = vmatpush1.xpose.msra.mxu0 0.0
  %1909 = vmatprep.mubr.f32.mxu0 0.0
  %1910 = vmatmul.mubr.f32.gmra.mrb[0].mxu0 %v1839
  %v1911 = vpop.f32.mrb[0].mxu0
  %v1912 = vadd.f32 0.0, %v1911
  %v1913 = vpop.f32.mrb[0].mxu0
  %1914 = vmatprep.mubr.f32.mxu0 0.0
  %1915 = vmatmul.mubr.f32.gmra.mrb[0].mxu0 %v1841
  %v1916 = vpop.f32.mrb[0].mxu0
  %v1917 = vadd.f32 0.0, %v1916
  %v1918 = vpop.f32.mrb[0].mxu0
  %1919 = vdwg.mxu0
  %v1920 = vsel %vm331, %v1814, 0
  %v1922 = vsel %vm331, %v1816, 0
  %v1924 = vsel %vm331, %v1828, 0
  %1926 = vmatprep.subr.mxu0 0.0
  %1927 = vmatpush1.xpose.msra.mxu0 %v1924
  %1928 = vmatprep.subr.mxu0 0.0
  %1929 = vmatpush1.xpose.msra.mxu0 0.0
  %1930 = vmatprep.subr.mxu0 0.0
  %1931 = vmatpush1.xpose.msra.mxu0 0.0
  %1932 = vmatprep.subr.mxu0 0.0
  %1933 = vmatpush1.xpose.msra.mxu0 0.0
  %1934 = vmatprep.subr.mxu0 0.0
  %1935 = vmatpush1.xpose.msra.mxu0 0.0
  %1936 = vmatprep.subr.mxu0 0.0
  %1937 = vmatpush1.xpose.msra.mxu0 0.0
  %1938 = vmatprep.subr.mxu0 0.0
  %1939 = vmatpush1.xpose.msra.mxu0 0.0
  %1940 = vmatprep.subr.mxu0 0.0
  %1941 = vmatpush1.xpose.msra.mxu0 0.0
  %1942 = vmatprep.subr.mxu0 0.0
  %1943 = vmatpush1.xpose.msra.mxu0 0.0
  %1944 = vmatprep.subr.mxu0 0.0
  %1945 = vmatpush1.xpose.msra.mxu0 0.0
  %1946 = vmatprep.subr.mxu0 0.0
  %1947 = vmatpush1.xpose.msra.mxu0 0.0
  %1948 = vmatprep.subr.mxu0 0.0
  %1949 = vmatpush1.xpose.msra.mxu0 0.0
  %1950 = vmatprep.subr.mxu0 0.0
  %1951 = vmatpush1.xpose.msra.mxu0 0.0
  %1952 = vmatprep.subr.mxu0 0.0
  %1953 = vmatpush1.xpose.msra.mxu0 0.0
  %1954 = vmatprep.subr.mxu0 0.0
  %1955 = vmatpush1.xpose.msra.mxu0 0.0
  %1956 = vmatprep.subr.mxu0 0.0
  %1957 = vmatpush1.xpose.msra.mxu0 0.0
  %1958 = vmatprep.subr.mxu0 0.0
  %1959 = vmatpush1.xpose.msra.mxu0 0.0
  %1960 = vmatprep.subr.mxu0 0.0
  %1961 = vmatpush1.xpose.msra.mxu0 0.0
  %1962 = vmatprep.subr.mxu0 0.0
  %1963 = vmatpush1.xpose.msra.mxu0 0.0
  %1964 = vmatprep.subr.mxu0 0.0
  %1965 = vmatpush1.xpose.msra.mxu0 0.0
  %1966 = vmatprep.subr.mxu0 0.0
  %1967 = vmatpush1.xpose.msra.mxu0 0.0
  %1968 = vmatprep.subr.mxu0 0.0
  %1969 = vmatpush1.xpose.msra.mxu0 0.0
  %1970 = vmatprep.subr.mxu0 0.0
  %1971 = vmatpush1.xpose.msra.mxu0 0.0
  %1972 = vmatprep.subr.mxu0 0.0
  %1973 = vmatpush1.xpose.msra.mxu0 0.0
  %1974 = vmatprep.subr.mxu0 0.0
  %1975 = vmatpush1.xpose.msra.mxu0 0.0
  %1976 = vmatprep.subr.mxu0 0.0
  %1977 = vmatpush1.xpose.msra.mxu0 0.0
  %1978 = vmatprep.subr.mxu0 0.0
  %1979 = vmatpush1.xpose.msra.mxu0 0.0
  %1980 = vmatprep.subr.mxu0 0.0
  %1981 = vmatpush1.xpose.msra.mxu0 0.0
  %1982 = vmatprep.subr.mxu0 0.0
  %1983 = vmatpush1.xpose.msra.mxu0 0.0
  %1984 = vmatprep.subr.mxu0 0.0
  %1985 = vmatpush1.xpose.msra.mxu0 0.0
  %1986 = vmatprep.subr.mxu0 0.0
  %1987 = vmatpush1.xpose.msra.mxu0 0.0
  %1988 = vmatprep.subr.mxu0 0.0
  %1989 = vmatpush1.xpose.msra.mxu0 0.0
  %1990 = vmatprep.mubr.f32.mxu0 0.0
  %1991 = vmatmul.mubr.f32.gmra.mrb[0].mxu0 %v1920
  %v1992 = vpop.f32.mrb[0].mxu0
  %v1993 = vadd.f32 0.0, %v1992
  %v1994 = vpop.f32.mrb[0].mxu0
  %1995 = vmatprep.mubr.f32.mxu0 0.0
  %1996 = vmatmul.mubr.f32.gmra.mrb[0].mxu0 %v1922
  %v1997 = vpop.f32.mrb[0].mxu0
  %v1998 = vadd.f32 0.0, %v1997
  %v1999 = vpop.f32.mrb[0].mxu0
  %2000 = vdwg.mxu0
  %v2001 = vsel %vm331, %v1818, 0
  %v2003 = vsel %vm331, %v1820, 0
  %v2005 = vsel %vm331, %v1832, 0
  %2007 = vmatprep.subr.mxu0 0.0
  %2008 = vmatpush1.xpose.msra.mxu0 %v2005
  %2009 = vmatprep.subr.mxu0 0.0
  %2010 = vmatpush1.xpose.msra.mxu0 0.0
  %2011 = vmatprep.subr.mxu0 0.0
  %2012 = vmatpush1.xpose.msra.mxu0 0.0
  %2013 = vmatprep.subr.mxu0 0.0
  %2014 = vmatpush1.xpose.msra.mxu0 0.0
  %2015 = vmatprep.subr.mxu0 0.0
  %2016 = vmatpush1.xpose.msra.mxu0 0.0
  %2017 = vmatprep.subr.mxu0 0.0
  %2018 = vmatpush1.xpose.msra.mxu0 0.0
  %2019 = vmatprep.subr.mxu0 0.0
  %2020 = vmatpush1.xpose.msra.mxu0 0.0
  %2021 = vmatprep.subr.mxu0 0.0
  %2022 = vmatpush1.xpose.msra.mxu0 0.0
  %2023 = vmatprep.subr.mxu0 0.0
  %2024 = vmatpush1.xpose.msra.mxu0 0.0
  %2025 = vmatprep.subr.mxu0 0.0
  %2026 = vmatpush1.xpose.msra.mxu0 0.0
  %2027 = vmatprep.subr.mxu0 0.0
  %2028 = vmatpush1.xpose.msra.mxu0 0.0
  %2029 = vmatprep.subr.mxu0 0.0
  %2030 = vmatpush1.xpose.msra.mxu0 0.0
  %2031 = vmatprep.subr.mxu0 0.0
  %2032 = vmatpush1.xpose.msra.mxu0 0.0
  %2033 = vmatprep.subr.mxu0 0.0
  %2034 = vmatpush1.xpose.msra.mxu0 0.0
  %2035 = vmatprep.subr.mxu0 0.0
  %2036 = vmatpush1.xpose.msra.mxu0 0.0
  %2037 = vmatprep.subr.mxu0 0.0
  %2038 = vmatpush1.xpose.msra.mxu0 0.0
  %2039 = vmatprep.subr.mxu0 0.0
  %2040 = vmatpush1.xpose.msra.mxu0 0.0
  %2041 = vmatprep.subr.mxu0 0.0
  %2042 = vmatpush1.xpose.msra.mxu0 0.0
  %2043 = vmatprep.subr.mxu0 0.0
  %2044 = vmatpush1.xpose.msra.mxu0 0.0
  %2045 = vmatprep.subr.mxu0 0.0
  %2046 = vmatpush1.xpose.msra.mxu0 0.0
  %2047 = vmatprep.subr.mxu0 0.0
  %2048 = vmatpush1.xpose.msra.mxu0 0.0
  %2049 = vmatprep.subr.mxu0 0.0
  %2050 = vmatpush1.xpose.msra.mxu0 0.0
  %2051 = vmatprep.subr.mxu0 0.0
  %2052 = vmatpush1.xpose.msra.mxu0 0.0
  %2053 = vmatprep.subr.mxu0 0.0
  %2054 = vmatpush1.xpose.msra.mxu0 0.0
  %2055 = vmatprep.subr.mxu0 0.0
  %2056 = vmatpush1.xpose.msra.mxu0 0.0
  %2057 = vmatprep.subr.mxu0 0.0
  %2058 = vmatpush1.xpose.msra.mxu0 0.0
  %2059 = vmatprep.subr.mxu0 0.0
  %2060 = vmatpush1.xpose.msra.mxu0 0.0
  %2061 = vmatprep.subr.mxu0 0.0
  %2062 = vmatpush1.xpose.msra.mxu0 0.0
  %2063 = vmatprep.subr.mxu0 0.0
  %2064 = vmatpush1.xpose.msra.mxu0 0.0
  %2065 = vmatprep.subr.mxu0 0.0
  %2066 = vmatpush1.xpose.msra.mxu0 0.0
  %2067 = vmatprep.subr.mxu0 0.0
  %2068 = vmatpush1.xpose.msra.mxu0 0.0
  %2069 = vmatprep.subr.mxu0 0.0
  %2070 = vmatpush1.xpose.msra.mxu0 0.0
  %2071 = vmatprep.mubr.f32.mxu0 0.0
  %2072 = vmatmul.mubr.f32.gmra.mrb[0].mxu0 %v2001
  %v2073 = vpop.f32.mrb[0].mxu0
  %v2074 = vadd.f32 0.0, %v2073
  %v2075 = vpop.f32.mrb[0].mxu0
  %2076 = vmatprep.mubr.f32.mxu0 0.0
  %2077 = vmatmul.mubr.f32.gmra.mrb[0].mxu0 %v2003
  %v2078 = vpop.f32.mrb[0].mxu0
  %v2079 = vadd.f32 0.0, %v2078
  %v2080 = vpop.f32.mrb[0].mxu0
  %2081 = vdwg.mxu0
  %v2082 = vsel %vm331, %v1822, 0
  %v2084 = vsel %vm331, %v1824, 0
  %v2086 = vsel %vm331, %v1836, 0
  %2088 = vmatprep.subr.mxu0 0.0
  %2089 = vmatpush1.xpose.msra.mxu0 %v2086
  %2090 = vmatprep.subr.mxu0 0.0
  %2091 = vmatpush1.xpose.msra.mxu0 0.0
  %2092 = vmatprep.subr.mxu0 0.0
  %2093 = vmatpush1.xpose.msra.mxu0 0.0
  %2094 = vmatprep.subr.mxu0 0.0
  %2095 = vmatpush1.xpose.msra.mxu0 0.0
  %2096 = vmatprep.subr.mxu0 0.0
  %2097 = vmatpush1.xpose.msra.mxu0 0.0
  %2098 = vmatprep.subr.mxu0 0.0
  %2099 = vmatpush1.xpose.msra.mxu0 0.0
  %2100 = vmatprep.subr.mxu0 0.0
  %2101 = vmatpush1.xpose.msra.mxu0 0.0
  %2102 = vmatprep.subr.mxu0 0.0
  %2103 = vmatpush1.xpose.msra.mxu0 0.0
  %2104 = vmatprep.subr.mxu0 0.0
  %2105 = vmatpush1.xpose.msra.mxu0 0.0
  %2106 = vmatprep.subr.mxu0 0.0
  %2107 = vmatpush1.xpose.msra.mxu0 0.0
  %2108 = vmatprep.subr.mxu0 0.0
  %2109 = vmatpush1.xpose.msra.mxu0 0.0
  %2110 = vmatprep.subr.mxu0 0.0
  %2111 = vmatpush1.xpose.msra.mxu0 0.0
  %2112 = vmatprep.subr.mxu0 0.0
  %2113 = vmatpush1.xpose.msra.mxu0 0.0
  %2114 = vmatprep.subr.mxu0 0.0
  %2115 = vmatpush1.xpose.msra.mxu0 0.0
  %2116 = vmatprep.subr.mxu0 0.0
  %2117 = vmatpush1.xpose.msra.mxu0 0.0
  %2118 = vmatprep.subr.mxu0 0.0
  %2119 = vmatpush1.xpose.msra.mxu0 0.0
  %2120 = vmatprep.subr.mxu0 0.0
  %2121 = vmatpush1.xpose.msra.mxu0 0.0
  %2122 = vmatprep.subr.mxu0 0.0
  %2123 = vmatpush1.xpose.msra.mxu0 0.0
  %2124 = vmatprep.subr.mxu0 0.0
  %2125 = vmatpush1.xpose.msra.mxu0 0.0
  %2126 = vmatprep.subr.mxu0 0.0
  %2127 = vmatpush1.xpose.msra.mxu0 0.0
  %2128 = vmatprep.subr.mxu0 0.0
  %2129 = vmatpush1.xpose.msra.mxu0 0.0
  %2130 = vmatprep.subr.mxu0 0.0
  %2131 = vmatpush1.xpose.msra.mxu0 0.0
  %2132 = vmatprep.subr.mxu0 0.0
  %2133 = vmatpush1.xpose.msra.mxu0 0.0
  %2134 = vmatprep.subr.mxu0 0.0
  %2135 = vmatpush1.xpose.msra.mxu0 0.0
  %2136 = vmatprep.subr.mxu0 0.0
  %2137 = vmatpush1.xpose.msra.mxu0 0.0
  %2138 = vmatprep.subr.mxu0 0.0
  %2139 = vmatpush1.xpose.msra.mxu0 0.0
  %2140 = vmatprep.subr.mxu0 0.0
  %2141 = vmatpush1.xpose.msra.mxu0 0.0
  %2142 = vmatprep.subr.mxu0 0.0
  %2143 = vmatpush1.xpose.msra.mxu0 0.0
  %2144 = vmatprep.subr.mxu0 0.0
  %2145 = vmatpush1.xpose.msra.mxu0 0.0
  %2146 = vmatprep.subr.mxu0 0.0
  %2147 = vmatpush1.xpose.msra.mxu0 0.0
  %2148 = vmatprep.subr.mxu0 0.0
  %2149 = vmatpush1.xpose.msra.mxu0 0.0
  %2150 = vmatprep.subr.mxu0 0.0
  %2151 = vmatpush1.xpose.msra.mxu0 0.0
  %2152 = vmatprep.mubr.f32.mxu0 0.0
  %2153 = vmatmul.mubr.f32.gmra.mrb[0].mxu0 %v2082
  %v2154 = vpop.f32.mrb[0].mxu0
  %v2155 = vadd.f32 0.0, %v2154
  %v2156 = vpop.f32.mrb[0].mxu0
  %2157 = vmatprep.mubr.f32.mxu0 0.0
  %2158 = vmatmul.mubr.f32.gmra.mrb[0].mxu0 %v2084
  %v2159 = vpop.f32.mrb[0].mxu0
  %v2160 = vadd.f32 0.0, %v2159
  %v2161 = vpop.f32.mrb[0].mxu0
  %2162 = vdwg.mxu0
  %2163 = vrot.lane.b32.xlu0 %v180, 64
  %v2164 = vpop.permute.xlu0 %2163
  %2165 = vrot.lane.b32.xlu0 %v291, 64
  %v2166 = vpop.permute.xlu0 %2165
  %v2167 = vsel %vm331, %v2164, 0
  %v2169 = vsel %vm331, %v2166, 0
  %v2171 = vsel %vm331, %v293, 0
  %2173 = vmatprep.subr.mxu0 0.0
  %2174 = vmatpush1.xpose.msra.mxu0 %v2171
  %2175 = vmatprep.subr.mxu0 0.0
  %2176 = vmatpush1.xpose.msra.mxu0 0.0
  %2177 = vmatprep.subr.mxu0 0.0
  %2178 = vmatpush1.xpose.msra.mxu0 0.0
  %2179 = vmatprep.subr.mxu0 0.0
  %2180 = vmatpush1.xpose.msra.mxu0 0.0
  %2181 = vmatprep.subr.mxu0 0.0
  %2182 = vmatpush1.xpose.msra.mxu0 0.0
  %2183 = vmatprep.subr.mxu0 0.0
  %2184 = vmatpush1.xpose.msra.mxu0 0.0
  %2185 = vmatprep.subr.mxu0 0.0
  %2186 = vmatpush1.xpose.msra.mxu0 0.0
  %2187 = vmatprep.subr.mxu0 0.0
  %2188 = vmatpush1.xpose.msra.mxu0 0.0
  %2189 = vmatprep.subr.mxu0 0.0
  %2190 = vmatpush1.xpose.msra.mxu0 0.0
  %2191 = vmatprep.subr.mxu0 0.0
  %2192 = vmatpush1.xpose.msra.mxu0 0.0
  %2193 = vmatprep.subr.mxu0 0.0
  %2194 = vmatpush1.xpose.msra.mxu0 0.0
  %2195 = vmatprep.subr.mxu0 0.0
  %2196 = vmatpush1.xpose.msra.mxu0 0.0
  %2197 = vmatprep.subr.mxu0 0.0
  %2198 = vmatpush1.xpose.msra.mxu0 0.0
  %2199 = vmatprep.subr.mxu0 0.0
  %2200 = vmatpush1.xpose.msra.mxu0 0.0
  %2201 = vmatprep.subr.mxu0 0.0
  %2202 = vmatpush1.xpose.msra.mxu0 0.0
  %2203 = vmatprep.subr.mxu0 0.0
  %2204 = vmatpush1.xpose.msra.mxu0 0.0
  %2205 = vmatprep.subr.mxu0 0.0
  %2206 = vmatpush1.xpose.msra.mxu0 0.0
  %2207 = vmatprep.subr.mxu0 0.0
  %2208 = vmatpush1.xpose.msra.mxu0 0.0
  %2209 = vmatprep.subr.mxu0 0.0
  %2210 = vmatpush1.xpose.msra.mxu0 0.0
  %2211 = vmatprep.subr.mxu0 0.0
  %2212 = vmatpush1.xpose.msra.mxu0 0.0
  %2213 = vmatprep.subr.mxu0 0.0
  %2214 = vmatpush1.xpose.msra.mxu0 0.0
  %2215 = vmatprep.subr.mxu0 0.0
  %2216 = vmatpush1.xpose.msra.mxu0 0.0
  %2217 = vmatprep.subr.mxu0 0.0
  %2218 = vmatpush1.xpose.msra.mxu0 0.0
  %2219 = vmatprep.subr.mxu0 0.0
  %2220 = vmatpush1.xpose.msra.mxu0 0.0
  %2221 = vmatprep.subr.mxu0 0.0
  %2222 = vmatpush1.xpose.msra.mxu0 0.0
  %2223 = vmatprep.subr.mxu0 0.0
  %2224 = vmatpush1.xpose.msra.mxu0 0.0
  %2225 = vmatprep.subr.mxu0 0.0
  %2226 = vmatpush1.xpose.msra.mxu0 0.0
  %2227 = vmatprep.subr.mxu0 0.0
  %2228 = vmatpush1.xpose.msra.mxu0 0.0
  %2229 = vmatprep.subr.mxu0 0.0
  %2230 = vmatpush1.xpose.msra.mxu0 0.0
  %2231 = vmatprep.subr.mxu0 0.0
  %2232 = vmatpush1.xpose.msra.mxu0 0.0
  %2233 = vmatprep.subr.mxu0 0.0
  %2234 = vmatpush1.xpose.msra.mxu0 0.0
  %2235 = vmatprep.subr.mxu0 0.0
  %2236 = vmatpush1.xpose.msra.mxu0 0.0
  %2237 = vmatprep.mubr.f32.mxu0 0.0
  %2238 = vmatmul.mubr.f32.gmra.mrb[0].mxu0 %v2167
  %v2239 = vpop.f32.mrb[0].mxu0
  %v2240 = vadd.f32 0.0, %v2239
  %v2241 = vpop.f32.mrb[0].mxu0
  %2242 = vmatprep.mubr.f32.mxu0 0.0
  %2243 = vmatmul.mubr.f32.gmra.mrb[0].mxu0 %v2169
  %v2244 = vpop.f32.mrb[0].mxu0
  %v2245 = vadd.f32 0.0, %v2244
  %v2246 = vpop.f32.mrb[0].mxu0
  %2247 = vdwg.mxu0
  %2248 = vrot.lane.b32.xlu0 %v1814, 64
  %v2249 = vpop.permute.xlu0 %2248
  %2250 = vrot.lane.b32.xlu0 %v1816, 64
  %v2251 = vpop.permute.xlu0 %2250
  %v2252 = vsel %vm331, %v2249, 0
  %v2254 = vsel %vm331, %v2251, 0
  %v2256 = vsel %vm331, %v1830, 0
  %2258 = vmatprep.subr.mxu0 0.0
  %2259 = vmatpush1.xpose.msra.mxu0 %v2256
  %2260 = vmatprep.subr.mxu0 0.0
  %2261 = vmatpush1.xpose.msra.mxu0 0.0
  %2262 = vmatprep.subr.mxu0 0.0
  %2263 = vmatpush1.xpose.msra.mxu0 0.0
  %2264 = vmatprep.subr.mxu0 0.0
  %2265 = vmatpush1.xpose.msra.mxu0 0.0
  %2266 = vmatprep.subr.mxu0 0.0
  %2267 = vmatpush1.xpose.msra.mxu0 0.0
  %2268 = vmatprep.subr.mxu0 0.0
  %2269 = vmatpush1.xpose.msra.mxu0 0.0
  %2270 = vmatprep.subr.mxu0 0.0
  %2271 = vmatpush1.xpose.msra.mxu0 0.0
  %2272 = vmatprep.subr.mxu0 0.0
  %2273 = vmatpush1.xpose.msra.mxu0 0.0
  %2274 = vmatprep.subr.mxu0 0.0
  %2275 = vmatpush1.xpose.msra.mxu0 0.0
  %2276 = vmatprep.subr.mxu0 0.0
  %2277 = vmatpush1.xpose.msra.mxu0 0.0
  %2278 = vmatprep.subr.mxu0 0.0
  %2279 = vmatpush1.xpose.msra.mxu0 0.0
  %2280 = vmatprep.subr.mxu0 0.0
  %2281 = vmatpush1.xpose.msra.mxu0 0.0
  %2282 = vmatprep.subr.mxu0 0.0
  %2283 = vmatpush1.xpose.msra.mxu0 0.0
  %2284 = vmatprep.subr.mxu0 0.0
  %2285 = vmatpush1.xpose.msra.mxu0 0.0
  %2286 = vmatprep.subr.mxu0 0.0
  %2287 = vmatpush1.xpose.msra.mxu0 0.0
  %2288 = vmatprep.subr.mxu0 0.0
  %2289 = vmatpush1.xpose.msra.mxu0 0.0
  %2290 = vmatprep.subr.mxu0 0.0
  %2291 = vmatpush1.xpose.msra.mxu0 0.0
  %2292 = vmatprep.subr.mxu0 0.0
  %2293 = vmatpush1.xpose.msra.mxu0 0.0
  %2294 = vmatprep.subr.mxu0 0.0
  %2295 = vmatpush1.xpose.msra.mxu0 0.0
  %2296 = vmatprep.subr.mxu0 0.0
  %2297 = vmatpush1.xpose.msra.mxu0 0.0
  %2298 = vmatprep.subr.mxu0 0.0
  %2299 = vmatpush1.xpose.msra.mxu0 0.0
  %2300 = vmatprep.subr.mxu0 0.0
  %2301 = vmatpush1.xpose.msra.mxu0 0.0
  %2302 = vmatprep.subr.mxu0 0.0
  %2303 = vmatpush1.xpose.msra.mxu0 0.0
  %2304 = vmatprep.subr.mxu0 0.0
  %2305 = vmatpush1.xpose.msra.mxu0 0.0
  %2306 = vmatprep.subr.mxu0 0.0
  %2307 = vmatpush1.xpose.msra.mxu0 0.0
  %2308 = vmatprep.subr.mxu0 0.0
  %2309 = vmatpush1.xpose.msra.mxu0 0.0
  %2310 = vmatprep.subr.mxu0 0.0
  %2311 = vmatpush1.xpose.msra.mxu0 0.0
  %2312 = vmatprep.subr.mxu0 0.0
  %2313 = vmatpush1.xpose.msra.mxu0 0.0
  %2314 = vmatprep.subr.mxu0 0.0
  %2315 = vmatpush1.xpose.msra.mxu0 0.0
  %2316 = vmatprep.subr.mxu0 0.0
  %2317 = vmatpush1.xpose.msra.mxu0 0.0
  %2318 = vmatprep.subr.mxu0 0.0
  %2319 = vmatpush1.xpose.msra.mxu0 0.0
  %2320 = vmatprep.subr.mxu0 0.0
  %2321 = vmatpush1.xpose.msra.mxu0 0.0
  %2322 = vmatprep.mubr.f32.mxu0 0.0
  %2323 = vmatmul.mubr.f32.gmra.mrb[0].mxu0 %v2252
  %v2324 = vpop.f32.mrb[0].mxu0
  %v2325 = vadd.f32 0.0, %v2324
  %v2326 = vpop.f32.mrb[0].mxu0
  %2327 = vmatprep.mubr.f32.mxu0 0.0
  %2328 = vmatmul.mubr.f32.gmra.mrb[0].mxu0 %v2254
  %v2329 = vpop.f32.mrb[0].mxu0
  %v2330 = vadd.f32 0.0, %v2329
  %v2331 = vpop.f32.mrb[0].mxu0
  %2332 = vdwg.mxu0
  %2333 = vrot.lane.b32.xlu0 %v1818, 64
  %v2334 = vpop.permute.xlu0 %2333
  %2335 = vrot.lane.b32.xlu0 %v1820, 64
  %v2336 = vpop.permute.xlu0 %2335
  %v2337 = vsel %vm331, %v2334, 0
  %v2339 = vsel %vm331, %v2336, 0
  %v2341 = vsel %vm331, %v1834, 0
  %2343 = vmatprep.subr.mxu0 0.0
  %2344 = vmatpush1.xpose.msra.mxu0 %v2341
  %2345 = vmatprep.subr.mxu0 0.0
  %2346 = vmatpush1.xpose.msra.mxu0 0.0
  %2347 = vmatprep.subr.mxu0 0.0
  %2348 = vmatpush1.xpose.msra.mxu0 0.0
  %2349 = vmatprep.subr.mxu0 0.0
  %2350 = vmatpush1.xpose.msra.mxu0 0.0
  %2351 = vmatprep.subr.mxu0 0.0
  %2352 = vmatpush1.xpose.msra.mxu0 0.0
  %2353 = vmatprep.subr.mxu0 0.0
  %2354 = vmatpush1.xpose.msra.mxu0 0.0
  %2355 = vmatprep.subr.mxu0 0.0
  %2356 = vmatpush1.xpose.msra.mxu0 0.0
  %2357 = vmatprep.subr.mxu0 0.0
  %2358 = vmatpush1.xpose.msra.mxu0 0.0
  %2359 = vmatprep.subr.mxu0 0.0
  %2360 = vmatpush1.xpose.msra.mxu0 0.0
  %2361 = vmatprep.subr.mxu0 0.0
  %2362 = vmatpush1.xpose.msra.mxu0 0.0
  %2363 = vmatprep.subr.mxu0 0.0
  %2364 = vmatpush1.xpose.msra.mxu0 0.0
  %2365 = vmatprep.subr.mxu0 0.0
  %2366 = vmatpush1.xpose.msra.mxu0 0.0
  %2367 = vmatprep.subr.mxu0 0.0
  %2368 = vmatpush1.xpose.msra.mxu0 0.0
  %2369 = vmatprep.subr.mxu0 0.0
  %2370 = vmatpush1.xpose.msra.mxu0 0.0
  %2371 = vmatprep.subr.mxu0 0.0
  %2372 = vmatpush1.xpose.msra.mxu0 0.0
  %2373 = vmatprep.subr.mxu0 0.0
  %2374 = vmatpush1.xpose.msra.mxu0 0.0
  %2375 = vmatprep.subr.mxu0 0.0
  %2376 = vmatpush1.xpose.msra.mxu0 0.0
  %2377 = vmatprep.subr.mxu0 0.0
  %2378 = vmatpush1.xpose.msra.mxu0 0.0
  %2379 = vmatprep.subr.mxu0 0.0
  %2380 = vmatpush1.xpose.msra.mxu0 0.0
  %2381 = vmatprep.subr.mxu0 0.0
  %2382 = vmatpush1.xpose.msra.mxu0 0.0
  %2383 = vmatprep.subr.mxu0 0.0
  %2384 = vmatpush1.xpose.msra.mxu0 0.0
  %2385 = vmatprep.subr.mxu0 0.0
  %2386 = vmatpush1.xpose.msra.mxu0 0.0
  %2387 = vmatprep.subr.mxu0 0.0
  %2388 = vmatpush1.xpose.msra.mxu0 0.0
  %2389 = vmatprep.subr.mxu0 0.0
  %2390 = vmatpush1.xpose.msra.mxu0 0.0
  %2391 = vmatprep.subr.mxu0 0.0
  %2392 = vmatpush1.xpose.msra.mxu0 0.0
  %2393 = vmatprep.subr.mxu0 0.0
  %2394 = vmatpush1.xpose.msra.mxu0 0.0
  %2395 = vmatprep.subr.mxu0 0.0
  %2396 = vmatpush1.xpose.msra.mxu0 0.0
  %2397 = vmatprep.subr.mxu0 0.0
  %2398 = vmatpush1.xpose.msra.mxu0 0.0
  %2399 = vmatprep.subr.mxu0 0.0
  %2400 = vmatpush1.xpose.msra.mxu0 0.0
  %2401 = vmatprep.subr.mxu0 0.0
  %2402 = vmatpush1.xpose.msra.mxu0 0.0
  %2403 = vmatprep.subr.mxu0 0.0
  %2404 = vmatpush1.xpose.msra.mxu0 0.0
  %2405 = vmatprep.subr.mxu0 0.0
  %2406 = vmatpush1.xpose.msra.mxu0 0.0
  %2407 = vmatprep.mubr.f32.mxu0 0.0
  %2408 = vmatmul.mubr.f32.gmra.mrb[0].mxu0 %v2337
  %v2409 = vpop.f32.mrb[0].mxu0
  %v2410 = vadd.f32 0.0, %v2409
  %v2411 = vpop.f32.mrb[0].mxu0
  %2412 = vmatprep.mubr.f32.mxu0 0.0
  %2413 = vmatmul.mubr.f32.gmra.mrb[0].mxu0 %v2339
  %v2414 = vpop.f32.mrb[0].mxu0
  %v2415 = vadd.f32 0.0, %v2414
  %v2416 = vpop.f32.mrb[0].mxu0
  %2417 = vdwg.mxu0
  %2418 = vrot.lane.b32.xlu0 %v1822, 64
  %v2419 = vpop.permute.xlu0 %2418
  %2420 = vrot.lane.b32.xlu0 %v1824, 64
  %v2421 = vpop.permute.xlu0 %2420
  %v2422 = vsel %vm331, %v2419, 0
  %v2424 = vsel %vm331, %v2421, 0
  %v2426 = vsel %vm331, %v1838, 0
  %2428 = vmatprep.subr.mxu0 0.0
  %2429 = vmatpush1.xpose.msra.mxu0 %v2426
  %2430 = vmatprep.subr.mxu0 0.0
  %2431 = vmatpush1.xpose.msra.mxu0 0.0
  %2432 = vmatprep.subr.mxu0 0.0
  %2433 = vmatpush1.xpose.msra.mxu0 0.0
  %2434 = vmatprep.subr.mxu0 0.0
  %2435 = vmatpush1.xpose.msra.mxu0 0.0
  %2436 = vmatprep.subr.mxu0 0.0
  %2437 = vmatpush1.xpose.msra.mxu0 0.0
  %2438 = vmatprep.subr.mxu0 0.0
  %2439 = vmatpush1.xpose.msra.mxu0 0.0
  %2440 = vmatprep.subr.mxu0 0.0
  %2441 = vmatpush1.xpose.msra.mxu0 0.0
  %2442 = vmatprep.subr.mxu0 0.0
  %2443 = vmatpush1.xpose.msra.mxu0 0.0
  %2444 = vmatprep.subr.mxu0 0.0
  %2445 = vmatpush1.xpose.msra.mxu0 0.0
  %2446 = vmatprep.subr.mxu0 0.0
  %2447 = vmatpush1.xpose.msra.mxu0 0.0
  %2448 = vmatprep.subr.mxu0 0.0
  %2449 = vmatpush1.xpose.msra.mxu0 0.0
  %2450 = vmatprep.subr.mxu0 0.0
  %2451 = vmatpush1.xpose.msra.mxu0 0.0
  %2452 = vmatprep.subr.mxu0 0.0
  %2453 = vmatpush1.xpose.msra.mxu0 0.0
  %2454 = vmatprep.subr.mxu0 0.0
  %2455 = vmatpush1.xpose.msra.mxu0 0.0
  %2456 = vmatprep.subr.mxu0 0.0
  %2457 = vmatpush1.xpose.msra.mxu0 0.0
  %2458 = vmatprep.subr.mxu0 0.0
  %2459 = vmatpush1.xpose.msra.mxu0 0.0
  %2460 = vmatprep.subr.mxu0 0.0
  %2461 = vmatpush1.xpose.msra.mxu0 0.0
  %2462 = vmatprep.subr.mxu0 0.0
  %2463 = vmatpush1.xpose.msra.mxu0 0.0
  %2464 = vmatprep.subr.mxu0 0.0
  %2465 = vmatpush1.xpose.msra.mxu0 0.0
  %2466 = vmatprep.subr.mxu0 0.0
  %2467 = vmatpush1.xpose.msra.mxu0 0.0
  %2468 = vmatprep.subr.mxu0 0.0
  %2469 = vmatpush1.xpose.msra.mxu0 0.0
  %2470 = vmatprep.subr.mxu0 0.0
  %2471 = vmatpush1.xpose.msra.mxu0 0.0
  %2472 = vmatprep.subr.mxu0 0.0
  %2473 = vmatpush1.xpose.msra.mxu0 0.0
  %2474 = vmatprep.subr.mxu0 0.0
  %2475 = vmatpush1.xpose.msra.mxu0 0.0
  %2476 = vmatprep.subr.mxu0 0.0
  %2477 = vmatpush1.xpose.msra.mxu0 0.0
  %2478 = vmatprep.subr.mxu0 0.0
  %2479 = vmatpush1.xpose.msra.mxu0 0.0
  %2480 = vmatprep.subr.mxu0 0.0
  %2481 = vmatpush1.xpose.msra.mxu0 0.0
  %2482 = vmatprep.subr.mxu0 0.0
  %2483 = vmatpush1.xpose.msra.mxu0 0.0
  %2484 = vmatprep.subr.mxu0 0.0
  %2485 = vmatpush1.xpose.msra.mxu0 0.0
  %2486 = vmatprep.subr.mxu0 0.0
  %2487 = vmatpush1.xpose.msra.mxu0 0.0
  %2488 = vmatprep.subr.mxu0 0.0
  %2489 = vmatpush1.xpose.msra.mxu0 0.0
  %2490 = vmatprep.subr.mxu0 0.0
  %2491 = vmatpush1.xpose.msra.mxu0 0.0
  %2492 = vmatprep.mubr.f32.mxu0 0.0
  %2493 = vmatmul.mubr.f32.gmra.mrb[0].mxu0 %v2422
  %v2494 = vpop.f32.mrb[0].mxu0
  %v2495 = vadd.f32 0.0, %v2494
  %v2496 = vpop.f32.mrb[0].mxu0
  %2497 = vmatprep.mubr.f32.mxu0 0.0
  %2498 = vmatmul.mubr.f32.gmra.mrb[0].mxu0 %v2424
  %v2499 = vpop.f32.mrb[0].mxu0
  %v2500 = vadd.f32 0.0, %v2499
  %v2501 = vpop.f32.mrb[0].mxu0
  %2502 = vdwg.mxu0
  %2511 = vrot.lane.b32.xlu0 %v2240, 8
  %v2512 = vpop.permute.xlu0 %2511
  %2513 = vrot.lane.b32.xlu0 %v2245, 8
  %v2514 = vpop.permute.xlu0 %2513
  %2515 = vrot.lane.b32.xlu0 %v2325, 8
  %v2516 = vpop.permute.xlu0 %2515
  %2517 = vrot.lane.b32.xlu0 %v2330, 8
  %v2518 = vpop.permute.xlu0 %2517
  %2519 = vrot.lane.b32.xlu0 %v2410, 8
  %v2520 = vpop.permute.xlu0 %2519
  %2521 = vrot.lane.b32.xlu0 %v2415, 8
  %v2522 = vpop.permute.xlu0 %2521
  %2523 = vrot.lane.b32.xlu0 %v2495, 8
  %v2524 = vpop.permute.xlu0 %2523
  %2525 = vrot.lane.b32.xlu0 %v2500, 8
  %v2526 = vpop.permute.xlu0 %2525
  %v2535 = vsel %vm1028, %v1912, %v2512
  %v2536 = vsel %vm1028, %v1917, %v2514
  %v2537 = vsel %vm1028, %v1993, %v2516
  %v2538 = vsel %vm1028, %v1998, %v2518
  %v2539 = vsel %vm1028, %v2074, %v2520
  %v2540 = vsel %vm1028, %v2079, %v2522
  %v2541 = vsel %vm1028, %v2155, %v2524
  %v2542 = vsel %vm1028, %v2160, %v2526
  %v2543 = vadd.f32 %v2535, %v70
  %v2544 = vadd.f32 %v2536, %v70
  %v2545 = vadd.f32 %v2537, %v70
  %v2546 = vadd.f32 %v2538, %v70
  %v2547 = vadd.f32 %v2539, %v70
  %v2548 = vadd.f32 %v2540, %v70
  %v2549 = vadd.f32 %v2541, %v70
  %v2550 = vadd.f32 %v2542, %v70
  %v2551 = vsel %vm331, %v2543, -inf
  %2552 = vmax.xlane.f32.xlu0 %v2551
  %v2553 = vpop.xlane.xlu0 %2552
  %v2554 = vsel %vm331, %v2544, -inf
  %2555 = vmax.xlane.f32.xlu0 %v2554
  %v2556 = vpop.xlane.xlu0 %2555
  %v2557 = vsel %vm331, %v2545, -inf
  %2558 = vmax.xlane.f32.xlu0 %v2557
  %v2559 = vpop.xlane.xlu0 %2558
  %v2560 = vsel %vm331, %v2546, -inf
  %2561 = vmax.xlane.f32.xlu0 %v2560
  %v2562 = vpop.xlane.xlu0 %2561
  %v2563 = vsel %vm331, %v2547, -inf
  %2564 = vmax.xlane.f32.xlu0 %v2563
  %v2565 = vpop.xlane.xlu0 %2564
  %v2566 = vsel %vm331, %v2548, -inf
  %2567 = vmax.xlane.f32.xlu0 %v2566
  %v2568 = vpop.xlane.xlu0 %2567
  %v2569 = vsel %vm331, %v2549, -inf
  %2570 = vmax.xlane.f32.xlu0 %v2569
  %v2571 = vpop.xlane.xlu0 %2570
  %v2572 = vsel %vm331, %v2550, -inf
  %2573 = vmax.xlane.f32.xlu0 %v2572
  %v2574 = vpop.xlane.xlu0 %2573
  %v2575 = vsub.f32 %v2543, %v2553
  %v2576 = vsub.f32 %v2544, %v2556
  %v2577 = vsub.f32 %v2545, %v2559
  %v2578 = vsub.f32 %v2546, %v2562
  %v2579 = vsub.f32 %v2547, %v2565
  %v2580 = vsub.f32 %v2548, %v2568
  %v2581 = vsub.f32 %v2549, %v2571
  %v2582 = vsub.f32 %v2550, %v2574
  %v2583 = vmul.f32 %v2575, 1.442695
  %v2584 = vpow.pop %v2583
  %v2585 = vmul.f32 %v2576, 1.442695
  %v2586 = vpow.pop %v2585
  %v2587 = vmul.f32 %v2577, 1.442695
  %v2588 = vpow.pop %v2587
  %v2589 = vmul.f32 %v2578, 1.442695
  %v2590 = vpow.pop %v2589
  %v2591 = vmul.f32 %v2579, 1.442695
  %v2592 = vpow.pop %v2591
  %v2593 = vmul.f32 %v2580, 1.442695
  %v2594 = vpow.pop %v2593
  %v2595 = vmul.f32 %v2581, 1.442695
  %v2596 = vpow.pop %v2595
  %v2597 = vmul.f32 %v2582, 1.442695
  %v2598 = vpow.pop %v2597
  %v2599 = vsel %vm331, %v2584, 0.0
  %2600 = vadd.xlane.f32.xlu0 %v2599
  %v2601 = vpop.xlane.xlu0 %2600
  %v2602 = vsel %vm331, %v2586, 0.0
  %2603 = vadd.xlane.f32.xlu0 %v2602
  %v2604 = vpop.xlane.xlu0 %2603
  %v2605 = vsel %vm331, %v2588, 0.0
  %2606 = vadd.xlane.f32.xlu0 %v2605
  %v2607 = vpop.xlane.xlu0 %2606
  %v2608 = vsel %vm331, %v2590, 0.0
  %2609 = vadd.xlane.f32.xlu0 %v2608
  %v2610 = vpop.xlane.xlu0 %2609
  %v2611 = vsel %vm331, %v2592, 0.0
  %2612 = vadd.xlane.f32.xlu0 %v2611
  %v2613 = vpop.xlane.xlu0 %2612
  %v2614 = vsel %vm331, %v2594, 0.0
  %2615 = vadd.xlane.f32.xlu0 %v2614
  %v2616 = vpop.xlane.xlu0 %2615
  %v2617 = vsel %vm331, %v2596, 0.0
  %2618 = vadd.xlane.f32.xlu0 %v2617
  %v2619 = vpop.xlane.xlu0 %2618
  %v2620 = vsel %vm331, %v2598, 0.0
  %2621 = vadd.xlane.f32.xlu0 %v2620
  %v2622 = vpop.xlane.xlu0 %2621
  %v2623 = vrcp.pop %v2601
  %v2624 = vrcp.pop %v2604
  %v2625 = vrcp.pop %v2607
  %v2626 = vrcp.pop %v2610
  %v2627 = vrcp.pop %v2613
  %v2628 = vrcp.pop %v2616
  %v2629 = vrcp.pop %v2619
  %v2630 = vrcp.pop %v2622
  %v2631 = vmul.f32 %v2584, %v2623
  %v2632 = vmul.f32 %v2586, %v2624
  %v2633 = vmul.f32 %v2588, %v2625
  %v2634 = vmul.f32 %v2590, %v2626
  %v2635 = vmul.f32 %v2592, %v2627
  %v2636 = vmul.f32 %v2594, %v2628
  %v2637 = vmul.f32 %v2596, %v2629
  %v2638 = vmul.f32 %v2598, %v2630
  %2639 = vrot.lane.b32.xlu0 %v182, 64
  %v2640 = vpop.permute.xlu0 %2639
  %2641 = vrot.lane.b32.xlu0 %v293, 64
  %v2642 = vpop.permute.xlu0 %2641
  %v2646 = vsel %vm331, %v2631, 0
  %v2649 = vsel %vm331, %v2632, 0
  %2651 = vmatprep.subr.mxu0 0.0
  %2652 = vmatpush1.msra.mxu0 %v2640
  %2653 = vmatprep.subr.mxu0 0.0
  %2654 = vmatpush1.msra.mxu0 %v2642
  %2655 = vmatprep.subr.mxu0 0.0
  %2656 = vmatpush1.msra.mxu0 0.0
  %2657 = vmatprep.subr.mxu0 0.0
  %2658 = vmatpush1.msra.mxu0 0.0
  %2659 = vmatprep.subr.mxu0 0.0
  %2660 = vmatpush1.msra.mxu0 0.0
  %2661 = vmatprep.subr.mxu0 0.0
  %2662 = vmatpush1.msra.mxu0 0.0
  %2663 = vmatprep.subr.mxu0 0.0
  %2664 = vmatpush1.msra.mxu0 0.0
  %2665 = vmatprep.subr.mxu0 0.0
  %2666 = vmatpush1.msra.mxu0 0.0
  %2667 = vmatprep.subr.mxu0 0.0
  %2668 = vmatpush1.msra.mxu0 0.0
  %2669 = vmatprep.subr.mxu0 0.0
  %2670 = vmatpush1.msra.mxu0 0.0
  %2671 = vmatprep.subr.mxu0 0.0
  %2672 = vmatpush1.msra.mxu0 0.0
  %2673 = vmatprep.subr.mxu0 0.0
  %2674 = vmatpush1.msra.mxu0 0.0
  %2675 = vmatprep.subr.mxu0 0.0
  %2676 = vmatpush1.msra.mxu0 0.0
  %2677 = vmatprep.subr.mxu0 0.0
  %2678 = vmatpush1.msra.mxu0 0.0
  %2679 = vmatprep.subr.mxu0 0.0
  %2680 = vmatpush1.msra.mxu0 0.0
  %2681 = vmatprep.subr.mxu0 0.0
  %2682 = vmatpush1.msra.mxu0 0.0
  %2683 = vmatprep.subr.mxu0 0.0
  %2684 = vmatpush1.msra.mxu0 0.0
  %2685 = vmatprep.subr.mxu0 0.0
  %2686 = vmatpush1.msra.mxu0 0.0
  %2687 = vmatprep.subr.mxu0 0.0
  %2688 = vmatpush1.msra.mxu0 0.0
  %2689 = vmatprep.subr.mxu0 0.0
  %2690 = vmatpush1.msra.mxu0 0.0
  %2691 = vmatprep.subr.mxu0 0.0
  %2692 = vmatpush1.msra.mxu0 0.0
  %2693 = vmatprep.subr.mxu0 0.0
  %2694 = vmatpush1.msra.mxu0 0.0
  %2695 = vmatprep.subr.mxu0 0.0
  %2696 = vmatpush1.msra.mxu0 0.0
  %2697 = vmatprep.subr.mxu0 0.0
  %2698 = vmatpush1.msra.mxu0 0.0
  %2699 = vmatprep.subr.mxu0 0.0
  %2700 = vmatpush1.msra.mxu0 0.0
  %2701 = vmatprep.subr.mxu0 0.0
  %2702 = vmatpush1.msra.mxu0 0.0
  %2703 = vmatprep.subr.mxu0 0.0
  %2704 = vmatpush1.msra.mxu0 0.0
  %2705 = vmatprep.subr.mxu0 0.0
  %2706 = vmatpush1.msra.mxu0 0.0
  %2707 = vmatprep.subr.mxu0 0.0
  %2708 = vmatpush1.msra.mxu0 0.0
  %2709 = vmatprep.subr.mxu0 0.0
  %2710 = vmatpush1.msra.mxu0 0.0
  %2711 = vmatprep.subr.mxu0 0.0
  %2712 = vmatpush1.msra.mxu0 0.0
  %2713 = vmatprep.subr.mxu0 0.0
  %2714 = vmatpush1.msra.mxu0 0.0
  %2715 = vmatprep.mubr.f32.mxu0 0.0
  %2716 = vmatmul.mubr.f32.gmra.mrb[0].mxu0 %v2646
  %v2717 = vpop.f32.mrb[0].mxu0
  %v2718 = vadd.f32 0.0, %v2717
  %v2719 = vpop.f32.mrb[0].mxu0
  %2720 = vmatprep.mubr.f32.mxu0 0.0
  %2721 = vmatmul.mubr.f32.gmra.mrb[0].mxu0 %v2649
  %v2722 = vpop.f32.mrb[0].mxu0
  %v2723 = vadd.f32 0.0, %v2722
  %v2724 = vpop.f32.mrb[0].mxu0
  %2725 = vdwg.mxu0
  %2726 = vrot.lane.b32.xlu0 %v1828, 64
  %v2727 = vpop.permute.xlu0 %2726
  %2728 = vrot.lane.b32.xlu0 %v1830, 64
  %v2729 = vpop.permute.xlu0 %2728
  %v2733 = vsel %vm331, %v2633, 0
  %v2736 = vsel %vm331, %v2634, 0
  %2738 = vmatprep.subr.mxu0 0.0
  %2739 = vmatpush1.msra.mxu0 %v2727
  %2740 = vmatprep.subr.mxu0 0.0
  %2741 = vmatpush1.msra.mxu0 %v2729
  %2742 = vmatprep.subr.mxu0 0.0
  %2743 = vmatpush1.msra.mxu0 0.0
  %2744 = vmatprep.subr.mxu0 0.0
  %2745 = vmatpush1.msra.mxu0 0.0
  %2746 = vmatprep.subr.mxu0 0.0
  %2747 = vmatpush1.msra.mxu0 0.0
  %2748 = vmatprep.subr.mxu0 0.0
  %2749 = vmatpush1.msra.mxu0 0.0
  %2750 = vmatprep.subr.mxu0 0.0
  %2751 = vmatpush1.msra.mxu0 0.0
  %2752 = vmatprep.subr.mxu0 0.0
  %2753 = vmatpush1.msra.mxu0 0.0
  %2754 = vmatprep.subr.mxu0 0.0
  %2755 = vmatpush1.msra.mxu0 0.0
  %2756 = vmatprep.subr.mxu0 0.0
  %2757 = vmatpush1.msra.mxu0 0.0
  %2758 = vmatprep.subr.mxu0 0.0
  %2759 = vmatpush1.msra.mxu0 0.0
  %2760 = vmatprep.subr.mxu0 0.0
  %2761 = vmatpush1.msra.mxu0 0.0
  %2762 = vmatprep.subr.mxu0 0.0
  %2763 = vmatpush1.msra.mxu0 0.0
  %2764 = vmatprep.subr.mxu0 0.0
  %2765 = vmatpush1.msra.mxu0 0.0
  %2766 = vmatprep.subr.mxu0 0.0
  %2767 = vmatpush1.msra.mxu0 0.0
  %2768 = vmatprep.subr.mxu0 0.0
  %2769 = vmatpush1.msra.mxu0 0.0
  %2770 = vmatprep.subr.mxu0 0.0
  %2771 = vmatpush1.msra.mxu0 0.0
  %2772 = vmatprep.subr.mxu0 0.0
  %2773 = vmatpush1.msra.mxu0 0.0
  %2774 = vmatprep.subr.mxu0 0.0
  %2775 = vmatpush1.msra.mxu0 0.0
  %2776 = vmatprep.subr.mxu0 0.0
  %2777 = vmatpush1.msra.mxu0 0.0
  %2778 = vmatprep.subr.mxu0 0.0
  %2779 = vmatpush1.msra.mxu0 0.0
  %2780 = vmatprep.subr.mxu0 0.0
  %2781 = vmatpush1.msra.mxu0 0.0
  %2782 = vmatprep.subr.mxu0 0.0
  %2783 = vmatpush1.msra.mxu0 0.0
  %2784 = vmatprep.subr.mxu0 0.0
  %2785 = vmatpush1.msra.mxu0 0.0
  %2786 = vmatprep.subr.mxu0 0.0
  %2787 = vmatpush1.msra.mxu0 0.0
  %2788 = vmatprep.subr.mxu0 0.0
  %2789 = vmatpush1.msra.mxu0 0.0
  %2790 = vmatprep.subr.mxu0 0.0
  %2791 = vmatpush1.msra.mxu0 0.0
  %2792 = vmatprep.subr.mxu0 0.0
  %2793 = vmatpush1.msra.mxu0 0.0
  %2794 = vmatprep.subr.mxu0 0.0
  %2795 = vmatpush1.msra.mxu0 0.0
  %2796 = vmatprep.subr.mxu0 0.0
  %2797 = vmatpush1.msra.mxu0 0.0
  %2798 = vmatprep.subr.mxu0 0.0
  %2799 = vmatpush1.msra.mxu0 0.0
  %2800 = vmatprep.subr.mxu0 0.0
  %2801 = vmatpush1.msra.mxu0 0.0
  %2802 = vmatprep.mubr.f32.mxu0 0.0
  %2803 = vmatmul.mubr.f32.gmra.mrb[0].mxu0 %v2733
  %v2804 = vpop.f32.mrb[0].mxu0
  %v2805 = vadd.f32 0.0, %v2804
  %v2806 = vpop.f32.mrb[0].mxu0
  %2807 = vmatprep.mubr.f32.mxu0 0.0
  %2808 = vmatmul.mubr.f32.gmra.mrb[0].mxu0 %v2736
  %v2809 = vpop.f32.mrb[0].mxu0
  %v2810 = vadd.f32 0.0, %v2809
  %v2811 = vpop.f32.mrb[0].mxu0
  %2812 = vdwg.mxu0
  %2813 = vrot.lane.b32.xlu0 %v1832, 64
  %v2814 = vpop.permute.xlu0 %2813
  %2815 = vrot.lane.b32.xlu0 %v1834, 64
  %v2816 = vpop.permute.xlu0 %2815
  %v2820 = vsel %vm331, %v2635, 0
  %v2823 = vsel %vm331, %v2636, 0
  %2825 = vmatprep.subr.mxu0 0.0
  %2826 = vmatpush1.msra.mxu0 %v2814
  %2827 = vmatprep.subr.mxu0 0.0
  %2828 = vmatpush1.msra.mxu0 %v2816
  %2829 = vmatprep.subr.mxu0 0.0
  %2830 = vmatpush1.msra.mxu0 0.0
  %2831 = vmatprep.subr.mxu0 0.0
  %2832 = vmatpush1.msra.mxu0 0.0
  %2833 = vmatprep.subr.mxu0 0.0
  %2834 = vmatpush1.msra.mxu0 0.0
  %2835 = vmatprep.subr.mxu0 0.0
  %2836 = vmatpush1.msra.mxu0 0.0
  %2837 = vmatprep.subr.mxu0 0.0
  %2838 = vmatpush1.msra.mxu0 0.0
  %2839 = vmatprep.subr.mxu0 0.0
  %2840 = vmatpush1.msra.mxu0 0.0
  %2841 = vmatprep.subr.mxu0 0.0
  %2842 = vmatpush1.msra.mxu0 0.0
  %2843 = vmatprep.subr.mxu0 0.0
  %2844 = vmatpush1.msra.mxu0 0.0
  %2845 = vmatprep.subr.mxu0 0.0
  %2846 = vmatpush1.msra.mxu0 0.0
  %2847 = vmatprep.subr.mxu0 0.0
  %2848 = vmatpush1.msra.mxu0 0.0
  %2849 = vmatprep.subr.mxu0 0.0
  %2850 = vmatpush1.msra.mxu0 0.0
  %2851 = vmatprep.subr.mxu0 0.0
  %2852 = vmatpush1.msra.mxu0 0.0
  %2853 = vmatprep.subr.mxu0 0.0
  %2854 = vmatpush1.msra.mxu0 0.0
  %2855 = vmatprep.subr.mxu0 0.0
  %2856 = vmatpush1.msra.mxu0 0.0
  %2857 = vmatprep.subr.mxu0 0.0
  %2858 = vmatpush1.msra.mxu0 0.0
  %2859 = vmatprep.subr.mxu0 0.0
  %2860 = vmatpush1.msra.mxu0 0.0
  %2861 = vmatprep.subr.mxu0 0.0
  %2862 = vmatpush1.msra.mxu0 0.0
  %2863 = vmatprep.subr.mxu0 0.0
  %2864 = vmatpush1.msra.mxu0 0.0
  %2865 = vmatprep.subr.mxu0 0.0
  %2866 = vmatpush1.msra.mxu0 0.0
  %2867 = vmatprep.subr.mxu0 0.0
  %2868 = vmatpush1.msra.mxu0 0.0
  %2869 = vmatprep.subr.mxu0 0.0
  %2870 = vmatpush1.msra.mxu0 0.0
  %2871 = vmatprep.subr.mxu0 0.0
  %2872 = vmatpush1.msra.mxu0 0.0
  %2873 = vmatprep.subr.mxu0 0.0
  %2874 = vmatpush1.msra.mxu0 0.0
  %2875 = vmatprep.subr.mxu0 0.0
  %2876 = vmatpush1.msra.mxu0 0.0
  %2877 = vmatprep.subr.mxu0 0.0
  %2878 = vmatpush1.msra.mxu0 0.0
  %2879 = vmatprep.subr.mxu0 0.0
  %2880 = vmatpush1.msra.mxu0 0.0
  %2881 = vmatprep.subr.mxu0 0.0
  %2882 = vmatpush1.msra.mxu0 0.0
  %2883 = vmatprep.subr.mxu0 0.0
  %2884 = vmatpush1.msra.mxu0 0.0
  %2885 = vmatprep.subr.mxu0 0.0
  %2886 = vmatpush1.msra.mxu0 0.0
  %2887 = vmatprep.subr.mxu0 0.0
  %2888 = vmatpush1.msra.mxu0 0.0
  %2889 = vmatprep.mubr.f32.mxu0 0.0
  %2890 = vmatmul.mubr.f32.gmra.mrb[0].mxu0 %v2820
  %v2891 = vpop.f32.mrb[0].mxu0
  %v2892 = vadd.f32 0.0, %v2891
  %v2893 = vpop.f32.mrb[0].mxu0
  %2894 = vmatprep.mubr.f32.mxu0 0.0
  %2895 = vmatmul.mubr.f32.gmra.mrb[0].mxu0 %v2823
  %v2896 = vpop.f32.mrb[0].mxu0
  %v2897 = vadd.f32 0.0, %v2896
  %v2898 = vpop.f32.mrb[0].mxu0
  %2899 = vdwg.mxu0
  %2900 = vrot.lane.b32.xlu0 %v1836, 64
  %v2901 = vpop.permute.xlu0 %2900
  %2902 = vrot.lane.b32.xlu0 %v1838, 64
  %v2903 = vpop.permute.xlu0 %2902
  %v2907 = vsel %vm331, %v2637, 0
  %v2910 = vsel %vm331, %v2638, 0
  %2912 = vmatprep.subr.mxu0 0.0
  %2913 = vmatpush1.msra.mxu0 %v2901
  %2914 = vmatprep.subr.mxu0 0.0
  %2915 = vmatpush1.msra.mxu0 %v2903
  %2916 = vmatprep.subr.mxu0 0.0
  %2917 = vmatpush1.msra.mxu0 0.0
  %2918 = vmatprep.subr.mxu0 0.0
  %2919 = vmatpush1.msra.mxu0 0.0
  %2920 = vmatprep.subr.mxu0 0.0
  %2921 = vmatpush1.msra.mxu0 0.0
  %2922 = vmatprep.subr.mxu0 0.0
  %2923 = vmatpush1.msra.mxu0 0.0
  %2924 = vmatprep.subr.mxu0 0.0
  %2925 = vmatpush1.msra.mxu0 0.0
  %2926 = vmatprep.subr.mxu0 0.0
  %2927 = vmatpush1.msra.mxu0 0.0
  %2928 = vmatprep.subr.mxu0 0.0
  %2929 = vmatpush1.msra.mxu0 0.0
  %2930 = vmatprep.subr.mxu0 0.0
  %2931 = vmatpush1.msra.mxu0 0.0
  %2932 = vmatprep.subr.mxu0 0.0
  %2933 = vmatpush1.msra.mxu0 0.0
  %2934 = vmatprep.subr.mxu0 0.0
  %2935 = vmatpush1.msra.mxu0 0.0
  %2936 = vmatprep.subr.mxu0 0.0
  %2937 = vmatpush1.msra.mxu0 0.0
  %2938 = vmatprep.subr.mxu0 0.0
  %2939 = vmatpush1.msra.mxu0 0.0
  %2940 = vmatprep.subr.mxu0 0.0
  %2941 = vmatpush1.msra.mxu0 0.0
  %2942 = vmatprep.subr.mxu0 0.0
  %2943 = vmatpush1.msra.mxu0 0.0
  %2944 = vmatprep.subr.mxu0 0.0
  %2945 = vmatpush1.msra.mxu0 0.0
  %2946 = vmatprep.subr.mxu0 0.0
  %2947 = vmatpush1.msra.mxu0 0.0
  %2948 = vmatprep.subr.mxu0 0.0
  %2949 = vmatpush1.msra.mxu0 0.0
  %2950 = vmatprep.subr.mxu0 0.0
  %2951 = vmatpush1.msra.mxu0 0.0
  %2952 = vmatprep.subr.mxu0 0.0
  %2953 = vmatpush1.msra.mxu0 0.0
  %2954 = vmatprep.subr.mxu0 0.0
  %2955 = vmatpush1.msra.mxu0 0.0
  %2956 = vmatprep.subr.mxu0 0.0
  %2957 = vmatpush1.msra.mxu0 0.0
  %2958 = vmatprep.subr.mxu0 0.0
  %2959 = vmatpush1.msra.mxu0 0.0
  %2960 = vmatprep.subr.mxu0 0.0
  %2961 = vmatpush1.msra.mxu0 0.0
  %2962 = vmatprep.subr.mxu0 0.0
  %2963 = vmatpush1.msra.mxu0 0.0
  %2964 = vmatprep.subr.mxu0 0.0
  %2965 = vmatpush1.msra.mxu0 0.0
  %2966 = vmatprep.subr.mxu0 0.0
  %2967 = vmatpush1.msra.mxu0 0.0
  %2968 = vmatprep.subr.mxu0 0.0
  %2969 = vmatpush1.msra.mxu0 0.0
  %2970 = vmatprep.subr.mxu0 0.0
  %2971 = vmatpush1.msra.mxu0 0.0
  %2972 = vmatprep.subr.mxu0 0.0
  %2973 = vmatpush1.msra.mxu0 0.0
  %2974 = vmatprep.subr.mxu0 0.0
  %2975 = vmatpush1.msra.mxu0 0.0
  %2976 = vmatprep.mubr.f32.mxu0 0.0
  %2977 = vmatmul.mubr.f32.gmra.mrb[0].mxu0 %v2907
  %v2978 = vpop.f32.mrb[0].mxu0
  %v2979 = vadd.f32 0.0, %v2978
  %v2980 = vpop.f32.mrb[0].mxu0
  %2981 = vmatprep.mubr.f32.mxu0 0.0
  %2982 = vmatmul.mubr.f32.gmra.mrb[0].mxu0 %v2910
  %v2983 = vpop.f32.mrb[0].mxu0
  %v2984 = vadd.f32 0.0, %v2983
  %v2985 = vpop.f32.mrb[0].mxu0
  %2986 = vdwg.mxu0
  %v2988 = vsel %vm331, %v2718, 0
  %v2991 = vsel %vm331, %v2723, 0
  %2993 = vmatprep.subr.mxu0 0.0
  %2994 = vmatpush1.msra.mxu0 %v295
  %2995 = vmatprep.subr.mxu0 0.0
  %2996 = vmatpush1.msra.mxu0 %v296
  %2997 = vmatprep.subr.mxu0 0.0
  %2998 = vmatpush1.msra.mxu0 0.0
  %2999 = vmatprep.subr.mxu0 0.0
  %3000 = vmatpush1.msra.mxu0 0.0
  %3001 = vmatprep.subr.mxu0 0.0
  %3002 = vmatpush1.msra.mxu0 0.0
  %3003 = vmatprep.subr.mxu0 0.0
  %3004 = vmatpush1.msra.mxu0 0.0
  %3005 = vmatprep.subr.mxu0 0.0
  %3006 = vmatpush1.msra.mxu0 0.0
  %3007 = vmatprep.subr.mxu0 0.0
  %3008 = vmatpush1.msra.mxu0 0.0
  %3009 = vmatprep.subr.mxu0 0.0
  %3010 = vmatpush1.msra.mxu0 0.0
  %3011 = vmatprep.subr.mxu0 0.0
  %3012 = vmatpush1.msra.mxu0 0.0
  %3013 = vmatprep.subr.mxu0 0.0
  %3014 = vmatpush1.msra.mxu0 0.0
  %3015 = vmatprep.subr.mxu0 0.0
  %3016 = vmatpush1.msra.mxu0 0.0
  %3017 = vmatprep.subr.mxu0 0.0
  %3018 = vmatpush1.msra.mxu0 0.0
  %3019 = vmatprep.subr.mxu0 0.0
  %3020 = vmatpush1.msra.mxu0 0.0
  %3021 = vmatprep.subr.mxu0 0.0
  %3022 = vmatpush1.msra.mxu0 0.0
  %3023 = vmatprep.subr.mxu0 0.0
  %3024 = vmatpush1.msra.mxu0 0.0
  %3025 = vmatprep.subr.mxu0 0.0
  %3026 = vmatpush1.msra.mxu0 0.0
  %3027 = vmatprep.subr.mxu0 0.0
  %3028 = vmatpush1.msra.mxu0 0.0
  %3029 = vmatprep.subr.mxu0 0.0
  %3030 = vmatpush1.msra.mxu0 0.0
  %3031 = vmatprep.subr.mxu0 0.0
  %3032 = vmatpush1.msra.mxu0 0.0
  %3033 = vmatprep.subr.mxu0 0.0
  %3034 = vmatpush1.msra.mxu0 0.0
  %3035 = vmatprep.subr.mxu0 0.0
  %3036 = vmatpush1.msra.mxu0 0.0
  %3037 = vmatprep.subr.mxu0 0.0
  %3038 = vmatpush1.msra.mxu0 0.0
  %3039 = vmatprep.subr.mxu0 0.0
  %3040 = vmatpush1.msra.mxu0 0.0
  %3041 = vmatprep.subr.mxu0 0.0
  %3042 = vmatpush1.msra.mxu0 0.0
  %3043 = vmatprep.subr.mxu0 0.0
  %3044 = vmatpush1.msra.mxu0 0.0
  %3045 = vmatprep.subr.mxu0 0.0
  %3046 = vmatpush1.msra.mxu0 0.0
  %3047 = vmatprep.subr.mxu0 0.0
  %3048 = vmatpush1.msra.mxu0 0.0
  %3049 = vmatprep.subr.mxu0 0.0
  %3050 = vmatpush1.msra.mxu0 0.0
  %3051 = vmatprep.subr.mxu0 0.0
  %3052 = vmatpush1.msra.mxu0 0.0
  %3053 = vmatprep.subr.mxu0 0.0
  %3054 = vmatpush1.msra.mxu0 0.0
  %3055 = vmatprep.subr.mxu0 0.0
  %3056 = vmatpush1.msra.mxu0 0.0
  %3057 = vmatprep.mubr.f32.mxu0 0.0
  %3058 = vmatmul.mubr.f32.gmra.mrb[0].mxu0 %v2988
  %v3059 = vpop.f32.mrb[0].mxu0
  %v3060 = vadd.f32 0.0, %v3059
  %v3061 = vpop.f32.mrb[0].mxu0
  %3062 = vmatprep.mubr.f32.mxu0 0.0
  %3063 = vmatmul.mubr.f32.gmra.mrb[0].mxu0 %v2991
  %v3064 = vpop.f32.mrb[0].mxu0
  %v3065 = vadd.f32 0.0, %v3064
  %v3066 = vpop.f32.mrb[0].mxu0
  %3067 = vdwg.mxu0
  %v3069 = vsel %vm331, %v2805, 0
  %v3072 = vsel %vm331, %v2810, 0
  %3074 = vmatprep.subr.mxu0 0.0
  %3075 = vmatpush1.msra.mxu0 %v297
  %3076 = vmatprep.subr.mxu0 0.0
  %3077 = vmatpush1.msra.mxu0 %v298
  %3078 = vmatprep.subr.mxu0 0.0
  %3079 = vmatpush1.msra.mxu0 0.0
  %3080 = vmatprep.subr.mxu0 0.0
  %3081 = vmatpush1.msra.mxu0 0.0
  %3082 = vmatprep.subr.mxu0 0.0
  %3083 = vmatpush1.msra.mxu0 0.0
  %3084 = vmatprep.subr.mxu0 0.0
  %3085 = vmatpush1.msra.mxu0 0.0
  %3086 = vmatprep.subr.mxu0 0.0
  %3087 = vmatpush1.msra.mxu0 0.0
  %3088 = vmatprep.subr.mxu0 0.0
  %3089 = vmatpush1.msra.mxu0 0.0
  %3090 = vmatprep.subr.mxu0 0.0
  %3091 = vmatpush1.msra.mxu0 0.0
  %3092 = vmatprep.subr.mxu0 0.0
  %3093 = vmatpush1.msra.mxu0 0.0
  %3094 = vmatprep.subr.mxu0 0.0
  %3095 = vmatpush1.msra.mxu0 0.0
  %3096 = vmatprep.subr.mxu0 0.0
  %3097 = vmatpush1.msra.mxu0 0.0
  %3098 = vmatprep.subr.mxu0 0.0
  %3099 = vmatpush1.msra.mxu0 0.0
  %3100 = vmatprep.subr.mxu0 0.0
  %3101 = vmatpush1.msra.mxu0 0.0
  %3102 = vmatprep.subr.mxu0 0.0
  %3103 = vmatpush1.msra.mxu0 0.0
  %3104 = vmatprep.subr.mxu0 0.0
  %3105 = vmatpush1.msra.mxu0 0.0
  %3106 = vmatprep.subr.mxu0 0.0
  %3107 = vmatpush1.msra.mxu0 0.0
  %3108 = vmatprep.subr.mxu0 0.0
  %3109 = vmatpush1.msra.mxu0 0.0
  %3110 = vmatprep.subr.mxu0 0.0
  %3111 = vmatpush1.msra.mxu0 0.0
  %3112 = vmatprep.subr.mxu0 0.0
  %3113 = vmatpush1.msra.mxu0 0.0
  %3114 = vmatprep.subr.mxu0 0.0
  %3115 = vmatpush1.msra.mxu0 0.0
  %3116 = vmatprep.subr.mxu0 0.0
  %3117 = vmatpush1.msra.mxu0 0.0
  %3118 = vmatprep.subr.mxu0 0.0
  %3119 = vmatpush1.msra.mxu0 0.0
  %3120 = vmatprep.subr.mxu0 0.0
  %3121 = vmatpush1.msra.mxu0 0.0
  %3122 = vmatprep.subr.mxu0 0.0
  %3123 = vmatpush1.msra.mxu0 0.0
  %3124 = vmatprep.subr.mxu0 0.0
  %3125 = vmatpush1.msra.mxu0 0.0
  %3126 = vmatprep.subr.mxu0 0.0
  %3127 = vmatpush1.msra.mxu0 0.0
  %3128 = vmatprep.subr.mxu0 0.0
  %3129 = vmatpush1.msra.mxu0 0.0
  %3130 = vmatprep.subr.mxu0 0.0
  %3131 = vmatpush1.msra.mxu0 0.0
  %3132 = vmatprep.subr.mxu0 0.0
  %3133 = vmatpush1.msra.mxu0 0.0
  %3134 = vmatprep.subr.mxu0 0.0
  %3135 = vmatpush1.msra.mxu0 0.0
  %3136 = vmatprep.subr.mxu0 0.0
  %3137 = vmatpush1.msra.mxu0 0.0
  %3138 = vmatprep.mubr.f32.mxu0 0.0
  %3139 = vmatmul.mubr.f32.gmra.mrb[0].mxu0 %v3069
  %v3140 = vpop.f32.mrb[0].mxu0
  %v3141 = vadd.f32 0.0, %v3140
  %v3142 = vpop.f32.mrb[0].mxu0
  %3143 = vmatprep.mubr.f32.mxu0 0.0
  %3144 = vmatmul.mubr.f32.gmra.mrb[0].mxu0 %v3072
  %v3145 = vpop.f32.mrb[0].mxu0
  %v3146 = vadd.f32 0.0, %v3145
  %v3147 = vpop.f32.mrb[0].mxu0
  %3148 = vdwg.mxu0
  %v3150 = vsel %vm331, %v2892, 0
  %v3153 = vsel %vm331, %v2897, 0
  %3155 = vmatprep.subr.mxu0 0.0
  %3156 = vmatpush1.msra.mxu0 %v299
  %3157 = vmatprep.subr.mxu0 0.0
  %3158 = vmatpush1.msra.mxu0 %v300
  %3159 = vmatprep.subr.mxu0 0.0
  %3160 = vmatpush1.msra.mxu0 0.0
  %3161 = vmatprep.subr.mxu0 0.0
  %3162 = vmatpush1.msra.mxu0 0.0
  %3163 = vmatprep.subr.mxu0 0.0
  %3164 = vmatpush1.msra.mxu0 0.0
  %3165 = vmatprep.subr.mxu0 0.0
  %3166 = vmatpush1.msra.mxu0 0.0
  %3167 = vmatprep.subr.mxu0 0.0
  %3168 = vmatpush1.msra.mxu0 0.0
  %3169 = vmatprep.subr.mxu0 0.0
  %3170 = vmatpush1.msra.mxu0 0.0
  %3171 = vmatprep.subr.mxu0 0.0
  %3172 = vmatpush1.msra.mxu0 0.0
  %3173 = vmatprep.subr.mxu0 0.0
  %3174 = vmatpush1.msra.mxu0 0.0
  %3175 = vmatprep.subr.mxu0 0.0
  %3176 = vmatpush1.msra.mxu0 0.0
  %3177 = vmatprep.subr.mxu0 0.0
  %3178 = vmatpush1.msra.mxu0 0.0
  %3179 = vmatprep.subr.mxu0 0.0
  %3180 = vmatpush1.msra.mxu0 0.0
  %3181 = vmatprep.subr.mxu0 0.0
  %3182 = vmatpush1.msra.mxu0 0.0
  %3183 = vmatprep.subr.mxu0 0.0
  %3184 = vmatpush1.msra.mxu0 0.0
  %3185 = vmatprep.subr.mxu0 0.0
  %3186 = vmatpush1.msra.mxu0 0.0
  %3187 = vmatprep.subr.mxu0 0.0
  %3188 = vmatpush1.msra.mxu0 0.0
  %3189 = vmatprep.subr.mxu0 0.0
  %3190 = vmatpush1.msra.mxu0 0.0
  %3191 = vmatprep.subr.mxu0 0.0
  %3192 = vmatpush1.msra.mxu0 0.0
  %3193 = vmatprep.subr.mxu0 0.0
  %3194 = vmatpush1.msra.mxu0 0.0
  %3195 = vmatprep.subr.mxu0 0.0
  %3196 = vmatpush1.msra.mxu0 0.0
  %3197 = vmatprep.subr.mxu0 0.0
  %3198 = vmatpush1.msra.mxu0 0.0
  %3199 = vmatprep.subr.mxu0 0.0
  %3200 = vmatpush1.msra.mxu0 0.0
  %3201 = vmatprep.subr.mxu0 0.0
  %3202 = vmatpush1.msra.mxu0 0.0
  %3203 = vmatprep.subr.mxu0 0.0
  %3204 = vmatpush1.msra.mxu0 0.0
  %3205 = vmatprep.subr.mxu0 0.0
  %3206 = vmatpush1.msra.mxu0 0.0
  %3207 = vmatprep.subr.mxu0 0.0
  %3208 = vmatpush1.msra.mxu0 0.0
  %3209 = vmatprep.subr.mxu0 0.0
  %3210 = vmatpush1.msra.mxu0 0.0
  %3211 = vmatprep.subr.mxu0 0.0
  %3212 = vmatpush1.msra.mxu0 0.0
  %3213 = vmatprep.subr.mxu0 0.0
  %3214 = vmatpush1.msra.mxu0 0.0
  %3215 = vmatprep.subr.mxu0 0.0
  %3216 = vmatpush1.msra.mxu0 0.0
  %3217 = vmatprep.subr.mxu0 0.0
  %3218 = vmatpush1.msra.mxu0 0.0
  %3219 = vmatprep.mubr.f32.mxu0 0.0
  %3220 = vmatmul.mubr.f32.gmra.mrb[0].mxu0 %v3150
  %v3221 = vpop.f32.mrb[0].mxu0
  %v3222 = vadd.f32 0.0, %v3221
  %v3223 = vpop.f32.mrb[0].mxu0
  %3224 = vmatprep.mubr.f32.mxu0 0.0
  %3225 = vmatmul.mubr.f32.gmra.mrb[0].mxu0 %v3153
  %v3226 = vpop.f32.mrb[0].mxu0
  %v3227 = vadd.f32 0.0, %v3226
  %v3228 = vpop.f32.mrb[0].mxu0
  %3229 = vdwg.mxu0
  %v3231 = vsel %vm331, %v2979, 0
  %v3234 = vsel %vm331, %v2984, 0
  %3236 = vmatprep.subr.mxu0 0.0
  %3237 = vmatpush1.msra.mxu0 %v301
  %3238 = vmatprep.subr.mxu0 0.0
  %3239 = vmatpush1.msra.mxu0 %v302
  %3240 = vmatprep.subr.mxu0 0.0
  %3241 = vmatpush1.msra.mxu0 0.0
  %3242 = vmatprep.subr.mxu0 0.0
  %3243 = vmatpush1.msra.mxu0 0.0
  %3244 = vmatprep.subr.mxu0 0.0
  %3245 = vmatpush1.msra.mxu0 0.0
  %3246 = vmatprep.subr.mxu0 0.0
  %3247 = vmatpush1.msra.mxu0 0.0
  %3248 = vmatprep.subr.mxu0 0.0
  %3249 = vmatpush1.msra.mxu0 0.0
  %3250 = vmatprep.subr.mxu0 0.0
  %3251 = vmatpush1.msra.mxu0 0.0
  %3252 = vmatprep.subr.mxu0 0.0
  %3253 = vmatpush1.msra.mxu0 0.0
  %3254 = vmatprep.subr.mxu0 0.0
  %3255 = vmatpush1.msra.mxu0 0.0
  %3256 = vmatprep.subr.mxu0 0.0
  %3257 = vmatpush1.msra.mxu0 0.0
  %3258 = vmatprep.subr.mxu0 0.0
  %3259 = vmatpush1.msra.mxu0 0.0
  %3260 = vmatprep.subr.mxu0 0.0
  %3261 = vmatpush1.msra.mxu0 0.0
  %3262 = vmatprep.subr.mxu0 0.0
  %3263 = vmatpush1.msra.mxu0 0.0
  %3264 = vmatprep.subr.mxu0 0.0
  %3265 = vmatpush1.msra.mxu0 0.0
  %3266 = vmatprep.subr.mxu0 0.0
  %3267 = vmatpush1.msra.mxu0 0.0
  %3268 = vmatprep.subr.mxu0 0.0
  %3269 = vmatpush1.msra.mxu0 0.0
  %3270 = vmatprep.subr.mxu0 0.0
  %3271 = vmatpush1.msra.mxu0 0.0
  %3272 = vmatprep.subr.mxu0 0.0
  %3273 = vmatpush1.msra.mxu0 0.0
  %3274 = vmatprep.subr.mxu0 0.0
  %3275 = vmatpush1.msra.mxu0 0.0
  %3276 = vmatprep.subr.mxu0 0.0
  %3277 = vmatpush1.msra.mxu0 0.0
  %3278 = vmatprep.subr.mxu0 0.0
  %3279 = vmatpush1.msra.mxu0 0.0
  %3280 = vmatprep.subr.mxu0 0.0
  %3281 = vmatpush1.msra.mxu0 0.0
  %3282 = vmatprep.subr.mxu0 0.0
  %3283 = vmatpush1.msra.mxu0 0.0
  %3284 = vmatprep.subr.mxu0 0.0
  %3285 = vmatpush1.msra.mxu0 0.0
  %3286 = vmatprep.subr.mxu0 0.0
  %3287 = vmatpush1.msra.mxu0 0.0
  %3288 = vmatprep.subr.mxu0 0.0
  %3289 = vmatpush1.msra.mxu0 0.0
  %3290 = vmatprep.subr.mxu0 0.0
  %3291 = vmatpush1.msra.mxu0 0.0
  %3292 = vmatprep.subr.mxu0 0.0
  %3293 = vmatpush1.msra.mxu0 0.0
  %3294 = vmatprep.subr.mxu0 0.0
  %3295 = vmatpush1.msra.mxu0 0.0
  %3296 = vmatprep.subr.mxu0 0.0
  %3297 = vmatpush1.msra.mxu0 0.0
  %3298 = vmatprep.subr.mxu0 0.0
  %3299 = vmatpush1.msra.mxu0 0.0
  %3300 = vmatprep.mubr.f32.mxu0 0.0
  %3301 = vmatmul.mubr.f32.gmra.mrb[0].mxu0 %v3231
  %v3302 = vpop.f32.mrb[0].mxu0
  %v3303 = vadd.f32 0.0, %v3302
  %v3304 = vpop.f32.mrb[0].mxu0
  %3305 = vmatprep.mubr.f32.mxu0 0.0
  %3306 = vmatmul.mubr.f32.gmra.mrb[0].mxu0 %v3234
  %v3307 = vpop.f32.mrb[0].mxu0
  %v3308 = vadd.f32 0.0, %v3307
  %v3309 = vpop.f32.mrb[0].mxu0
  %3310 = vdwg.mxu0
  %v3311 = vadd.f32 %v3060, %v3141
  %v3312 = vadd.f32 %v3065, %v3146
  %v3313 = vadd.f32 %v3311, %v3222
  %v3314 = vadd.f32 %v3312, %v3227
  %v3315 = vadd.f32 %v3313, %v3303
  %v3316 = vadd.f32 %v3314, %v3308
  %v3317 = vld [vmem:[%s7] sm:$0x1]
  %v3319 = vlaneseq
  %v3320 = vshrl.u32 %v3319, 7
  %v3321 = vsub.s32 0, %v3320
  %v3322 = vrot.slane %v3317, %v3321
  %v3324 = vadd.f32 %v1809, %v3322
  %v3325 = vadd.f32 %v3315, %v3322
  %v3326 = vadd.f32 %v1810, %v3322
  %v3327 = vadd.f32 %v3316, %v3322
  %v3328 = vadd.f32 %v3324, %v53
  %v3329 = vadd.f32 %v3325, %v54
  %v3330 = vadd.f32 %v3326, %v55
  %v3331 = vadd.f32 %v3327, %v56
  %v3332 = vld [vmem:[%s8] sm:$0x1]
  %v3333 = vld [vmem:[%s9] sm:$0x1]
  %v3334 = vsel %vm100, %v3328, 0.0
  %3335 = vadd.xlane.f32.xlu0 %v3334
  %v3336 = vpop.xlane.xlu0 %3335
  %v3337 = vsel %vm100, %v3329, 0.0
  %3338 = vadd.xlane.f32.xlu0 %v3337
  %v3339 = vpop.xlane.xlu0 %3338
  %v3340 = vsel %vm100, %v3330, 0.0
  %3341 = vadd.xlane.f32.xlu0 %v3340
  %v3342 = vpop.xlane.xlu0 %3341
  %v3343 = vsel %vm100, %v3331, 0.0
  %3344 = vadd.xlane.f32.xlu0 %v3343
  %v3345 = vpop.xlane.xlu0 %3344
  %v3346 = vrcp.pop 64.0
  %v3347 = vmul.f32 %v3336, %v3346
  %v3348 = vmul.f32 %v3339, %v3346
  %v3349 = vmul.f32 %v3342, %v3346
  %v3350 = vmul.f32 %v3345, %v3346
  %v3351 = vsub.f32 %v3328, %v3347
  %v3352 = vsub.f32 %v3329, %v3348
  %v3353 = vsub.f32 %v3330, %v3349
  %v3354 = vsub.f32 %v3331, %v3350
  %v3355 = vmul.f32 %v3351, %v3351
  %v3356 = vmul.f32 %v3352, %v3352
  %v3357 = vmul.f32 %v3353, %v3353
  %v3358 = vmul.f32 %v3354, %v3354
  %v3359 = vsel %vm100, %v3355, 0.0
  %3360 = vadd.xlane.f32.xlu0 %v3359
  %v3361 = vpop.xlane.xlu0 %3360
  %v3362 = vsel %vm100, %v3356, 0.0
  %3363 = vadd.xlane.f32.xlu0 %v3362
  %v3364 = vpop.xlane.xlu0 %3363
  %v3365 = vsel %vm100, %v3357, 0.0
  %3366 = vadd.xlane.f32.xlu0 %v3365
  %v3367 = vpop.xlane.xlu0 %3366
  %v3368 = vsel %vm100, %v3358, 0.0
  %3369 = vadd.xlane.f32.xlu0 %v3368
  %v3370 = vpop.xlane.xlu0 %3369
  %v3371 = vmul.f32 %v3361, %v3346
  %v3372 = vmul.f32 %v3364, %v3346
  %v3373 = vmul.f32 %v3367, %v3346
  %v3374 = vmul.f32 %v3370, %v3346
  %v3375 = vadd.f32 %v3371, 1e-12
  %v3376 = vadd.f32 %v3372, 1e-12
  %v3377 = vadd.f32 %v3373, 1e-12
  %v3378 = vadd.f32 %v3374, 1e-12
  %v3379 = vrsqrt.pop %v3375
  %v3380 = vrsqrt.pop %v3376
  %v3381 = vrsqrt.pop %v3377
  %v3382 = vrsqrt.pop %v3378
  %v3383 = vmul.f32 %v3351, %v3379
  %v3384 = vmul.f32 %v3352, %v3380
  %v3385 = vmul.f32 %v3353, %v3381
  %v3386 = vmul.f32 %v3354, %v3382
  %v3388 = vlaneseq
  %v3389 = vshrl.u32 %v3388, 7
  %v3390 = vsub.s32 0, %v3389
  %v3391 = vrot.slane %v3332, %v3390
  %v3393 = vmul.f32 %v3383, %v3391
  %v3394 = vmul.f32 %v3384, %v3391
  %v3395 = vmul.f32 %v3385, %v3391
  %v3396 = vmul.f32 %v3386, %v3391
  %v3398 = vlaneseq
  %v3399 = vshrl.u32 %v3398, 7
  %v3400 = vsub.s32 0, %v3399
  %v3401 = vrot.slane %v3333, %v3400
  %v3403 = vadd.f32 %v3393, %v3401
  %v3404 = vadd.f32 %v3394, %v3401
  %v3405 = vadd.f32 %v3395, %v3401
  %v3406 = vadd.f32 %v3396, %v3401
  %v3407 = vld [vmem:[%s10] sm:$0xff]
  %v3408 = vld [vmem:[%s10 + $0x8] sm:$0xff]
  %v3409 = vld [vmem:[%s10 + $0x10] sm:$0xff]
  %v3410 = vld [vmem:[%s10 + $0x18] sm:$0xff]
  %v3411 = vld [vmem:[%s10 + $0x20] sm:$0xff]
  %v3412 = vld [vmem:[%s10 + $0x28] sm:$0xff]
  %v3413 = vld [vmem:[%s10 + $0x30] sm:$0xff]
  %v3414 = vld [vmem:[%s10 + $0x38] sm:$0xff]
  %v3415 = vld [vmem:[%s11] sm:$0x1]
  %v3417 = vlaneseq
  %v3418 = vshrl.u32 %v3417, 7
  %v3419 = vsub.s32 0, %v3418
  %v3420 = vrot.slane %v3415, %v3419
  %v3423 = vsel %vm100, %v3403, 0
  %v3426 = vsel %vm100, %v3404, 0
  %v3429 = vsel %vm100, %v3405, 0
  %v3432 = vsel %vm100, %v3406, 0
  %3434 = vmatprep.subr.mxu0 0.0
  %3435 = vmatpush1.msra.mxu0 %v3407
  %3436 = vmatprep.subr.mxu0 0.0
  %3437 = vmatpush1.msra.mxu0 %v3408
  %3438 = vmatprep.subr.mxu0 0.0
  %3439 = vmatpush1.msra.mxu0 %v3409
  %3440 = vmatprep.subr.mxu0 0.0
  %3441 = vmatpush1.msra.mxu0 %v3410
  %3442 = vmatprep.subr.mxu0 0.0
  %3443 = vmatpush1.msra.mxu0 %v3411
  %3444 = vmatprep.subr.mxu0 0.0
  %3445 = vmatpush1.msra.mxu0 %v3412
  %3446 = vmatprep.subr.mxu0 0.0
  %3447 = vmatpush1.msra.mxu0 %v3413
  %3448 = vmatprep.subr.mxu0 0.0
  %3449 = vmatpush1.msra.mxu0 %v3414
  %3450 = vmatprep.subr.mxu0 0.0
  %3451 = vmatpush1.msra.mxu0 0.0
  %3452 = vmatprep.subr.mxu0 0.0
  %3453 = vmatpush1.msra.mxu0 0.0
  %3454 = vmatprep.subr.mxu0 0.0
  %3455 = vmatpush1.msra.mxu0 0.0
  %3456 = vmatprep.subr.mxu0 0.0
  %3457 = vmatpush1.msra.mxu0 0.0
  %3458 = vmatprep.subr.mxu0 0.0
  %3459 = vmatpush1.msra.mxu0 0.0
  %3460 = vmatprep.subr.mxu0 0.0
  %3461 = vmatpush1.msra.mxu0 0.0
  %3462 = vmatprep.subr.mxu0 0.0
  %3463 = vmatpush1.msra.mxu0 0.0
  %3464 = vmatprep.subr.mxu0 0.0
  %3465 = vmatpush1.msra.mxu0 0.0
  %3466 = vmatprep.subr.mxu0 0.0
  %3467 = vmatpush1.msra.mxu0 0.0
  %3468 = vmatprep.subr.mxu0 0.0
  %3469 = vmatpush1.msra.mxu0 0.0
  %3470 = vmatprep.subr.mxu0 0.0
  %3471 = vmatpush1.msra.mxu0 0.0
  %3472 = vmatprep.subr.mxu0 0.0
  %3473 = vmatpush1.msra.mxu0 0.0
  %3474 = vmatprep.subr.mxu0 0.0
  %3475 = vmatpush1.msra.mxu0 0.0
  %3476 = vmatprep.subr.mxu0 0.0
  %3477 = vmatpush1.msra.mxu0 0.0
  %3478 = vmatprep.subr.mxu0 0.0
  %3479 = vmatpush1.msra.mxu0 0.0
  %3480 = vmatprep.subr.mxu0 0.0
  %3481 = vmatpush1.msra.mxu0 0.0
  %3482 = vmatprep.subr.mxu0 0.0
  %3483 = vmatpush1.msra.mxu0 0.0
  %3484 = vmatprep.subr.mxu0 0.0
  %3485 = vmatpush1.msra.mxu0 0.0
  %3486 = vmatprep.subr.mxu0 0.0
  %3487 = vmatpush1.msra.mxu0 0.0
  %3488 = vmatprep.subr.mxu0 0.0
  %3489 = vmatpush1.msra.mxu0 0.0
  %3490 = vmatprep.subr.mxu0 0.0
  %3491 = vmatpush1.msra.mxu0 0.0
  %3492 = vmatprep.subr.mxu0 0.0
  %3493 = vmatpush1.msra.mxu0 0.0
  %3494 = vmatprep.subr.mxu0 0.0
  %3495 = vmatpush1.msra.mxu0 0.0
  %3496 = vmatprep.subr.mxu0 0.0
  %3497 = vmatpush1.msra.mxu0 0.0
  %3498 = vmatprep.mubr.f32.mxu0 0.0
  %3499 = vmatmul.mubr.f32.gmra.mrb[0].mxu0 %v3423
  %v3500 = vpop.f32.mrb[0].mxu0
  %v3501 = vadd.f32 %v3420, %v3500
  %v3502 = vpop.f32.mrb[0].mxu0
  %3503 = vmatprep.mubr.f32.mxu0 0.0
  %3504 = vmatmul.mubr.f32.gmra.mrb[0].mxu0 %v3426
  %v3505 = vpop.f32.mrb[0].mxu0
  %v3506 = vadd.f32 %v3420, %v3505
  %v3507 = vpop.f32.mrb[0].mxu0
  %3508 = vmatprep.mubr.f32.mxu0 0.0
  %3509 = vmatmul.mubr.f32.gmra.mrb[0].mxu0 %v3429
  %v3510 = vpop.f32.mrb[0].mxu0
  %v3511 = vadd.f32 %v3420, %v3510
  %v3512 = vpop.f32.mrb[0].mxu0
  %3513 = vmatprep.mubr.f32.mxu0 0.0
  %3514 = vmatmul.mubr.f32.gmra.mrb[0].mxu0 %v3432
  %v3515 = vpop.f32.mrb[0].mxu0
  %v3516 = vadd.f32 %v3420, %v3515
  %v3517 = vpop.f32.mrb[0].mxu0
  %3518 = vdwg.mxu0
  %v3519 = vmul.f32 %v3501, %v3501
  %v3520 = vmul.f32 %v3506, %v3506
  %v3521 = vmul.f32 %v3511, %v3511
  %v3522 = vmul.f32 %v3516, %v3516
  %v3523 = vmul.f32 %v3501, %v3519
  %v3524 = vmul.f32 %v3506, %v3520
  %v3525 = vmul.f32 %v3511, %v3521
  %v3526 = vmul.f32 %v3516, %v3522
  %v3527 = vmul.f32 %v3523, 0.044715
  %v3528 = vmul.f32 %v3524, 0.044715
  %v3529 = vmul.f32 %v3525, 0.044715
  %v3530 = vmul.f32 %v3526, 0.044715
  %v3531 = vadd.f32 %v3501, %v3527
  %v3532 = vadd.f32 %v3506, %v3528
  %v3533 = vadd.f32 %v3511, %v3529
  %v3534 = vadd.f32 %v3516, %v3530
  %v3535 = vmul.f32 %v3531, 0.7978846
  %v3536 = vmul.f32 %v3532, 0.7978846
  %v3537 = vmul.f32 %v3533, 0.7978846
  %v3538 = vmul.f32 %v3534, 0.7978846
  %v3539 = vtanh.pop %v3535
  %v3540 = vtanh.pop %v3536
  %v3541 = vtanh.pop %v3537
  %v3542 = vtanh.pop %v3538
  %v3543 = vadd.f32 %v3539, 1.0
  %v3544 = vadd.f32 %v3540, 1.0
  %v3545 = vadd.f32 %v3541, 1.0
  %v3546 = vadd.f32 %v3542, 1.0
  %v3547 = vmul.f32 %v3543, 0.5
  %v3548 = vmul.f32 %v3544, 0.5
  %v3549 = vmul.f32 %v3545, 0.5
  %v3550 = vmul.f32 %v3546, 0.5
  %v3551 = vmul.f32 %v3501, %v3547
  %v3552 = vmul.f32 %v3506, %v3548
  %v3553 = vmul.f32 %v3511, %v3549
  %v3554 = vmul.f32 %v3516, %v3550
  %v3555 = vld [vmem:[%s12] sm:$0xff]
  %v3556 = vld [vmem:[%s12 + $0x8] sm:$0xff]
  %v3557 = vld [vmem:[%s12 + $0x10] sm:$0xff]
  %v3558 = vld [vmem:[%s12 + $0x18] sm:$0xff]
  %v3559 = vld [vmem:[%s12 + $0x20] sm:$0xff]
  %v3560 = vld [vmem:[%s12 + $0x28] sm:$0xff]
  %v3561 = vld [vmem:[%s12 + $0x30] sm:$0xff]
  %v3562 = vld [vmem:[%s12 + $0x38] sm:$0xff]
  %v3563 = vld [vmem:[%s12 + $0x40] sm:$0xff]
  %v3564 = vld [vmem:[%s12 + $0x48] sm:$0xff]
  %v3565 = vld [vmem:[%s12 + $0x50] sm:$0xff]
  %v3566 = vld [vmem:[%s12 + $0x58] sm:$0xff]
  %v3567 = vld [vmem:[%s12 + $0x60] sm:$0xff]
  %v3568 = vld [vmem:[%s12 + $0x68] sm:$0xff]
  %v3569 = vld [vmem:[%s12 + $0x70] sm:$0xff]
  %v3570 = vld [vmem:[%s12 + $0x78] sm:$0xff]
  %v3571 = vld [vmem:[%s13] sm:$0x1]
  %v3573 = vlaneseq
  %v3574 = vshrl.u32 %v3573, 7
  %v3575 = vsub.s32 0, %v3574
  %v3576 = vrot.slane %v3571, %v3575
  %3578 = vmatprep.subr.mxu0 0.0
  %3579 = vmatpush1.msra.mxu0 %v3555
  %3580 = vmatprep.subr.mxu0 0.0
  %3581 = vmatpush1.msra.mxu0 %v3556
  %3582 = vmatprep.subr.mxu0 0.0
  %3583 = vmatpush1.msra.mxu0 %v3557
  %3584 = vmatprep.subr.mxu0 0.0
  %3585 = vmatpush1.msra.mxu0 %v3558
  %3586 = vmatprep.subr.mxu0 0.0
  %3587 = vmatpush1.msra.mxu0 %v3559
  %3588 = vmatprep.subr.mxu0 0.0
  %3589 = vmatpush1.msra.mxu0 %v3560
  %3590 = vmatprep.subr.mxu0 0.0
  %3591 = vmatpush1.msra.mxu0 %v3561
  %3592 = vmatprep.subr.mxu0 0.0
  %3593 = vmatpush1.msra.mxu0 %v3562
  %3594 = vmatprep.subr.mxu0 0.0
  %3595 = vmatpush1.msra.mxu0 %v3563
  %3596 = vmatprep.subr.mxu0 0.0
  %3597 = vmatpush1.msra.mxu0 %v3564
  %3598 = vmatprep.subr.mxu0 0.0
  %3599 = vmatpush1.msra.mxu0 %v3565
  %3600 = vmatprep.subr.mxu0 0.0
  %3601 = vmatpush1.msra.mxu0 %v3566
  %3602 = vmatprep.subr.mxu0 0.0
  %3603 = vmatpush1.msra.mxu0 %v3567
  %3604 = vmatprep.subr.mxu0 0.0
  %3605 = vmatpush1.msra.mxu0 %v3568
  %3606 = vmatprep.subr.mxu0 0.0
  %3607 = vmatpush1.msra.mxu0 %v3569
  %3608 = vmatprep.subr.mxu0 0.0
  %3609 = vmatpush1.msra.mxu0 %v3570
  %3610 = vmatprep.subr.mxu0 0.0
  %3611 = vmatpush1.msra.mxu0 0.0
  %3612 = vmatprep.subr.mxu0 0.0
  %3613 = vmatpush1.msra.mxu0 0.0
  %3614 = vmatprep.subr.mxu0 0.0
  %3615 = vmatpush1.msra.mxu0 0.0
  %3616 = vmatprep.subr.mxu0 0.0
  %3617 = vmatpush1.msra.mxu0 0.0
  %3618 = vmatprep.subr.mxu0 0.0
  %3619 = vmatpush1.msra.mxu0 0.0
  %3620 = vmatprep.subr.mxu0 0.0
  %3621 = vmatpush1.msra.mxu0 0.0
  %3622 = vmatprep.subr.mxu0 0.0
  %3623 = vmatpush1.msra.mxu0 0.0
  %3624 = vmatprep.subr.mxu0 0.0
  %3625 = vmatpush1.msra.mxu0 0.0
  %3626 = vmatprep.subr.mxu0 0.0
  %3627 = vmatpush1.msra.mxu0 0.0
  %3628 = vmatprep.subr.mxu0 0.0
  %3629 = vmatpush1.msra.mxu0 0.0
  %3630 = vmatprep.subr.mxu0 0.0
  %3631 = vmatpush1.msra.mxu0 0.0
  %3632 = vmatprep.subr.mxu0 0.0
  %3633 = vmatpush1.msra.mxu0 0.0
  %3634 = vmatprep.subr.mxu0 0.0
  %3635 = vmatpush1.msra.mxu0 0.0
  %3636 = vmatprep.subr.mxu0 0.0
  %3637 = vmatpush1.msra.mxu0 0.0
  %3638 = vmatprep.subr.mxu0 0.0
  %3639 = vmatpush1.msra.mxu0 0.0
  %3640 = vmatprep.subr.mxu0 0.0
  %3641 = vmatpush1.msra.mxu0 0.0
  %3642 = vmatprep.mubr.f32.mxu0 0.0
  %3643 = vmatmul.mubr.f32.gmra.mrb[0].mxu0 %v3551
  %v3644 = vpop.f32.mrb[0].mxu0
  %v3645 = vadd.f32 %v3576, %v3644
  %v3646 = vpop.f32.mrb[0].mxu0
  %3647 = vmatprep.mubr.f32.mxu0 0.0
  %3648 = vmatmul.mubr.f32.gmra.mrb[0].mxu0 %v3552
  %v3649 = vpop.f32.mrb[0].mxu0
  %v3650 = vadd.f32 %v3576, %v3649
  %v3651 = vpop.f32.mrb[0].mxu0
  %3652 = vmatprep.mubr.f32.mxu0 0.0
  %3653 = vmatmul.mubr.f32.gmra.mrb[0].mxu0 %v3553
  %v3654 = vpop.f32.mrb[0].mxu0
  %v3655 = vadd.f32 %v3576, %v3654
  %v3656 = vpop.f32.mrb[0].mxu0
  %3657 = vmatprep.mubr.f32.mxu0 0.0
  %3658 = vmatmul.mubr.f32.gmra.mrb[0].mxu0 %v3554
  %v3659 = vpop.f32.mrb[0].mxu0
  %v3660 = vadd.f32 %v3576, %v3659
  %v3661 = vpop.f32.mrb[0].mxu0
  %3662 = vdwg.mxu0
  %v3663 = vadd.f32 %v3645, %v3403
  %v3664 = vadd.f32 %v3650, %v3404
  %v3665 = vadd.f32 %v3655, %v3405
  %v3666 = vadd.f32 %v3660, %v3406
  %v3667 = vld [vmem:[%s14] sm:$0x1]
  %v3668 = vld [vmem:[%s15] sm:$0x1]
  %v3669 = vsel %vm100, %v3663, 0.0
  %3670 = vadd.xlane.f32.xlu0 %v3669
  %v3671 = vpop.xlane.xlu0 %3670
  %v3672 = vsel %vm100, %v3664, 0.0
  %3673 = vadd.xlane.f32.xlu0 %v3672
  %v3674 = vpop.xlane.xlu0 %3673
  %v3675 = vsel %vm100, %v3665, 0.0
  %3676 = vadd.xlane.f32.xlu0 %v3675
  %v3677 = vpop.xlane.xlu0 %3676
  %v3678 = vsel %vm100, %v3666, 0.0
  %3679 = vadd.xlane.f32.xlu0 %v3678
  %v3680 = vpop.xlane.xlu0 %3679
  %v3681 = vmul.f32 %v3671, %v3346
  %v3682 = vmul.f32 %v3674, %v3346
  %v3683 = vmul.f32 %v3677, %v3346
  %v3684 = vmul.f32 %v3680, %v3346
  %v3685 = vsub.f32 %v3663, %v3681
  %v3686 = vsub.f32 %v3664, %v3682
  %v3687 = vsub.f32 %v3665, %v3683
  %v3688 = vsub.f32 %v3666, %v3684
  %v3689 = vmul.f32 %v3685, %v3685
  %v3690 = vmul.f32 %v3686, %v3686
  %v3691 = vmul.f32 %v3687, %v3687
  %v3692 = vmul.f32 %v3688, %v3688
  %v3693 = vsel %vm100, %v3689, 0.0
  %3694 = vadd.xlane.f32.xlu0 %v3693
  %v3695 = vpop.xlane.xlu0 %3694
  %v3696 = vsel %vm100, %v3690, 0.0
  %3697 = vadd.xlane.f32.xlu0 %v3696
  %v3698 = vpop.xlane.xlu0 %3697
  %v3699 = vsel %vm100, %v3691, 0.0
  %3700 = vadd.xlane.f32.xlu0 %v3699
  %v3701 = vpop.xlane.xlu0 %3700
  %v3702 = vsel %vm100, %v3692, 0.0
  %3703 = vadd.xlane.f32.xlu0 %v3702
  %v3704 = vpop.xlane.xlu0 %3703
  %v3705 = vmul.f32 %v3695, %v3346
  %v3706 = vmul.f32 %v3698, %v3346
  %v3707 = vmul.f32 %v3701, %v3346
  %v3708 = vmul.f32 %v3704, %v3346
  %v3709 = vadd.f32 %v3705, 1e-12
  %v3710 = vadd.f32 %v3706, 1e-12
  %v3711 = vadd.f32 %v3707, 1e-12
  %v3712 = vadd.f32 %v3708, 1e-12
  %v3713 = vrsqrt.pop %v3709
  %v3714 = vrsqrt.pop %v3710
  %v3715 = vrsqrt.pop %v3711
  %v3716 = vrsqrt.pop %v3712
  %v3717 = vmul.f32 %v3685, %v3713
  %v3718 = vmul.f32 %v3686, %v3714
  %v3719 = vmul.f32 %v3687, %v3715
  %v3720 = vmul.f32 %v3688, %v3716
  %v3722 = vlaneseq
  %v3723 = vshrl.u32 %v3722, 7
  %v3724 = vsub.s32 0, %v3723
  %v3725 = vrot.slane %v3667, %v3724
  %v3727 = vmul.f32 %v3717, %v3725
  %v3728 = vmul.f32 %v3718, %v3725
  %v3729 = vmul.f32 %v3719, %v3725
  %v3730 = vmul.f32 %v3720, %v3725
  %v3732 = vlaneseq
  %v3733 = vshrl.u32 %v3732, 7
  %v3734 = vsub.s32 0, %v3733
  %v3735 = vrot.slane %v3668, %v3734
  %v3737 = vadd.f32 %v3727, %v3735
  %v3738 = vadd.f32 %v3728, %v3735
  %v3739 = vadd.f32 %v3729, %v3735
  %v3740 = vadd.f32 %v3730, %v3735
  %s3741 = scalar_lea.vmem %s2, 128
  %v3742 = vld [vmem:[%s3741] sm:$0xff]
  %v3743 = vld [vmem:[%s3741 + $0x8] sm:$0xff]
  %v3744 = vld [vmem:[%s3741 + $0x10] sm:$0xff]
  %v3745 = vld [vmem:[%s3741 + $0x18] sm:$0xff]
  %v3746 = vld [vmem:[%s3741 + $0x20] sm:$0xff]
  %v3747 = vld [vmem:[%s3741 + $0x28] sm:$0xff]
  %v3748 = vld [vmem:[%s3741 + $0x30] sm:$0xff]
  %v3749 = vld [vmem:[%s3741 + $0x38] sm:$0xff]
  %v3750 = vld [vmem:[%s3741 + $0x40] sm:$0xff]
  %v3751 = vld [vmem:[%s3741 + $0x48] sm:$0xff]
  %v3752 = vld [vmem:[%s3741 + $0x50] sm:$0xff]
  %v3753 = vld [vmem:[%s3741 + $0x58] sm:$0xff]
  %v3754 = vld [vmem:[%s3741 + $0x60] sm:$0xff]
  %v3755 = vld [vmem:[%s3741 + $0x68] sm:$0xff]
  %v3756 = vld [vmem:[%s3741 + $0x70] sm:$0xff]
  %v3757 = vld [vmem:[%s3741 + $0x78] sm:$0xff]
  %s3758 = scalar_lea.vmem %s3, 2
  %v3759 = vld [vmem:[%s3758] sm:$0x3]
  %v3761 = vlaneseq
  %v3762 = vshrl.u32 %v3761, 7
  %v3763 = vsub.s32 0, %v3762
  %v3764 = vrot.slane %v3759, %v3763
  %v3765 = vlaneseq
  %v3766 = vshrl.u32 %v3765, 7
  %v3767 = vsub.s32 1, %v3766
  %v3768 = vrot.slane %v3759, %v3767
  %v3772 = vsel %vm100, %v3737, 0
  %v3775 = vsel %vm100, %v3738, 0
  %3777 = vmatprep.subr.mxu0 %v3743
  %3778 = vmatpush1.msra.mxu0 %v3742
  %3779 = vmatprep.subr.mxu0 %v3745
  %3780 = vmatpush1.msra.mxu0 %v3744
  %3781 = vmatprep.subr.mxu0 %v3747
  %3782 = vmatpush1.msra.mxu0 %v3746
  %3783 = vmatprep.subr.mxu0 %v3749
  %3784 = vmatpush1.msra.mxu0 %v3748
  %3785 = vmatprep.subr.mxu0 %v3751
  %3786 = vmatpush1.msra.mxu0 %v3750
  %3787 = vmatprep.subr.mxu0 %v3753
  %3788 = vmatpush1.msra.mxu0 %v3752
  %3789 = vmatprep.subr.mxu0 %v3755
  %3790 = vmatpush1.msra.mxu0 %v3754
  %3791 = vmatprep.subr.mxu0 %v3757
  %3792 = vmatpush1.msra.mxu0 %v3756
  %3793 = vmatprep.subr.mxu0 0.0
  %3794 = vmatpush1.msra.mxu0 0.0
  %3795 = vmatprep.subr.mxu0 0.0
  %3796 = vmatpush1.msra.mxu0 0.0
  %3797 = vmatprep.subr.mxu0 0.0
  %3798 = vmatpush1.msra.mxu0 0.0
  %3799 = vmatprep.subr.mxu0 0.0
  %3800 = vmatpush1.msra.mxu0 0.0
  %3801 = vmatprep.subr.mxu0 0.0
  %3802 = vmatpush1.msra.mxu0 0.0
  %3803 = vmatprep.subr.mxu0 0.0
  %3804 = vmatpush1.msra.mxu0 0.0
  %3805 = vmatprep.subr.mxu0 0.0
  %3806 = vmatpush1.msra.mxu0 0.0
  %3807 = vmatprep.subr.mxu0 0.0
  %3808 = vmatpush1.msra.mxu0 0.0
  %3809 = vmatprep.subr.mxu0 0.0
  %3810 = vmatpush1.msra.mxu0 0.0
  %3811 = vmatprep.subr.mxu0 0.0
  %3812 = vmatpush1.msra.mxu0 0.0
  %3813 = vmatprep.subr.mxu0 0.0
  %3814 = vmatpush1.msra.mxu0 0.0
  %3815 = vmatprep.subr.mxu0 0.0
  %3816 = vmatpush1.msra.mxu0 0.0
  %3817 = vmatprep.subr.mxu0 0.0
  %3818 = vmatpush1.msra.mxu0 0.0
  %3819 = vmatprep.subr.mxu0 0.0
  %3820 = vmatpush1.msra.mxu0 0.0
  %3821 = vmatprep.subr.mxu0 0.0
  %3822 = vmatpush1.msra.mxu0 0.0
  %3823 = vmatprep.subr.mxu0 0.0
  %3824 = vmatpush1.msra.mxu0 0.0
  %3825 = vmatprep.subr.mxu0 0.0
  %3826 = vmatpush1.msra.mxu0 0.0
  %3827 = vmatprep.subr.mxu0 0.0
  %3828 = vmatpush1.msra.mxu0 0.0
  %3829 = vmatprep.subr.mxu0 0.0
  %3830 = vmatpush1.msra.mxu0 0.0
  %3831 = vmatprep.subr.mxu0 0.0
  %3832 = vmatpush1.msra.mxu0 0.0
  %3833 = vmatprep.subr.mxu0 0.0
  %3834 = vmatpush1.msra.mxu0 0.0
  %3835 = vmatprep.subr.mxu0 0.0
  %3836 = vmatpush1.msra.mxu0 0.0
  %3837 = vmatprep.subr.mxu0 0.0
  %3838 = vmatpush1.msra.mxu0 0.0
  %3839 = vmatprep.subr.mxu0 0.0
  %3840 = vmatpush1.msra.mxu0 0.0
  %3841 = vmatprep.mubr.f32.mxu0 0.0
  %3842 = vmatmul.mubr.f32.gmra.mrb[0].mxu0 %v3772
  %v3843 = vpop.f32.mrb[0].mxu0
  %v3844 = vadd.f32 %v3764, %v3843
  %v3845 = vpop.f32.mrb[0].mxu0
  %v3846 = vadd.f32 %v3768, %v3845
  %3847 = vmatprep.mubr.f32.mxu0 0.0
  %3848 = vmatmul.mubr.f32.gmra.mrb[0].mxu0 %v3775
  %v3849 = vpop.f32.mrb[0].mxu0
  %v3850 = vadd.f32 %v3764, %v3849
  %v3851 = vpop.f32.mrb[0].mxu0
  %v3852 = vadd.f32 %v3768, %v3851
  %3853 = vdwg.mxu0
  %s3854 = scalar_lea.vmem %s4, 128
  %v3855 = vld [vmem:[%s3854] sm:$0xff]
  %v3856 = vld [vmem:[%s3854 + $0x8] sm:$0xff]
  %v3857 = vld [vmem:[%s3854 + $0x10] sm:$0xff]
  %v3858 = vld [vmem:[%s3854 + $0x18] sm:$0xff]
  %v3859 = vld [vmem:[%s3854 + $0x20] sm:$0xff]
  %v3860 = vld [vmem:[%s3854 + $0x28] sm:$0xff]
  %v3861 = vld [vmem:[%s3854 + $0x30] sm:$0xff]
  %v3862 = vld [vmem:[%s3854 + $0x38] sm:$0xff]
  %v3863 = vld [vmem:[%s3854 + $0x40] sm:$0xff]
  %v3864 = vld [vmem:[%s3854 + $0x48] sm:$0xff]
  %v3865 = vld [vmem:[%s3854 + $0x50] sm:$0xff]
  %v3866 = vld [vmem:[%s3854 + $0x58] sm:$0xff]
  %v3867 = vld [vmem:[%s3854 + $0x60] sm:$0xff]
  %v3868 = vld [vmem:[%s3854 + $0x68] sm:$0xff]
  %v3869 = vld [vmem:[%s3854 + $0x70] sm:$0xff]
  %v3870 = vld [vmem:[%s3854 + $0x78] sm:$0xff]
  %s3871 = scalar_lea.vmem %s5, 2
  %v3872 = vld [vmem:[%s3871] sm:$0x3]
  %v3874 = vlaneseq
  %v3875 = vshrl.u32 %v3874, 7
  %v3876 = vsub.s32 0, %v3875
  %v3877 = vrot.slane %v3872, %v3876
  %v3878 = vlaneseq
  %v3879 = vshrl.u32 %v3878, 7
  %v3880 = vsub.s32 1, %v3879
  %v3881 = vrot.slane %v3872, %v3880
  %v3885 = vsel %vm100, %v3739, 0
  %v3888 = vsel %vm100, %v3740, 0
  %3890 = vmatprep.subr.mxu0 %v3856
  %3891 = vmatpush1.msra.mxu0 %v3855
  %3892 = vmatprep.subr.mxu0 %v3858
  %3893 = vmatpush1.msra.mxu0 %v3857
  %3894 = vmatprep.subr.mxu0 %v3860
  %3895 = vmatpush1.msra.mxu0 %v3859
  %3896 = vmatprep.subr.mxu0 %v3862
  %3897 = vmatpush1.msra.mxu0 %v3861
  %3898 = vmatprep.subr.mxu0 %v3864
  %3899 = vmatpush1.msra.mxu0 %v3863
  %3900 = vmatprep.subr.mxu0 %v3866
  %3901 = vmatpush1.msra.mxu0 %v3865
  %3902 = vmatprep.subr.mxu0 %v3868
  %3903 = vmatpush1.msra.mxu0 %v3867
  %3904 = vmatprep.subr.mxu0 %v3870
  %3905 = vmatpush1.msra.mxu0 %v3869
  %3906 = vmatprep.subr.mxu0 0.0
  %3907 = vmatpush1.msra.mxu0 0.0
  %3908 = vmatprep.subr.mxu0 0.0
  %3909 = vmatpush1.msra.mxu0 0.0
  %3910 = vmatprep.subr.mxu0 0.0
  %3911 = vmatpush1.msra.mxu0 0.0
  %3912 = vmatprep.subr.mxu0 0.0
  %3913 = vmatpush1.msra.mxu0 0.0
  %3914 = vmatprep.subr.mxu0 0.0
  %3915 = vmatpush1.msra.mxu0 0.0
  %3916 = vmatprep.subr.mxu0 0.0
  %3917 = vmatpush1.msra.mxu0 0.0
  %3918 = vmatprep.subr.mxu0 0.0
  %3919 = vmatpush1.msra.mxu0 0.0
  %3920 = vmatprep.subr.mxu0 0.0
  %3921 = vmatpush1.msra.mxu0 0.0
  %3922 = vmatprep.subr.mxu0 0.0
  %3923 = vmatpush1.msra.mxu0 0.0
  %3924 = vmatprep.subr.mxu0 0.0
  %3925 = vmatpush1.msra.mxu0 0.0
  %3926 = vmatprep.subr.mxu0 0.0
  %3927 = vmatpush1.msra.mxu0 0.0
  %3928 = vmatprep.subr.mxu0 0.0
  %3929 = vmatpush1.msra.mxu0 0.0
  %3930 = vmatprep.subr.mxu0 0.0
  %3931 = vmatpush1.msra.mxu0 0.0
  %3932 = vmatprep.subr.mxu0 0.0
  %3933 = vmatpush1.msra.mxu0 0.0
  %3934 = vmatprep.subr.mxu0 0.0
  %3935 = vmatpush1.msra.mxu0 0.0
  %3936 = vmatprep.subr.mxu0 0.0
  %3937 = vmatpush1.msra.mxu0 0.0
  %3938 = vmatprep.subr.mxu0 0.0
  %3939 = vmatpush1.msra.mxu0 0.0
  %3940 = vmatprep.subr.mxu0 0.0
  %3941 = vmatpush1.msra.mxu0 0.0
  %3942 = vmatprep.subr.mxu0 0.0
  %3943 = vmatpush1.msra.mxu0 0.0
  %3944 = vmatprep.subr.mxu0 0.0
  %3945 = vmatpush1.msra.mxu0 0.0
  %3946 = vmatprep.subr.mxu0 0.0
  %3947 = vmatpush1.msra.mxu0 0.0
  %3948 = vmatprep.subr.mxu0 0.0
  %3949 = vmatpush1.msra.mxu0 0.0
  %3950 = vmatprep.subr.mxu0 0.0
  %3951 = vmatpush1.msra.mxu0 0.0
  %3952 = vmatprep.subr.mxu0 0.0
  %3953 = vmatpush1.msra.mxu0 0.0
  %3954 = vmatprep.mubr.f32.mxu0 0.0
  %3955 = vmatmul.mubr.f32.gmra.mrb[0].mxu0 %v3885
  %v3956 = vpop.f32.mrb[0].mxu0
  %v3957 = vadd.f32 %v3877, %v3956
  %v3958 = vpop.f32.mrb[0].mxu0
  %v3959 = vadd.f32 %v3881, %v3958
  %3960 = vmatprep.mubr.f32.mxu0 0.0
  %3961 = vmatmul.mubr.f32.gmra.mrb[0].mxu0 %v3888
  %v3962 = vpop.f32.mrb[0].mxu0
  %v3963 = vadd.f32 %v3877, %v3962
  %v3964 = vpop.f32.mrb[0].mxu0
  %v3965 = vadd.f32 %v3881, %v3964
  %3966 = vdwg.mxu0
  %s3967 = scalar_lea.vmem %s6, 64
  %v3968 = vld [vmem:[%s3967] sm:$0xff]
  %v3969 = vld [vmem:[%s3967 + $0x8] sm:$0xff]
  %v3970 = vld [vmem:[%s3967 + $0x10] sm:$0xff]
  %v3971 = vld [vmem:[%s3967 + $0x18] sm:$0xff]
  %v3972 = vld [vmem:[%s3967 + $0x20] sm:$0xff]
  %v3973 = vld [vmem:[%s3967 + $0x28] sm:$0xff]
  %v3974 = vld [vmem:[%s3967 + $0x30] sm:$0xff]
  %v3975 = vld [vmem:[%s3967 + $0x38] sm:$0xff]
  %3978 = vrot.lane.b32.xlu0 %v3844, 112
  %v3979 = vpop.permute.xlu0 %3978
  %3980 = vrot.lane.b32.xlu0 %v3957, 112
  %v3981 = vpop.permute.xlu0 %3980
  %3982 = vrot.lane.b32.xlu0 %v3844, 96
  %v3983 = vpop.permute.xlu0 %3982
  %3984 = vrot.lane.b32.xlu0 %v3957, 96
  %v3985 = vpop.permute.xlu0 %3984
  %3986 = vrot.lane.b32.xlu0 %v3844, 80
  %v3987 = vpop.permute.xlu0 %3986
  %3988 = vrot.lane.b32.xlu0 %v3957, 80
  %v3989 = vpop.permute.xlu0 %3988
  %3992 = vrot.lane.b32.xlu0 %v3846, 112
  %v3993 = vpop.permute.xlu0 %3992
  %3994 = vrot.lane.b32.xlu0 %v3959, 112
  %v3995 = vpop.permute.xlu0 %3994
  %3996 = vrot.lane.b32.xlu0 %v3846, 96
  %v3997 = vpop.permute.xlu0 %3996
  %3998 = vrot.lane.b32.xlu0 %v3959, 96
  %v3999 = vpop.permute.xlu0 %3998
  %4000 = vrot.lane.b32.xlu0 %v3846, 80
  %v4001 = vpop.permute.xlu0 %4000
  %4002 = vrot.lane.b32.xlu0 %v3959, 80
  %v4003 = vpop.permute.xlu0 %4002
  %v4004 = vsel %vm331, %v3844, 0
  %v4006 = vsel %vm331, %v3957, 0
  %v4008 = vsel %vm331, %v3846, 0
  %4010 = vmatprep.subr.mxu0 0.0
  %4011 = vmatpush1.xpose.msra.mxu0 %v4008
  %4012 = vmatprep.subr.mxu0 0.0
  %4013 = vmatpush1.xpose.msra.mxu0 0.0
  %4014 = vmatprep.subr.mxu0 0.0
  %4015 = vmatpush1.xpose.msra.mxu0 0.0
  %4016 = vmatprep.subr.mxu0 0.0
  %4017 = vmatpush1.xpose.msra.mxu0 0.0
  %4018 = vmatprep.subr.mxu0 0.0
  %4019 = vmatpush1.xpose.msra.mxu0 0.0
  %4020 = vmatprep.subr.mxu0 0.0
  %4021 = vmatpush1.xpose.msra.mxu0 0.0
  %4022 = vmatprep.subr.mxu0 0.0
  %4023 = vmatpush1.xpose.msra.mxu0 0.0
  %4024 = vmatprep.subr.mxu0 0.0
  %4025 = vmatpush1.xpose.msra.mxu0 0.0
  %4026 = vmatprep.subr.mxu0 0.0
  %4027 = vmatpush1.xpose.msra.mxu0 0.0
  %4028 = vmatprep.subr.mxu0 0.0
  %4029 = vmatpush1.xpose.msra.mxu0 0.0
  %4030 = vmatprep.subr.mxu0 0.0
  %4031 = vmatpush1.xpose.msra.mxu0 0.0
  %4032 = vmatprep.subr.mxu0 0.0
  %4033 = vmatpush1.xpose.msra.mxu0 0.0
  %4034 = vmatprep.subr.mxu0 0.0
  %4035 = vmatpush1.xpose.msra.mxu0 0.0
  %4036 = vmatprep.subr.mxu0 0.0
  %4037 = vmatpush1.xpose.msra.mxu0 0.0
  %4038 = vmatprep.subr.mxu0 0.0
  %4039 = vmatpush1.xpose.msra.mxu0 0.0
  %4040 = vmatprep.subr.mxu0 0.0
  %4041 = vmatpush1.xpose.msra.mxu0 0.0
  %4042 = vmatprep.subr.mxu0 0.0
  %4043 = vmatpush1.xpose.msra.mxu0 0.0
  %4044 = vmatprep.subr.mxu0 0.0
  %4045 = vmatpush1.xpose.msra.mxu0 0.0
  %4046 = vmatprep.subr.mxu0 0.0
  %4047 = vmatpush1.xpose.msra.mxu0 0.0
  %4048 = vmatprep.subr.mxu0 0.0
  %4049 = vmatpush1.xpose.msra.mxu0 0.0
  %4050 = vmatprep.subr.mxu0 0.0
  %4051 = vmatpush1.xpose.msra.mxu0 0.0
  %4052 = vmatprep.subr.mxu0 0.0
  %4053 = vmatpush1.xpose.msra.mxu0 0.0
  %4054 = vmatprep.subr.mxu0 0.0
  %4055 = vmatpush1.xpose.msra.mxu0 0.0
  %4056 = vmatprep.subr.mxu0 0.0
  %4057 = vmatpush1.xpose.msra.mxu0 0.0
  %4058 = vmatprep.subr.mxu0 0.0
  %4059 = vmatpush1.xpose.msra.mxu0 0.0
  %4060 = vmatprep.subr.mxu0 0.0
  %4061 = vmatpush1.xpose.msra.mxu0 0.0
  %4062 = vmatprep.subr.mxu0 0.0
  %4063 = vmatpush1.xpose.msra.mxu0 0.0
  %4064 = vmatprep.subr.mxu0 0.0
  %4065 = vmatpush1.xpose.msra.mxu0 0.0
  %4066 = vmatprep.subr.mxu0 0.0
  %4067 = vmatpush1.xpose.msra.mxu0 0.0
  %4068 = vmatprep.subr.mxu0 0.0
  %4069 = vmatpush1.xpose.msra.mxu0 0.0
  %4070 = vmatprep.subr.mxu0 0.0
  %4071 = vmatpush1.xpose.msra.mxu0 0.0
  %4072 = vmatprep.subr.mxu0 0.0
  %4073 = vmatpush1.xpose.msra.mxu0 0.0
  %4074 = vmatprep.mubr.f32.mxu0 0.0
  %4075 = vmatmul.mubr.f32.gmra.mrb[0].mxu0 %v4004
  %v4076 = vpop.f32.mrb[0].mxu0
  %v4077 = vadd.f32 0.0, %v4076
  %v4078 = vpop.f32.mrb[0].mxu0
  %4079 = vmatprep.mubr.f32.mxu0 0.0
  %4080 = vmatmul.mubr.f32.gmra.mrb[0].mxu0 %v4006
  %v4081 = vpop.f32.mrb[0].mxu0
  %v4082 = vadd.f32 0.0, %v4081
  %v4083 = vpop.f32.mrb[0].mxu0
  %4084 = vdwg.mxu0
  %v4085 = vsel %vm331, %v3979, 0
  %v4087 = vsel %vm331, %v3981, 0
  %v4089 = vsel %vm331, %v3993, 0
  %4091 = vmatprep.subr.mxu0 0.0
  %4092 = vmatpush1.xpose.msra.mxu0 %v4089
  %4093 = vmatprep.subr.mxu0 0.0
  %4094 = vmatpush1.xpose.msra.mxu0 0.0
  %4095 = vmatprep.subr.mxu0 0.0
  %4096 = vmatpush1.xpose.msra.mxu0 0.0
  %4097 = vmatprep.subr.mxu0 0.0
  %4098 = vmatpush1.xpose.msra.mxu0 0.0
  %4099 = vmatprep.subr.mxu0 0.0
  %4100 = vmatpush1.xpose.msra.mxu0 0.0
  %4101 = vmatprep.subr.mxu0 0.0
  %4102 = vmatpush1.xpose.msra.mxu0 0.0
  %4103 = vmatprep.subr.mxu0 0.0
  %4104 = vmatpush1.xpose.msra.mxu0 0.0
  %4105 = vmatprep.subr.mxu0 0.0
  %4106 = vmatpush1.xpose.msra.mxu0 0.0
  %4107 = vmatprep.subr.mxu0 0.0
  %4108 = vmatpush1.xpose.msra.mxu0 0.0
  %4109 = vmatprep.subr.mxu0 0.0
  %4110 = vmatpush1.xpose.msra.mxu0 0.0
  %4111 = vmatprep.subr.mxu0 0.0
  %4112 = vmatpush1.xpose.msra.mxu0 0.0
  %4113 = vmatprep.subr.mxu0 0.0
  %4114 = vmatpush1.xpose.msra.mxu0 0.0
  %4115 = vmatprep.subr.mxu0 0.0
  %4116 = vmatpush1.xpose.msra.mxu0 0.0
  %4117 = vmatprep.subr.mxu0 0.0
  %4118 = vmatpush1.xpose.msra.mxu0 0.0
  %4119 = vmatprep.subr.mxu0 0.0
  %4120 = vmatpush1.xpose.msra.mxu0 0.0
  %4121 = vmatprep.subr.mxu0 0.0
  %4122 = vmatpush1.xpose.msra.mxu0 0.0
  %4123 = vmatprep.subr.mxu0 0.0
  %4124 = vmatpush1.xpose.msra.mxu0 0.0
  %4125 = vmatprep.subr.mxu0 0.0
  %4126 = vmatpush1.xpose.msra.mxu0 0.0
  %4127 = vmatprep.subr.mxu0 0.0
  %4128 = vmatpush1.xpose.msra.mxu0 0.0
  %4129 = vmatprep.subr.mxu0 0.0
  %4130 = vmatpush1.xpose.msra.mxu0 0.0
  %4131 = vmatprep.subr.mxu0 0.0
  %4132 = vmatpush1.xpose.msra.mxu0 0.0
  %4133 = vmatprep.subr.mxu0 0.0
  %4134 = vmatpush1.xpose.msra.mxu0 0.0
  %4135 = vmatprep.subr.mxu0 0.0
  %4136 = vmatpush1.xpose.msra.mxu0 0.0
  %4137 = vmatprep.subr.mxu0 0.0
  %4138 = vmatpush1.xpose.msra.mxu0 0.0
  %4139 = vmatprep.subr.mxu0 0.0
  %4140 = vmatpush1.xpose.msra.mxu0 0.0
  %4141 = vmatprep.subr.mxu0 0.0
  %4142 = vmatpush1.xpose.msra.mxu0 0.0
  %4143 = vmatprep.subr.mxu0 0.0
  %4144 = vmatpush1.xpose.msra.mxu0 0.0
  %4145 = vmatprep.subr.mxu0 0.0
  %4146 = vmatpush1.xpose.msra.mxu0 0.0
  %4147 = vmatprep.subr.mxu0 0.0
  %4148 = vmatpush1.xpose.msra.mxu0 0.0
  %4149 = vmatprep.subr.mxu0 0.0
  %4150 = vmatpush1.xpose.msra.mxu0 0.0
  %4151 = vmatprep.subr.mxu0 0.0
  %4152 = vmatpush1.xpose.msra.mxu0 0.0
  %4153 = vmatprep.subr.mxu0 0.0
  %4154 = vmatpush1.xpose.msra.mxu0 0.0
  %4155 = vmatprep.mubr.f32.mxu0 0.0
  %4156 = vmatmul.mubr.f32.gmra.mrb[0].mxu0 %v4085
  %v4157 = vpop.f32.mrb[0].mxu0
  %v4158 = vadd.f32 0.0, %v4157
  %v4159 = vpop.f32.mrb[0].mxu0
  %4160 = vmatprep.mubr.f32.mxu0 0.0
  %4161 = vmatmul.mubr.f32.gmra.mrb[0].mxu0 %v4087
  %v4162 = vpop.f32.mrb[0].mxu0
  %v4163 = vadd.f32 0.0, %v4162
  %v4164 = vpop.f32.mrb[0].mxu0
  %4165 = vdwg.mxu0
  %v4166 = vsel %vm331, %v3983, 0
  %v4168 = vsel %vm331, %v3985, 0
  %v4170 = vsel %vm331, %v3997, 0
  %4172 = vmatprep.subr.mxu0 0.0
  %4173 = vmatpush1.xpose.msra.mxu0 %v4170
  %4174 = vmatprep.subr.mxu0 0.0
  %4175 = vmatpush1.xpose.msra.mxu0 0.0
  %4176 = vmatprep.subr.mxu0 0.0
  %4177 = vmatpush1.xpose.msra.mxu0 0.0
  %4178 = vmatprep.subr.mxu0 0.0
  %4179 = vmatpush1.xpose.msra.mxu0 0.0
  %4180 = vmatprep.subr.mxu0 0.0
  %4181 = vmatpush1.xpose.msra.mxu0 0.0
  %4182 = vmatprep.subr.mxu0 0.0
  %4183 = vmatpush1.xpose.msra.mxu0 0.0
  %4184 = vmatprep.subr.mxu0 0.0
  %4185 = vmatpush1.xpose.msra.mxu0 0.0
  %4186 = vmatprep.subr.mxu0 0.0
  %4187 = vmatpush1.xpose.msra.mxu0 0.0
  %4188 = vmatprep.subr.mxu0 0.0
  %4189 = vmatpush1.xpose.msra.mxu0 0.0
  %4190 = vmatprep.subr.mxu0 0.0
  %4191 = vmatpush1.xpose.msra.mxu0 0.0
  %4192 = vmatprep.subr.mxu0 0.0
  %4193 = vmatpush1.xpose.msra.mxu0 0.0
  %4194 = vmatprep.subr.mxu0 0.0
  %4195 = vmatpush1.xpose.msra.mxu0 0.0
  %4196 = vmatprep.subr.mxu0 0.0
  %4197 = vmatpush1.xpose.msra.mxu0 0.0
  %4198 = vmatprep.subr.mxu0 0.0
  %4199 = vmatpush1.xpose.msra.mxu0 0.0
  %4200 = vmatprep.subr.mxu0 0.0
  %4201 = vmatpush1.xpose.msra.mxu0 0.0
  %4202 = vmatprep.subr.mxu0 0.0
  %4203 = vmatpush1.xpose.msra.mxu0 0.0
  %4204 = vmatprep.subr.mxu0 0.0
  %4205 = vmatpush1.xpose.msra.mxu0 0.0
  %4206 = vmatprep.subr.mxu0 0.0
  %4207 = vmatpush1.xpose.msra.mxu0 0.0
  %4208 = vmatprep.subr.mxu0 0.0
  %4209 = vmatpush1.xpose.msra.mxu0 0.0
  %4210 = vmatprep.subr.mxu0 0.0
  %4211 = vmatpush1.xpose.msra.mxu0 0.0
  %4212 = vmatprep.subr.mxu0 0.0
  %4213 = vmatpush1.xpose.msra.mxu0 0.0
  %4214 = vmatprep.subr.mxu0 0.0
  %4215 = vmatpush1.xpose.msra.mxu0 0.0
  %4216 = vmatprep.subr.mxu0 0.0
  %4217 = vmatpush1.xpose.msra.mxu0 0.0
  %4218 = vmatprep.subr.mxu0 0.0
  %4219 = vmatpush1.xpose.msra.mxu0 0.0
  %4220 = vmatprep.subr.mxu0 0.0
  %4221 = vmatpush1.xpose.msra.mxu0 0.0
  %4222 = vmatprep.subr.mxu0 0.0
  %4223 = vmatpush1.xpose.msra.mxu0 0.0
  %4224 = vmatprep.subr.mxu0 0.0
  %4225 = vmatpush1.xpose.msra.mxu0 0.0
  %4226 = vmatprep.subr.mxu0 0.0
  %4227 = vmatpush1.xpose.msra.mxu0 0.0
  %4228 = vmatprep.subr.mxu0 0.0
  %4229 = vmatpush1.xpose.msra.mxu0 0.0
  %4230 = vmatprep.subr.mxu0 0.0
  %4231 = vmatpush1.xpose.msra.mxu0 0.0
  %4232 = vmatprep.subr.mxu0 0.0
  %4233 = vmatpush1.xpose.msra.mxu0 0.0
  %4234 = vmatprep.subr.mxu0 0.0
  %4235 = vmatpush1.xpose.msra.mxu0 0.0
  %4236 = vmatprep.mubr.f32.mxu0 0.0
  %4237 = vmatmul.mubr.f32.gmra.mrb[0].mxu0 %v4166
  %v4238 = vpop.f32.mrb[0].mxu0
  %v4239 = vadd.f32 0.0, %v4238
  %v4240 = vpop.f32.mrb[0].mxu0
  %4241 = vmatprep.mubr.f32.mxu0 0.0
  %4242 = vmatmul.mubr.f32.gmra.mrb[0].mxu0 %v4168
  %v4243 = vpop.f32.mrb[0].mxu0
  %v4244 = vadd.f32 0.0, %v4243
  %v4245 = vpop.f32.mrb[0].mxu0
  %4246 = vdwg.mxu0
  %v4247 = vsel %vm331, %v3987, 0
  %v4249 = vsel %vm331, %v3989, 0
  %v4251 = vsel %vm331, %v4001, 0
  %4253 = vmatprep.subr.mxu0 0.0
  %4254 = vmatpush1.xpose.msra.mxu0 %v4251
  %4255 = vmatprep.subr.mxu0 0.0
  %4256 = vmatpush1.xpose.msra.mxu0 0.0
  %4257 = vmatprep.subr.mxu0 0.0
  %4258 = vmatpush1.xpose.msra.mxu0 0.0
  %4259 = vmatprep.subr.mxu0 0.0
  %4260 = vmatpush1.xpose.msra.mxu0 0.0
  %4261 = vmatprep.subr.mxu0 0.0
  %4262 = vmatpush1.xpose.msra.mxu0 0.0
  %4263 = vmatprep.subr.mxu0 0.0
  %4264 = vmatpush1.xpose.msra.mxu0 0.0
  %4265 = vmatprep.subr.mxu0 0.0
  %4266 = vmatpush1.xpose.msra.mxu0 0.0
  %4267 = vmatprep.subr.mxu0 0.0
  %4268 = vmatpush1.xpose.msra.mxu0 0.0
  %4269 = vmatprep.subr.mxu0 0.0
  %4270 = vmatpush1.xpose.msra.mxu0 0.0
  %4271 = vmatprep.subr.mxu0 0.0
  %4272 = vmatpush1.xpose.msra.mxu0 0.0
  %4273 = vmatprep.subr.mxu0 0.0
  %4274 = vmatpush1.xpose.msra.mxu0 0.0
  %4275 = vmatprep.subr.mxu0 0.0
  %4276 = vmatpush1.xpose.msra.mxu0 0.0
  %4277 = vmatprep.subr.mxu0 0.0
  %4278 = vmatpush1.xpose.msra.mxu0 0.0
  %4279 = vmatprep.subr.mxu0 0.0
  %4280 = vmatpush1.xpose.msra.mxu0 0.0
  %4281 = vmatprep.subr.mxu0 0.0
  %4282 = vmatpush1.xpose.msra.mxu0 0.0
  %4283 = vmatprep.subr.mxu0 0.0
  %4284 = vmatpush1.xpose.msra.mxu0 0.0
  %4285 = vmatprep.subr.mxu0 0.0
  %4286 = vmatpush1.xpose.msra.mxu0 0.0
  %4287 = vmatprep.subr.mxu0 0.0
  %4288 = vmatpush1.xpose.msra.mxu0 0.0
  %4289 = vmatprep.subr.mxu0 0.0
  %4290 = vmatpush1.xpose.msra.mxu0 0.0
  %4291 = vmatprep.subr.mxu0 0.0
  %4292 = vmatpush1.xpose.msra.mxu0 0.0
  %4293 = vmatprep.subr.mxu0 0.0
  %4294 = vmatpush1.xpose.msra.mxu0 0.0
  %4295 = vmatprep.subr.mxu0 0.0
  %4296 = vmatpush1.xpose.msra.mxu0 0.0
  %4297 = vmatprep.subr.mxu0 0.0
  %4298 = vmatpush1.xpose.msra.mxu0 0.0
  %4299 = vmatprep.subr.mxu0 0.0
  %4300 = vmatpush1.xpose.msra.mxu0 0.0
  %4301 = vmatprep.subr.mxu0 0.0
  %4302 = vmatpush1.xpose.msra.mxu0 0.0
  %4303 = vmatprep.subr.mxu0 0.0
  %4304 = vmatpush1.xpose.msra.mxu0 0.0
  %4305 = vmatprep.subr.mxu0 0.0
  %4306 = vmatpush1.xpose.msra.mxu0 0.0
  %4307 = vmatprep.subr.mxu0 0.0
  %4308 = vmatpush1.xpose.msra.mxu0 0.0
  %4309 = vmatprep.subr.mxu0 0.0
  %4310 = vmatpush1.xpose.msra.mxu0 0.0
  %4311 = vmatprep.subr.mxu0 0.0
  %4312 = vmatpush1.xpose.msra.mxu0 0.0
  %4313 = vmatprep.subr.mxu0 0.0
  %4314 = vmatpush1.xpose.msra.mxu0 0.0
  %4315 = vmatprep.subr.mxu0 0.0
  %4316 = vmatpush1.xpose.msra.mxu0 0.0
  %4317 = vmatprep.mubr.f32.mxu0 0.0
  %4318 = vmatmul.mubr.f32.gmra.mrb[0].mxu0 %v4247
  %v4319 = vpop.f32.mrb[0].mxu0
  %v4320 = vadd.f32 0.0, %v4319
  %v4321 = vpop.f32.mrb[0].mxu0
  %4322 = vmatprep.mubr.f32.mxu0 0.0
  %4323 = vmatmul.mubr.f32.gmra.mrb[0].mxu0 %v4249
  %v4324 = vpop.f32.mrb[0].mxu0
  %v4325 = vadd.f32 0.0, %v4324
  %v4326 = vpop.f32.mrb[0].mxu0
  %4327 = vdwg.mxu0
  %4328 = vrot.lane.b32.xlu0 %v3844, 64
  %v4329 = vpop.permute.xlu0 %4328
  %4330 = vrot.lane.b32.xlu0 %v3957, 64
  %v4331 = vpop.permute.xlu0 %4330
  %v4332 = vsel %vm331, %v4329, 0
  %v4334 = vsel %vm331, %v4331, 0
  %v4336 = vsel %vm331, %v3959, 0
  %4338 = vmatprep.subr.mxu0 0.0
  %4339 = vmatpush1.xpose.msra.mxu0 %v4336
  %4340 = vmatprep.subr.mxu0 0.0
  %4341 = vmatpush1.xpose.msra.mxu0 0.0
  %4342 = vmatprep.subr.mxu0 0.0
  %4343 = vmatpush1.xpose.msra.mxu0 0.0
  %4344 = vmatprep.subr.mxu0 0.0
  %4345 = vmatpush1.xpose.msra.mxu0 0.0
  %4346 = vmatprep.subr.mxu0 0.0
  %4347 = vmatpush1.xpose.msra.mxu0 0.0
  %4348 = vmatprep.subr.mxu0 0.0
  %4349 = vmatpush1.xpose.msra.mxu0 0.0
  %4350 = vmatprep.subr.mxu0 0.0
  %4351 = vmatpush1.xpose.msra.mxu0 0.0
  %4352 = vmatprep.subr.mxu0 0.0
  %4353 = vmatpush1.xpose.msra.mxu0 0.0
  %4354 = vmatprep.subr.mxu0 0.0
  %4355 = vmatpush1.xpose.msra.mxu0 0.0
  %4356 = vmatprep.subr.mxu0 0.0
  %4357 = vmatpush1.xpose.msra.mxu0 0.0
  %4358 = vmatprep.subr.mxu0 0.0
  %4359 = vmatpush1.xpose.msra.mxu0 0.0
  %4360 = vmatprep.subr.mxu0 0.0
  %4361 = vmatpush1.xpose.msra.mxu0 0.0
  %4362 = vmatprep.subr.mxu0 0.0
  %4363 = vmatpush1.xpose.msra.mxu0 0.0
  %4364 = vmatprep.subr.mxu0 0.0
  %4365 = vmatpush1.xpose.msra.mxu0 0.0
  %4366 = vmatprep.subr.mxu0 0.0
  %4367 = vmatpush1.xpose.msra.mxu0 0.0
  %4368 = vmatprep.subr.mxu0 0.0
  %4369 = vmatpush1.xpose.msra.mxu0 0.0
  %4370 = vmatprep.subr.mxu0 0.0
  %4371 = vmatpush1.xpose.msra.mxu0 0.0
  %4372 = vmatprep.subr.mxu0 0.0
  %4373 = vmatpush1.xpose.msra.mxu0 0.0
  %4374 = vmatprep.subr.mxu0 0.0
  %4375 = vmatpush1.xpose.msra.mxu0 0.0
  %4376 = vmatprep.subr.mxu0 0.0
  %4377 = vmatpush1.xpose.msra.mxu0 0.0
  %4378 = vmatprep.subr.mxu0 0.0
  %4379 = vmatpush1.xpose.msra.mxu0 0.0
  %4380 = vmatprep.subr.mxu0 0.0
  %4381 = vmatpush1.xpose.msra.mxu0 0.0
  %4382 = vmatprep.subr.mxu0 0.0
  %4383 = vmatpush1.xpose.msra.mxu0 0.0
  %4384 = vmatprep.subr.mxu0 0.0
  %4385 = vmatpush1.xpose.msra.mxu0 0.0
  %4386 = vmatprep.subr.mxu0 0.0
  %4387 = vmatpush1.xpose.msra.mxu0 0.0
  %4388 = vmatprep.subr.mxu0 0.0
  %4389 = vmatpush1.xpose.msra.mxu0 0.0
  %4390 = vmatprep.subr.mxu0 0.0
  %4391 = vmatpush1.xpose.msra.mxu0 0.0
  %4392 = vmatprep.subr.mxu0 0.0
  %4393 = vmatpush1.xpose.msra.mxu0 0.0
  %4394 = vmatprep.subr.mxu0 0.0
  %4395 = vmatpush1.xpose.msra.mxu0 0.0
  %4396 = vmatprep.subr.mxu0 0.0
  %4397 = vmatpush1.xpose.msra.mxu0 0.0
  %4398 = vmatprep.subr.mxu0 0.0
  %4399 = vmatpush1.xpose.msra.mxu0 0.0
  %4400 = vmatprep.subr.mxu0 0.0
  %4401 = vmatpush1.xpose.msra.mxu0 0.0
  %4402 = vmatprep.mubr.f32.mxu0 0.0
  %4403 = vmatmul.mubr.f32.gmra.mrb[0].mxu0 %v4332
  %v4404 = vpop.f32.mrb[0].mxu0
  %v4405 = vadd.f32 0.0, %v4404
  %v4406 = vpop.f32.mrb[0].mxu0
  %4407 = vmatprep.mubr.f32.mxu0 0.0
  %4408 = vmatmul.mubr.f32.gmra.mrb[0].mxu0 %v4334
  %v4409 = vpop.f32.mrb[0].mxu0
  %v4410 = vadd.f32 0.0, %v4409
  %v4411 = vpop.f32.mrb[0].mxu0
  %4412 = vdwg.mxu0
  %4413 = vrot.lane.b32.xlu0 %v3979, 64
  %v4414 = vpop.permute.xlu0 %4413
  %4415 = vrot.lane.b32.xlu0 %v3981, 64
  %v4416 = vpop.permute.xlu0 %4415
  %v4417 = vsel %vm331, %v4414, 0
  %v4419 = vsel %vm331, %v4416, 0
  %v4421 = vsel %vm331, %v3995, 0
  %4423 = vmatprep.subr.mxu0 0.0
  %4424 = vmatpush1.xpose.msra.mxu0 %v4421
  %4425 = vmatprep.subr.mxu0 0.0
  %4426 = vmatpush1.xpose.msra.mxu0 0.0
  %4427 = vmatprep.subr.mxu0 0.0
  %4428 = vmatpush1.xpose.msra.mxu0 0.0
  %4429 = vmatprep.subr.mxu0 0.0
  %4430 = vmatpush1.xpose.msra.mxu0 0.0
  %4431 = vmatprep.subr.mxu0 0.0
  %4432 = vmatpush1.xpose.msra.mxu0 0.0
  %4433 = vmatprep.subr.mxu0 0.0
  %4434 = vmatpush1.xpose.msra.mxu0 0.0
  %4435 = vmatprep.subr.mxu0 0.0
  %4436 = vmatpush1.xpose.msra.mxu0 0.0
  %4437 = vmatprep.subr.mxu0 0.0
  %4438 = vmatpush1.xpose.msra.mxu0 0.0
  %4439 = vmatprep.subr.mxu0 0.0
  %4440 = vmatpush1.xpose.msra.mxu0 0.0
  %4441 = vmatprep.subr.mxu0 0.0
  %4442 = vmatpush1.xpose.msra.mxu0 0.0
  %4443 = vmatprep.subr.mxu0 0.0
  %4444 = vmatpush1.xpose.msra.mxu0 0.0
  %4445 = vmatprep.subr.mxu0 0.0
  %4446 = vmatpush1.xpose.msra.mxu0 0.0
  %4447 = vmatprep.subr.mxu0 0.0
  %4448 = vmatpush1.xpose.msra.mxu0 0.0
  %4449 = vmatprep.subr.mxu0 0.0
  %4450 = vmatpush1.xpose.msra.mxu0 0.0
  %4451 = vmatprep.subr.mxu0 0.0
  %4452 = vmatpush1.xpose.msra.mxu0 0.0
  %4453 = vmatprep.subr.mxu0 0.0
  %4454 = vmatpush1.xpose.msra.mxu0 0.0
  %4455 = vmatprep.subr.mxu0 0.0
  %4456 = vmatpush1.xpose.msra.mxu0 0.0
  %4457 = vmatprep.subr.mxu0 0.0
  %4458 = vmatpush1.xpose.msra.mxu0 0.0
  %4459 = vmatprep.subr.mxu0 0.0
  %4460 = vmatpush1.xpose.msra.mxu0 0.0
  %4461 = vmatprep.subr.mxu0 0.0
  %4462 = vmatpush1.xpose.msra.mxu0 0.0
  %4463 = vmatprep.subr.mxu0 0.0
  %4464 = vmatpush1.xpose.msra.mxu0 0.0
  %4465 = vmatprep.subr.mxu0 0.0
  %4466 = vmatpush1.xpose.msra.mxu0 0.0
  %4467 = vmatprep.subr.mxu0 0.0
  %4468 = vmatpush1.xpose.msra.mxu0 0.0
  %4469 = vmatprep.subr.mxu0 0.0
  %4470 = vmatpush1.xpose.msra.mxu0 0.0
  %4471 = vmatprep.subr.mxu0 0.0
  %4472 = vmatpush1.xpose.msra.mxu0 0.0
  %4473 = vmatprep.subr.mxu0 0.0
  %4474 = vmatpush1.xpose.msra.mxu0 0.0
  %4475 = vmatprep.subr.mxu0 0.0
  %4476 = vmatpush1.xpose.msra.mxu0 0.0
  %4477 = vmatprep.subr.mxu0 0.0
  %4478 = vmatpush1.xpose.msra.mxu0 0.0
  %4479 = vmatprep.subr.mxu0 0.0
  %4480 = vmatpush1.xpose.msra.mxu0 0.0
  %4481 = vmatprep.subr.mxu0 0.0
  %4482 = vmatpush1.xpose.msra.mxu0 0.0
  %4483 = vmatprep.subr.mxu0 0.0
  %4484 = vmatpush1.xpose.msra.mxu0 0.0
  %4485 = vmatprep.subr.mxu0 0.0
  %4486 = vmatpush1.xpose.msra.mxu0 0.0
  %4487 = vmatprep.mubr.f32.mxu0 0.0
  %4488 = vmatmul.mubr.f32.gmra.mrb[0].mxu0 %v4417
  %v4489 = vpop.f32.mrb[0].mxu0
  %v4490 = vadd.f32 0.0, %v4489
  %v4491 = vpop.f32.mrb[0].mxu0
  %4492 = vmatprep.mubr.f32.mxu0 0.0
  %4493 = vmatmul.mubr.f32.gmra.mrb[0].mxu0 %v4419
  %v4494 = vpop.f32.mrb[0].mxu0
  %v4495 = vadd.f32 0.0, %v4494
  %v4496 = vpop.f32.mrb[0].mxu0
  %4497 = vdwg.mxu0
  %4498 = vrot.lane.b32.xlu0 %v3983, 64
  %v4499 = vpop.permute.xlu0 %4498
  %4500 = vrot.lane.b32.xlu0 %v3985, 64
  %v4501 = vpop.permute.xlu0 %4500
  %v4502 = vsel %vm331, %v4499, 0
  %v4504 = vsel %vm331, %v4501, 0
  %v4506 = vsel %vm331, %v3999, 0
  %4508 = vmatprep.subr.mxu0 0.0
  %4509 = vmatpush1.xpose.msra.mxu0 %v4506
  %4510 = vmatprep.subr.mxu0 0.0
  %4511 = vmatpush1.xpose.msra.mxu0 0.0
  %4512 = vmatprep.subr.mxu0 0.0
  %4513 = vmatpush1.xpose.msra.mxu0 0.0
  %4514 = vmatprep.subr.mxu0 0.0
  %4515 = vmatpush1.xpose.msra.mxu0 0.0
  %4516 = vmatprep.subr.mxu0 0.0
  %4517 = vmatpush1.xpose.msra.mxu0 0.0
  %4518 = vmatprep.subr.mxu0 0.0
  %4519 = vmatpush1.xpose.msra.mxu0 0.0
  %4520 = vmatprep.subr.mxu0 0.0
  %4521 = vmatpush1.xpose.msra.mxu0 0.0
  %4522 = vmatprep.subr.mxu0 0.0
  %4523 = vmatpush1.xpose.msra.mxu0 0.0
  %4524 = vmatprep.subr.mxu0 0.0
  %4525 = vmatpush1.xpose.msra.mxu0 0.0
  %4526 = vmatprep.subr.mxu0 0.0
  %4527 = vmatpush1.xpose.msra.mxu0 0.0
  %4528 = vmatprep.subr.mxu0 0.0
  %4529 = vmatpush1.xpose.msra.mxu0 0.0
  %4530 = vmatprep.subr.mxu0 0.0
  %4531 = vmatpush1.xpose.msra.mxu0 0.0
  %4532 = vmatprep.subr.mxu0 0.0
  %4533 = vmatpush1.xpose.msra.mxu0 0.0
  %4534 = vmatprep.subr.mxu0 0.0
  %4535 = vmatpush1.xpose.msra.mxu0 0.0
  %4536 = vmatprep.subr.mxu0 0.0
  %4537 = vmatpush1.xpose.msra.mxu0 0.0
  %4538 = vmatprep.subr.mxu0 0.0
  %4539 = vmatpush1.xpose.msra.mxu0 0.0
  %4540 = vmatprep.subr.mxu0 0.0
  %4541 = vmatpush1.xpose.msra.mxu0 0.0
  %4542 = vmatprep.subr.mxu0 0.0
  %4543 = vmatpush1.xpose.msra.mxu0 0.0
  %4544 = vmatprep.subr.mxu0 0.0
  %4545 = vmatpush1.xpose.msra.mxu0 0.0
  %4546 = vmatprep.subr.mxu0 0.0
  %4547 = vmatpush1.xpose.msra.mxu0 0.0
  %4548 = vmatprep.subr.mxu0 0.0
  %4549 = vmatpush1.xpose.msra.mxu0 0.0
  %4550 = vmatprep.subr.mxu0 0.0
  %4551 = vmatpush1.xpose.msra.mxu0 0.0
  %4552 = vmatprep.subr.mxu0 0.0
  %4553 = vmatpush1.xpose.msra.mxu0 0.0
  %4554 = vmatprep.subr.mxu0 0.0
  %4555 = vmatpush1.xpose.msra.mxu0 0.0
  %4556 = vmatprep.subr.mxu0 0.0
  %4557 = vmatpush1.xpose.msra.mxu0 0.0
  %4558 = vmatprep.subr.mxu0 0.0
  %4559 = vmatpush1.xpose.msra.mxu0 0.0
  %4560 = vmatprep.subr.mxu0 0.0
  %4561 = vmatpush1.xpose.msra.mxu0 0.0
  %4562 = vmatprep.subr.mxu0 0.0
  %4563 = vmatpush1.xpose.msra.mxu0 0.0
  %4564 = vmatprep.subr.mxu0 0.0
  %4565 = vmatpush1.xpose.msra.mxu0 0.0
  %4566 = vmatprep.subr.mxu0 0.0
  %4567 = vmatpush1.xpose.msra.mxu0 0.0
  %4568 = vmatprep.subr.mxu0 0.0
  %4569 = vmatpush1.xpose.msra.mxu0 0.0
  %4570 = vmatprep.subr.mxu0 0.0
  %4571 = vmatpush1.xpose.msra.mxu0 0.0
  %4572 = vmatprep.mubr.f32.mxu0 0.0
  %4573 = vmatmul.mubr.f32.gmra.mrb[0].mxu0 %v4502
  %v4574 = vpop.f32.mrb[0].mxu0
  %v4575 = vadd.f32 0.0, %v4574
  %v4576 = vpop.f32.mrb[0].mxu0
  %4577 = vmatprep.mubr.f32.mxu0 0.0
  %4578 = vmatmul.mubr.f32.gmra.mrb[0].mxu0 %v4504
  %v4579 = vpop.f32.mrb[0].mxu0
  %v4580 = vadd.f32 0.0, %v4579
  %v4581 = vpop.f32.mrb[0].mxu0
  %4582 = vdwg.mxu0
  %4583 = vrot.lane.b32.xlu0 %v3987, 64
  %v4584 = vpop.permute.xlu0 %4583
  %4585 = vrot.lane.b32.xlu0 %v3989, 64
  %v4586 = vpop.permute.xlu0 %4585
  %v4587 = vsel %vm331, %v4584, 0
  %v4589 = vsel %vm331, %v4586, 0
  %v4591 = vsel %vm331, %v4003, 0
  %4593 = vmatprep.subr.mxu0 0.0
  %4594 = vmatpush1.xpose.msra.mxu0 %v4591
  %4595 = vmatprep.subr.mxu0 0.0
  %4596 = vmatpush1.xpose.msra.mxu0 0.0
  %4597 = vmatprep.subr.mxu0 0.0
  %4598 = vmatpush1.xpose.msra.mxu0 0.0
  %4599 = vmatprep.subr.mxu0 0.0
  %4600 = vmatpush1.xpose.msra.mxu0 0.0
  %4601 = vmatprep.subr.mxu0 0.0
  %4602 = vmatpush1.xpose.msra.mxu0 0.0
  %4603 = vmatprep.subr.mxu0 0.0
  %4604 = vmatpush1.xpose.msra.mxu0 0.0
  %4605 = vmatprep.subr.mxu0 0.0
  %4606 = vmatpush1.xpose.msra.mxu0 0.0
  %4607 = vmatprep.subr.mxu0 0.0
  %4608 = vmatpush1.xpose.msra.mxu0 0.0
  %4609 = vmatprep.subr.mxu0 0.0
  %4610 = vmatpush1.xpose.msra.mxu0 0.0
  %4611 = vmatprep.subr.mxu0 0.0
  %4612 = vmatpush1.xpose.msra.mxu0 0.0
  %4613 = vmatprep.subr.mxu0 0.0
  %4614 = vmatpush1.xpose.msra.mxu0 0.0
  %4615 = vmatprep.subr.mxu0 0.0
  %4616 = vmatpush1.xpose.msra.mxu0 0.0
  %4617 = vmatprep.subr.mxu0 0.0
  %4618 = vmatpush1.xpose.msra.mxu0 0.0
  %4619 = vmatprep.subr.mxu0 0.0
  %4620 = vmatpush1.xpose.msra.mxu0 0.0
  %4621 = vmatprep.subr.mxu0 0.0
  %4622 = vmatpush1.xpose.msra.mxu0 0.0
  %4623 = vmatprep.subr.mxu0 0.0
  %4624 = vmatpush1.xpose.msra.mxu0 0.0
  %4625 = vmatprep.subr.mxu0 0.0
  %4626 = vmatpush1.xpose.msra.mxu0 0.0
  %4627 = vmatprep.subr.mxu0 0.0
  %4628 = vmatpush1.xpose.msra.mxu0 0.0
  %4629 = vmatprep.subr.mxu0 0.0
  %4630 = vmatpush1.xpose.msra.mxu0 0.0
  %4631 = vmatprep.subr.mxu0 0.0
  %4632 = vmatpush1.xpose.msra.mxu0 0.0
  %4633 = vmatprep.subr.mxu0 0.0
  %4634 = vmatpush1.xpose.msra.mxu0 0.0
  %4635 = vmatprep.subr.mxu0 0.0
  %4636 = vmatpush1.xpose.msra.mxu0 0.0
  %4637 = vmatprep.subr.mxu0 0.0
  %4638 = vmatpush1.xpose.msra.mxu0 0.0
  %4639 = vmatprep.subr.mxu0 0.0
  %4640 = vmatpush1.xpose.msra.mxu0 0.0
  %4641 = vmatprep.subr.mxu0 0.0
  %4642 = vmatpush1.xpose.msra.mxu0 0.0
  %4643 = vmatprep.subr.mxu0 0.0
  %4644 = vmatpush1.xpose.msra.mxu0 0.0
  %4645 = vmatprep.subr.mxu0 0.0
  %4646 = vmatpush1.xpose.msra.mxu0 0.0
  %4647 = vmatprep.subr.mxu0 0.0
  %4648 = vmatpush1.xpose.msra.mxu0 0.0
  %4649 = vmatprep.subr.mxu0 0.0
  %4650 = vmatpush1.xpose.msra.mxu0 0.0
  %4651 = vmatprep.subr.mxu0 0.0
  %4652 = vmatpush1.xpose.msra.mxu0 0.0
  %4653 = vmatprep.subr.mxu0 0.0
  %4654 = vmatpush1.xpose.msra.mxu0 0.0
  %4655 = vmatprep.subr.mxu0 0.0
  %4656 = vmatpush1.xpose.msra.mxu0 0.0
  %4657 = vmatprep.mubr.f32.mxu0 0.0
  %4658 = vmatmul.mubr.f32.gmra.mrb[0].mxu0 %v4587
  %v4659 = vpop.f32.mrb[0].mxu0
  %v4660 = vadd.f32 0.0, %v4659
  %v4661 = vpop.f32.mrb[0].mxu0
  %4662 = vmatprep.mubr.f32.mxu0 0.0
  %4663 = vmatmul.mubr.f32.gmra.mrb[0].mxu0 %v4589
  %v4664 = vpop.f32.mrb[0].mxu0
  %v4665 = vadd.f32 0.0, %v4664
  %v4666 = vpop.f32.mrb[0].mxu0
  %4667 = vdwg.mxu0
  %4676 = vrot.lane.b32.xlu0 %v4405, 8
  %v4677 = vpop.permute.xlu0 %4676
  %4678 = vrot.lane.b32.xlu0 %v4410, 8
  %v4679 = vpop.permute.xlu0 %4678
  %4680 = vrot.lane.b32.xlu0 %v4490, 8
  %v4681 = vpop.permute.xlu0 %4680
  %4682 = vrot.lane.b32.xlu0 %v4495, 8
  %v4683 = vpop.permute.xlu0 %4682
  %4684 = vrot.lane.b32.xlu0 %v4575, 8
  %v4685 = vpop.permute.xlu0 %4684
  %4686 = vrot.lane.b32.xlu0 %v4580, 8
  %v4687 = vpop.permute.xlu0 %4686
  %4688 = vrot.lane.b32.xlu0 %v4660, 8
  %v4689 = vpop.permute.xlu0 %4688
  %4690 = vrot.lane.b32.xlu0 %v4665, 8
  %v4691 = vpop.permute.xlu0 %4690
  %v4700 = vsel %vm1028, %v4077, %v4677
  %v4701 = vsel %vm1028, %v4082, %v4679
  %v4702 = vsel %vm1028, %v4158, %v4681
  %v4703 = vsel %vm1028, %v4163, %v4683
  %v4704 = vsel %vm1028, %v4239, %v4685
  %v4705 = vsel %vm1028, %v4244, %v4687
  %v4706 = vsel %vm1028, %v4320, %v4689
  %v4707 = vsel %vm1028, %v4325, %v4691
  %v4708 = vadd.f32 %v4700, %v62
  %v4709 = vadd.f32 %v4701, %v62
  %v4710 = vadd.f32 %v4702, %v62
  %v4711 = vadd.f32 %v4703, %v62
  %v4712 = vadd.f32 %v4704, %v62
  %v4713 = vadd.f32 %v4705, %v62
  %v4714 = vadd.f32 %v4706, %v62
  %v4715 = vadd.f32 %v4707, %v62
  %v4716 = vsel %vm331, %v4708, -inf
  %4717 = vmax.xlane.f32.xlu0 %v4716
  %v4718 = vpop.xlane.xlu0 %4717
  %v4719 = vsel %vm331, %v4709, -inf
  %4720 = vmax.xlane.f32.xlu0 %v4719
  %v4721 = vpop.xlane.xlu0 %4720
  %v4722 = vsel %vm331, %v4710, -inf
  %4723 = vmax.xlane.f32.xlu0 %v4722
  %v4724 = vpop.xlane.xlu0 %4723
  %v4725 = vsel %vm331, %v4711, -inf
  %4726 = vmax.xlane.f32.xlu0 %v4725
  %v4727 = vpop.xlane.xlu0 %4726
  %v4728 = vsel %vm331, %v4712, -inf
  %4729 = vmax.xlane.f32.xlu0 %v4728
  %v4730 = vpop.xlane.xlu0 %4729
  %v4731 = vsel %vm331, %v4713, -inf
  %4732 = vmax.xlane.f32.xlu0 %v4731
  %v4733 = vpop.xlane.xlu0 %4732
  %v4734 = vsel %vm331, %v4714, -inf
  %4735 = vmax.xlane.f32.xlu0 %v4734
  %v4736 = vpop.xlane.xlu0 %4735
  %v4737 = vsel %vm331, %v4715, -inf
  %4738 = vmax.xlane.f32.xlu0 %v4737
  %v4739 = vpop.xlane.xlu0 %4738
  %v4740 = vsub.f32 %v4708, %v4718
  %v4741 = vsub.f32 %v4709, %v4721
  %v4742 = vsub.f32 %v4710, %v4724
  %v4743 = vsub.f32 %v4711, %v4727
  %v4744 = vsub.f32 %v4712, %v4730
  %v4745 = vsub.f32 %v4713, %v4733
  %v4746 = vsub.f32 %v4714, %v4736
  %v4747 = vsub.f32 %v4715, %v4739
  %v4748 = vmul.f32 %v4740, 1.442695
  %v4749 = vpow.pop %v4748
  %v4750 = vmul.f32 %v4741, 1.442695
  %v4751 = vpow.pop %v4750
  %v4752 = vmul.f32 %v4742, 1.442695
  %v4753 = vpow.pop %v4752
  %v4754 = vmul.f32 %v4743, 1.442695
  %v4755 = vpow.pop %v4754
  %v4756 = vmul.f32 %v4744, 1.442695
  %v4757 = vpow.pop %v4756
  %v4758 = vmul.f32 %v4745, 1.442695
  %v4759 = vpow.pop %v4758
  %v4760 = vmul.f32 %v4746, 1.442695
  %v4761 = vpow.pop %v4760
  %v4762 = vmul.f32 %v4747, 1.442695
  %v4763 = vpow.pop %v4762
  %v4764 = vsel %vm331, %v4749, 0.0
  %4765 = vadd.xlane.f32.xlu0 %v4764
  %v4766 = vpop.xlane.xlu0 %4765
  %v4767 = vsel %vm331, %v4751, 0.0
  %4768 = vadd.xlane.f32.xlu0 %v4767
  %v4769 = vpop.xlane.xlu0 %4768
  %v4770 = vsel %vm331, %v4753, 0.0
  %4771 = vadd.xlane.f32.xlu0 %v4770
  %v4772 = vpop.xlane.xlu0 %4771
  %v4773 = vsel %vm331, %v4755, 0.0
  %4774 = vadd.xlane.f32.xlu0 %v4773
  %v4775 = vpop.xlane.xlu0 %4774
  %v4776 = vsel %vm331, %v4757, 0.0
  %4777 = vadd.xlane.f32.xlu0 %v4776
  %v4778 = vpop.xlane.xlu0 %4777
  %v4779 = vsel %vm331, %v4759, 0.0
  %4780 = vadd.xlane.f32.xlu0 %v4779
  %v4781 = vpop.xlane.xlu0 %4780
  %v4782 = vsel %vm331, %v4761, 0.0
  %4783 = vadd.xlane.f32.xlu0 %v4782
  %v4784 = vpop.xlane.xlu0 %4783
  %v4785 = vsel %vm331, %v4763, 0.0
  %4786 = vadd.xlane.f32.xlu0 %v4785
  %v4787 = vpop.xlane.xlu0 %4786
  %v4788 = vrcp.pop %v4766
  %v4789 = vrcp.pop %v4769
  %v4790 = vrcp.pop %v4772
  %v4791 = vrcp.pop %v4775
  %v4792 = vrcp.pop %v4778
  %v4793 = vrcp.pop %v4781
  %v4794 = vrcp.pop %v4784
  %v4795 = vrcp.pop %v4787
  %v4796 = vmul.f32 %v4749, %v4788
  %v4797 = vmul.f32 %v4751, %v4789
  %v4798 = vmul.f32 %v4753, %v4790
  %v4799 = vmul.f32 %v4755, %v4791
  %v4800 = vmul.f32 %v4757, %v4792
  %v4801 = vmul.f32 %v4759, %v4793
  %v4802 = vmul.f32 %v4761, %v4794
  %v4803 = vmul.f32 %v4763, %v4795
  %4804 = vrot.lane.b32.xlu0 %v3846, 64
  %v4805 = vpop.permute.xlu0 %4804
  %4806 = vrot.lane.b32.xlu0 %v3959, 64
  %v4807 = vpop.permute.xlu0 %4806
  %v4811 = vsel %vm331, %v4796, 0
  %v4814 = vsel %vm331, %v4797, 0
  %4816 = vmatprep.subr.mxu0 0.0
  %4817 = vmatpush1.msra.mxu0 %v4805
  %4818 = vmatprep.subr.mxu0 0.0
  %4819 = vmatpush1.msra.mxu0 %v4807
  %4820 = vmatprep.subr.mxu0 0.0
  %4821 = vmatpush1.msra.mxu0 0.0
  %4822 = vmatprep.subr.mxu0 0.0
  %4823 = vmatpush1.msra.mxu0 0.0
  %4824 = vmatprep.subr.mxu0 0.0
  %4825 = vmatpush1.msra.mxu0 0.0
  %4826 = vmatprep.subr.mxu0 0.0
  %4827 = vmatpush1.msra.mxu0 0.0
  %4828 = vmatprep.subr.mxu0 0.0
  %4829 = vmatpush1.msra.mxu0 0.0
  %4830 = vmatprep.subr.mxu0 0.0
  %4831 = vmatpush1.msra.mxu0 0.0
  %4832 = vmatprep.subr.mxu0 0.0
  %4833 = vmatpush1.msra.mxu0 0.0
  %4834 = vmatprep.subr.mxu0 0.0
  %4835 = vmatpush1.msra.mxu0 0.0
  %4836 = vmatprep.subr.mxu0 0.0
  %4837 = vmatpush1.msra.mxu0 0.0
  %4838 = vmatprep.subr.mxu0 0.0
  %4839 = vmatpush1.msra.mxu0 0.0
  %4840 = vmatprep.subr.mxu0 0.0
  %4841 = vmatpush1.msra.mxu0 0.0
  %4842 = vmatprep.subr.mxu0 0.0
  %4843 = vmatpush1.msra.mxu0 0.0
  %4844 = vmatprep.subr.mxu0 0.0
  %4845 = vmatpush1.msra.mxu0 0.0
  %4846 = vmatprep.subr.mxu0 0.0
  %4847 = vmatpush1.msra.mxu0 0.0
  %4848 = vmatprep.subr.mxu0 0.0
  %4849 = vmatpush1.msra.mxu0 0.0
  %4850 = vmatprep.subr.mxu0 0.0
  %4851 = vmatpush1.msra.mxu0 0.0
  %4852 = vmatprep.subr.mxu0 0.0
  %4853 = vmatpush1.msra.mxu0 0.0
  %4854 = vmatprep.subr.mxu0 0.0
  %4855 = vmatpush1.msra.mxu0 0.0
  %4856 = vmatprep.subr.mxu0 0.0
  %4857 = vmatpush1.msra.mxu0 0.0
  %4858 = vmatprep.subr.mxu0 0.0
  %4859 = vmatpush1.msra.mxu0 0.0
  %4860 = vmatprep.subr.mxu0 0.0
  %4861 = vmatpush1.msra.mxu0 0.0
  %4862 = vmatprep.subr.mxu0 0.0
  %4863 = vmatpush1.msra.mxu0 0.0
  %4864 = vmatprep.subr.mxu0 0.0
  %4865 = vmatpush1.msra.mxu0 0.0
  %4866 = vmatprep.subr.mxu0 0.0
  %4867 = vmatpush1.msra.mxu0 0.0
  %4868 = vmatprep.subr.mxu0 0.0
  %4869 = vmatpush1.msra.mxu0 0.0
  %4870 = vmatprep.subr.mxu0 0.0
  %4871 = vmatpush1.msra.mxu0 0.0
  %4872 = vmatprep.subr.mxu0 0.0
  %4873 = vmatpush1.msra.mxu0 0.0
  %4874 = vmatprep.subr.mxu0 0.0
  %4875 = vmatpush1.msra.mxu0 0.0
  %4876 = vmatprep.subr.mxu0 0.0
  %4877 = vmatpush1.msra.mxu0 0.0
  %4878 = vmatprep.subr.mxu0 0.0
  %4879 = vmatpush1.msra.mxu0 0.0
  %4880 = vmatprep.mubr.f32.mxu0 0.0
  %4881 = vmatmul.mubr.f32.gmra.mrb[0].mxu0 %v4811
  %v4882 = vpop.f32.mrb[0].mxu0
  %v4883 = vadd.f32 0.0, %v4882
  %v4884 = vpop.f32.mrb[0].mxu0
  %4885 = vmatprep.mubr.f32.mxu0 0.0
  %4886 = vmatmul.mubr.f32.gmra.mrb[0].mxu0 %v4814
  %v4887 = vpop.f32.mrb[0].mxu0
  %v4888 = vadd.f32 0.0, %v4887
  %v4889 = vpop.f32.mrb[0].mxu0
  %4890 = vdwg.mxu0
  %4891 = vrot.lane.b32.xlu0 %v3993, 64
  %v4892 = vpop.permute.xlu0 %4891
  %4893 = vrot.lane.b32.xlu0 %v3995, 64
  %v4894 = vpop.permute.xlu0 %4893
  %v4898 = vsel %vm331, %v4798, 0
  %v4901 = vsel %vm331, %v4799, 0
  %4903 = vmatprep.subr.mxu0 0.0
  %4904 = vmatpush1.msra.mxu0 %v4892
  %4905 = vmatprep.subr.mxu0 0.0
  %4906 = vmatpush1.msra.mxu0 %v4894
  %4907 = vmatprep.subr.mxu0 0.0
  %4908 = vmatpush1.msra.mxu0 0.0
  %4909 = vmatprep.subr.mxu0 0.0
  %4910 = vmatpush1.msra.mxu0 0.0
  %4911 = vmatprep.subr.mxu0 0.0
  %4912 = vmatpush1.msra.mxu0 0.0
  %4913 = vmatprep.subr.mxu0 0.0
  %4914 = vmatpush1.msra.mxu0 0.0
  %4915 = vmatprep.subr.mxu0 0.0
  %4916 = vmatpush1.msra.mxu0 0.0
  %4917 = vmatprep.subr.mxu0 0.0
  %4918 = vmatpush1.msra.mxu0 0.0
  %4919 = vmatprep.subr.mxu0 0.0
  %4920 = vmatpush1.msra.mxu0 0.0
  %4921 = vmatprep.subr.mxu0 0.0
  %4922 = vmatpush1.msra.mxu0 0.0
  %4923 = vmatprep.subr.mxu0 0.0
  %4924 = vmatpush1.msra.mxu0 0.0
  %4925 = vmatprep.subr.mxu0 0.0
  %4926 = vmatpush1.msra.mxu0 0.0
  %4927 = vmatprep.subr.mxu0 0.0
  %4928 = vmatpush1.msra.mxu0 0.0
  %4929 = vmatprep.subr.mxu0 0.0
  %4930 = vmatpush1.msra.mxu0 0.0
  %4931 = vmatprep.subr.mxu0 0.0
  %4932 = vmatpush1.msra.mxu0 0.0
  %4933 = vmatprep.subr.mxu0 0.0
  %4934 = vmatpush1.msra.mxu0 0.0
  %4935 = vmatprep.subr.mxu0 0.0
  %4936 = vmatpush1.msra.mxu0 0.0
  %4937 = vmatprep.subr.mxu0 0.0
  %4938 = vmatpush1.msra.mxu0 0.0
  %4939 = vmatprep.subr.mxu0 0.0
  %4940 = vmatpush1.msra.mxu0 0.0
  %4941 = vmatprep.subr.mxu0 0.0
  %4942 = vmatpush1.msra.mxu0 0.0
  %4943 = vmatprep.subr.mxu0 0.0
  %4944 = vmatpush1.msra.mxu0 0.0
  %4945 = vmatprep.subr.mxu0 0.0
  %4946 = vmatpush1.msra.mxu0 0.0
  %4947 = vmatprep.subr.mxu0 0.0
  %4948 = vmatpush1.msra.mxu0 0.0
  %4949 = vmatprep.subr.mxu0 0.0
  %4950 = vmatpush1.msra.mxu0 0.0
  %4951 = vmatprep.subr.mxu0 0.0
  %4952 = vmatpush1.msra.mxu0 0.0
  %4953 = vmatprep.subr.mxu0 0.0
  %4954 = vmatpush1.msra.mxu0 0.0
  %4955 = vmatprep.subr.mxu0 0.0
  %4956 = vmatpush1.msra.mxu0 0.0
  %4957 = vmatprep.subr.mxu0 0.0
  %4958 = vmatpush1.msra.mxu0 0.0
  %4959 = vmatprep.subr.mxu0 0.0
  %4960 = vmatpush1.msra.mxu0 0.0
  %4961 = vmatprep.subr.mxu0 0.0
  %4962 = vmatpush1.msra.mxu0 0.0
  %4963 = vmatprep.subr.mxu0 0.0
  %4964 = vmatpush1.msra.mxu0 0.0
  %4965 = vmatprep.subr.mxu0 0.0
  %4966 = vmatpush1.msra.mxu0 0.0
  %4967 = vmatprep.mubr.f32.mxu0 0.0
  %4968 = vmatmul.mubr.f32.gmra.mrb[0].mxu0 %v4898
  %v4969 = vpop.f32.mrb[0].mxu0
  %v4970 = vadd.f32 0.0, %v4969
  %v4971 = vpop.f32.mrb[0].mxu0
  %4972 = vmatprep.mubr.f32.mxu0 0.0
  %4973 = vmatmul.mubr.f32.gmra.mrb[0].mxu0 %v4901
  %v4974 = vpop.f32.mrb[0].mxu0
  %v4975 = vadd.f32 0.0, %v4974
  %v4976 = vpop.f32.mrb[0].mxu0
  %4977 = vdwg.mxu0
  %4978 = vrot.lane.b32.xlu0 %v3997, 64
  %v4979 = vpop.permute.xlu0 %4978
  %4980 = vrot.lane.b32.xlu0 %v3999, 64
  %v4981 = vpop.permute.xlu0 %4980
  %v4985 = vsel %vm331, %v4800, 0
  %v4988 = vsel %vm331, %v4801, 0
  %4990 = vmatprep.subr.mxu0 0.0
  %4991 = vmatpush1.msra.mxu0 %v4979
  %4992 = vmatprep.subr.mxu0 0.0
  %4993 = vmatpush1.msra.mxu0 %v4981
  %4994 = vmatprep.subr.mxu0 0.0
  %4995 = vmatpush1.msra.mxu0 0.0
  %4996 = vmatprep.subr.mxu0 0.0
  %4997 = vmatpush1.msra.mxu0 0.0
  %4998 = vmatprep.subr.mxu0 0.0
  %4999 = vmatpush1.msra.mxu0 0.0
  %5000 = vmatprep.subr.mxu0 0.0
  %5001 = vmatpush1.msra.mxu0 0.0
  %5002 = vmatprep.subr.mxu0 0.0
  %5003 = vmatpush1.msra.mxu0 0.0
  %5004 = vmatprep.subr.mxu0 0.0
  %5005 = vmatpush1.msra.mxu0 0.0
  %5006 = vmatprep.subr.mxu0 0.0
  %5007 = vmatpush1.msra.mxu0 0.0
  %5008 = vmatprep.subr.mxu0 0.0
  %5009 = vmatpush1.msra.mxu0 0.0
  %5010 = vmatprep.subr.mxu0 0.0
  %5011 = vmatpush1.msra.mxu0 0.0
  %5012 = vmatprep.subr.mxu0 0.0
  %5013 = vmatpush1.msra.mxu0 0.0
  %5014 = vmatprep.subr.mxu0 0.0
  %5015 = vmatpush1.msra.mxu0 0.0
  %5016 = vmatprep.subr.mxu0 0.0
  %5017 = vmatpush1.msra.mxu0 0.0
  %5018 = vmatprep.subr.mxu0 0.0
  %5019 = vmatpush1.msra.mxu0 0.0
  %5020 = vmatprep.subr.mxu0 0.0
  %5021 = vmatpush1.msra.mxu0 0.0
  %5022 = vmatprep.subr.mxu0 0.0
  %5023 = vmatpush1.msra.mxu0 0.0
  %5024 = vmatprep.subr.mxu0 0.0
  %5025 = vmatpush1.msra.mxu0 0.0
  %5026 = vmatprep.subr.mxu0 0.0
  %5027 = vmatpush1.msra.mxu0 0.0
  %5028 = vmatprep.subr.mxu0 0.0
  %5029 = vmatpush1.msra.mxu0 0.0
  %5030 = vmatprep.subr.mxu0 0.0
  %5031 = vmatpush1.msra.mxu0 0.0
  %5032 = vmatprep.subr.mxu0 0.0
  %5033 = vmatpush1.msra.mxu0 0.0
  %5034 = vmatprep.subr.mxu0 0.0
  %5035 = vmatpush1.msra.mxu0 0.0
  %5036 = vmatprep.subr.mxu0 0.0
  %5037 = vmatpush1.msra.mxu0 0.0
  %5038 = vmatprep.subr.mxu0 0.0
  %5039 = vmatpush1.msra.mxu0 0.0
  %5040 = vmatprep.subr.mxu0 0.0
  %5041 = vmatpush1.msra.mxu0 0.0
  %5042 = vmatprep.subr.mxu0 0.0
  %5043 = vmatpush1.msra.mxu0 0.0
  %5044 = vmatprep.subr.mxu0 0.0
  %5045 = vmatpush1.msra.mxu0 0.0
  %5046 = vmatprep.subr.mxu0 0.0
  %5047 = vmatpush1.msra.mxu0 0.0
  %5048 = vmatprep.subr.mxu0 0.0
  %5049 = vmatpush1.msra.mxu0 0.0
  %5050 = vmatprep.subr.mxu0 0.0
  %5051 = vmatpush1.msra.mxu0 0.0
  %5052 = vmatprep.subr.mxu0 0.0
  %5053 = vmatpush1.msra.mxu0 0.0
  %5054 = vmatprep.mubr.f32.mxu0 0.0
  %5055 = vmatmul.mubr.f32.gmra.mrb[0].mxu0 %v4985
  %v5056 = vpop.f32.mrb[0].mxu0
  %v5057 = vadd.f32 0.0, %v5056
  %v5058 = vpop.f32.mrb[0].mxu0
  %5059 = vmatprep.mubr.f32.mxu0 0.0
  %5060 = vmatmul.mubr.f32.gmra.mrb[0].mxu0 %v4988
  %v5061 = vpop.f32.mrb[0].mxu0
  %v5062 = vadd.f32 0.0, %v5061
  %v5063 = vpop.f32.mrb[0].mxu0
  %5064 = vdwg.mxu0
  %5065 = vrot.lane.b32.xlu0 %v4001, 64
  %v5066 = vpop.permute.xlu0 %5065
  %5067 = vrot.lane.b32.xlu0 %v4003, 64
  %v5068 = vpop.permute.xlu0 %5067
  %v5072 = vsel %vm331, %v4802, 0
  %v5075 = vsel %vm331, %v4803, 0
  %5077 = vmatprep.subr.mxu0 0.0
  %5078 = vmatpush1.msra.mxu0 %v5066
  %5079 = vmatprep.subr.mxu0 0.0
  %5080 = vmatpush1.msra.mxu0 %v5068
  %5081 = vmatprep.subr.mxu0 0.0
  %5082 = vmatpush1.msra.mxu0 0.0
  %5083 = vmatprep.subr.mxu0 0.0
  %5084 = vmatpush1.msra.mxu0 0.0
  %5085 = vmatprep.subr.mxu0 0.0
  %5086 = vmatpush1.msra.mxu0 0.0
  %5087 = vmatprep.subr.mxu0 0.0
  %5088 = vmatpush1.msra.mxu0 0.0
  %5089 = vmatprep.subr.mxu0 0.0
  %5090 = vmatpush1.msra.mxu0 0.0
  %5091 = vmatprep.subr.mxu0 0.0
  %5092 = vmatpush1.msra.mxu0 0.0
  %5093 = vmatprep.subr.mxu0 0.0
  %5094 = vmatpush1.msra.mxu0 0.0
  %5095 = vmatprep.subr.mxu0 0.0
  %5096 = vmatpush1.msra.mxu0 0.0
  %5097 = vmatprep.subr.mxu0 0.0
  %5098 = vmatpush1.msra.mxu0 0.0
  %5099 = vmatprep.subr.mxu0 0.0
  %5100 = vmatpush1.msra.mxu0 0.0
  %5101 = vmatprep.subr.mxu0 0.0
  %5102 = vmatpush1.msra.mxu0 0.0
  %5103 = vmatprep.subr.mxu0 0.0
  %5104 = vmatpush1.msra.mxu0 0.0
  %5105 = vmatprep.subr.mxu0 0.0
  %5106 = vmatpush1.msra.mxu0 0.0
  %5107 = vmatprep.subr.mxu0 0.0
  %5108 = vmatpush1.msra.mxu0 0.0
  %5109 = vmatprep.subr.mxu0 0.0
  %5110 = vmatpush1.msra.mxu0 0.0
  %5111 = vmatprep.subr.mxu0 0.0
  %5112 = vmatpush1.msra.mxu0 0.0
  %5113 = vmatprep.subr.mxu0 0.0
  %5114 = vmatpush1.msra.mxu0 0.0
  %5115 = vmatprep.subr.mxu0 0.0
  %5116 = vmatpush1.msra.mxu0 0.0
  %5117 = vmatprep.subr.mxu0 0.0
  %5118 = vmatpush1.msra.mxu0 0.0
  %5119 = vmatprep.subr.mxu0 0.0
  %5120 = vmatpush1.msra.mxu0 0.0
  %5121 = vmatprep.subr.mxu0 0.0
  %5122 = vmatpush1.msra.mxu0 0.0
  %5123 = vmatprep.subr.mxu0 0.0
  %5124 = vmatpush1.msra.mxu0 0.0
  %5125 = vmatprep.subr.mxu0 0.0
  %5126 = vmatpush1.msra.mxu0 0.0
  %5127 = vmatprep.subr.mxu0 0.0
  %5128 = vmatpush1.msra.mxu0 0.0
  %5129 = vmatprep.subr.mxu0 0.0
  %5130 = vmatpush1.msra.mxu0 0.0
  %5131 = vmatprep.subr.mxu0 0.0
  %5132 = vmatpush1.msra.mxu0 0.0
  %5133 = vmatprep.subr.mxu0 0.0
  %5134 = vmatpush1.msra.mxu0 0.0
  %5135 = vmatprep.subr.mxu0 0.0
  %5136 = vmatpush1.msra.mxu0 0.0
  %5137 = vmatprep.subr.mxu0 0.0
  %5138 = vmatpush1.msra.mxu0 0.0
  %5139 = vmatprep.subr.mxu0 0.0
  %5140 = vmatpush1.msra.mxu0 0.0
  %5141 = vmatprep.mubr.f32.mxu0 0.0
  %5142 = vmatmul.mubr.f32.gmra.mrb[0].mxu0 %v5072
  %v5143 = vpop.f32.mrb[0].mxu0
  %v5144 = vadd.f32 0.0, %v5143
  %v5145 = vpop.f32.mrb[0].mxu0
  %5146 = vmatprep.mubr.f32.mxu0 0.0
  %5147 = vmatmul.mubr.f32.gmra.mrb[0].mxu0 %v5075
  %v5148 = vpop.f32.mrb[0].mxu0
  %v5149 = vadd.f32 0.0, %v5148
  %v5150 = vpop.f32.mrb[0].mxu0
  %5151 = vdwg.mxu0
  %v5153 = vsel %vm331, %v4883, 0
  %v5156 = vsel %vm331, %v4888, 0
  %5158 = vmatprep.subr.mxu0 0.0
  %5159 = vmatpush1.msra.mxu0 %v3968
  %5160 = vmatprep.subr.mxu0 0.0
  %5161 = vmatpush1.msra.mxu0 %v3969
  %5162 = vmatprep.subr.mxu0 0.0
  %5163 = vmatpush1.msra.mxu0 0.0
  %5164 = vmatprep.subr.mxu0 0.0
  %5165 = vmatpush1.msra.mxu0 0.0
  %5166 = vmatprep.subr.mxu0 0.0
  %5167 = vmatpush1.msra.mxu0 0.0
  %5168 = vmatprep.subr.mxu0 0.0
  %5169 = vmatpush1.msra.mxu0 0.0
  %5170 = vmatprep.subr.mxu0 0.0
  %5171 = vmatpush1.msra.mxu0 0.0
  %5172 = vmatprep.subr.mxu0 0.0
  %5173 = vmatpush1.msra.mxu0 0.0
  %5174 = vmatprep.subr.mxu0 0.0
  %5175 = vmatpush1.msra.mxu0 0.0
  %5176 = vmatprep.subr.mxu0 0.0
  %5177 = vmatpush1.msra.mxu0 0.0
  %5178 = vmatprep.subr.mxu0 0.0
  %5179 = vmatpush1.msra.mxu0 0.0
  %5180 = vmatprep.subr.mxu0 0.0
  %5181 = vmatpush1.msra.mxu0 0.0
  %5182 = vmatprep.subr.mxu0 0.0
  %5183 = vmatpush1.msra.mxu0 0.0
  %5184 = vmatprep.subr.mxu0 0.0
  %5185 = vmatpush1.msra.mxu0 0.0
  %5186 = vmatprep.subr.mxu0 0.0
  %5187 = vmatpush1.msra.mxu0 0.0
  %5188 = vmatprep.subr.mxu0 0.0
  %5189 = vmatpush1.msra.mxu0 0.0
  %5190 = vmatprep.subr.mxu0 0.0
  %5191 = vmatpush1.msra.mxu0 0.0
  %5192 = vmatprep.subr.mxu0 0.0
  %5193 = vmatpush1.msra.mxu0 0.0
  %5194 = vmatprep.subr.mxu0 0.0
  %5195 = vmatpush1.msra.mxu0 0.0
  %5196 = vmatprep.subr.mxu0 0.0
  %5197 = vmatpush1.msra.mxu0 0.0
  %5198 = vmatprep.subr.mxu0 0.0
  %5199 = vmatpush1.msra.mxu0 0.0
  %5200 = vmatprep.subr.mxu0 0.0
  %5201 = vmatpush1.msra.mxu0 0.0
  %5202 = vmatprep.subr.mxu0 0.0
  %5203 = vmatpush1.msra.mxu0 0.0
  %5204 = vmatprep.subr.mxu0 0.0
  %5205 = vmatpush1.msra.mxu0 0.0
  %5206 = vmatprep.subr.mxu0 0.0
  %5207 = vmatpush1.msra.mxu0 0.0
  %5208 = vmatprep.subr.mxu0 0.0
  %5209 = vmatpush1.msra.mxu0 0.0
  %5210 = vmatprep.subr.mxu0 0.0
  %5211 = vmatpush1.msra.mxu0 0.0
  %5212 = vmatprep.subr.mxu0 0.0
  %5213 = vmatpush1.msra.mxu0 0.0
  %5214 = vmatprep.subr.mxu0 0.0
  %5215 = vmatpush1.msra.mxu0 0.0
  %5216 = vmatprep.subr.mxu0 0.0
  %5217 = vmatpush1.msra.mxu0 0.0
  %5218 = vmatprep.subr.mxu0 0.0
  %5219 = vmatpush1.msra.mxu0 0.0
  %5220 = vmatprep.subr.mxu0 0.0
  %5221 = vmatpush1.msra.mxu0 0.0
  %5222 = vmatprep.mubr.f32.mxu0 0.0
  %5223 = vmatmul.mubr.f32.gmra.mrb[0].mxu0 %v5153
  %v5224 = vpop.f32.mrb[0].mxu0
  %v5225 = vadd.f32 0.0, %v5224
  %v5226 = vpop.f32.mrb[0].mxu0
  %5227 = vmatprep.mubr.f32.mxu0 0.0
  %5228 = vmatmul.mubr.f32.gmra.mrb[0].mxu0 %v5156
  %v5229 = vpop.f32.mrb[0].mxu0
  %v5230 = vadd.f32 0.0, %v5229
  %v5231 = vpop.f32.mrb[0].mxu0
  %5232 = vdwg.mxu0
  %v5234 = vsel %vm331, %v4970, 0
  %v5237 = vsel %vm331, %v4975, 0
  %5239 = vmatprep.subr.mxu0 0.0
  %5240 = vmatpush1.msra.mxu0 %v3970
  %5241 = vmatprep.subr.mxu0 0.0
  %5242 = vmatpush1.msra.mxu0 %v3971
  %5243 = vmatprep.subr.mxu0 0.0
  %5244 = vmatpush1.msra.mxu0 0.0
  %5245 = vmatprep.subr.mxu0 0.0
  %5246 = vmatpush1.msra.mxu0 0.0
  %5247 = vmatprep.subr.mxu0 0.0
  %5248 = vmatpush1.msra.mxu0 0.0
  %5249 = vmatprep.subr.mxu0 0.0
  %5250 = vmatpush1.msra.mxu0 0.0
  %5251 = vmatprep.subr.mxu0 0.0
  %5252 = vmatpush1.msra.mxu0 0.0
  %5253 = vmatprep.subr.mxu0 0.0
  %5254 = vmatpush1.msra.mxu0 0.0
  %5255 = vmatprep.subr.mxu0 0.0
  %5256 = vmatpush1.msra.mxu0 0.0
  %5257 = vmatprep.subr.mxu0 0.0
  %5258 = vmatpush1.msra.mxu0 0.0
  %5259 = vmatprep.subr.mxu0 0.0
  %5260 = vmatpush1.msra.mxu0 0.0
  %5261 = vmatprep.subr.mxu0 0.0
  %5262 = vmatpush1.msra.mxu0 0.0
  %5263 = vmatprep.subr.mxu0 0.0
  %5264 = vmatpush1.msra.mxu0 0.0
  %5265 = vmatprep.subr.mxu0 0.0
  %5266 = vmatpush1.msra.mxu0 0.0
  %5267 = vmatprep.subr.mxu0 0.0
  %5268 = vmatpush1.msra.mxu0 0.0
  %5269 = vmatprep.subr.mxu0 0.0
  %5270 = vmatpush1.msra.mxu0 0.0
  %5271 = vmatprep.subr.mxu0 0.0
  %5272 = vmatpush1.msra.mxu0 0.0
  %5273 = vmatprep.subr.mxu0 0.0
  %5274 = vmatpush1.msra.mxu0 0.0
  %5275 = vmatprep.subr.mxu0 0.0
  %5276 = vmatpush1.msra.mxu0 0.0
  %5277 = vmatprep.subr.mxu0 0.0
  %5278 = vmatpush1.msra.mxu0 0.0
  %5279 = vmatprep.subr.mxu0 0.0
  %5280 = vmatpush1.msra.mxu0 0.0
  %5281 = vmatprep.subr.mxu0 0.0
  %5282 = vmatpush1.msra.mxu0 0.0
  %5283 = vmatprep.subr.mxu0 0.0
  %5284 = vmatpush1.msra.mxu0 0.0
  %5285 = vmatprep.subr.mxu0 0.0
  %5286 = vmatpush1.msra.mxu0 0.0
  %5287 = vmatprep.subr.mxu0 0.0
  %5288 = vmatpush1.msra.mxu0 0.0
  %5289 = vmatprep.subr.mxu0 0.0
  %5290 = vmatpush1.msra.mxu0 0.0
  %5291 = vmatprep.subr.mxu0 0.0
  %5292 = vmatpush1.msra.mxu0 0.0
  %5293 = vmatprep.subr.mxu0 0.0
  %5294 = vmatpush1.msra.mxu0 0.0
  %5295 = vmatprep.subr.mxu0 0.0
  %5296 = vmatpush1.msra.mxu0 0.0
  %5297 = vmatprep.subr.mxu0 0.0
  %5298 = vmatpush1.msra.mxu0 0.0
  %5299 = vmatprep.subr.mxu0 0.0
  %5300 = vmatpush1.msra.mxu0 0.0
  %5301 = vmatprep.subr.mxu0 0.0
  %5302 = vmatpush1.msra.mxu0 0.0
  %5303 = vmatprep.mubr.f32.mxu0 0.0
  %5304 = vmatmul.mubr.f32.gmra.mrb[0].mxu0 %v5234
  %v5305 = vpop.f32.mrb[0].mxu0
  %v5306 = vadd.f32 0.0, %v5305
  %v5307 = vpop.f32.mrb[0].mxu0
  %5308 = vmatprep.mubr.f32.mxu0 0.0
  %5309 = vmatmul.mubr.f32.gmra.mrb[0].mxu0 %v5237
  %v5310 = vpop.f32.mrb[0].mxu0
  %v5311 = vadd.f32 0.0, %v5310
  %v5312 = vpop.f32.mrb[0].mxu0
  %5313 = vdwg.mxu0
  %v5315 = vsel %vm331, %v5057, 0
  %v5318 = vsel %vm331, %v5062, 0
  %5320 = vmatprep.subr.mxu0 0.0
  %5321 = vmatpush1.msra.mxu0 %v3972
  %5322 = vmatprep.subr.mxu0 0.0
  %5323 = vmatpush1.msra.mxu0 %v3973
  %5324 = vmatprep.subr.mxu0 0.0
  %5325 = vmatpush1.msra.mxu0 0.0
  %5326 = vmatprep.subr.mxu0 0.0
  %5327 = vmatpush1.msra.mxu0 0.0
  %5328 = vmatprep.subr.mxu0 0.0
  %5329 = vmatpush1.msra.mxu0 0.0
  %5330 = vmatprep.subr.mxu0 0.0
  %5331 = vmatpush1.msra.mxu0 0.0
  %5332 = vmatprep.subr.mxu0 0.0
  %5333 = vmatpush1.msra.mxu0 0.0
  %5334 = vmatprep.subr.mxu0 0.0
  %5335 = vmatpush1.msra.mxu0 0.0
  %5336 = vmatprep.subr.mxu0 0.0
  %5337 = vmatpush1.msra.mxu0 0.0
  %5338 = vmatprep.subr.mxu0 0.0
  %5339 = vmatpush1.msra.mxu0 0.0
  %5340 = vmatprep.subr.mxu0 0.0
  %5341 = vmatpush1.msra.mxu0 0.0
  %5342 = vmatprep.subr.mxu0 0.0
  %5343 = vmatpush1.msra.mxu0 0.0
  %5344 = vmatprep.subr.mxu0 0.0
  %5345 = vmatpush1.msra.mxu0 0.0
  %5346 = vmatprep.subr.mxu0 0.0
  %5347 = vmatpush1.msra.mxu0 0.0
  %5348 = vmatprep.subr.mxu0 0.0
  %5349 = vmatpush1.msra.mxu0 0.0
  %5350 = vmatprep.subr.mxu0 0.0
  %5351 = vmatpush1.msra.mxu0 0.0
  %5352 = vmatprep.subr.mxu0 0.0
  %5353 = vmatpush1.msra.mxu0 0.0
  %5354 = vmatprep.subr.mxu0 0.0
  %5355 = vmatpush1.msra.mxu0 0.0
  %5356 = vmatprep.subr.mxu0 0.0
  %5357 = vmatpush1.msra.mxu0 0.0
  %5358 = vmatprep.subr.mxu0 0.0
  %5359 = vmatpush1.msra.mxu0 0.0
  %5360 = vmatprep.subr.mxu0 0.0
  %5361 = vmatpush1.msra.mxu0 0.0
  %5362 = vmatprep.subr.mxu0 0.0
  %5363 = vmatpush1.msra.mxu0 0.0
  %5364 = vmatprep.subr.mxu0 0.0
  %5365 = vmatpush1.msra.mxu0 0.0
  %5366 = vmatprep.subr.mxu0 0.0
  %5367 = vmatpush1.msra.mxu0 0.0
  %5368 = vmatprep.subr.mxu0 0.0
  %5369 = vmatpush1.msra.mxu0 0.0
  %5370 = vmatprep.subr.mxu0 0.0
  %5371 = vmatpush1.msra.mxu0 0.0
  %5372 = vmatprep.subr.mxu0 0.0
  %5373 = vmatpush1.msra.mxu0 0.0
  %5374 = vmatprep.subr.mxu0 0.0
  %5375 = vmatpush1.msra.mxu0 0.0
  %5376 = vmatprep.subr.mxu0 0.0
  %5377 = vmatpush1.msra.mxu0 0.0
  %5378 = vmatprep.subr.mxu0 0.0
  %5379 = vmatpush1.msra.mxu0 0.0
  %5380 = vmatprep.subr.mxu0 0.0
  %5381 = vmatpush1.msra.mxu0 0.0
  %5382 = vmatprep.subr.mxu0 0.0
  %5383 = vmatpush1.msra.mxu0 0.0
  %5384 = vmatprep.mubr.f32.mxu0 0.0
  %5385 = vmatmul.mubr.f32.gmra.mrb[0].mxu0 %v5315
  %v5386 = vpop.f32.mrb[0].mxu0
  %v5387 = vadd.f32 0.0, %v5386
  %v5388 = vpop.f32.mrb[0].mxu0
  %5389 = vmatprep.mubr.f32.mxu0 0.0
  %5390 = vmatmul.mubr.f32.gmra.mrb[0].mxu0 %v5318
  %v5391 = vpop.f32.mrb[0].mxu0
  %v5392 = vadd.f32 0.0, %v5391
  %v5393 = vpop.f32.mrb[0].mxu0
  %5394 = vdwg.mxu0
  %v5396 = vsel %vm331, %v5144, 0
  %v5399 = vsel %vm331, %v5149, 0
  %5401 = vmatprep.subr.mxu0 0.0
  %5402 = vmatpush1.msra.mxu0 %v3974
  %5403 = vmatprep.subr.mxu0 0.0
  %5404 = vmatpush1.msra.mxu0 %v3975
  %5405 = vmatprep.subr.mxu0 0.0
  %5406 = vmatpush1.msra.mxu0 0.0
  %5407 = vmatprep.subr.mxu0 0.0
  %5408 = vmatpush1.msra.mxu0 0.0
  %5409 = vmatprep.subr.mxu0 0.0
  %5410 = vmatpush1.msra.mxu0 0.0
  %5411 = vmatprep.subr.mxu0 0.0
  %5412 = vmatpush1.msra.mxu0 0.0
  %5413 = vmatprep.subr.mxu0 0.0
  %5414 = vmatpush1.msra.mxu0 0.0
  %5415 = vmatprep.subr.mxu0 0.0
  %5416 = vmatpush1.msra.mxu0 0.0
  %5417 = vmatprep.subr.mxu0 0.0
  %5418 = vmatpush1.msra.mxu0 0.0
  %5419 = vmatprep.subr.mxu0 0.0
  %5420 = vmatpush1.msra.mxu0 0.0
  %5421 = vmatprep.subr.mxu0 0.0
  %5422 = vmatpush1.msra.mxu0 0.0
  %5423 = vmatprep.subr.mxu0 0.0
  %5424 = vmatpush1.msra.mxu0 0.0
  %5425 = vmatprep.subr.mxu0 0.0
  %5426 = vmatpush1.msra.mxu0 0.0
  %5427 = vmatprep.subr.mxu0 0.0
  %5428 = vmatpush1.msra.mxu0 0.0
  %5429 = vmatprep.subr.mxu0 0.0
  %5430 = vmatpush1.msra.mxu0 0.0
  %5431 = vmatprep.subr.mxu0 0.0
  %5432 = vmatpush1.msra.mxu0 0.0
  %5433 = vmatprep.subr.mxu0 0.0
  %5434 = vmatpush1.msra.mxu0 0.0
  %5435 = vmatprep.subr.mxu0 0.0
  %5436 = vmatpush1.msra.mxu0 0.0
  %5437 = vmatprep.subr.mxu0 0.0
  %5438 = vmatpush1.msra.mxu0 0.0
  %5439 = vmatprep.subr.mxu0 0.0
  %5440 = vmatpush1.msra.mxu0 0.0
  %5441 = vmatprep.subr.mxu0 0.0
  %5442 = vmatpush1.msra.mxu0 0.0
  %5443 = vmatprep.subr.mxu0 0.0
  %5444 = vmatpush1.msra.mxu0 0.0
  %5445 = vmatprep.subr.mxu0 0.0
  %5446 = vmatpush1.msra.mxu0 0.0
  %5447 = vmatprep.subr.mxu0 0.0
  %5448 = vmatpush1.msra.mxu0 0.0
  %5449 = vmatprep.subr.mxu0 0.0
  %5450 = vmatpush1.msra.mxu0 0.0
  %5451 = vmatprep.subr.mxu0 0.0
  %5452 = vmatpush1.msra.mxu0 0.0
  %5453 = vmatprep.subr.mxu0 0.0
  %5454 = vmatpush1.msra.mxu0 0.0
  %5455 = vmatprep.subr.mxu0 0.0
  %5456 = vmatpush1.msra.mxu0 0.0
  %5457 = vmatprep.subr.mxu0 0.0
  %5458 = vmatpush1.msra.mxu0 0.0
  %5459 = vmatprep.subr.mxu0 0.0
  %5460 = vmatpush1.msra.mxu0 0.0
  %5461 = vmatprep.subr.mxu0 0.0
  %5462 = vmatpush1.msra.mxu0 0.0
  %5463 = vmatprep.subr.mxu0 0.0
  %5464 = vmatpush1.msra.mxu0 0.0
  %5465 = vmatprep.mubr.f32.mxu0 0.0
  %5466 = vmatmul.mubr.f32.gmra.mrb[0].mxu0 %v5396
  %v5467 = vpop.f32.mrb[0].mxu0
  %v5468 = vadd.f32 0.0, %v5467
  %v5469 = vpop.f32.mrb[0].mxu0
  %5470 = vmatprep.mubr.f32.mxu0 0.0
  %5471 = vmatmul.mubr.f32.gmra.mrb[0].mxu0 %v5399
  %v5472 = vpop.f32.mrb[0].mxu0
  %v5473 = vadd.f32 0.0, %v5472
  %v5474 = vpop.f32.mrb[0].mxu0
  %5475 = vdwg.mxu0
  %v5476 = vadd.f32 %v5225, %v5306
  %v5477 = vadd.f32 %v5230, %v5311
  %v5478 = vadd.f32 %v5476, %v5387
  %v5479 = vadd.f32 %v5477, %v5392
  %v5480 = vadd.f32 %v5478, %v5468
  %v5481 = vadd.f32 %v5479, %v5473
  %5484 = vrot.lane.b32.xlu0 %v3850, 112
  %v5485 = vpop.permute.xlu0 %5484
  %5486 = vrot.lane.b32.xlu0 %v3963, 112
  %v5487 = vpop.permute.xlu0 %5486
  %5488 = vrot.lane.b32.xlu0 %v3850, 96
  %v5489 = vpop.permute.xlu0 %5488
  %5490 = vrot.lane.b32.xlu0 %v3963, 96
  %v5491 = vpop.permute.xlu0 %5490
  %5492 = vrot.lane.b32.xlu0 %v3850, 80
  %v5493 = vpop.permute.xlu0 %5492
  %5494 = vrot.lane.b32.xlu0 %v3963, 80
  %v5495 = vpop.permute.xlu0 %5494
  %5498 = vrot.lane.b32.xlu0 %v3852, 112
  %v5499 = vpop.permute.xlu0 %5498
  %5500 = vrot.lane.b32.xlu0 %v3965, 112
  %v5501 = vpop.permute.xlu0 %5500
  %5502 = vrot.lane.b32.xlu0 %v3852, 96
  %v5503 = vpop.permute.xlu0 %5502
  %5504 = vrot.lane.b32.xlu0 %v3965, 96
  %v5505 = vpop.permute.xlu0 %5504
  %5506 = vrot.lane.b32.xlu0 %v3852, 80
  %v5507 = vpop.permute.xlu0 %5506
  %5508 = vrot.lane.b32.xlu0 %v3965, 80
  %v5509 = vpop.permute.xlu0 %5508
  %v5510 = vsel %vm331, %v3850, 0
  %v5512 = vsel %vm331, %v3963, 0
  %v5514 = vsel %vm331, %v3852, 0
  %5516 = vmatprep.subr.mxu0 0.0
  %5517 = vmatpush1.xpose.msra.mxu0 %v5514
  %5518 = vmatprep.subr.mxu0 0.0
  %5519 = vmatpush1.xpose.msra.mxu0 0.0
  %5520 = vmatprep.subr.mxu0 0.0
  %5521 = vmatpush1.xpose.msra.mxu0 0.0
  %5522 = vmatprep.subr.mxu0 0.0
  %5523 = vmatpush1.xpose.msra.mxu0 0.0
  %5524 = vmatprep.subr.mxu0 0.0
  %5525 = vmatpush1.xpose.msra.mxu0 0.0
  %5526 = vmatprep.subr.mxu0 0.0
  %5527 = vmatpush1.xpose.msra.mxu0 0.0
  %5528 = vmatprep.subr.mxu0 0.0
  %5529 = vmatpush1.xpose.msra.mxu0 0.0
  %5530 = vmatprep.subr.mxu0 0.0
  %5531 = vmatpush1.xpose.msra.mxu0 0.0
  %5532 = vmatprep.subr.mxu0 0.0
  %5533 = vmatpush1.xpose.msra.mxu0 0.0
  %5534 = vmatprep.subr.mxu0 0.0
  %5535 = vmatpush1.xpose.msra.mxu0 0.0
  %5536 = vmatprep.subr.mxu0 0.0
  %5537 = vmatpush1.xpose.msra.mxu0 0.0
  %5538 = vmatprep.subr.mxu0 0.0
  %5539 = vmatpush1.xpose.msra.mxu0 0.0
  %5540 = vmatprep.subr.mxu0 0.0
  %5541 = vmatpush1.xpose.msra.mxu0 0.0
  %5542 = vmatprep.subr.mxu0 0.0
  %5543 = vmatpush1.xpose.msra.mxu0 0.0
  %5544 = vmatprep.subr.mxu0 0.0
  %5545 = vmatpush1.xpose.msra.mxu0 0.0
  %5546 = vmatprep.subr.mxu0 0.0
  %5547 = vmatpush1.xpose.msra.mxu0 0.0
  %5548 = vmatprep.subr.mxu0 0.0
  %5549 = vmatpush1.xpose.msra.mxu0 0.0
  %5550 = vmatprep.subr.mxu0 0.0
  %5551 = vmatpush1.xpose.msra.mxu0 0.0
  %5552 = vmatprep.subr.mxu0 0.0
  %5553 = vmatpush1.xpose.msra.mxu0 0.0
  %5554 = vmatprep.subr.mxu0 0.0
  %5555 = vmatpush1.xpose.msra.mxu0 0.0
  %5556 = vmatprep.subr.mxu0 0.0
  %5557 = vmatpush1.xpose.msra.mxu0 0.0
  %5558 = vmatprep.subr.mxu0 0.0
  %5559 = vmatpush1.xpose.msra.mxu0 0.0
  %5560 = vmatprep.subr.mxu0 0.0
  %5561 = vmatpush1.xpose.msra.mxu0 0.0
  %5562 = vmatprep.subr.mxu0 0.0
  %5563 = vmatpush1.xpose.msra.mxu0 0.0
  %5564 = vmatprep.subr.mxu0 0.0
  %5565 = vmatpush1.xpose.msra.mxu0 0.0
  %5566 = vmatprep.subr.mxu0 0.0
  %5567 = vmatpush1.xpose.msra.mxu0 0.0
  %5568 = vmatprep.subr.mxu0 0.0
  %5569 = vmatpush1.xpose.msra.mxu0 0.0
  %5570 = vmatprep.subr.mxu0 0.0
  %5571 = vmatpush1.xpose.msra.mxu0 0.0
  %5572 = vmatprep.subr.mxu0 0.0
  %5573 = vmatpush1.xpose.msra.mxu0 0.0
  %5574 = vmatprep.subr.mxu0 0.0
  %5575 = vmatpush1.xpose.msra.mxu0 0.0
  %5576 = vmatprep.subr.mxu0 0.0
  %5577 = vmatpush1.xpose.msra.mxu0 0.0
  %5578 = vmatprep.subr.mxu0 0.0
  %5579 = vmatpush1.xpose.msra.mxu0 0.0
  %5580 = vmatprep.mubr.f32.mxu0 0.0
  %5581 = vmatmul.mubr.f32.gmra.mrb[0].mxu0 %v5510
  %v5582 = vpop.f32.mrb[0].mxu0
  %v5583 = vadd.f32 0.0, %v5582
  %v5584 = vpop.f32.mrb[0].mxu0
  %5585 = vmatprep.mubr.f32.mxu0 0.0
  %5586 = vmatmul.mubr.f32.gmra.mrb[0].mxu0 %v5512
  %v5587 = vpop.f32.mrb[0].mxu0
  %v5588 = vadd.f32 0.0, %v5587
  %v5589 = vpop.f32.mrb[0].mxu0
  %5590 = vdwg.mxu0
  %v5591 = vsel %vm331, %v5485, 0
  %v5593 = vsel %vm331, %v5487, 0
  %v5595 = vsel %vm331, %v5499, 0
  %5597 = vmatprep.subr.mxu0 0.0
  %5598 = vmatpush1.xpose.msra.mxu0 %v5595
  %5599 = vmatprep.subr.mxu0 0.0
  %5600 = vmatpush1.xpose.msra.mxu0 0.0
  %5601 = vmatprep.subr.mxu0 0.0
  %5602 = vmatpush1.xpose.msra.mxu0 0.0
  %5603 = vmatprep.subr.mxu0 0.0
  %5604 = vmatpush1.xpose.msra.mxu0 0.0
  %5605 = vmatprep.subr.mxu0 0.0
  %5606 = vmatpush1.xpose.msra.mxu0 0.0
  %5607 = vmatprep.subr.mxu0 0.0
  %5608 = vmatpush1.xpose.msra.mxu0 0.0
  %5609 = vmatprep.subr.mxu0 0.0
  %5610 = vmatpush1.xpose.msra.mxu0 0.0
  %5611 = vmatprep.subr.mxu0 0.0
  %5612 = vmatpush1.xpose.msra.mxu0 0.0
  %5613 = vmatprep.subr.mxu0 0.0
  %5614 = vmatpush1.xpose.msra.mxu0 0.0
  %5615 = vmatprep.subr.mxu0 0.0
  %5616 = vmatpush1.xpose.msra.mxu0 0.0
  %5617 = vmatprep.subr.mxu0 0.0
  %5618 = vmatpush1.xpose.msra.mxu0 0.0
  %5619 = vmatprep.subr.mxu0 0.0
  %5620 = vmatpush1.xpose.msra.mxu0 0.0
  %5621 = vmatprep.subr.mxu0 0.0
  %5622 = vmatpush1.xpose.msra.mxu0 0.0
  %5623 = vmatprep.subr.mxu0 0.0
  %5624 = vmatpush1.xpose.msra.mxu0 0.0
  %5625 = vmatprep.subr.mxu0 0.0
  %5626 = vmatpush1.xpose.msra.mxu0 0.0
  %5627 = vmatprep.subr.mxu0 0.0
  %5628 = vmatpush1.xpose.msra.mxu0 0.0
  %5629 = vmatprep.subr.mxu0 0.0
  %5630 = vmatpush1.xpose.msra.mxu0 0.0
  %5631 = vmatprep.subr.mxu0 0.0
  %5632 = vmatpush1.xpose.msra.mxu0 0.0
  %5633 = vmatprep.subr.mxu0 0.0
  %5634 = vmatpush1.xpose.msra.mxu0 0.0
  %5635 = vmatprep.subr.mxu0 0.0
  %5636 = vmatpush1.xpose.msra.mxu0 0.0
  %5637 = vmatprep.subr.mxu0 0.0
  %5638 = vmatpush1.xpose.msra.mxu0 0.0
  %5639 = vmatprep.subr.mxu0 0.0
  %5640 = vmatpush1.xpose.msra.mxu0 0.0
  %5641 = vmatprep.subr.mxu0 0.0
  %5642 = vmatpush1.xpose.msra.mxu0 0.0
  %5643 = vmatprep.subr.mxu0 0.0
  %5644 = vmatpush1.xpose.msra.mxu0 0.0
  %5645 = vmatprep.subr.mxu0 0.0
  %5646 = vmatpush1.xpose.msra.mxu0 0.0
  %5647 = vmatprep.subr.mxu0 0.0
  %5648 = vmatpush1.xpose.msra.mxu0 0.0
  %5649 = vmatprep.subr.mxu0 0.0
  %5650 = vmatpush1.xpose.msra.mxu0 0.0
  %5651 = vmatprep.subr.mxu0 0.0
  %5652 = vmatpush1.xpose.msra.mxu0 0.0
  %5653 = vmatprep.subr.mxu0 0.0
  %5654 = vmatpush1.xpose.msra.mxu0 0.0
  %5655 = vmatprep.subr.mxu0 0.0
  %5656 = vmatpush1.xpose.msra.mxu0 0.0
  %5657 = vmatprep.subr.mxu0 0.0
  %5658 = vmatpush1.xpose.msra.mxu0 0.0
  %5659 = vmatprep.subr.mxu0 0.0
  %5660 = vmatpush1.xpose.msra.mxu0 0.0
  %5661 = vmatprep.mubr.f32.mxu0 0.0
  %5662 = vmatmul.mubr.f32.gmra.mrb[0].mxu0 %v5591
  %v5663 = vpop.f32.mrb[0].mxu0
  %v5664 = vadd.f32 0.0, %v5663
  %v5665 = vpop.f32.mrb[0].mxu0
  %5666 = vmatprep.mubr.f32.mxu0 0.0
  %5667 = vmatmul.mubr.f32.gmra.mrb[0].mxu0 %v5593
  %v5668 = vpop.f32.mrb[0].mxu0
  %v5669 = vadd.f32 0.0, %v5668
  %v5670 = vpop.f32.mrb[0].mxu0
  %5671 = vdwg.mxu0
  %v5672 = vsel %vm331, %v5489, 0
  %v5674 = vsel %vm331, %v5491, 0
  %v5676 = vsel %vm331, %v5503, 0
  %5678 = vmatprep.subr.mxu0 0.0
  %5679 = vmatpush1.xpose.msra.mxu0 %v5676
  %5680 = vmatprep.subr.mxu0 0.0
  %5681 = vmatpush1.xpose.msra.mxu0 0.0
  %5682 = vmatprep.subr.mxu0 0.0
  %5683 = vmatpush1.xpose.msra.mxu0 0.0
  %5684 = vmatprep.subr.mxu0 0.0
  %5685 = vmatpush1.xpose.msra.mxu0 0.0
  %5686 = vmatprep.subr.mxu0 0.0
  %5687 = vmatpush1.xpose.msra.mxu0 0.0
  %5688 = vmatprep.subr.mxu0 0.0
  %5689 = vmatpush1.xpose.msra.mxu0 0.0
  %5690 = vmatprep.subr.mxu0 0.0
  %5691 = vmatpush1.xpose.msra.mxu0 0.0
  %5692 = vmatprep.subr.mxu0 0.0
  %5693 = vmatpush1.xpose.msra.mxu0 0.0
  %5694 = vmatprep.subr.mxu0 0.0
  %5695 = vmatpush1.xpose.msra.mxu0 0.0
  %5696 = vmatprep.subr.mxu0 0.0
  %5697 = vmatpush1.xpose.msra.mxu0 0.0
  %5698 = vmatprep.subr.mxu0 0.0
  %5699 = vmatpush1.xpose.msra.mxu0 0.0
  %5700 = vmatprep.subr.mxu0 0.0
  %5701 = vmatpush1.xpose.msra.mxu0 0.0
  %5702 = vmatprep.subr.mxu0 0.0
  %5703 = vmatpush1.xpose.msra.mxu0 0.0
  %5704 = vmatprep.subr.mxu0 0.0
  %5705 = vmatpush1.xpose.msra.mxu0 0.0
  %5706 = vmatprep.subr.mxu0 0.0
  %5707 = vmatpush1.xpose.msra.mxu0 0.0
  %5708 = vmatprep.subr.mxu0 0.0
  %5709 = vmatpush1.xpose.msra.mxu0 0.0
  %5710 = vmatprep.subr.mxu0 0.0
  %5711 = vmatpush1.xpose.msra.mxu0 0.0
  %5712 = vmatprep.subr.mxu0 0.0
  %5713 = vmatpush1.xpose.msra.mxu0 0.0
  %5714 = vmatprep.subr.mxu0 0.0
  %5715 = vmatpush1.xpose.msra.mxu0 0.0
  %5716 = vmatprep.subr.mxu0 0.0
  %5717 = vmatpush1.xpose.msra.mxu0 0.0
  %5718 = vmatprep.subr.mxu0 0.0
  %5719 = vmatpush1.xpose.msra.mxu0 0.0
  %5720 = vmatprep.subr.mxu0 0.0
  %5721 = vmatpush1.xpose.msra.mxu0 0.0
  %5722 = vmatprep.subr.mxu0 0.0
  %5723 = vmatpush1.xpose.msra.mxu0 0.0
  %5724 = vmatprep.subr.mxu0 0.0
  %5725 = vmatpush1.xpose.msra.mxu0 0.0
  %5726 = vmatprep.subr.mxu0 0.0
  %5727 = vmatpush1.xpose.msra.mxu0 0.0
  %5728 = vmatprep.subr.mxu0 0.0
  %5729 = vmatpush1.xpose.msra.mxu0 0.0
  %5730 = vmatprep.subr.mxu0 0.0
  %5731 = vmatpush1.xpose.msra.mxu0 0.0
  %5732 = vmatprep.subr.mxu0 0.0
  %5733 = vmatpush1.xpose.msra.mxu0 0.0
  %5734 = vmatprep.subr.mxu0 0.0
  %5735 = vmatpush1.xpose.msra.mxu0 0.0
  %5736 = vmatprep.subr.mxu0 0.0
  %5737 = vmatpush1.xpose.msra.mxu0 0.0
  %5738 = vmatprep.subr.mxu0 0.0
  %5739 = vmatpush1.xpose.msra.mxu0 0.0
  %5740 = vmatprep.subr.mxu0 0.0
  %5741 = vmatpush1.xpose.msra.mxu0 0.0
  %5742 = vmatprep.mubr.f32.mxu0 0.0
  %5743 = vmatmul.mubr.f32.gmra.mrb[0].mxu0 %v5672
  %v5744 = vpop.f32.mrb[0].mxu0
  %v5745 = vadd.f32 0.0, %v5744
  %v5746 = vpop.f32.mrb[0].mxu0
  %5747 = vmatprep.mubr.f32.mxu0 0.0
  %5748 = vmatmul.mubr.f32.gmra.mrb[0].mxu0 %v5674
  %v5749 = vpop.f32.mrb[0].mxu0
  %v5750 = vadd.f32 0.0, %v5749
  %v5751 = vpop.f32.mrb[0].mxu0
  %5752 = vdwg.mxu0
  %v5753 = vsel %vm331, %v5493, 0
  %v5755 = vsel %vm331, %v5495, 0
  %v5757 = vsel %vm331, %v5507, 0
  %5759 = vmatprep.subr.mxu0 0.0
  %5760 = vmatpush1.xpose.msra.mxu0 %v5757
  %5761 = vmatprep.subr.mxu0 0.0
  %5762 = vmatpush1.xpose.msra.mxu0 0.0
  %5763 = vmatprep.subr.mxu0 0.0
  %5764 = vmatpush1.xpose.msra.mxu0 0.0
  %5765 = vmatprep.subr.mxu0 0.0
  %5766 = vmatpush1.xpose.msra.mxu0 0.0
  %5767 = vmatprep.subr.mxu0 0.0
  %5768 = vmatpush1.xpose.msra.mxu0 0.0
  %5769 = vmatprep.subr.mxu0 0.0
  %5770 = vmatpush1.xpose.msra.mxu0 0.0
  %5771 = vmatprep.subr.mxu0 0.0
  %5772 = vmatpush1.xpose.msra.mxu0 0.0
  %5773 = vmatprep.subr.mxu0 0.0
  %5774 = vmatpush1.xpose.msra.mxu0 0.0
  %5775 = vmatprep.subr.mxu0 0.0
  %5776 = vmatpush1.xpose.msra.mxu0 0.0
  %5777 = vmatprep.subr.mxu0 0.0
  %5778 = vmatpush1.xpose.msra.mxu0 0.0
  %5779 = vmatprep.subr.mxu0 0.0
  %5780 = vmatpush1.xpose.msra.mxu0 0.0
  %5781 = vmatprep.subr.mxu0 0.0
  %5782 = vmatpush1.xpose.msra.mxu0 0.0
  %5783 = vmatprep.subr.mxu0 0.0
  %5784 = vmatpush1.xpose.msra.mxu0 0.0
  %5785 = vmatprep.subr.mxu0 0.0
  %5786 = vmatpush1.xpose.msra.mxu0 0.0
  %5787 = vmatprep.subr.mxu0 0.0
  %5788 = vmatpush1.xpose.msra.mxu0 0.0
  %5789 = vmatprep.subr.mxu0 0.0
  %5790 = vmatpush1.xpose.msra.mxu0 0.0
  %5791 = vmatprep.subr.mxu0 0.0
  %5792 = vmatpush1.xpose.msra.mxu0 0.0
  %5793 = vmatprep.subr.mxu0 0.0
  %5794 = vmatpush1.xpose.msra.mxu0 0.0
  %5795 = vmatprep.subr.mxu0 0.0
  %5796 = vmatpush1.xpose.msra.mxu0 0.0
  %5797 = vmatprep.subr.mxu0 0.0
  %5798 = vmatpush1.xpose.msra.mxu0 0.0
  %5799 = vmatprep.subr.mxu0 0.0
  %5800 = vmatpush1.xpose.msra.mxu0 0.0
  %5801 = vmatprep.subr.mxu0 0.0
  %5802 = vmatpush1.xpose.msra.mxu0 0.0
  %5803 = vmatprep.subr.mxu0 0.0
  %5804 = vmatpush1.xpose.msra.mxu0 0.0
  %5805 = vmatprep.subr.mxu0 0.0
  %5806 = vmatpush1.xpose.msra.mxu0 0.0
  %5807 = vmatprep.subr.mxu0 0.0
  %5808 = vmatpush1.xpose.msra.mxu0 0.0
  %5809 = vmatprep.subr.mxu0 0.0
  %5810 = vmatpush1.xpose.msra.mxu0 0.0
  %5811 = vmatprep.subr.mxu0 0.0
  %5812 = vmatpush1.xpose.msra.mxu0 0.0
  %5813 = vmatprep.subr.mxu0 0.0
  %5814 = vmatpush1.xpose.msra.mxu0 0.0
  %5815 = vmatprep.subr.mxu0 0.0
  %5816 = vmatpush1.xpose.msra.mxu0 0.0
  %5817 = vmatprep.subr.mxu0 0.0
  %5818 = vmatpush1.xpose.msra.mxu0 0.0
  %5819 = vmatprep.subr.mxu0 0.0
  %5820 = vmatpush1.xpose.msra.mxu0 0.0
  %5821 = vmatprep.subr.mxu0 0.0
  %5822 = vmatpush1.xpose.msra.mxu0 0.0
  %5823 = vmatprep.mubr.f32.mxu0 0.0
  %5824 = vmatmul.mubr.f32.gmra.mrb[0].mxu0 %v5753
  %v5825 = vpop.f32.mrb[0].mxu0
  %v5826 = vadd.f32 0.0, %v5825
  %v5827 = vpop.f32.mrb[0].mxu0
  %5828 = vmatprep.mubr.f32.mxu0 0.0
  %5829 = vmatmul.mubr.f32.gmra.mrb[0].mxu0 %v5755
  %v5830 = vpop.f32.mrb[0].mxu0
  %v5831 = vadd.f32 0.0, %v5830
  %v5832 = vpop.f32.mrb[0].mxu0
  %5833 = vdwg.mxu0
  %5834 = vrot.lane.b32.xlu0 %v3850, 64
  %v5835 = vpop.permute.xlu0 %5834
  %5836 = vrot.lane.b32.xlu0 %v3963, 64
  %v5837 = vpop.permute.xlu0 %5836
  %v5838 = vsel %vm331, %v5835, 0
  %v5840 = vsel %vm331, %v5837, 0
  %v5842 = vsel %vm331, %v3965, 0
  %5844 = vmatprep.subr.mxu0 0.0
  %5845 = vmatpush1.xpose.msra.mxu0 %v5842
  %5846 = vmatprep.subr.mxu0 0.0
  %5847 = vmatpush1.xpose.msra.mxu0 0.0
  %5848 = vmatprep.subr.mxu0 0.0
  %5849 = vmatpush1.xpose.msra.mxu0 0.0
  %5850 = vmatprep.subr.mxu0 0.0
  %5851 = vmatpush1.xpose.msra.mxu0 0.0
  %5852 = vmatprep.subr.mxu0 0.0
  %5853 = vmatpush1.xpose.msra.mxu0 0.0
  %5854 = vmatprep.subr.mxu0 0.0
  %5855 = vmatpush1.xpose.msra.mxu0 0.0
  %5856 = vmatprep.subr.mxu0 0.0
  %5857 = vmatpush1.xpose.msra.mxu0 0.0
  %5858 = vmatprep.subr.mxu0 0.0
  %5859 = vmatpush1.xpose.msra.mxu0 0.0
  %5860 = vmatprep.subr.mxu0 0.0
  %5861 = vmatpush1.xpose.msra.mxu0 0.0
  %5862 = vmatprep.subr.mxu0 0.0
  %5863 = vmatpush1.xpose.msra.mxu0 0.0
  %5864 = vmatprep.subr.mxu0 0.0
  %5865 = vmatpush1.xpose.msra.mxu0 0.0
  %5866 = vmatprep.subr.mxu0 0.0
  %5867 = vmatpush1.xpose.msra.mxu0 0.0
  %5868 = vmatprep.subr.mxu0 0.0
  %5869 = vmatpush1.xpose.msra.mxu0 0.0
  %5870 = vmatprep.subr.mxu0 0.0
  %5871 = vmatpush1.xpose.msra.mxu0 0.0
  %5872 = vmatprep.subr.mxu0 0.0
  %5873 = vmatpush1.xpose.msra.mxu0 0.0
  %5874 = vmatprep.subr.mxu0 0.0
  %5875 = vmatpush1.xpose.msra.mxu0 0.0
  %5876 = vmatprep.subr.mxu0 0.0
  %5877 = vmatpush1.xpose.msra.mxu0 0.0
  %5878 = vmatprep.subr.mxu0 0.0
  %5879 = vmatpush1.xpose.msra.mxu0 0.0
  %5880 = vmatprep.subr.mxu0 0.0
  %5881 = vmatpush1.xpose.msra.mxu0 0.0
  %5882 = vmatprep.subr.mxu0 0.0
  %5883 = vmatpush1.xpose.msra.mxu0 0.0
  %5884 = vmatprep.subr.mxu0 0.0
  %5885 = vmatpush1.xpose.msra.mxu0 0.0
  %5886 = vmatprep.subr.mxu0 0.0
  %5887 = vmatpush1.xpose.msra.mxu0 0.0
  %5888 = vmatprep.subr.mxu0 0.0
  %5889 = vmatpush1.xpose.msra.mxu0 0.0
  %5890 = vmatprep.subr.mxu0 0.0
  %5891 = vmatpush1.xpose.msra.mxu0 0.0
  %5892 = vmatprep.subr.mxu0 0.0
  %5893 = vmatpush1.xpose.msra.mxu0 0.0
  %5894 = vmatprep.subr.mxu0 0.0
  %5895 = vmatpush1.xpose.msra.mxu0 0.0
  %5896 = vmatprep.subr.mxu0 0.0
  %5897 = vmatpush1.xpose.msra.mxu0 0.0
  %5898 = vmatprep.subr.mxu0 0.0
  %5899 = vmatpush1.xpose.msra.mxu0 0.0
  %5900 = vmatprep.subr.mxu0 0.0
  %5901 = vmatpush1.xpose.msra.mxu0 0.0
  %5902 = vmatprep.subr.mxu0 0.0
  %5903 = vmatpush1.xpose.msra.mxu0 0.0
  %5904 = vmatprep.subr.mxu0 0.0
  %5905 = vmatpush1.xpose.msra.mxu0 0.0
  %5906 = vmatprep.subr.mxu0 0.0
  %5907 = vmatpush1.xpose.msra.mxu0 0.0
  %5908 = vmatprep.mubr.f32.mxu0 0.0
  %5909 = vmatmul.mubr.f32.gmra.mrb[0].mxu0 %v5838
  %v5910 = vpop.f32.mrb[0].mxu0
  %v5911 = vadd.f32 0.0, %v5910
  %v5912 = vpop.f32.mrb[0].mxu0
  %5913 = vmatprep.mubr.f32.mxu0 0.0
  %5914 = vmatmul.mubr.f32.gmra.mrb[0].mxu0 %v5840
  %v5915 = vpop.f32.mrb[0].mxu0
  %v5916 = vadd.f32 0.0, %v5915
  %v5917 = vpop.f32.mrb[0].mxu0
  %5918 = vdwg.mxu0
  %5919 = vrot.lane.b32.xlu0 %v5485, 64
  %v5920 = vpop.permute.xlu0 %5919
  %5921 = vrot.lane.b32.xlu0 %v5487, 64
  %v5922 = vpop.permute.xlu0 %5921
  %v5923 = vsel %vm331, %v5920, 0
  %v5925 = vsel %vm331, %v5922, 0
  %v5927 = vsel %vm331, %v5501, 0
  %5929 = vmatprep.subr.mxu0 0.0
  %5930 = vmatpush1.xpose.msra.mxu0 %v5927
  %5931 = vmatprep.subr.mxu0 0.0
  %5932 = vmatpush1.xpose.msra.mxu0 0.0
  %5933 = vmatprep.subr.mxu0 0.0
  %5934 = vmatpush1.xpose.msra.mxu0 0.0
  %5935 = vmatprep.subr.mxu0 0.0
  %5936 = vmatpush1.xpose.msra.mxu0 0.0
  %5937 = vmatprep.subr.mxu0 0.0
  %5938 = vmatpush1.xpose.msra.mxu0 0.0
  %5939 = vmatprep.subr.mxu0 0.0
  %5940 = vmatpush1.xpose.msra.mxu0 0.0
  %5941 = vmatprep.subr.mxu0 0.0
  %5942 = vmatpush1.xpose.msra.mxu0 0.0
  %5943 = vmatprep.subr.mxu0 0.0
  %5944 = vmatpush1.xpose.msra.mxu0 0.0
  %5945 = vmatprep.subr.mxu0 0.0
  %5946 = vmatpush1.xpose.msra.mxu0 0.0
  %5947 = vmatprep.subr.mxu0 0.0
  %5948 = vmatpush1.xpose.msra.mxu0 0.0
  %5949 = vmatprep.subr.mxu0 0.0
  %5950 = vmatpush1.xpose.msra.mxu0 0.0
  %5951 = vmatprep.subr.mxu0 0.0
  %5952 = vmatpush1.xpose.msra.mxu0 0.0
  %5953 = vmatprep.subr.mxu0 0.0
  %5954 = vmatpush1.xpose.msra.mxu0 0.0
  %5955 = vmatprep.subr.mxu0 0.0
  %5956 = vmatpush1.xpose.msra.mxu0 0.0
  %5957 = vmatprep.subr.mxu0 0.0
  %5958 = vmatpush1.xpose.msra.mxu0 0.0
  %5959 = vmatprep.subr.mxu0 0.0
  %5960 = vmatpush1.xpose.msra.mxu0 0.0
  %5961 = vmatprep.subr.mxu0 0.0
  %5962 = vmatpush1.xpose.msra.mxu0 0.0
  %5963 = vmatprep.subr.mxu0 0.0
  %5964 = vmatpush1.xpose.msra.mxu0 0.0
  %5965 = vmatprep.subr.mxu0 0.0
  %5966 = vmatpush1.xpose.msra.mxu0 0.0
  %5967 = vmatprep.subr.mxu0 0.0
  %5968 = vmatpush1.xpose.msra.mxu0 0.0
  %5969 = vmatprep.subr.mxu0 0.0
  %5970 = vmatpush1.xpose.msra.mxu0 0.0
  %5971 = vmatprep.subr.mxu0 0.0
  %5972 = vmatpush1.xpose.msra.mxu0 0.0
  %5973 = vmatprep.subr.mxu0 0.0
  %5974 = vmatpush1.xpose.msra.mxu0 0.0
  %5975 = vmatprep.subr.mxu0 0.0
  %5976 = vmatpush1.xpose.msra.mxu0 0.0
  %5977 = vmatprep.subr.mxu0 0.0
  %5978 = vmatpush1.xpose.msra.mxu0 0.0
  %5979 = vmatprep.subr.mxu0 0.0
  %5980 = vmatpush1.xpose.msra.mxu0 0.0
  %5981 = vmatprep.subr.mxu0 0.0
  %5982 = vmatpush1.xpose.msra.mxu0 0.0
  %5983 = vmatprep.subr.mxu0 0.0
  %5984 = vmatpush1.xpose.msra.mxu0 0.0
  %5985 = vmatprep.subr.mxu0 0.0
  %5986 = vmatpush1.xpose.msra.mxu0 0.0
  %5987 = vmatprep.subr.mxu0 0.0
  %5988 = vmatpush1.xpose.msra.mxu0 0.0
  %5989 = vmatprep.subr.mxu0 0.0
  %5990 = vmatpush1.xpose.msra.mxu0 0.0
  %5991 = vmatprep.subr.mxu0 0.0
  %5992 = vmatpush1.xpose.msra.mxu0 0.0
  %5993 = vmatprep.mubr.f32.mxu0 0.0
  %5994 = vmatmul.mubr.f32.gmra.mrb[0].mxu0 %v5923
  %v5995 = vpop.f32.mrb[0].mxu0
  %v5996 = vadd.f32 0.0, %v5995
  %v5997 = vpop.f32.mrb[0].mxu0
  %5998 = vmatprep.mubr.f32.mxu0 0.0
  %5999 = vmatmul.mubr.f32.gmra.mrb[0].mxu0 %v5925
  %v6000 = vpop.f32.mrb[0].mxu0
  %v6001 = vadd.f32 0.0, %v6000
  %v6002 = vpop.f32.mrb[0].mxu0
  %6003 = vdwg.mxu0
  %6004 = vrot.lane.b32.xlu0 %v5489, 64
  %v6005 = vpop.permute.xlu0 %6004
  %6006 = vrot.lane.b32.xlu0 %v5491, 64
  %v6007 = vpop.permute.xlu0 %6006
  %v6008 = vsel %vm331, %v6005, 0
  %v6010 = vsel %vm331, %v6007, 0
  %v6012 = vsel %vm331, %v5505, 0
  %6014 = vmatprep.subr.mxu0 0.0
  %6015 = vmatpush1.xpose.msra.mxu0 %v6012
  %6016 = vmatprep.subr.mxu0 0.0
  %6017 = vmatpush1.xpose.msra.mxu0 0.0
  %6018 = vmatprep.subr.mxu0 0.0
  %6019 = vmatpush1.xpose.msra.mxu0 0.0
  %6020 = vmatprep.subr.mxu0 0.0
  %6021 = vmatpush1.xpose.msra.mxu0 0.0
  %6022 = vmatprep.subr.mxu0 0.0
  %6023 = vmatpush1.xpose.msra.mxu0 0.0
  %6024 = vmatprep.subr.mxu0 0.0
  %6025 = vmatpush1.xpose.msra.mxu0 0.0
  %6026 = vmatprep.subr.mxu0 0.0
  %6027 = vmatpush1.xpose.msra.mxu0 0.0
  %6028 = vmatprep.subr.mxu0 0.0
  %6029 = vmatpush1.xpose.msra.mxu0 0.0
  %6030 = vmatprep.subr.mxu0 0.0
  %6031 = vmatpush1.xpose.msra.mxu0 0.0
  %6032 = vmatprep.subr.mxu0 0.0
  %6033 = vmatpush1.xpose.msra.mxu0 0.0
  %6034 = vmatprep.subr.mxu0 0.0
  %6035 = vmatpush1.xpose.msra.mxu0 0.0
  %6036 = vmatprep.subr.mxu0 0.0
  %6037 = vmatpush1.xpose.msra.mxu0 0.0
  %6038 = vmatprep.subr.mxu0 0.0
  %6039 = vmatpush1.xpose.msra.mxu0 0.0
  %6040 = vmatprep.subr.mxu0 0.0
  %6041 = vmatpush1.xpose.msra.mxu0 0.0
  %6042 = vmatprep.subr.mxu0 0.0
  %6043 = vmatpush1.xpose.msra.mxu0 0.0
  %6044 = vmatprep.subr.mxu0 0.0
  %6045 = vmatpush1.xpose.msra.mxu0 0.0
  %6046 = vmatprep.subr.mxu0 0.0
  %6047 = vmatpush1.xpose.msra.mxu0 0.0
  %6048 = vmatprep.subr.mxu0 0.0
  %6049 = vmatpush1.xpose.msra.mxu0 0.0
  %6050 = vmatprep.subr.mxu0 0.0
  %6051 = vmatpush1.xpose.msra.mxu0 0.0
  %6052 = vmatprep.subr.mxu0 0.0
  %6053 = vmatpush1.xpose.msra.mxu0 0.0
  %6054 = vmatprep.subr.mxu0 0.0
  %6055 = vmatpush1.xpose.msra.mxu0 0.0
  %6056 = vmatprep.subr.mxu0 0.0
  %6057 = vmatpush1.xpose.msra.mxu0 0.0
  %6058 = vmatprep.subr.mxu0 0.0
  %6059 = vmatpush1.xpose.msra.mxu0 0.0
  %6060 = vmatprep.subr.mxu0 0.0
  %6061 = vmatpush1.xpose.msra.mxu0 0.0
  %6062 = vmatprep.subr.mxu0 0.0
  %6063 = vmatpush1.xpose.msra.mxu0 0.0
  %6064 = vmatprep.subr.mxu0 0.0
  %6065 = vmatpush1.xpose.msra.mxu0 0.0
  %6066 = vmatprep.subr.mxu0 0.0
  %6067 = vmatpush1.xpose.msra.mxu0 0.0
  %6068 = vmatprep.subr.mxu0 0.0
  %6069 = vmatpush1.xpose.msra.mxu0 0.0
  %6070 = vmatprep.subr.mxu0 0.0
  %6071 = vmatpush1.xpose.msra.mxu0 0.0
  %6072 = vmatprep.subr.mxu0 0.0
  %6073 = vmatpush1.xpose.msra.mxu0 0.0
  %6074 = vmatprep.subr.mxu0 0.0
  %6075 = vmatpush1.xpose.msra.mxu0 0.0
  %6076 = vmatprep.subr.mxu0 0.0
  %6077 = vmatpush1.xpose.msra.mxu0 0.0
  %6078 = vmatprep.mubr.f32.mxu0 0.0
  %6079 = vmatmul.mubr.f32.gmra.mrb[0].mxu0 %v6008
  %v6080 = vpop.f32.mrb[0].mxu0
  %v6081 = vadd.f32 0.0, %v6080
  %v6082 = vpop.f32.mrb[0].mxu0
  %6083 = vmatprep.mubr.f32.mxu0 0.0
  %6084 = vmatmul.mubr.f32.gmra.mrb[0].mxu0 %v6010
  %v6085 = vpop.f32.mrb[0].mxu0
  %v6086 = vadd.f32 0.0, %v6085
  %v6087 = vpop.f32.mrb[0].mxu0
  %6088 = vdwg.mxu0
  %6089 = vrot.lane.b32.xlu0 %v5493, 64
  %v6090 = vpop.permute.xlu0 %6089
  %6091 = vrot.lane.b32.xlu0 %v5495, 64
  %v6092 = vpop.permute.xlu0 %6091
  %v6093 = vsel %vm331, %v6090, 0
  %v6095 = vsel %vm331, %v6092, 0
  %v6097 = vsel %vm331, %v5509, 0
  %6099 = vmatprep.subr.mxu0 0.0
  %6100 = vmatpush1.xpose.msra.mxu0 %v6097
  %6101 = vmatprep.subr.mxu0 0.0
  %6102 = vmatpush1.xpose.msra.mxu0 0.0
  %6103 = vmatprep.subr.mxu0 0.0
  %6104 = vmatpush1.xpose.msra.mxu0 0.0
  %6105 = vmatprep.subr.mxu0 0.0
  %6106 = vmatpush1.xpose.msra.mxu0 0.0
  %6107 = vmatprep.subr.mxu0 0.0
  %6108 = vmatpush1.xpose.msra.mxu0 0.0
  %6109 = vmatprep.subr.mxu0 0.0
  %6110 = vmatpush1.xpose.msra.mxu0 0.0
  %6111 = vmatprep.subr.mxu0 0.0
  %6112 = vmatpush1.xpose.msra.mxu0 0.0
  %6113 = vmatprep.subr.mxu0 0.0
  %6114 = vmatpush1.xpose.msra.mxu0 0.0
  %6115 = vmatprep.subr.mxu0 0.0
  %6116 = vmatpush1.xpose.msra.mxu0 0.0
  %6117 = vmatprep.subr.mxu0 0.0
  %6118 = vmatpush1.xpose.msra.mxu0 0.0
  %6119 = vmatprep.subr.mxu0 0.0
  %6120 = vmatpush1.xpose.msra.mxu0 0.0
  %6121 = vmatprep.subr.mxu0 0.0
  %6122 = vmatpush1.xpose.msra.mxu0 0.0
  %6123 = vmatprep.subr.mxu0 0.0
  %6124 = vmatpush1.xpose.msra.mxu0 0.0
  %6125 = vmatprep.subr.mxu0 0.0
  %6126 = vmatpush1.xpose.msra.mxu0 0.0
  %6127 = vmatprep.subr.mxu0 0.0
  %6128 = vmatpush1.xpose.msra.mxu0 0.0
  %6129 = vmatprep.subr.mxu0 0.0
  %6130 = vmatpush1.xpose.msra.mxu0 0.0
  %6131 = vmatprep.subr.mxu0 0.0
  %6132 = vmatpush1.xpose.msra.mxu0 0.0
  %6133 = vmatprep.subr.mxu0 0.0
  %6134 = vmatpush1.xpose.msra.mxu0 0.0
  %6135 = vmatprep.subr.mxu0 0.0
  %6136 = vmatpush1.xpose.msra.mxu0 0.0
  %6137 = vmatprep.subr.mxu0 0.0
  %6138 = vmatpush1.xpose.msra.mxu0 0.0
  %6139 = vmatprep.subr.mxu0 0.0
  %6140 = vmatpush1.xpose.msra.mxu0 0.0
  %6141 = vmatprep.subr.mxu0 0.0
  %6142 = vmatpush1.xpose.msra.mxu0 0.0
  %6143 = vmatprep.subr.mxu0 0.0
  %6144 = vmatpush1.xpose.msra.mxu0 0.0
  %6145 = vmatprep.subr.mxu0 0.0
  %6146 = vmatpush1.xpose.msra.mxu0 0.0
  %6147 = vmatprep.subr.mxu0 0.0
  %6148 = vmatpush1.xpose.msra.mxu0 0.0
  %6149 = vmatprep.subr.mxu0 0.0
  %6150 = vmatpush1.xpose.msra.mxu0 0.0
  %6151 = vmatprep.subr.mxu0 0.0
  %6152 = vmatpush1.xpose.msra.mxu0 0.0
  %6153 = vmatprep.subr.mxu0 0.0
  %6154 = vmatpush1.xpose.msra.mxu0 0.0
  %6155 = vmatprep.subr.mxu0 0.0
  %6156 = vmatpush1.xpose.msra.mxu0 0.0
  %6157 = vmatprep.subr.mxu0 0.0
  %6158 = vmatpush1.xpose.msra.mxu0 0.0
  %6159 = vmatprep.subr.mxu0 0.0
  %6160 = vmatpush1.xpose.msra.mxu0 0.0
  %6161 = vmatprep.subr.mxu0 0.0
  %6162 = vmatpush1.xpose.msra.mxu0 0.0
  %6163 = vmatprep.mubr.f32.mxu0 0.0
  %6164 = vmatmul.mubr.f32.gmra.mrb[0].mxu0 %v6093
  %v6165 = vpop.f32.mrb[0].mxu0
  %v6166 = vadd.f32 0.0, %v6165
  %v6167 = vpop.f32.mrb[0].mxu0
  %6168 = vmatprep.mubr.f32.mxu0 0.0
  %6169 = vmatmul.mubr.f32.gmra.mrb[0].mxu0 %v6095
  %v6170 = vpop.f32.mrb[0].mxu0
  %v6171 = vadd.f32 0.0, %v6170
  %v6172 = vpop.f32.mrb[0].mxu0
  %6173 = vdwg.mxu0
  %6182 = vrot.lane.b32.xlu0 %v5911, 8
  %v6183 = vpop.permute.xlu0 %6182
  %6184 = vrot.lane.b32.xlu0 %v5916, 8
  %v6185 = vpop.permute.xlu0 %6184
  %6186 = vrot.lane.b32.xlu0 %v5996, 8
  %v6187 = vpop.permute.xlu0 %6186
  %6188 = vrot.lane.b32.xlu0 %v6001, 8
  %v6189 = vpop.permute.xlu0 %6188
  %6190 = vrot.lane.b32.xlu0 %v6081, 8
  %v6191 = vpop.permute.xlu0 %6190
  %6192 = vrot.lane.b32.xlu0 %v6086, 8
  %v6193 = vpop.permute.xlu0 %6192
  %6194 = vrot.lane.b32.xlu0 %v6166, 8
  %v6195 = vpop.permute.xlu0 %6194
  %6196 = vrot.lane.b32.xlu0 %v6171, 8
  %v6197 = vpop.permute.xlu0 %6196
  %v6206 = vsel %vm1028, %v5583, %v6183
  %v6207 = vsel %vm1028, %v5588, %v6185
  %v6208 = vsel %vm1028, %v5664, %v6187
  %v6209 = vsel %vm1028, %v5669, %v6189
  %v6210 = vsel %vm1028, %v5745, %v6191
  %v6211 = vsel %vm1028, %v5750, %v6193
  %v6212 = vsel %vm1028, %v5826, %v6195
  %v6213 = vsel %vm1028, %v5831, %v6197
  %v6214 = vadd.f32 %v6206, %v70
  %v6215 = vadd.f32 %v6207, %v70
  %v6216 = vadd.f32 %v6208, %v70
  %v6217 = vadd.f32 %v6209, %v70
  %v6218 = vadd.f32 %v6210, %v70
  %v6219 = vadd.f32 %v6211, %v70
  %v6220 = vadd.f32 %v6212, %v70
  %v6221 = vadd.f32 %v6213, %v70
  %v6222 = vsel %vm331, %v6214, -inf
  %6223 = vmax.xlane.f32.xlu0 %v6222
  %v6224 = vpop.xlane.xlu0 %6223
  %v6225 = vsel %vm331, %v6215, -inf
  %6226 = vmax.xlane.f32.xlu0 %v6225
  %v6227 = vpop.xlane.xlu0 %6226
  %v6228 = vsel %vm331, %v6216, -inf
  %6229 = vmax.xlane.f32.xlu0 %v6228
  %v6230 = vpop.xlane.xlu0 %6229
  %v6231 = vsel %vm331, %v6217, -inf
  %6232 = vmax.xlane.f32.xlu0 %v6231
  %v6233 = vpop.xlane.xlu0 %6232
  %v6234 = vsel %vm331, %v6218, -inf
  %6235 = vmax.xlane.f32.xlu0 %v6234
  %v6236 = vpop.xlane.xlu0 %6235
  %v6237 = vsel %vm331, %v6219, -inf
  %6238 = vmax.xlane.f32.xlu0 %v6237
  %v6239 = vpop.xlane.xlu0 %6238
  %v6240 = vsel %vm331, %v6220, -inf
  %6241 = vmax.xlane.f32.xlu0 %v6240
  %v6242 = vpop.xlane.xlu0 %6241
  %v6243 = vsel %vm331, %v6221, -inf
  %6244 = vmax.xlane.f32.xlu0 %v6243
  %v6245 = vpop.xlane.xlu0 %6244
  %v6246 = vsub.f32 %v6214, %v6224
  %v6247 = vsub.f32 %v6215, %v6227
  %v6248 = vsub.f32 %v6216, %v6230
  %v6249 = vsub.f32 %v6217, %v6233
  %v6250 = vsub.f32 %v6218, %v6236
  %v6251 = vsub.f32 %v6219, %v6239
  %v6252 = vsub.f32 %v6220, %v6242
  %v6253 = vsub.f32 %v6221, %v6245
  %v6254 = vmul.f32 %v6246, 1.442695
  %v6255 = vpow.pop %v6254
  %v6256 = vmul.f32 %v6247, 1.442695
  %v6257 = vpow.pop %v6256
  %v6258 = vmul.f32 %v6248, 1.442695
  %v6259 = vpow.pop %v6258
  %v6260 = vmul.f32 %v6249, 1.442695
  %v6261 = vpow.pop %v6260
  %v6262 = vmul.f32 %v6250, 1.442695
  %v6263 = vpow.pop %v6262
  %v6264 = vmul.f32 %v6251, 1.442695
  %v6265 = vpow.pop %v6264
  %v6266 = vmul.f32 %v6252, 1.442695
  %v6267 = vpow.pop %v6266
  %v6268 = vmul.f32 %v6253, 1.442695
  %v6269 = vpow.pop %v6268
  %v6270 = vsel %vm331, %v6255, 0.0
  %6271 = vadd.xlane.f32.xlu0 %v6270
  %v6272 = vpop.xlane.xlu0 %6271
  %v6273 = vsel %vm331, %v6257, 0.0
  %6274 = vadd.xlane.f32.xlu0 %v6273
  %v6275 = vpop.xlane.xlu0 %6274
  %v6276 = vsel %vm331, %v6259, 0.0
  %6277 = vadd.xlane.f32.xlu0 %v6276
  %v6278 = vpop.xlane.xlu0 %6277
  %v6279 = vsel %vm331, %v6261, 0.0
  %6280 = vadd.xlane.f32.xlu0 %v6279
  %v6281 = vpop.xlane.xlu0 %6280
  %v6282 = vsel %vm331, %v6263, 0.0
  %6283 = vadd.xlane.f32.xlu0 %v6282
  %v6284 = vpop.xlane.xlu0 %6283
  %v6285 = vsel %vm331, %v6265, 0.0
  %6286 = vadd.xlane.f32.xlu0 %v6285
  %v6287 = vpop.xlane.xlu0 %6286
  %v6288 = vsel %vm331, %v6267, 0.0
  %6289 = vadd.xlane.f32.xlu0 %v6288
  %v6290 = vpop.xlane.xlu0 %6289
  %v6291 = vsel %vm331, %v6269, 0.0
  %6292 = vadd.xlane.f32.xlu0 %v6291
  %v6293 = vpop.xlane.xlu0 %6292
  %v6294 = vrcp.pop %v6272
  %v6295 = vrcp.pop %v6275
  %v6296 = vrcp.pop %v6278
  %v6297 = vrcp.pop %v6281
  %v6298 = vrcp.pop %v6284
  %v6299 = vrcp.pop %v6287
  %v6300 = vrcp.pop %v6290
  %v6301 = vrcp.pop %v6293
  %v6302 = vmul.f32 %v6255, %v6294
  %v6303 = vmul.f32 %v6257, %v6295
  %v6304 = vmul.f32 %v6259, %v6296
  %v6305 = vmul.f32 %v6261, %v6297
  %v6306 = vmul.f32 %v6263, %v6298
  %v6307 = vmul.f32 %v6265, %v6299
  %v6308 = vmul.f32 %v6267, %v6300
  %v6309 = vmul.f32 %v6269, %v6301
  %6310 = vrot.lane.b32.xlu0 %v3852, 64
  %v6311 = vpop.permute.xlu0 %6310
  %6312 = vrot.lane.b32.xlu0 %v3965, 64
  %v6313 = vpop.permute.xlu0 %6312
  %v6317 = vsel %vm331, %v6302, 0
  %v6320 = vsel %vm331, %v6303, 0
  %6322 = vmatprep.subr.mxu0 0.0
  %6323 = vmatpush1.msra.mxu0 %v6311
  %6324 = vmatprep.subr.mxu0 0.0
  %6325 = vmatpush1.msra.mxu0 %v6313
  %6326 = vmatprep.subr.mxu0 0.0
  %6327 = vmatpush1.msra.mxu0 0.0
  %6328 = vmatprep.subr.mxu0 0.0
  %6329 = vmatpush1.msra.mxu0 0.0
  %6330 = vmatprep.subr.mxu0 0.0
  %6331 = vmatpush1.msra.mxu0 0.0
  %6332 = vmatprep.subr.mxu0 0.0
  %6333 = vmatpush1.msra.mxu0 0.0
  %6334 = vmatprep.subr.mxu0 0.0
  %6335 = vmatpush1.msra.mxu0 0.0
  %6336 = vmatprep.subr.mxu0 0.0
  %6337 = vmatpush1.msra.mxu0 0.0
  %6338 = vmatprep.subr.mxu0 0.0
  %6339 = vmatpush1.msra.mxu0 0.0
  %6340 = vmatprep.subr.mxu0 0.0
  %6341 = vmatpush1.msra.mxu0 0.0
  %6342 = vmatprep.subr.mxu0 0.0
  %6343 = vmatpush1.msra.mxu0 0.0
  %6344 = vmatprep.subr.mxu0 0.0
  %6345 = vmatpush1.msra.mxu0 0.0
  %6346 = vmatprep.subr.mxu0 0.0
  %6347 = vmatpush1.msra.mxu0 0.0
  %6348 = vmatprep.subr.mxu0 0.0
  %6349 = vmatpush1.msra.mxu0 0.0
  %6350 = vmatprep.subr.mxu0 0.0
  %6351 = vmatpush1.msra.mxu0 0.0
  %6352 = vmatprep.subr.mxu0 0.0
  %6353 = vmatpush1.msra.mxu0 0.0
  %6354 = vmatprep.subr.mxu0 0.0
  %6355 = vmatpush1.msra.mxu0 0.0
  %6356 = vmatprep.subr.mxu0 0.0
  %6357 = vmatpush1.msra.mxu0 0.0
  %6358 = vmatprep.subr.mxu0 0.0
  %6359 = vmatpush1.msra.mxu0 0.0
  %6360 = vmatprep.subr.mxu0 0.0
  %6361 = vmatpush1.msra.mxu0 0.0
  %6362 = vmatprep.subr.mxu0 0.0
  %6363 = vmatpush1.msra.mxu0 0.0
  %6364 = vmatprep.subr.mxu0 0.0
  %6365 = vmatpush1.msra.mxu0 0.0
  %6366 = vmatprep.subr.mxu0 0.0
  %6367 = vmatpush1.msra.mxu0 0.0
  %6368 = vmatprep.subr.mxu0 0.0
  %6369 = vmatpush1.msra.mxu0 0.0
  %6370 = vmatprep.subr.mxu0 0.0
  %6371 = vmatpush1.msra.mxu0 0.0
  %6372 = vmatprep.subr.mxu0 0.0
  %6373 = vmatpush1.msra.mxu0 0.0
  %6374 = vmatprep.subr.mxu0 0.0
  %6375 = vmatpush1.msra.mxu0 0.0
  %6376 = vmatprep.subr.mxu0 0.0
  %6377 = vmatpush1.msra.mxu0 0.0
  %6378 = vmatprep.subr.mxu0 0.0
  %6379 = vmatpush1.msra.mxu0 0.0
  %6380 = vmatprep.subr.mxu0 0.0
  %6381 = vmatpush1.msra.mxu0 0.0
  %6382 = vmatprep.subr.mxu0 0.0
  %6383 = vmatpush1.msra.mxu0 0.0
  %6384 = vmatprep.subr.mxu0 0.0
  %6385 = vmatpush1.msra.mxu0 0.0
  %6386 = vmatprep.mubr.f32.mxu0 0.0
  %6387 = vmatmul.mubr.f32.gmra.mrb[0].mxu0 %v6317
  %v6388 = vpop.f32.mrb[0].mxu0
  %v6389 = vadd.f32 0.0, %v6388
  %v6390 = vpop.f32.mrb[0].mxu0
  %6391 = vmatprep.mubr.f32.mxu0 0.0
  %6392 = vmatmul.mubr.f32.gmra.mrb[0].mxu0 %v6320
  %v6393 = vpop.f32.mrb[0].mxu0
  %v6394 = vadd.f32 0.0, %v6393
  %v6395 = vpop.f32.mrb[0].mxu0
  %6396 = vdwg.mxu0
  %6397 = vrot.lane.b32.xlu0 %v5499, 64
  %v6398 = vpop.permute.xlu0 %6397
  %6399 = vrot.lane.b32.xlu0 %v5501, 64
  %v6400 = vpop.permute.xlu0 %6399
  %v6404 = vsel %vm331, %v6304, 0
  %v6407 = vsel %vm331, %v6305, 0
  %6409 = vmatprep.subr.mxu0 0.0
  %6410 = vmatpush1.msra.mxu0 %v6398
  %6411 = vmatprep.subr.mxu0 0.0
  %6412 = vmatpush1.msra.mxu0 %v6400
  %6413 = vmatprep.subr.mxu0 0.0
  %6414 = vmatpush1.msra.mxu0 0.0
  %6415 = vmatprep.subr.mxu0 0.0
  %6416 = vmatpush1.msra.mxu0 0.0
  %6417 = vmatprep.subr.mxu0 0.0
  %6418 = vmatpush1.msra.mxu0 0.0
  %6419 = vmatprep.subr.mxu0 0.0
  %6420 = vmatpush1.msra.mxu0 0.0
  %6421 = vmatprep.subr.mxu0 0.0
  %6422 = vmatpush1.msra.mxu0 0.0
  %6423 = vmatprep.subr.mxu0 0.0
  %6424 = vmatpush1.msra.mxu0 0.0
  %6425 = vmatprep.subr.mxu0 0.0
  %6426 = vmatpush1.msra.mxu0 0.0
  %6427 = vmatprep.subr.mxu0 0.0
  %6428 = vmatpush1.msra.mxu0 0.0
  %6429 = vmatprep.subr.mxu0 0.0
  %6430 = vmatpush1.msra.mxu0 0.0
  %6431 = vmatprep.subr.mxu0 0.0
  %6432 = vmatpush1.msra.mxu0 0.0
  %6433 = vmatprep.subr.mxu0 0.0
  %6434 = vmatpush1.msra.mxu0 0.0
  %6435 = vmatprep.subr.mxu0 0.0
  %6436 = vmatpush1.msra.mxu0 0.0
  %6437 = vmatprep.subr.mxu0 0.0
  %6438 = vmatpush1.msra.mxu0 0.0
  %6439 = vmatprep.subr.mxu0 0.0
  %6440 = vmatpush1.msra.mxu0 0.0
  %6441 = vmatprep.subr.mxu0 0.0
  %6442 = vmatpush1.msra.mxu0 0.0
  %6443 = vmatprep.subr.mxu0 0.0
  %6444 = vmatpush1.msra.mxu0 0.0
  %6445 = vmatprep.subr.mxu0 0.0
  %6446 = vmatpush1.msra.mxu0 0.0
  %6447 = vmatprep.subr.mxu0 0.0
  %6448 = vmatpush1.msra.mxu0 0.0
  %6449 = vmatprep.subr.mxu0 0.0
  %6450 = vmatpush1.msra.mxu0 0.0
  %6451 = vmatprep.subr.mxu0 0.0
  %6452 = vmatpush1.msra.mxu0 0.0
  %6453 = vmatprep.subr.mxu0 0.0
  %6454 = vmatpush1.msra.mxu0 0.0
  %6455 = vmatprep.subr.mxu0 0.0
  %6456 = vmatpush1.msra.mxu0 0.0
  %6457 = vmatprep.subr.mxu0 0.0
  %6458 = vmatpush1.msra.mxu0 0.0
  %6459 = vmatprep.subr.mxu0 0.0
  %6460 = vmatpush1.msra.mxu0 0.0
  %6461 = vmatprep.subr.mxu0 0.0
  %6462 = vmatpush1.msra.mxu0 0.0
  %6463 = vmatprep.subr.mxu0 0.0
  %6464 = vmatpush1.msra.mxu0 0.0
  %6465 = vmatprep.subr.mxu0 0.0
  %6466 = vmatpush1.msra.mxu0 0.0
  %6467 = vmatprep.subr.mxu0 0.0
  %6468 = vmatpush1.msra.mxu0 0.0
  %6469 = vmatprep.subr.mxu0 0.0
  %6470 = vmatpush1.msra.mxu0 0.0
  %6471 = vmatprep.subr.mxu0 0.0
  %6472 = vmatpush1.msra.mxu0 0.0
  %6473 = vmatprep.mubr.f32.mxu0 0.0
  %6474 = vmatmul.mubr.f32.gmra.mrb[0].mxu0 %v6404
  %v6475 = vpop.f32.mrb[0].mxu0
  %v6476 = vadd.f32 0.0, %v6475
  %v6477 = vpop.f32.mrb[0].mxu0
  %6478 = vmatprep.mubr.f32.mxu0 0.0
  %6479 = vmatmul.mubr.f32.gmra.mrb[0].mxu0 %v6407
  %v6480 = vpop.f32.mrb[0].mxu0
  %v6481 = vadd.f32 0.0, %v6480
  %v6482 = vpop.f32.mrb[0].mxu0
  %6483 = vdwg.mxu0
  %6484 = vrot.lane.b32.xlu0 %v5503, 64
  %v6485 = vpop.permute.xlu0 %6484
  %6486 = vrot.lane.b32.xlu0 %v5505, 64
  %v6487 = vpop.permute.xlu0 %6486
  %v6491 = vsel %vm331, %v6306, 0
  %v6494 = vsel %vm331, %v6307, 0
  %6496 = vmatprep.subr.mxu0 0.0
  %6497 = vmatpush1.msra.mxu0 %v6485
  %6498 = vmatprep.subr.mxu0 0.0
  %6499 = vmatpush1.msra.mxu0 %v6487
  %6500 = vmatprep.subr.mxu0 0.0
  %6501 = vmatpush1.msra.mxu0 0.0
  %6502 = vmatprep.subr.mxu0 0.0
  %6503 = vmatpush1.msra.mxu0 0.0
  %6504 = vmatprep.subr.mxu0 0.0
  %6505 = vmatpush1.msra.mxu0 0.0
  %6506 = vmatprep.subr.mxu0 0.0
  %6507 = vmatpush1.msra.mxu0 0.0
  %6508 = vmatprep.subr.mxu0 0.0
  %6509 = vmatpush1.msra.mxu0 0.0
  %6510 = vmatprep.subr.mxu0 0.0
  %6511 = vmatpush1.msra.mxu0 0.0
  %6512 = vmatprep.subr.mxu0 0.0
  %6513 = vmatpush1.msra.mxu0 0.0
  %6514 = vmatprep.subr.mxu0 0.0
  %6515 = vmatpush1.msra.mxu0 0.0
  %6516 = vmatprep.subr.mxu0 0.0
  %6517 = vmatpush1.msra.mxu0 0.0
  %6518 = vmatprep.subr.mxu0 0.0
  %6519 = vmatpush1.msra.mxu0 0.0
  %6520 = vmatprep.subr.mxu0 0.0
  %6521 = vmatpush1.msra.mxu0 0.0
  %6522 = vmatprep.subr.mxu0 0.0
  %6523 = vmatpush1.msra.mxu0 0.0
  %6524 = vmatprep.subr.mxu0 0.0
  %6525 = vmatpush1.msra.mxu0 0.0
  %6526 = vmatprep.subr.mxu0 0.0
  %6527 = vmatpush1.msra.mxu0 0.0
  %6528 = vmatprep.subr.mxu0 0.0
  %6529 = vmatpush1.msra.mxu0 0.0
  %6530 = vmatprep.subr.mxu0 0.0
  %6531 = vmatpush1.msra.mxu0 0.0
  %6532 = vmatprep.subr.mxu0 0.0
  %6533 = vmatpush1.msra.mxu0 0.0
  %6534 = vmatprep.subr.mxu0 0.0
  %6535 = vmatpush1.msra.mxu0 0.0
  %6536 = vmatprep.subr.mxu0 0.0
  %6537 = vmatpush1.msra.mxu0 0.0
  %6538 = vmatprep.subr.mxu0 0.0
  %6539 = vmatpush1.msra.mxu0 0.0
  %6540 = vmatprep.subr.mxu0 0.0
  %6541 = vmatpush1.msra.mxu0 0.0
  %6542 = vmatprep.subr.mxu0 0.0
  %6543 = vmatpush1.msra.mxu0 0.0
  %6544 = vmatprep.subr.mxu0 0.0
  %6545 = vmatpush1.msra.mxu0 0.0
  %6546 = vmatprep.subr.mxu0 0.0
  %6547 = vmatpush1.msra.mxu0 0.0
  %6548 = vmatprep.subr.mxu0 0.0
  %6549 = vmatpush1.msra.mxu0 0.0
  %6550 = vmatprep.subr.mxu0 0.0
  %6551 = vmatpush1.msra.mxu0 0.0
  %6552 = vmatprep.subr.mxu0 0.0
  %6553 = vmatpush1.msra.mxu0 0.0
  %6554 = vmatprep.subr.mxu0 0.0
  %6555 = vmatpush1.msra.mxu0 0.0
  %6556 = vmatprep.subr.mxu0 0.0
  %6557 = vmatpush1.msra.mxu0 0.0
  %6558 = vmatprep.subr.mxu0 0.0
  %6559 = vmatpush1.msra.mxu0 0.0
  %6560 = vmatprep.mubr.f32.mxu0 0.0
  %6561 = vmatmul.mubr.f32.gmra.mrb[0].mxu0 %v6491
  %v6562 = vpop.f32.mrb[0].mxu0
  %v6563 = vadd.f32 0.0, %v6562
  %v6564 = vpop.f32.mrb[0].mxu0
  %6565 = vmatprep.mubr.f32.mxu0 0.0
  %6566 = vmatmul.mubr.f32.gmra.mrb[0].mxu0 %v6494
  %v6567 = vpop.f32.mrb[0].mxu0
  %v6568 = vadd.f32 0.0, %v6567
  %v6569 = vpop.f32.mrb[0].mxu0
  %6570 = vdwg.mxu0
  %6571 = vrot.lane.b32.xlu0 %v5507, 64
  %v6572 = vpop.permute.xlu0 %6571
  %6573 = vrot.lane.b32.xlu0 %v5509, 64
  %v6574 = vpop.permute.xlu0 %6573
  %v6578 = vsel %vm331, %v6308, 0
  %v6581 = vsel %vm331, %v6309, 0
  %6583 = vmatprep.subr.mxu0 0.0
  %6584 = vmatpush1.msra.mxu0 %v6572
  %6585 = vmatprep.subr.mxu0 0.0
  %6586 = vmatpush1.msra.mxu0 %v6574
  %6587 = vmatprep.subr.mxu0 0.0
  %6588 = vmatpush1.msra.mxu0 0.0
  %6589 = vmatprep.subr.mxu0 0.0
  %6590 = vmatpush1.msra.mxu0 0.0
  %6591 = vmatprep.subr.mxu0 0.0
  %6592 = vmatpush1.msra.mxu0 0.0
  %6593 = vmatprep.subr.mxu0 0.0
  %6594 = vmatpush1.msra.mxu0 0.0
  %6595 = vmatprep.subr.mxu0 0.0
  %6596 = vmatpush1.msra.mxu0 0.0
  %6597 = vmatprep.subr.mxu0 0.0
  %6598 = vmatpush1.msra.mxu0 0.0
  %6599 = vmatprep.subr.mxu0 0.0
  %6600 = vmatpush1.msra.mxu0 0.0
  %6601 = vmatprep.subr.mxu0 0.0
  %6602 = vmatpush1.msra.mxu0 0.0
  %6603 = vmatprep.subr.mxu0 0.0
  %6604 = vmatpush1.msra.mxu0 0.0
  %6605 = vmatprep.subr.mxu0 0.0
  %6606 = vmatpush1.msra.mxu0 0.0
  %6607 = vmatprep.subr.mxu0 0.0
  %6608 = vmatpush1.msra.mxu0 0.0
  %6609 = vmatprep.subr.mxu0 0.0
  %6610 = vmatpush1.msra.mxu0 0.0
  %6611 = vmatprep.subr.mxu0 0.0
  %6612 = vmatpush1.msra.mxu0 0.0
  %6613 = vmatprep.subr.mxu0 0.0
  %6614 = vmatpush1.msra.mxu0 0.0
  %6615 = vmatprep.subr.mxu0 0.0
  %6616 = vmatpush1.msra.mxu0 0.0
  %6617 = vmatprep.subr.mxu0 0.0
  %6618 = vmatpush1.msra.mxu0 0.0
  %6619 = vmatprep.subr.mxu0 0.0
  %6620 = vmatpush1.msra.mxu0 0.0
  %6621 = vmatprep.subr.mxu0 0.0
  %6622 = vmatpush1.msra.mxu0 0.0
  %6623 = vmatprep.subr.mxu0 0.0
  %6624 = vmatpush1.msra.mxu0 0.0
  %6625 = vmatprep.subr.mxu0 0.0
  %6626 = vmatpush1.msra.mxu0 0.0
  %6627 = vmatprep.subr.mxu0 0.0
  %6628 = vmatpush1.msra.mxu0 0.0
  %6629 = vmatprep.subr.mxu0 0.0
  %6630 = vmatpush1.msra.mxu0 0.0
  %6631 = vmatprep.subr.mxu0 0.0
  %6632 = vmatpush1.msra.mxu0 0.0
  %6633 = vmatprep.subr.mxu0 0.0
  %6634 = vmatpush1.msra.mxu0 0.0
  %6635 = vmatprep.subr.mxu0 0.0
  %6636 = vmatpush1.msra.mxu0 0.0
  %6637 = vmatprep.subr.mxu0 0.0
  %6638 = vmatpush1.msra.mxu0 0.0
  %6639 = vmatprep.subr.mxu0 0.0
  %6640 = vmatpush1.msra.mxu0 0.0
  %6641 = vmatprep.subr.mxu0 0.0
  %6642 = vmatpush1.msra.mxu0 0.0
  %6643 = vmatprep.subr.mxu0 0.0
  %6644 = vmatpush1.msra.mxu0 0.0
  %6645 = vmatprep.subr.mxu0 0.0
  %6646 = vmatpush1.msra.mxu0 0.0
  %6647 = vmatprep.mubr.f32.mxu0 0.0
  %6648 = vmatmul.mubr.f32.gmra.mrb[0].mxu0 %v6578
  %v6649 = vpop.f32.mrb[0].mxu0
  %v6650 = vadd.f32 0.0, %v6649
  %v6651 = vpop.f32.mrb[0].mxu0
  %6652 = vmatprep.mubr.f32.mxu0 0.0
  %6653 = vmatmul.mubr.f32.gmra.mrb[0].mxu0 %v6581
  %v6654 = vpop.f32.mrb[0].mxu0
  %v6655 = vadd.f32 0.0, %v6654
  %v6656 = vpop.f32.mrb[0].mxu0
  %6657 = vdwg.mxu0
  %v6659 = vsel %vm331, %v6389, 0
  %v6662 = vsel %vm331, %v6394, 0
  %6664 = vmatprep.subr.mxu0 0.0
  %6665 = vmatpush1.msra.mxu0 %v3968
  %6666 = vmatprep.subr.mxu0 0.0
  %6667 = vmatpush1.msra.mxu0 %v3969
  %6668 = vmatprep.subr.mxu0 0.0
  %6669 = vmatpush1.msra.mxu0 0.0
  %6670 = vmatprep.subr.mxu0 0.0
  %6671 = vmatpush1.msra.mxu0 0.0
  %6672 = vmatprep.subr.mxu0 0.0
  %6673 = vmatpush1.msra.mxu0 0.0
  %6674 = vmatprep.subr.mxu0 0.0
  %6675 = vmatpush1.msra.mxu0 0.0
  %6676 = vmatprep.subr.mxu0 0.0
  %6677 = vmatpush1.msra.mxu0 0.0
  %6678 = vmatprep.subr.mxu0 0.0
  %6679 = vmatpush1.msra.mxu0 0.0
  %6680 = vmatprep.subr.mxu0 0.0
  %6681 = vmatpush1.msra.mxu0 0.0
  %6682 = vmatprep.subr.mxu0 0.0
  %6683 = vmatpush1.msra.mxu0 0.0
  %6684 = vmatprep.subr.mxu0 0.0
  %6685 = vmatpush1.msra.mxu0 0.0
  %6686 = vmatprep.subr.mxu0 0.0
  %6687 = vmatpush1.msra.mxu0 0.0
  %6688 = vmatprep.subr.mxu0 0.0
  %6689 = vmatpush1.msra.mxu0 0.0
  %6690 = vmatprep.subr.mxu0 0.0
  %6691 = vmatpush1.msra.mxu0 0.0
  %6692 = vmatprep.subr.mxu0 0.0
  %6693 = vmatpush1.msra.mxu0 0.0
  %6694 = vmatprep.subr.mxu0 0.0
  %6695 = vmatpush1.msra.mxu0 0.0
  %6696 = vmatprep.subr.mxu0 0.0
  %6697 = vmatpush1.msra.mxu0 0.0
  %6698 = vmatprep.subr.mxu0 0.0
  %6699 = vmatpush1.msra.mxu0 0.0
  %6700 = vmatprep.subr.mxu0 0.0
  %6701 = vmatpush1.msra.mxu0 0.0
  %6702 = vmatprep.subr.mxu0 0.0
  %6703 = vmatpush1.msra.mxu0 0.0
  %6704 = vmatprep.subr.mxu0 0.0
  %6705 = vmatpush1.msra.mxu0 0.0
  %6706 = vmatprep.subr.mxu0 0.0
  %6707 = vmatpush1.msra.mxu0 0.0
  %6708 = vmatprep.subr.mxu0 0.0
  %6709 = vmatpush1.msra.mxu0 0.0
  %6710 = vmatprep.subr.mxu0 0.0
  %6711 = vmatpush1.msra.mxu0 0.0
  %6712 = vmatprep.subr.mxu0 0.0
  %6713 = vmatpush1.msra.mxu0 0.0
  %6714 = vmatprep.subr.mxu0 0.0
  %6715 = vmatpush1.msra.mxu0 0.0
  %6716 = vmatprep.subr.mxu0 0.0
  %6717 = vmatpush1.msra.mxu0 0.0
  %6718 = vmatprep.subr.mxu0 0.0
  %6719 = vmatpush1.msra.mxu0 0.0
  %6720 = vmatprep.subr.mxu0 0.0
  %6721 = vmatpush1.msra.mxu0 0.0
  %6722 = vmatprep.subr.mxu0 0.0
  %6723 = vmatpush1.msra.mxu0 0.0
  %6724 = vmatprep.subr.mxu0 0.0
  %6725 = vmatpush1.msra.mxu0 0.0
  %6726 = vmatprep.subr.mxu0 0.0
  %6727 = vmatpush1.msra.mxu0 0.0
  %6728 = vmatprep.mubr.f32.mxu0 0.0
  %6729 = vmatmul.mubr.f32.gmra.mrb[0].mxu0 %v6659
  %v6730 = vpop.f32.mrb[0].mxu0
  %v6731 = vadd.f32 0.0, %v6730
  %v6732 = vpop.f32.mrb[0].mxu0
  %6733 = vmatprep.mubr.f32.mxu0 0.0
  %6734 = vmatmul.mubr.f32.gmra.mrb[0].mxu0 %v6662
  %v6735 = vpop.f32.mrb[0].mxu0
  %v6736 = vadd.f32 0.0, %v6735
  %v6737 = vpop.f32.mrb[0].mxu0
  %6738 = vdwg.mxu0
  %v6740 = vsel %vm331, %v6476, 0
  %v6743 = vsel %vm331, %v6481, 0
  %6745 = vmatprep.subr.mxu0 0.0
  %6746 = vmatpush1.msra.mxu0 %v3970
  %6747 = vmatprep.subr.mxu0 0.0
  %6748 = vmatpush1.msra.mxu0 %v3971
  %6749 = vmatprep.subr.mxu0 0.0
  %6750 = vmatpush1.msra.mxu0 0.0
  %6751 = vmatprep.subr.mxu0 0.0
  %6752 = vmatpush1.msra.mxu0 0.0
  %6753 = vmatprep.subr.mxu0 0.0
  %6754 = vmatpush1.msra.mxu0 0.0
  %6755 = vmatprep.subr.mxu0 0.0
  %6756 = vmatpush1.msra.mxu0 0.0
  %6757 = vmatprep.subr.mxu0 0.0
  %6758 = vmatpush1.msra.mxu0 0.0
  %6759 = vmatprep.subr.mxu0 0.0
  %6760 = vmatpush1.msra.mxu0 0.0
  %6761 = vmatprep.subr.mxu0 0.0
  %6762 = vmatpush1.msra.mxu0 0.0
  %6763 = vmatprep.subr.mxu0 0.0
  %6764 = vmatpush1.msra.mxu0 0.0
  %6765 = vmatprep.subr.mxu0 0.0
  %6766 = vmatpush1.msra.mxu0 0.0
  %6767 = vmatprep.subr.mxu0 0.0
  %6768 = vmatpush1.msra.mxu0 0.0
  %6769 = vmatprep.subr.mxu0 0.0
  %6770 = vmatpush1.msra.mxu0 0.0
  %6771 = vmatprep.subr.mxu0 0.0
  %6772 = vmatpush1.msra.mxu0 0.0
  %6773 = vmatprep.subr.mxu0 0.0
  %6774 = vmatpush1.msra.mxu0 0.0
  %6775 = vmatprep.subr.mxu0 0.0
  %6776 = vmatpush1.msra.mxu0 0.0
  %6777 = vmatprep.subr.mxu0 0.0
  %6778 = vmatpush1.msra.mxu0 0.0
  %6779 = vmatprep.subr.mxu0 0.0
  %6780 = vmatpush1.msra.mxu0 0.0
  %6781 = vmatprep.subr.mxu0 0.0
  %6782 = vmatpush1.msra.mxu0 0.0
  %6783 = vmatprep.subr.mxu0 0.0
  %6784 = vmatpush1.msra.mxu0 0.0
  %6785 = vmatprep.subr.mxu0 0.0
  %6786 = vmatpush1.msra.mxu0 0.0
  %6787 = vmatprep.subr.mxu0 0.0
  %6788 = vmatpush1.msra.mxu0 0.0
  %6789 = vmatprep.subr.mxu0 0.0
  %6790 = vmatpush1.msra.mxu0 0.0
  %6791 = vmatprep.subr.mxu0 0.0
  %6792 = vmatpush1.msra.mxu0 0.0
  %6793 = vmatprep.subr.mxu0 0.0
  %6794 = vmatpush1.msra.mxu0 0.0
  %6795 = vmatprep.subr.mxu0 0.0
  %6796 = vmatpush1.msra.mxu0 0.0
  %6797 = vmatprep.subr.mxu0 0.0
  %6798 = vmatpush1.msra.mxu0 0.0
  %6799 = vmatprep.subr.mxu0 0.0
  %6800 = vmatpush1.msra.mxu0 0.0
  %6801 = vmatprep.subr.mxu0 0.0
  %6802 = vmatpush1.msra.mxu0 0.0
  %6803 = vmatprep.subr.mxu0 0.0
  %6804 = vmatpush1.msra.mxu0 0.0
  %6805 = vmatprep.subr.mxu0 0.0
  %6806 = vmatpush1.msra.mxu0 0.0
  %6807 = vmatprep.subr.mxu0 0.0
  %6808 = vmatpush1.msra.mxu0 0.0
  %6809 = vmatprep.mubr.f32.mxu0 0.0
  %6810 = vmatmul.mubr.f32.gmra.mrb[0].mxu0 %v6740
  %v6811 = vpop.f32.mrb[0].mxu0
  %v6812 = vadd.f32 0.0, %v6811
  %v6813 = vpop.f32.mrb[0].mxu0
  %6814 = vmatprep.mubr.f32.mxu0 0.0
  %6815 = vmatmul.mubr.f32.gmra.mrb[0].mxu0 %v6743
  %v6816 = vpop.f32.mrb[0].mxu0
  %v6817 = vadd.f32 0.0, %v6816
  %v6818 = vpop.f32.mrb[0].mxu0
  %6819 = vdwg.mxu0
  %v6821 = vsel %vm331, %v6563, 0
  %v6824 = vsel %vm331, %v6568, 0
  %6826 = vmatprep.subr.mxu0 0.0
  %6827 = vmatpush1.msra.mxu0 %v3972
  %6828 = vmatprep.subr.mxu0 0.0
  %6829 = vmatpush1.msra.mxu0 %v3973
  %6830 = vmatprep.subr.mxu0 0.0
  %6831 = vmatpush1.msra.mxu0 0.0
  %6832 = vmatprep.subr.mxu0 0.0
  %6833 = vmatpush1.msra.mxu0 0.0
  %6834 = vmatprep.subr.mxu0 0.0
  %6835 = vmatpush1.msra.mxu0 0.0
  %6836 = vmatprep.subr.mxu0 0.0
  %6837 = vmatpush1.msra.mxu0 0.0
  %6838 = vmatprep.subr.mxu0 0.0
  %6839 = vmatpush1.msra.mxu0 0.0
  %6840 = vmatprep.subr.mxu0 0.0
  %6841 = vmatpush1.msra.mxu0 0.0
  %6842 = vmatprep.subr.mxu0 0.0
  %6843 = vmatpush1.msra.mxu0 0.0
  %6844 = vmatprep.subr.mxu0 0.0
  %6845 = vmatpush1.msra.mxu0 0.0
  %6846 = vmatprep.subr.mxu0 0.0
  %6847 = vmatpush1.msra.mxu0 0.0
  %6848 = vmatprep.subr.mxu0 0.0
  %6849 = vmatpush1.msra.mxu0 0.0
  %6850 = vmatprep.subr.mxu0 0.0
  %6851 = vmatpush1.msra.mxu0 0.0
  %6852 = vmatprep.subr.mxu0 0.0
  %6853 = vmatpush1.msra.mxu0 0.0
  %6854 = vmatprep.subr.mxu0 0.0
  %6855 = vmatpush1.msra.mxu0 0.0
  %6856 = vmatprep.subr.mxu0 0.0
  %6857 = vmatpush1.msra.mxu0 0.0
  %6858 = vmatprep.subr.mxu0 0.0
  %6859 = vmatpush1.msra.mxu0 0.0
  %6860 = vmatprep.subr.mxu0 0.0
  %6861 = vmatpush1.msra.mxu0 0.0
  %6862 = vmatprep.subr.mxu0 0.0
  %6863 = vmatpush1.msra.mxu0 0.0
  %6864 = vmatprep.subr.mxu0 0.0
  %6865 = vmatpush1.msra.mxu0 0.0
  %6866 = vmatprep.subr.mxu0 0.0
  %6867 = vmatpush1.msra.mxu0 0.0
  %6868 = vmatprep.subr.mxu0 0.0
  %6869 = vmatpush1.msra.mxu0 0.0
  %6870 = vmatprep.subr.mxu0 0.0
  %6871 = vmatpush1.msra.mxu0 0.0
  %6872 = vmatprep.subr.mxu0 0.0
  %6873 = vmatpush1.msra.mxu0 0.0
  %6874 = vmatprep.subr.mxu0 0.0
  %6875 = vmatpush1.msra.mxu0 0.0
  %6876 = vmatprep.subr.mxu0 0.0
  %6877 = vmatpush1.msra.mxu0 0.0
  %6878 = vmatprep.subr.mxu0 0.0
  %6879 = vmatpush1.msra.mxu0 0.0
  %6880 = vmatprep.subr.mxu0 0.0
  %6881 = vmatpush1.msra.mxu0 0.0
  %6882 = vmatprep.subr.mxu0 0.0
  %6883 = vmatpush1.msra.mxu0 0.0
  %6884 = vmatprep.subr.mxu0 0.0
  %6885 = vmatpush1.msra.mxu0 0.0
  %6886 = vmatprep.subr.mxu0 0.0
  %6887 = vmatpush1.msra.mxu0 0.0
  %6888 = vmatprep.subr.mxu0 0.0
  %6889 = vmatpush1.msra.mxu0 0.0
  %6890 = vmatprep.mubr.f32.mxu0 0.0
  %6891 = vmatmul.mubr.f32.gmra.mrb[0].mxu0 %v6821
  %v6892 = vpop.f32.mrb[0].mxu0
  %v6893 = vadd.f32 0.0, %v6892
  %v6894 = vpop.f32.mrb[0].mxu0
  %6895 = vmatprep.mubr.f32.mxu0 0.0
  %6896 = vmatmul.mubr.f32.gmra.mrb[0].mxu0 %v6824
  %v6897 = vpop.f32.mrb[0].mxu0
  %v6898 = vadd.f32 0.0, %v6897
  %v6899 = vpop.f32.mrb[0].mxu0
  %6900 = vdwg.mxu0
  %v6902 = vsel %vm331, %v6650, 0
  %v6905 = vsel %vm331, %v6655, 0
  %6907 = vmatprep.subr.mxu0 0.0
  %6908 = vmatpush1.msra.mxu0 %v3974
  %6909 = vmatprep.subr.mxu0 0.0
  %6910 = vmatpush1.msra.mxu0 %v3975
  %6911 = vmatprep.subr.mxu0 0.0
  %6912 = vmatpush1.msra.mxu0 0.0
  %6913 = vmatprep.subr.mxu0 0.0
  %6914 = vmatpush1.msra.mxu0 0.0
  %6915 = vmatprep.subr.mxu0 0.0
  %6916 = vmatpush1.msra.mxu0 0.0
  %6917 = vmatprep.subr.mxu0 0.0
  %6918 = vmatpush1.msra.mxu0 0.0
  %6919 = vmatprep.subr.mxu0 0.0
  %6920 = vmatpush1.msra.mxu0 0.0
  %6921 = vmatprep.subr.mxu0 0.0
  %6922 = vmatpush1.msra.mxu0 0.0
  %6923 = vmatprep.subr.mxu0 0.0
  %6924 = vmatpush1.msra.mxu0 0.0
  %6925 = vmatprep.subr.mxu0 0.0
  %6926 = vmatpush1.msra.mxu0 0.0
  %6927 = vmatprep.subr.mxu0 0.0
  %6928 = vmatpush1.msra.mxu0 0.0
  %6929 = vmatprep.subr.mxu0 0.0
  %6930 = vmatpush1.msra.mxu0 0.0
  %6931 = vmatprep.subr.mxu0 0.0
  %6932 = vmatpush1.msra.mxu0 0.0
  %6933 = vmatprep.subr.mxu0 0.0
  %6934 = vmatpush1.msra.mxu0 0.0
  %6935 = vmatprep.subr.mxu0 0.0
  %6936 = vmatpush1.msra.mxu0 0.0
  %6937 = vmatprep.subr.mxu0 0.0
  %6938 = vmatpush1.msra.mxu0 0.0
  %6939 = vmatprep.subr.mxu0 0.0
  %6940 = vmatpush1.msra.mxu0 0.0
  %6941 = vmatprep.subr.mxu0 0.0
  %6942 = vmatpush1.msra.mxu0 0.0
  %6943 = vmatprep.subr.mxu0 0.0
  %6944 = vmatpush1.msra.mxu0 0.0
  %6945 = vmatprep.subr.mxu0 0.0
  %6946 = vmatpush1.msra.mxu0 0.0
  %6947 = vmatprep.subr.mxu0 0.0
  %6948 = vmatpush1.msra.mxu0 0.0
  %6949 = vmatprep.subr.mxu0 0.0
  %6950 = vmatpush1.msra.mxu0 0.0
  %6951 = vmatprep.subr.mxu0 0.0
  %6952 = vmatpush1.msra.mxu0 0.0
  %6953 = vmatprep.subr.mxu0 0.0
  %6954 = vmatpush1.msra.mxu0 0.0
  %6955 = vmatprep.subr.mxu0 0.0
  %6956 = vmatpush1.msra.mxu0 0.0
  %6957 = vmatprep.subr.mxu0 0.0
  %6958 = vmatpush1.msra.mxu0 0.0
  %6959 = vmatprep.subr.mxu0 0.0
  %6960 = vmatpush1.msra.mxu0 0.0
  %6961 = vmatprep.subr.mxu0 0.0
  %6962 = vmatpush1.msra.mxu0 0.0
  %6963 = vmatprep.subr.mxu0 0.0
  %6964 = vmatpush1.msra.mxu0 0.0
  %6965 = vmatprep.subr.mxu0 0.0
  %6966 = vmatpush1.msra.mxu0 0.0
  %6967 = vmatprep.subr.mxu0 0.0
  %6968 = vmatpush1.msra.mxu0 0.0
  %6969 = vmatprep.subr.mxu0 0.0
  %6970 = vmatpush1.msra.mxu0 0.0
  %6971 = vmatprep.mubr.f32.mxu0 0.0
  %6972 = vmatmul.mubr.f32.gmra.mrb[0].mxu0 %v6902
  %v6973 = vpop.f32.mrb[0].mxu0
  %v6974 = vadd.f32 0.0, %v6973
  %v6975 = vpop.f32.mrb[0].mxu0
  %6976 = vmatprep.mubr.f32.mxu0 0.0
  %6977 = vmatmul.mubr.f32.gmra.mrb[0].mxu0 %v6905
  %v6978 = vpop.f32.mrb[0].mxu0
  %v6979 = vadd.f32 0.0, %v6978
  %v6980 = vpop.f32.mrb[0].mxu0
  %6981 = vdwg.mxu0
  %v6982 = vadd.f32 %v6731, %v6812
  %v6983 = vadd.f32 %v6736, %v6817
  %v6984 = vadd.f32 %v6982, %v6893
  %v6985 = vadd.f32 %v6983, %v6898
  %v6986 = vadd.f32 %v6984, %v6974
  %v6987 = vadd.f32 %v6985, %v6979
  %s6988 = scalar_lea.vmem %s7, 1
  %v6989 = vld [vmem:[%s6988] sm:$0x1]
  %v6991 = vlaneseq
  %v6992 = vshrl.u32 %v6991, 7
  %v6993 = vsub.s32 0, %v6992
  %v6994 = vrot.slane %v6989, %v6993
  %v6996 = vadd.f32 %v5480, %v6994
  %v6997 = vadd.f32 %v6986, %v6994
  %v6998 = vadd.f32 %v5481, %v6994
  %v6999 = vadd.f32 %v6987, %v6994
  %v7000 = vadd.f32 %v6996, %v3737
  %v7001 = vadd.f32 %v6997, %v3738
  %v7002 = vadd.f32 %v6998, %v3739
  %v7003 = vadd.f32 %v6999, %v3740
  %s7004 = scalar_lea.vmem %s8, 1
  %v7005 = vld [vmem:[%s7004] sm:$0x1]
  %s7006 = scalar_lea.vmem %s9, 1
  %v7007 = vld [vmem:[%s7006] sm:$0x1]
  %v7008 = vsel %vm100, %v7000, 0.0
  %7009 = vadd.xlane.f32.xlu0 %v7008
  %v7010 = vpop.xlane.xlu0 %7009
  %v7011 = vsel %vm100, %v7001, 0.0
  %7012 = vadd.xlane.f32.xlu0 %v7011
  %v7013 = vpop.xlane.xlu0 %7012
  %v7014 = vsel %vm100, %v7002, 0.0
  %7015 = vadd.xlane.f32.xlu0 %v7014
  %v7016 = vpop.xlane.xlu0 %7015
  %v7017 = vsel %vm100, %v7003, 0.0
  %7018 = vadd.xlane.f32.xlu0 %v7017
  %v7019 = vpop.xlane.xlu0 %7018
  %v7020 = vmul.f32 %v7010, %v3346
  %v7021 = vmul.f32 %v7013, %v3346
  %v7022 = vmul.f32 %v7016, %v3346
  %v7023 = vmul.f32 %v7019, %v3346
  %v7024 = vsub.f32 %v7000, %v7020
  %v7025 = vsub.f32 %v7001, %v7021
  %v7026 = vsub.f32 %v7002, %v7022
  %v7027 = vsub.f32 %v7003, %v7023
  %v7028 = vmul.f32 %v7024, %v7024
  %v7029 = vmul.f32 %v7025, %v7025
  %v7030 = vmul.f32 %v7026, %v7026
  %v7031 = vmul.f32 %v7027, %v7027
  %v7032 = vsel %vm100, %v7028, 0.0
  %7033 = vadd.xlane.f32.xlu0 %v7032
  %v7034 = vpop.xlane.xlu0 %7033
  %v7035 = vsel %vm100, %v7029, 0.0
  %7036 = vadd.xlane.f32.xlu0 %v7035
  %v7037 = vpop.xlane.xlu0 %7036
  %v7038 = vsel %vm100, %v7030, 0.0
  %7039 = vadd.xlane.f32.xlu0 %v7038
  %v7040 = vpop.xlane.xlu0 %7039
  %v7041 = vsel %vm100, %v7031, 0.0
  %7042 = vadd.xlane.f32.xlu0 %v7041
  %v7043 = vpop.xlane.xlu0 %7042
  %v7044 = vmul.f32 %v7034, %v3346
  %v7045 = vmul.f32 %v7037, %v3346
  %v7046 = vmul.f32 %v7040, %v3346
  %v7047 = vmul.f32 %v7043, %v3346
  %v7048 = vadd.f32 %v7044, 1e-12
  %v7049 = vadd.f32 %v7045, 1e-12
  %v7050 = vadd.f32 %v7046, 1e-12
  %v7051 = vadd.f32 %v7047, 1e-12
  %v7052 = vrsqrt.pop %v7048
  %v7053 = vrsqrt.pop %v7049
  %v7054 = vrsqrt.pop %v7050
  %v7055 = vrsqrt.pop %v7051
  %v7056 = vmul.f32 %v7024, %v7052
  %v7057 = vmul.f32 %v7025, %v7053
  %v7058 = vmul.f32 %v7026, %v7054
  %v7059 = vmul.f32 %v7027, %v7055
  %v7061 = vlaneseq
  %v7062 = vshrl.u32 %v7061, 7
  %v7063 = vsub.s32 0, %v7062
  %v7064 = vrot.slane %v7005, %v7063
  %v7066 = vmul.f32 %v7056, %v7064
  %v7067 = vmul.f32 %v7057, %v7064
  %v7068 = vmul.f32 %v7058, %v7064
  %v7069 = vmul.f32 %v7059, %v7064
  %v7071 = vlaneseq
  %v7072 = vshrl.u32 %v7071, 7
  %v7073 = vsub.s32 0, %v7072
  %v7074 = vrot.slane %v7007, %v7073
  %v7076 = vadd.f32 %v7066, %v7074
  %v7077 = vadd.f32 %v7067, %v7074
  %v7078 = vadd.f32 %v7068, %v7074
  %v7079 = vadd.f32 %v7069, %v7074
  %s7080 = scalar_lea.vmem %s10, 64
  %v7081 = vld [vmem:[%s7080] sm:$0xff]
  %v7082 = vld [vmem:[%s7080 + $0x8] sm:$0xff]
  %v7083 = vld [vmem:[%s7080 + $0x10] sm:$0xff]
  %v7084 = vld [vmem:[%s7080 + $0x18] sm:$0xff]
  %v7085 = vld [vmem:[%s7080 + $0x20] sm:$0xff]
  %v7086 = vld [vmem:[%s7080 + $0x28] sm:$0xff]
  %v7087 = vld [vmem:[%s7080 + $0x30] sm:$0xff]
  %v7088 = vld [vmem:[%s7080 + $0x38] sm:$0xff]
  %s7089 = scalar_lea.vmem %s11, 1
  %v7090 = vld [vmem:[%s7089] sm:$0x1]
  %v7092 = vlaneseq
  %v7093 = vshrl.u32 %v7092, 7
  %v7094 = vsub.s32 0, %v7093
  %v7095 = vrot.slane %v7090, %v7094
  %v7098 = vsel %vm100, %v7076, 0
  %v7101 = vsel %vm100, %v7077, 0
  %v7104 = vsel %vm100, %v7078, 0
  %v7107 = vsel %vm100, %v7079, 0
  %7109 = vmatprep.subr.mxu0 0.0
  %7110 = vmatpush1.msra.mxu0 %v7081
  %7111 = vmatprep.subr.mxu0 0.0
  %7112 = vmatpush1.msra.mxu0 %v7082
  %7113 = vmatprep.subr.mxu0 0.0
  %7114 = vmatpush1.msra.mxu0 %v7083
  %7115 = vmatprep.subr.mxu0 0.0
  %7116 = vmatpush1.msra.mxu0 %v7084
  %7117 = vmatprep.subr.mxu0 0.0
  %7118 = vmatpush1.msra.mxu0 %v7085
  %7119 = vmatprep.subr.mxu0 0.0
  %7120 = vmatpush1.msra.mxu0 %v7086
  %7121 = vmatprep.subr.mxu0 0.0
  %7122 = vmatpush1.msra.mxu0 %v7087
  %7123 = vmatprep.subr.mxu0 0.0
  %7124 = vmatpush1.msra.mxu0 %v7088
  %7125 = vmatprep.subr.mxu0 0.0
  %7126 = vmatpush1.msra.mxu0 0.0
  %7127 = vmatprep.subr.mxu0 0.0
  %7128 = vmatpush1.msra.mxu0 0.0
  %7129 = vmatprep.subr.mxu0 0.0
  %7130 = vmatpush1.msra.mxu0 0.0
  %7131 = vmatprep.subr.mxu0 0.0
  %7132 = vmatpush1.msra.mxu0 0.0
  %7133 = vmatprep.subr.mxu0 0.0
  %7134 = vmatpush1.msra.mxu0 0.0
  %7135 = vmatprep.subr.mxu0 0.0
  %7136 = vmatpush1.msra.mxu0 0.0
  %7137 = vmatprep.subr.mxu0 0.0
  %7138 = vmatpush1.msra.mxu0 0.0
  %7139 = vmatprep.subr.mxu0 0.0
  %7140 = vmatpush1.msra.mxu0 0.0
  %7141 = vmatprep.subr.mxu0 0.0
  %7142 = vmatpush1.msra.mxu0 0.0
  %7143 = vmatprep.subr.mxu0 0.0
  %7144 = vmatpush1.msra.mxu0 0.0
  %7145 = vmatprep.subr.mxu0 0.0
  %7146 = vmatpush1.msra.mxu0 0.0
  %7147 = vmatprep.subr.mxu0 0.0
  %7148 = vmatpush1.msra.mxu0 0.0
  %7149 = vmatprep.subr.mxu0 0.0
  %7150 = vmatpush1.msra.mxu0 0.0
  %7151 = vmatprep.subr.mxu0 0.0
  %7152 = vmatpush1.msra.mxu0 0.0
  %7153 = vmatprep.subr.mxu0 0.0
  %7154 = vmatpush1.msra.mxu0 0.0
  %7155 = vmatprep.subr.mxu0 0.0
  %7156 = vmatpush1.msra.mxu0 0.0
  %7157 = vmatprep.subr.mxu0 0.0
  %7158 = vmatpush1.msra.mxu0 0.0
  %7159 = vmatprep.subr.mxu0 0.0
  %7160 = vmatpush1.msra.mxu0 0.0
  %7161 = vmatprep.subr.mxu0 0.0
  %7162 = vmatpush1.msra.mxu0 0.0
  %7163 = vmatprep.subr.mxu0 0.0
  %7164 = vmatpush1.msra.mxu0 0.0
  %7165 = vmatprep.subr.mxu0 0.0
  %7166 = vmatpush1.msra.mxu0 0.0
  %7167 = vmatprep.subr.mxu0 0.0
  %7168 = vmatpush1.msra.mxu0 0.0
  %7169 = vmatprep.subr.mxu0 0.0
  %7170 = vmatpush1.msra.mxu0 0.0
  %7171 = vmatprep.subr.mxu0 0.0
  %7172 = vmatpush1.msra.mxu0 0.0
  %7173 = vmatprep.mubr.f32.mxu0 0.0
  %7174 = vmatmul.mubr.f32.gmra.mrb[0].mxu0 %v7098
  %v7175 = vpop.f32.mrb[0].mxu0
  %v7176 = vadd.f32 %v7095, %v7175
  %v7177 = vpop.f32.mrb[0].mxu0
  %7178 = vmatprep.mubr.f32.mxu0 0.0
  %7179 = vmatmul.mubr.f32.gmra.mrb[0].mxu0 %v7101
  %v7180 = vpop.f32.mrb[0].mxu0
  %v7181 = vadd.f32 %v7095, %v7180
  %v7182 = vpop.f32.mrb[0].mxu0
  %7183 = vmatprep.mubr.f32.mxu0 0.0
  %7184 = vmatmul.mubr.f32.gmra.mrb[0].mxu0 %v7104
  %v7185 = vpop.f32.mrb[0].mxu0
  %v7186 = vadd.f32 %v7095, %v7185
  %v7187 = vpop.f32.mrb[0].mxu0
  %7188 = vmatprep.mubr.f32.mxu0 0.0
  %7189 = vmatmul.mubr.f32.gmra.mrb[0].mxu0 %v7107
  %v7190 = vpop.f32.mrb[0].mxu0
  %v7191 = vadd.f32 %v7095, %v7190
  %v7192 = vpop.f32.mrb[0].mxu0
  %7193 = vdwg.mxu0
  %v7194 = vmul.f32 %v7176, %v7176
  %v7195 = vmul.f32 %v7181, %v7181
  %v7196 = vmul.f32 %v7186, %v7186
  %v7197 = vmul.f32 %v7191, %v7191
  %v7198 = vmul.f32 %v7176, %v7194
  %v7199 = vmul.f32 %v7181, %v7195
  %v7200 = vmul.f32 %v7186, %v7196
  %v7201 = vmul.f32 %v7191, %v7197
  %v7202 = vmul.f32 %v7198, 0.044715
  %v7203 = vmul.f32 %v7199, 0.044715
  %v7204 = vmul.f32 %v7200, 0.044715
  %v7205 = vmul.f32 %v7201, 0.044715
  %v7206 = vadd.f32 %v7176, %v7202
  %v7207 = vadd.f32 %v7181, %v7203
  %v7208 = vadd.f32 %v7186, %v7204
  %v7209 = vadd.f32 %v7191, %v7205
  %v7210 = vmul.f32 %v7206, 0.7978846
  %v7211 = vmul.f32 %v7207, 0.7978846
  %v7212 = vmul.f32 %v7208, 0.7978846
  %v7213 = vmul.f32 %v7209, 0.7978846
  %v7214 = vtanh.pop %v7210
  %v7215 = vtanh.pop %v7211
  %v7216 = vtanh.pop %v7212
  %v7217 = vtanh.pop %v7213
  %v7218 = vadd.f32 %v7214, 1.0
  %v7219 = vadd.f32 %v7215, 1.0
  %v7220 = vadd.f32 %v7216, 1.0
  %v7221 = vadd.f32 %v7217, 1.0
  %v7222 = vmul.f32 %v7218, 0.5
  %v7223 = vmul.f32 %v7219, 0.5
  %v7224 = vmul.f32 %v7220, 0.5
  %v7225 = vmul.f32 %v7221, 0.5
  %v7226 = vmul.f32 %v7176, %v7222
  %v7227 = vmul.f32 %v7181, %v7223
  %v7228 = vmul.f32 %v7186, %v7224
  %v7229 = vmul.f32 %v7191, %v7225
  %s7230 = scalar_lea.vmem %s12, 128
  %v7231 = vld [vmem:[%s7230] sm:$0xff]
  %v7232 = vld [vmem:[%s7230 + $0x8] sm:$0xff]
  %v7233 = vld [vmem:[%s7230 + $0x10] sm:$0xff]
  %v7234 = vld [vmem:[%s7230 + $0x18] sm:$0xff]
  %v7235 = vld [vmem:[%s7230 + $0x20] sm:$0xff]
  %v7236 = vld [vmem:[%s7230 + $0x28] sm:$0xff]
  %v7237 = vld [vmem:[%s7230 + $0x30] sm:$0xff]
  %v7238 = vld [vmem:[%s7230 + $0x38] sm:$0xff]
  %v7239 = vld [vmem:[%s7230 + $0x40] sm:$0xff]
  %v7240 = vld [vmem:[%s7230 + $0x48] sm:$0xff]
  %v7241 = vld [vmem:[%s7230 + $0x50] sm:$0xff]
  %v7242 = vld [vmem:[%s7230 + $0x58] sm:$0xff]
  %v7243 = vld [vmem:[%s7230 + $0x60] sm:$0xff]
  %v7244 = vld [vmem:[%s7230 + $0x68] sm:$0xff]
  %v7245 = vld [vmem:[%s7230 + $0x70] sm:$0xff]
  %v7246 = vld [vmem:[%s7230 + $0x78] sm:$0xff]
  %s7247 = scalar_lea.vmem %s13, 1
  %v7248 = vld [vmem:[%s7247] sm:$0x1]
  %v7250 = vlaneseq
  %v7251 = vshrl.u32 %v7250, 7
  %v7252 = vsub.s32 0, %v7251
  %v7253 = vrot.slane %v7248, %v7252
  %7255 = vmatprep.subr.mxu0 0.0
  %7256 = vmatpush1.msra.mxu0 %v7231
  %7257 = vmatprep.subr.mxu0 0.0
  %7258 = vmatpush1.msra.mxu0 %v7232
  %7259 = vmatprep.subr.mxu0 0.0
  %7260 = vmatpush1.msra.mxu0 %v7233
  %7261 = vmatprep.subr.mxu0 0.0
  %7262 = vmatpush1.msra.mxu0 %v7234
  %7263 = vmatprep.subr.mxu0 0.0
  %7264 = vmatpush1.msra.mxu0 %v7235
  %7265 = vmatprep.subr.mxu0 0.0
  %7266 = vmatpush1.msra.mxu0 %v7236
  %7267 = vmatprep.subr.mxu0 0.0
  %7268 = vmatpush1.msra.mxu0 %v7237
  %7269 = vmatprep.subr.mxu0 0.0
  %7270 = vmatpush1.msra.mxu0 %v7238
  %7271 = vmatprep.subr.mxu0 0.0
  %7272 = vmatpush1.msra.mxu0 %v7239
  %7273 = vmatprep.subr.mxu0 0.0
  %7274 = vmatpush1.msra.mxu0 %v7240
  %7275 = vmatprep.subr.mxu0 0.0
  %7276 = vmatpush1.msra.mxu0 %v7241
  %7277 = vmatprep.subr.mxu0 0.0
  %7278 = vmatpush1.msra.mxu0 %v7242
  %7279 = vmatprep.subr.mxu0 0.0
  %7280 = vmatpush1.msra.mxu0 %v7243
  %7281 = vmatprep.subr.mxu0 0.0
  %7282 = vmatpush1.msra.mxu0 %v7244
  %7283 = vmatprep.subr.mxu0 0.0
  %7284 = vmatpush1.msra.mxu0 %v7245
  %7285 = vmatprep.subr.mxu0 0.0
  %7286 = vmatpush1.msra.mxu0 %v7246
  %7287 = vmatprep.subr.mxu0 0.0
  %7288 = vmatpush1.msra.mxu0 0.0
  %7289 = vmatprep.subr.mxu0 0.0
  %7290 = vmatpush1.msra.mxu0 0.0
  %7291 = vmatprep.subr.mxu0 0.0
  %7292 = vmatpush1.msra.mxu0 0.0
  %7293 = vmatprep.subr.mxu0 0.0
  %7294 = vmatpush1.msra.mxu0 0.0
  %7295 = vmatprep.subr.mxu0 0.0
  %7296 = vmatpush1.msra.mxu0 0.0
  %7297 = vmatprep.subr.mxu0 0.0
  %7298 = vmatpush1.msra.mxu0 0.0
  %7299 = vmatprep.subr.mxu0 0.0
  %7300 = vmatpush1.msra.mxu0 0.0
  %7301 = vmatprep.subr.mxu0 0.0
  %7302 = vmatpush1.msra.mxu0 0.0
  %7303 = vmatprep.subr.mxu0 0.0
  %7304 = vmatpush1.msra.mxu0 0.0
  %7305 = vmatprep.subr.mxu0 0.0
  %7306 = vmatpush1.msra.mxu0 0.0
  %7307 = vmatprep.subr.mxu0 0.0
  %7308 = vmatpush1.msra.mxu0 0.0
  %7309 = vmatprep.subr.mxu0 0.0
  %7310 = vmatpush1.msra.mxu0 0.0
  %7311 = vmatprep.subr.mxu0 0.0
  %7312 = vmatpush1.msra.mxu0 0.0
  %7313 = vmatprep.subr.mxu0 0.0
  %7314 = vmatpush1.msra.mxu0 0.0
  %7315 = vmatprep.subr.mxu0 0.0
  %7316 = vmatpush1.msra.mxu0 0.0
  %7317 = vmatprep.subr.mxu0 0.0
  %7318 = vmatpush1.msra.mxu0 0.0
  %7319 = vmatprep.mubr.f32.mxu0 0.0
  %7320 = vmatmul.mubr.f32.gmra.mrb[0].mxu0 %v7226
  %v7321 = vpop.f32.mrb[0].mxu0
  %v7322 = vadd.f32 %v7253, %v7321
  %v7323 = vpop.f32.mrb[0].mxu0
  %7324 = vmatprep.mubr.f32.mxu0 0.0
  %7325 = vmatmul.mubr.f32.gmra.mrb[0].mxu0 %v7227
  %v7326 = vpop.f32.mrb[0].mxu0
  %v7327 = vadd.f32 %v7253, %v7326
  %v7328 = vpop.f32.mrb[0].mxu0
  %7329 = vmatprep.mubr.f32.mxu0 0.0
  %7330 = vmatmul.mubr.f32.gmra.mrb[0].mxu0 %v7228
  %v7331 = vpop.f32.mrb[0].mxu0
  %v7332 = vadd.f32 %v7253, %v7331
  %v7333 = vpop.f32.mrb[0].mxu0
  %7334 = vmatprep.mubr.f32.mxu0 0.0
  %7335 = vmatmul.mubr.f32.gmra.mrb[0].mxu0 %v7229
  %v7336 = vpop.f32.mrb[0].mxu0
  %v7337 = vadd.f32 %v7253, %v7336
  %v7338 = vpop.f32.mrb[0].mxu0
  %7339 = vdwg.mxu0
  %v7340 = vadd.f32 %v7322, %v7076
  %v7341 = vadd.f32 %v7327, %v7077
  %v7342 = vadd.f32 %v7332, %v7078
  %v7343 = vadd.f32 %v7337, %v7079
  %s7344 = scalar_lea.vmem %s14, 1
  %v7345 = vld [vmem:[%s7344] sm:$0x1]
  %s7346 = scalar_lea.vmem %s15, 1
  %v7347 = vld [vmem:[%s7346] sm:$0x1]
  %v7348 = vsel %vm100, %v7340, 0.0
  %7349 = vadd.xlane.f32.xlu0 %v7348
  %v7350 = vpop.xlane.xlu0 %7349
  %v7351 = vsel %vm100, %v7341, 0.0
  %7352 = vadd.xlane.f32.xlu0 %v7351
  %v7353 = vpop.xlane.xlu0 %7352
  %v7354 = vsel %vm100, %v7342, 0.0
  %7355 = vadd.xlane.f32.xlu0 %v7354
  %v7356 = vpop.xlane.xlu0 %7355
  %v7357 = vsel %vm100, %v7343, 0.0
  %7358 = vadd.xlane.f32.xlu0 %v7357
  %v7359 = vpop.xlane.xlu0 %7358
  %v7360 = vmul.f32 %v7350, %v3346
  %v7361 = vmul.f32 %v7353, %v3346
  %v7362 = vmul.f32 %v7356, %v3346
  %v7363 = vmul.f32 %v7359, %v3346
  %v7364 = vsub.f32 %v7340, %v7360
  %v7365 = vsub.f32 %v7341, %v7361
  %v7366 = vsub.f32 %v7342, %v7362
  %v7367 = vsub.f32 %v7343, %v7363
  %v7368 = vmul.f32 %v7364, %v7364
  %v7369 = vmul.f32 %v7365, %v7365
  %v7370 = vmul.f32 %v7366, %v7366
  %v7371 = vmul.f32 %v7367, %v7367
  %v7372 = vsel %vm100, %v7368, 0.0
  %7373 = vadd.xlane.f32.xlu0 %v7372
  %v7374 = vpop.xlane.xlu0 %7373
  %v7375 = vsel %vm100, %v7369, 0.0
  %7376 = vadd.xlane.f32.xlu0 %v7375
  %v7377 = vpop.xlane.xlu0 %7376
  %v7378 = vsel %vm100, %v7370, 0.0
  %7379 = vadd.xlane.f32.xlu0 %v7378
  %v7380 = vpop.xlane.xlu0 %7379
  %v7381 = vsel %vm100, %v7371, 0.0
  %7382 = vadd.xlane.f32.xlu0 %v7381
  %v7383 = vpop.xlane.xlu0 %7382
  %v7384 = vmul.f32 %v7374, %v3346
  %v7385 = vmul.f32 %v7377, %v3346
  %v7386 = vmul.f32 %v7380, %v3346
  %v7387 = vmul.f32 %v7383, %v3346
  %v7388 = vadd.f32 %v7384, 1e-12
  %v7389 = vadd.f32 %v7385, 1e-12
  %v7390 = vadd.f32 %v7386, 1e-12
  %v7391 = vadd.f32 %v7387, 1e-12
  %v7392 = vrsqrt.pop %v7388
  %v7393 = vrsqrt.pop %v7389
  %v7394 = vrsqrt.pop %v7390
  %v7395 = vrsqrt.pop %v7391
  %v7396 = vmul.f32 %v7364, %v7392
  %v7397 = vmul.f32 %v7365, %v7393
  %v7398 = vmul.f32 %v7366, %v7394
  %v7399 = vmul.f32 %v7367, %v7395
  %v7401 = vlaneseq
  %v7402 = vshrl.u32 %v7401, 7
  %v7403 = vsub.s32 0, %v7402
  %v7404 = vrot.slane %v7345, %v7403
  %v7406 = vmul.f32 %v7396, %v7404
  %v7407 = vmul.f32 %v7397, %v7404
  %v7408 = vmul.f32 %v7398, %v7404
  %v7409 = vmul.f32 %v7399, %v7404
  %v7411 = vlaneseq
  %v7412 = vshrl.u32 %v7411, 7
  %v7413 = vsub.s32 0, %v7412
  %v7414 = vrot.slane %v7347, %v7413
  %v7416 = vadd.f32 %v7406, %v7414
  %v7417 = vadd.f32 %v7407, %v7414
  %v7418 = vadd.f32 %v7408, %v7414
  %v7419 = vadd.f32 %v7409, %v7414
  %7420 = vst.msk [vmem:[%s16] sm:$0xff] %vm100, %v7416
  %7421 = vst.msk [vmem:[%s16 + $0x8] sm:$0xff] %vm100, %v7417
  %7422 = vst.msk [vmem:[%s16 + $0x10] sm:$0xff] %vm100, %v7418
  %7423 = vst.msk [vmem:[%s16 + $0x18] sm:$0xff] %vm100, %v7419
  // Predicated region
  $region66: #{luke_encoder_forward.1} parent=0 // pred_check
    _
  $region67: #{luke_encoder_forward.1} parent=0 // pred_check_branch
    %7425 = sbr.rel (0) target = $region69
  $region68: #{luke_encoder_forward.1} parent=0 // pred_region
    _
  $region69: #{luke_encoder_forward.1} parent=0 // pred_fallthru
    _
  // Predicated region
  $region70: #{luke_encoder_forward.1} parent=0 // pred_check
    _
  $region71: #{luke_encoder_forward.1} parent=0 // pred_check_branch
    %7427 = sbr.rel (0) target = $region73
  $region72: #{luke_encoder_forward.1} parent=0 // pred_region
    _
  $region73: #{luke_encoder_forward.1} parent=0 // pred_fallthru
    _

</llo_original>
